<compile_context>
chip_gen: v7x
topology: tpu7x:2x2x1
jax: 0.10.0
libtpu: 0.0.40
codegen_flags: <defaults>
</compile_context>

<pallas_src>
import functools
import numpy as np
import jax
import jax.numpy as jnp
from jax.experimental import pallas as pl
from jax.experimental.pallas import tpu as pltpu

LRELU_SLOPE = 0.1


def _lrelu(x):
    # max(x, a*x) == LeakyReLU(a) for 0 < a < 1.
    return jnp.maximum(x, LRELU_SLOPE * x)


# --------------------------------------------------------------------------- #
# The fused Pallas kernel: CPEN2 encoder + MLP head + DDPM reverse loop
# --------------------------------------------------------------------------- #
def _fused_kernel(a0_ref, mask_ref,
                  e1w_ref, e1b_ref, rbw_ref, rbb_ref,
                  e3w0_ref, e3b0_ref, e3w1_ref, e3b1_ref, e3w2_ref, e3b2_ref,
                  mw0_ref, mb0_ref, mw1_ref, mb1_ref,
                  dw1c_ref, dw1t_ref, dw1x_ref, db1_ref, dw2_ref, db2_ref,
                  xn_ref, out_ref,
                  *, offs, n_res, coef1, coef2, max_period):
    f32 = jnp.float32
    bf16 = jnp.bfloat16
    M = a0_ref.shape[0]                       # B * H * W (flat pixel rows)

    def conv3x3(a, w_cat, bias, act):
        """a: (M, Cin) -> (M, Cout).  One MXU matmul; taps combined with XLU
        rolls of the output partials + 0/1 boundary masks (zero padding)."""
        cout = w_cat.shape[-1] // 9
        p = jnp.dot(a.astype(bf16), w_cat, preferred_element_type=f32)  # (M, 9*Cout)
        acc = p[:, 4 * cout:5 * cout]                                   # center tap
        for t in range(9):
            if t == 4:
                continue
            blk = p[:, t * cout:(t + 1) * cout]
            # out[m] needs P_t[m + off]; jnp.roll semantics -> shift = -off.
            rolled = pltpu.roll(blk, shift=(-offs[t]) % M, axis=0)
            acc = acc + rolled * mask_ref[t]                            # (M,1) mask
        acc = acc + bias
        return _lrelu(acc) if act else acc

    # ---- CPEN2: E1 (conv 144->64 + lrelu) ----
    h = conv3x3(a0_ref[...], e1w_ref[...], e1b_ref[...], True)

    # ---- CPEN2: ResBlocks (conv -> lrelu -> conv, + x) ----
    for r in range(n_res):
        t1 = conv3x3(h, rbw_ref[2 * r], rbb_ref[2 * r], True)
        t2 = conv3x3(t1, rbw_ref[2 * r + 1], rbb_ref[2 * r + 1], False)
        h = t2 + h                                                      # residual (f32)

    # ---- CPEN2: E3 (64->128, 128->128, 128->256, each + lrelu) ----
    g = conv3x3(h, e3w0_ref[...], e3b0_ref[...], True)
    g = conv3x3(g, e3w1_ref[...], e3b1_ref[...], True)
    g = conv3x3(g, e3w2_ref[...], e3b2_ref[...], True)

    # AdaptiveAvgPool2d(1): per-sample spatial mean as a sublane reduction.
    B = xn_ref.shape[0]
    hw = M // B
    fea1 = jnp.sum(g.reshape(B, hw, g.shape[-1]), axis=1) * (1.0 / hw)  # (B, 256)

    # ---- CPEN2: MLP head + exact sigmoid ----
    z = jnp.dot(fea1.astype(bf16), mw0_ref[...],
                preferred_element_type=f32) + mb0_ref[...]
    z = _lrelu(z)
    z = jnp.dot(z.astype(bf16), mw1_ref[...],
                preferred_element_type=f32) + mb1_ref[...]
    c_z = 1.0 / (1.0 + jnp.exp(-z))                                     # (B, 256)

    # ---- DDPM reverse loop (x0 parameterization), fully unrolled ----
    # denoise input is cat([c, t, x]); splitting W1 rows avoids an in-kernel concat:
    #   inp @ W1 = c @ W1[:256] + t * W1[256:257] + x @ W1[257:]
    base = jnp.dot(c_z.astype(bf16), dw1c_ref[...],
                   preferred_element_type=f32) + db1_ref[...]
    w1t = dw1t_ref[...]
    dw1x = dw1x_ref[...]
    dw2 = dw2_ref[...]
    db2 = db2_ref[...]

    x = xn_ref[...]                                                     # (B, 256) f32
    for i in reversed(range(len(coef1))):                               # reversed(range(T))
        tval = float(i) / max_period
        hd = _lrelu(base + tval * w1t
                    + jnp.dot(x.astype(bf16), dw1x, preferred_element_type=f32))
        hd = _lrelu(jnp.dot(hd.astype(bf16), dw2,
                            preferred_element_type=f32) + db2)          # x_recon
        x = coef1[i] * hd + coef2[i] * x                                # posterior mean

    out_ref[...] = x


def _vspec():
    return pl.BlockSpec(memory_space=pltpu.MemorySpace.VMEM)


# --------------------------------------------------------------------------- #
# Host-side (trace-time) helpers: constants, weight relayout, schedule
# --------------------------------------------------------------------------- #
def pixel_unshuffle(x, r):
    B, C, H, W = x.shape
    x = x.reshape(B, C, H // r, r, W // r, r)
    x = x.transpose(0, 1, 3, 5, 2, 4)
    return x.reshape(B, C * r * r, H // r, W // r)


def _make_tap_masks(B, H, W):
    """Per-tap flat-row offsets and 0/1 masks that encode the conv zero padding."""
    M = B * H * W
    masks = np.zeros((9, M, 1), np.float32)
    offs = []
    for ky in range(3):
        for kx in range(3):
            dy, dx = ky - 1, kx - 1
            offs.append(dy * W + dx)
            t = ky * 3 + kx
            for b in range(B):
                for y in range(H):
                    for x in range(W):
                        if 0 <= y + dy < H and 0 <= x + dx < W:
                            masks[t, (b * H + y) * W + x, 0] = 1.0
    return masks, tuple(offs)


def make_schedule(timesteps, linear_start, linear_end):
    betas = np.linspace(linear_start ** 0.5, linear_end ** 0.5,
                        timesteps, dtype=np.float64) ** 2
    alphas = 1.0 - betas
    acp = np.cumprod(alphas, axis=0)
    acp_prev = np.append(1.0, acp[:-1])
    coef1 = betas * np.sqrt(acp_prev) / (1.0 - acp)
    coef2 = (1.0 - acp_prev) * np.sqrt(alphas) / (1.0 - acp)
    return coef1.astype(np.float32), coef2.astype(np.float32)


def init_params(key, ms_channels=8, n_feats=64, n_encoder_res=4):
    keys = iter(jax.random.split(key, 64))

    def conv_p(cin, cout):
        w = jax.random.normal(next(keys), (cout, cin, 3, 3), jnp.float32)
        w = w * (1.0 / np.sqrt(cin * 9))
        b = jax.random.normal(next(keys), (cout,), jnp.float32) * 0.01
        return w, b

    def lin_p(fin, fout):
        w = jax.random.normal(next(keys), (fin, fout), jnp.float32)
        w = w * (1.0 / np.sqrt(fin))
        b = jax.random.normal(next(keys), (fout,), jnp.float32) * 0.01
        return w, b

    n4 = 4 * n_feats
    return {
        "e1": conv_p(ms_channels * 16 + 16, n_feats),
        "resblocks": [(conv_p(n_feats, n_feats), conv_p(n_feats, n_feats))
                      for _ in range(n_encoder_res)],
        "e3_0": conv_p(n_feats, n_feats * 2),
        "e3_1": conv_p(n_feats * 2, n_feats * 2),
        "e3_2": conv_p(n_feats * 2, n_feats * 4),
        "mlp_0": lin_p(n4, n4),
        "mlp_1": lin_p(n4, n4),
        "den_lin1": lin_p(n4 * 2 + 1, n4),
        "den_lin2": lin_p(n4, n4),
    }


def prepare_params(params, coef1, coef2, *, batch, height, width,
                   timesteps, n_res=4):
    """One-time weight relayout: conv weights -> (Cin, 9*Cout) bf16 tap-concat,
    biases -> (1, Cout) f32 rows, denoise W1 row-split.  Plus tap masks."""
    bf16 = jnp.bfloat16

    def conv_repack(w):          # torch (Cout, Cin, 3, 3) -> (Cin, 9*Cout) bf16
        cout, cin = w.shape[0], w.shape[1]
        return jnp.transpose(w, (1, 2, 3, 0)).reshape(cin, 9 * cout).astype(bf16)

    def bias_row(b):
        return jnp.asarray(b, jnp.float32).reshape(1, -1)

    rb_ws, rb_bs = [], []
    for (w1, b1), (w2, b2) in params["resblocks"]:
        rb_ws += [conv_repack(w1), conv_repack(w2)]
        rb_bs += [bias_row(b1), bias_row(b2)]

    dw1, db1 = params["den_lin1"]        # (513, 256), (256,)
    dw2, db2 = params["den_lin2"]        # (256, 256), (256,)
    n4 = dw2.shape[0]

    masks, offs = _make_tap_masks(batch, height, width)

    return {
        "n_res": n_res,
        "coef1": tuple(float(v) for v in coef1),
        "coef2": tuple(float(v) for v in coef2),
        "max_period": float(timesteps * 10),
        "offs": offs,
        "mask": jnp.asarray(masks),                        # (9, M, 1) f32
        "e1_w": conv_repack(params["e1"][0]),   "e1_b": bias_row(params["e1"][1]),
        "rb_w": jnp.stack(rb_ws, axis=0),                  # (2*n_res, 64, 576) bf16
        "rb_b": jnp.stack(rb_bs, axis=0),                  # (2*n_res, 1, 64)   f32
        "e3_w0": conv_repack(params["e3_0"][0]), "e3_b0": bias_row(params["e3_0"][1]),
        "e3_w1": conv_repack(params["e3_1"][0]), "e3_b1": bias_row(params["e3_1"][1]),
        "e3_w2": conv_repack(params["e3_2"][0]), "e3_b2": bias_row(params["e3_2"][1]),
        "mlp_w0": params["mlp_0"][0].astype(bf16), "mlp_b0": bias_row(params["mlp_0"][1]),
        "mlp_w1": params["mlp_1"][0].astype(bf16), "mlp_b1": bias_row(params["mlp_1"][1]),
        "d_w1c": dw1[:n4].astype(bf16),
        "d_w1t": dw1[n4:n4 + 1].astype(jnp.float32),
        "d_w1x": dw1[n4 + 1:].astype(bf16),
        "d_b1": bias_row(db1),
        "d_w2": dw2.astype(bf16),
        "d_b2": bias_row(db2),
    }


# --------------------------------------------------------------------------- #
# Forward (eval path): pixel-unshuffle glue + one fused pallas_call
# --------------------------------------------------------------------------- #
def diffirs2_ipr_forward(prep, ms, pan, x_noisy):
    B = ms.shape[0]
    ms_u = pixel_unshuffle(ms, 4)
    pan_u = pixel_unshuffle(pan, 4)
    x = jnp.concatenate([ms_u, pan_u], axis=1)             # (B, 144, H, W)
    _, C, H, W = x.shape
    a0 = x.transpose(0, 2, 3, 1).reshape(B * H * W, C).astype(jnp.bfloat16)

    kern = functools.partial(
        _fused_kernel,
        offs=prep["offs"], n_res=prep["n_res"],
        coef1=prep["coef1"], coef2=prep["coef2"],
        max_period=prep["max_period"])

    args = (a0, prep["mask"],
            prep["e1_w"], prep["e1_b"], prep["rb_w"], prep["rb_b"],
            prep["e3_w0"], prep["e3_b0"], prep["e3_w1"], prep["e3_b1"],
            prep["e3_w2"], prep["e3_b2"],
            prep["mlp_w0"], prep["mlp_b0"], prep["mlp_w1"], prep["mlp_b1"],
            prep["d_w1c"], prep["d_w1t"], prep["d_w1x"], prep["d_b1"],
            prep["d_w2"], prep["d_b2"],
            x_noisy)

    return pl.pallas_call(
        kern,
        out_shape=jax.ShapeDtypeStruct((B, x_noisy.shape[1]), jnp.float32),
        in_specs=[_vspec()] * len(args),
        out_specs=_vspec(),
    )(*args)


# --------------------------------------------------------------------------- #
if __name__ == "__main__":
    key = jax.random.PRNGKey(0)
    k_ms, k_pan, k_noise = jax.random.split(key, 3)
    B = 2
    ms = jax.random.normal(k_ms, (B, 8, 16, 16), jnp.float32)
    pan = jax.random.normal(k_pan, (B, 1, 16, 16), jnp.float32)

    params = init_params(jax.random.PRNGKey(42))
    timesteps = 10
    coef1, coef2 = make_schedule(timesteps, linear_start=0.1, linear_end=0.99)
    prep = prepare_params(params, coef1, coef2, batch=B, height=4, width=4,
                          timesteps=timesteps, n_res=4)

    x_noisy = jax.random.normal(k_noise, (B, 256), jnp.float32)

    run = jax.jit(lambda m, p, xn: diffirs2_ipr_forward(prep, m, p, xn))
    out = run(ms, pan, x_noisy)
    jax.block_until_ready(out)

    assert out.shape == (B, 256) and out.dtype == jnp.float32
    assert bool(jnp.all(jnp.isfinite(out)))
    print("KERNEL_OK")
</pallas_src>

<mosaic_0001>
module attributes {stable_mosaic.version = 11 : i64} {
  func.func @_fused_kernel(%arg0: memref<32x144xbf16, #tpu.memory_space<vmem>>, %arg1: memref<9x32x1xf32, #tpu.memory_space<vmem>>, %arg2: memref<144x576xbf16, #tpu.memory_space<vmem>>, %arg3: memref<1x64xf32, #tpu.memory_space<vmem>>, %arg4: memref<8x64x576xbf16, #tpu.memory_space<vmem>>, %arg5: memref<8x1x64xf32, #tpu.memory_space<vmem>>, %arg6: memref<64x1152xbf16, #tpu.memory_space<vmem>>, %arg7: memref<1x128xf32, #tpu.memory_space<vmem>>, %arg8: memref<128x1152xbf16, #tpu.memory_space<vmem>>, %arg9: memref<1x128xf32, #tpu.memory_space<vmem>>, %arg10: memref<128x2304xbf16, #tpu.memory_space<vmem>>, %arg11: memref<1x256xf32, #tpu.memory_space<vmem>>, %arg12: memref<256x256xbf16, #tpu.memory_space<vmem>>, %arg13: memref<1x256xf32, #tpu.memory_space<vmem>>, %arg14: memref<256x256xbf16, #tpu.memory_space<vmem>>, %arg15: memref<1x256xf32, #tpu.memory_space<vmem>>, %arg16: memref<256x256xbf16, #tpu.memory_space<vmem>>, %arg17: memref<1x256xf32, #tpu.memory_space<vmem>>, %arg18: memref<256x256xbf16, #tpu.memory_space<vmem>>, %arg19: memref<1x256xf32, #tpu.memory_space<vmem>>, %arg20: memref<256x256xbf16, #tpu.memory_space<vmem>>, %arg21: memref<1x256xf32, #tpu.memory_space<vmem>>, %arg22: memref<2x256xf32, #tpu.memory_space<vmem>>, %arg23: memref<2x256xf32, #tpu.memory_space<vmem>>) attributes {dimension_semantics = [], scalar_prefetch = 0 : i64, scratch_operands = 0 : i64, tpu.core_type = #tpu.core_type<tc>} {
    %c0 = arith.constant 0 : index
    %c0_0 = arith.constant 0 : index
    %0 = vector.load %arg0[%c0, %c0_0] : memref<32x144xbf16, #tpu.memory_space<vmem>>, vector<32x144xbf16>
    %c0_1 = arith.constant 0 : index
    %c0_2 = arith.constant 0 : index
    %1 = vector.load %arg2[%c0_1, %c0_2] : memref<144x576xbf16, #tpu.memory_space<vmem>>, vector<144x576xbf16>
    %c0_3 = arith.constant 0 : index
    %c0_4 = arith.constant 0 : index
    %2 = vector.load %arg3[%c0_3, %c0_4] : memref<1x64xf32, #tpu.memory_space<vmem>>, vector<1x64xf32>
    %cst = arith.constant dense<0.000000e+00> : vector<32x576xf32>
    %3 = tpu.matmul %0, %1, %cst {dimension_numbers = #tpu.dot_dimension_numbers<[1], [0], [0], [1], [0, 0, 1, 1], [], []>} : vector<32x144xbf16>, vector<144x576xbf16>, vector<32x576xf32> -> vector<32x576xf32>
    %4 = vector.extract_strided_slice %3 {offsets = [0, 256], sizes = [32, 64], strides = [1, 1]} : vector<32x576xf32> to vector<32x64xf32>
    %5 = vector.extract_strided_slice %3 {offsets = [0, 0], sizes = [32, 64], strides = [1, 1]} : vector<32x576xf32> to vector<32x64xf32>
    %c5_i32 = arith.constant 5 : i32
    %6 = tpu.dynamic_rotate %5 by %c5_i32 dim 0 : vector<32x64xf32>, i32 -> vector<32x64xf32>
    %c0_5 = arith.constant 0 : index
    %c0_6 = arith.constant 0 : index
    %c0_7 = arith.constant 0 : index
    %7 = vector.load %arg1[%c0_5, %c0_6, %c0_7] : memref<9x32x1xf32, #tpu.memory_space<vmem>>, vector<1x32x1xf32>
    %8 = vector.shape_cast %7 : vector<1x32x1xf32> to vector<32x1xf32>
    %9 = vector.broadcast %8 : vector<32x1xf32> to vector<32x64xf32>
    %10 = arith.mulf %6, %9 : vector<32x64xf32>
    %11 = arith.addf %4, %10 : vector<32x64xf32>
    %12 = vector.extract_strided_slice %3 {offsets = [0, 64], sizes = [32, 64], strides = [1, 1]} : vector<32x576xf32> to vector<32x64xf32>
    %c4_i32 = arith.constant 4 : i32
    %13 = tpu.dynamic_rotate %12 by %c4_i32 dim 0 : vector<32x64xf32>, i32 -> vector<32x64xf32>
    %c1 = arith.constant 1 : index
    %c0_8 = arith.constant 0 : index
    %c0_9 = arith.constant 0 : index
    %14 = vector.load %arg1[%c1, %c0_8, %c0_9] : memref<9x32x1xf32, #tpu.memory_space<vmem>>, vector<1x32x1xf32>
    %15 = vector.shape_cast %14 : vector<1x32x1xf32> to vector<32x1xf32>
    %16 = vector.broadcast %15 : vector<32x1xf32> to vector<32x64xf32>
    %17 = arith.mulf %13, %16 : vector<32x64xf32>
    %18 = arith.addf %11, %17 : vector<32x64xf32>
    %19 = vector.extract_strided_slice %3 {offsets = [0, 128], sizes = [32, 64], strides = [1, 1]} : vector<32x576xf32> to vector<32x64xf32>
    %c3_i32 = arith.constant 3 : i32
    %20 = tpu.dynamic_rotate %19 by %c3_i32 dim 0 : vector<32x64xf32>, i32 -> vector<32x64xf32>
    %c2 = arith.constant 2 : index
    %c0_10 = arith.constant 0 : index
    %c0_11 = arith.constant 0 : index
    %21 = vector.load %arg1[%c2, %c0_10, %c0_11] : memref<9x32x1xf32, #tpu.memory_space<vmem>>, vector<1x32x1xf32>
    %22 = vector.shape_cast %21 : vector<1x32x1xf32> to vector<32x1xf32>
    %23 = vector.broadcast %22 : vector<32x1xf32> to vector<32x64xf32>
    %24 = arith.mulf %20, %23 : vector<32x64xf32>
    %25 = arith.addf %18, %24 : vector<32x64xf32>
    %26 = vector.extract_strided_slice %3 {offsets = [0, 192], sizes = [32, 64], strides = [1, 1]} : vector<32x576xf32> to vector<32x64xf32>
    %c1_i32 = arith.constant 1 : i32
    %27 = tpu.dynamic_rotate %26 by %c1_i32 dim 0 : vector<32x64xf32>, i32 -> vector<32x64xf32>
    %c3 = arith.constant 3 : index
    %c0_12 = arith.constant 0 : index
    %c0_13 = arith.constant 0 : index
    %28 = vector.load %arg1[%c3, %c0_12, %c0_13] : memref<9x32x1xf32, #tpu.memory_space<vmem>>, vector<1x32x1xf32>
    %29 = vector.shape_cast %28 : vector<1x32x1xf32> to vector<32x1xf32>
    %30 = vector.broadcast %29 : vector<32x1xf32> to vector<32x64xf32>
    %31 = arith.mulf %27, %30 : vector<32x64xf32>
    %32 = arith.addf %25, %31 : vector<32x64xf32>
    %33 = vector.extract_strided_slice %3 {offsets = [0, 320], sizes = [32, 64], strides = [1, 1]} : vector<32x576xf32> to vector<32x64xf32>
    %c31_i32 = arith.constant 31 : i32
    %34 = tpu.dynamic_rotate %33 by %c31_i32 dim 0 : vector<32x64xf32>, i32 -> vector<32x64xf32>
    %c5 = arith.constant 5 : index
    %c0_14 = arith.constant 0 : index
    %c0_15 = arith.constant 0 : index
    %35 = vector.load %arg1[%c5, %c0_14, %c0_15] : memref<9x32x1xf32, #tpu.memory_space<vmem>>, vector<1x32x1xf32>
    %36 = vector.shape_cast %35 : vector<1x32x1xf32> to vector<32x1xf32>
    %37 = vector.broadcast %36 : vector<32x1xf32> to vector<32x64xf32>
    %38 = arith.mulf %34, %37 : vector<32x64xf32>
    %39 = arith.addf %32, %38 : vector<32x64xf32>
    %40 = vector.extract_strided_slice %3 {offsets = [0, 384], sizes = [32, 64], strides = [1, 1]} : vector<32x576xf32> to vector<32x64xf32>
    %c29_i32 = arith.constant 29 : i32
    %41 = tpu.dynamic_rotate %40 by %c29_i32 dim 0 : vector<32x64xf32>, i32 -> vector<32x64xf32>
    %c6 = arith.constant 6 : index
    %c0_16 = arith.constant 0 : index
    %c0_17 = arith.constant 0 : index
    %42 = vector.load %arg1[%c6, %c0_16, %c0_17] : memref<9x32x1xf32, #tpu.memory_space<vmem>>, vector<1x32x1xf32>
    %43 = vector.shape_cast %42 : vector<1x32x1xf32> to vector<32x1xf32>
    %44 = vector.broadcast %43 : vector<32x1xf32> to vector<32x64xf32>
    %45 = arith.mulf %41, %44 : vector<32x64xf32>
    %46 = arith.addf %39, %45 : vector<32x64xf32>
    %47 = vector.extract_strided_slice %3 {offsets = [0, 448], sizes = [32, 64], strides = [1, 1]} : vector<32x576xf32> to vector<32x64xf32>
    %c28_i32 = arith.constant 28 : i32
    %48 = tpu.dynamic_rotate %47 by %c28_i32 dim 0 : vector<32x64xf32>, i32 -> vector<32x64xf32>
    %c7 = arith.constant 7 : index
    %c0_18 = arith.constant 0 : index
    %c0_19 = arith.constant 0 : index
    %49 = vector.load %arg1[%c7, %c0_18, %c0_19] : memref<9x32x1xf32, #tpu.memory_space<vmem>>, vector<1x32x1xf32>
    %50 = vector.shape_cast %49 : vector<1x32x1xf32> to vector<32x1xf32>
    %51 = vector.broadcast %50 : vector<32x1xf32> to vector<32x64xf32>
    %52 = arith.mulf %48, %51 : vector<32x64xf32>
    %53 = arith.addf %46, %52 : vector<32x64xf32>
    %54 = vector.extract_strided_slice %3 {offsets = [0, 512], sizes = [32, 64], strides = [1, 1]} : vector<32x576xf32> to vector<32x64xf32>
    %c27_i32 = arith.constant 27 : i32
    %55 = tpu.dynamic_rotate %54 by %c27_i32 dim 0 : vector<32x64xf32>, i32 -> vector<32x64xf32>
    %c8 = arith.constant 8 : index
    %c0_20 = arith.constant 0 : index
    %c0_21 = arith.constant 0 : index
    %56 = vector.load %arg1[%c8, %c0_20, %c0_21] : memref<9x32x1xf32, #tpu.memory_space<vmem>>, vector<1x32x1xf32>
    %57 = vector.shape_cast %56 : vector<1x32x1xf32> to vector<32x1xf32>
    %58 = vector.broadcast %57 : vector<32x1xf32> to vector<32x64xf32>
    %59 = arith.mulf %55, %58 : vector<32x64xf32>
    %60 = arith.addf %53, %59 : vector<32x64xf32>
    %61 = vector.broadcast %2 : vector<1x64xf32> to vector<32x64xf32>
    %62 = arith.addf %60, %61 : vector<32x64xf32>
    %cst_22 = arith.constant 1.000000e-01 : f32
    %63 = vector.broadcast %cst_22 : f32 to vector<32x64xf32>
    %64 = arith.mulf %63, %62 : vector<32x64xf32>
    %65 = arith.maximumf %62, %64 : vector<32x64xf32>
    %c0_23 = arith.constant 0 : index
    %c0_24 = arith.constant 0 : index
    %c0_25 = arith.constant 0 : index
    %66 = vector.load %arg4[%c0_23, %c0_24, %c0_25] : memref<8x64x576xbf16, #tpu.memory_space<vmem>>, vector<1x64x576xbf16>
    %67 = vector.shape_cast %66 : vector<1x64x576xbf16> to vector<64x576xbf16>
    %c0_26 = arith.constant 0 : index
    %c0_27 = arith.constant 0 : index
    %c0_28 = arith.constant 0 : index
    %68 = vector.load %arg5[%c0_26, %c0_27, %c0_28] : memref<8x1x64xf32, #tpu.memory_space<vmem>>, vector<1x1x64xf32>
    %69 = vector.shape_cast %68 : vector<1x1x64xf32> to vector<1x64xf32>
    %70 = arith.truncf %65 : vector<32x64xf32> to vector<32x64xbf16>
    %cst_29 = arith.constant dense<0.000000e+00> : vector<32x576xf32>
    %71 = tpu.matmul %70, %67, %cst_29 {dimension_numbers = #tpu.dot_dimension_numbers<[1], [0], [0], [1], [0, 0, 1, 1], [], []>} : vector<32x64xbf16>, vector<64x576xbf16>, vector<32x576xf32> -> vector<32x576xf32>
    %72 = vector.extract_strided_slice %71 {offsets = [0, 256], sizes = [32, 64], strides = [1, 1]} : vector<32x576xf32> to vector<32x64xf32>
    %73 = vector.extract_strided_slice %71 {offsets = [0, 0], sizes = [32, 64], strides = [1, 1]} : vector<32x576xf32> to vector<32x64xf32>
    %c5_i32_30 = arith.constant 5 : i32
    %74 = tpu.dynamic_rotate %73 by %c5_i32_30 dim 0 : vector<32x64xf32>, i32 -> vector<32x64xf32>
    %c0_31 = arith.constant 0 : index
    %c0_32 = arith.constant 0 : index
    %c0_33 = arith.constant 0 : index
    %75 = vector.load %arg1[%c0_31, %c0_32, %c0_33] : memref<9x32x1xf32, #tpu.memory_space<vmem>>, vector<1x32x1xf32>
    %76 = vector.shape_cast %75 : vector<1x32x1xf32> to vector<32x1xf32>
    %77 = vector.broadcast %76 : vector<32x1xf32> to vector<32x64xf32>
    %78 = arith.mulf %74, %77 : vector<32x64xf32>
    %79 = arith.addf %72, %78 : vector<32x64xf32>
    %80 = vector.extract_strided_slice %71 {offsets = [0, 64], sizes = [32, 64], strides = [1, 1]} : vector<32x576xf32> to vector<32x64xf32>
    %c4_i32_34 = arith.constant 4 : i32
    %81 = tpu.dynamic_rotate %80 by %c4_i32_34 dim 0 : vector<32x64xf32>, i32 -> vector<32x64xf32>
    %c1_35 = arith.constant 1 : index
    %c0_36 = arith.constant 0 : index
    %c0_37 = arith.constant 0 : index
    %82 = vector.load %arg1[%c1_35, %c0_36, %c0_37] : memref<9x32x1xf32, #tpu.memory_space<vmem>>, vector<1x32x1xf32>
    %83 = vector.shape_cast %82 : vector<1x32x1xf32> to vector<32x1xf32>
    %84 = vector.broadcast %83 : vector<32x1xf32> to vector<32x64xf32>
    %85 = arith.mulf %81, %84 : vector<32x64xf32>
    %86 = arith.addf %79, %85 : vector<32x64xf32>
    %87 = vector.extract_strided_slice %71 {offsets = [0, 128], sizes = [32, 64], strides = [1, 1]} : vector<32x576xf32> to vector<32x64xf32>
    %c3_i32_38 = arith.constant 3 : i32
    %88 = tpu.dynamic_rotate %87 by %c3_i32_38 dim 0 : vector<32x64xf32>, i32 -> vector<32x64xf32>
    %c2_39 = arith.constant 2 : index
    %c0_40 = arith.constant 0 : index
    %c0_41 = arith.constant 0 : index
    %89 = vector.load %arg1[%c2_39, %c0_40, %c0_41] : memref<9x32x1xf32, #tpu.memory_space<vmem>>, vector<1x32x1xf32>
    %90 = vector.shape_cast %89 : vector<1x32x1xf32> to vector<32x1xf32>
    %91 = vector.broadcast %90 : vector<32x1xf32> to vector<32x64xf32>
    %92 = arith.mulf %88, %91 : vector<32x64xf32>
    %93 = arith.addf %86, %92 : vector<32x64xf32>
    %94 = vector.extract_strided_slice %71 {offsets = [0, 192], sizes = [32, 64], strides = [1, 1]} : vector<32x576xf32> to vector<32x64xf32>
    %c1_i32_42 = arith.constant 1 : i32
    %95 = tpu.dynamic_rotate %94 by %c1_i32_42 dim 0 : vector<32x64xf32>, i32 -> vector<32x64xf32>
    %c3_43 = arith.constant 3 : index
    %c0_44 = arith.constant 0 : index
    %c0_45 = arith.constant 0 : index
    %96 = vector.load %arg1[%c3_43, %c0_44, %c0_45] : memref<9x32x1xf32, #tpu.memory_space<vmem>>, vector<1x32x1xf32>
    %97 = vector.shape_cast %96 : vector<1x32x1xf32> to vector<32x1xf32>
    %98 = vector.broadcast %97 : vector<32x1xf32> to vector<32x64xf32>
    %99 = arith.mulf %95, %98 : vector<32x64xf32>
    %100 = arith.addf %93, %99 : vector<32x64xf32>
    %101 = vector.extract_strided_slice %71 {offsets = [0, 320], sizes = [32, 64], strides = [1, 1]} : vector<32x576xf32> to vector<32x64xf32>
    %c31_i32_46 = arith.constant 31 : i32
    %102 = tpu.dynamic_rotate %101 by %c31_i32_46 dim 0 : vector<32x64xf32>, i32 -> vector<32x64xf32>
    %c5_47 = arith.constant 5 : index
    %c0_48 = arith.constant 0 : index
    %c0_49 = arith.constant 0 : index
    %103 = vector.load %arg1[%c5_47, %c0_48, %c0_49] : memref<9x32x1xf32, #tpu.memory_space<vmem>>, vector<1x32x1xf32>
    %104 = vector.shape_cast %103 : vector<1x32x1xf32> to vector<32x1xf32>
    %105 = vector.broadcast %104 : vector<32x1xf32> to vector<32x64xf32>
    %106 = arith.mulf %102, %105 : vector<32x64xf32>
    %107 = arith.addf %100, %106 : vector<32x64xf32>
    %108 = vector.extract_strided_slice %71 {offsets = [0, 384], sizes = [32, 64], strides = [1, 1]} : vector<32x576xf32> to vector<32x64xf32>
    %c29_i32_50 = arith.constant 29 : i32
    %109 = tpu.dynamic_rotate %108 by %c29_i32_50 dim 0 : vector<32x64xf32>, i32 -> vector<32x64xf32>
    %c6_51 = arith.constant 6 : index
    %c0_52 = arith.constant 0 : index
    %c0_53 = arith.constant 0 : index
    %110 = vector.load %arg1[%c6_51, %c0_52, %c0_53] : memref<9x32x1xf32, #tpu.memory_space<vmem>>, vector<1x32x1xf32>
    %111 = vector.shape_cast %110 : vector<1x32x1xf32> to vector<32x1xf32>
    %112 = vector.broadcast %111 : vector<32x1xf32> to vector<32x64xf32>
    %113 = arith.mulf %109, %112 : vector<32x64xf32>
    %114 = arith.addf %107, %113 : vector<32x64xf32>
    %115 = vector.extract_strided_slice %71 {offsets = [0, 448], sizes = [32, 64], strides = [1, 1]} : vector<32x576xf32> to vector<32x64xf32>
    %c28_i32_54 = arith.constant 28 : i32
    %116 = tpu.dynamic_rotate %115 by %c28_i32_54 dim 0 : vector<32x64xf32>, i32 -> vector<32x64xf32>
    %c7_55 = arith.constant 7 : index
    %c0_56 = arith.constant 0 : index
    %c0_57 = arith.constant 0 : index
    %117 = vector.load %arg1[%c7_55, %c0_56, %c0_57] : memref<9x32x1xf32, #tpu.memory_space<vmem>>, vector<1x32x1xf32>
    %118 = vector.shape_cast %117 : vector<1x32x1xf32> to vector<32x1xf32>
    %119 = vector.broadcast %118 : vector<32x1xf32> to vector<32x64xf32>
    %120 = arith.mulf %116, %119 : vector<32x64xf32>
    %121 = arith.addf %114, %120 : vector<32x64xf32>
    %122 = vector.extract_strided_slice %71 {offsets = [0, 512], sizes = [32, 64], strides = [1, 1]} : vector<32x576xf32> to vector<32x64xf32>
    %c27_i32_58 = arith.constant 27 : i32
    %123 = tpu.dynamic_rotate %122 by %c27_i32_58 dim 0 : vector<32x64xf32>, i32 -> vector<32x64xf32>
    %c8_59 = arith.constant 8 : index
    %c0_60 = arith.constant 0 : index
    %c0_61 = arith.constant 0 : index
    %124 = vector.load %arg1[%c8_59, %c0_60, %c0_61] : memref<9x32x1xf32, #tpu.memory_space<vmem>>, vector<1x32x1xf32>
    %125 = vector.shape_cast %124 : vector<1x32x1xf32> to vector<32x1xf32>
    %126 = vector.broadcast %125 : vector<32x1xf32> to vector<32x64xf32>
    %127 = arith.mulf %123, %126 : vector<32x64xf32>
    %128 = arith.addf %121, %127 : vector<32x64xf32>
    %129 = vector.broadcast %69 : vector<1x64xf32> to vector<32x64xf32>
    %130 = arith.addf %128, %129 : vector<32x64xf32>
    %cst_62 = arith.constant 1.000000e-01 : f32
    %131 = vector.broadcast %cst_62 : f32 to vector<32x64xf32>
    %132 = arith.mulf %131, %130 : vector<32x64xf32>
    %133 = arith.maximumf %130, %132 : vector<32x64xf32>
    %c1_63 = arith.constant 1 : index
    %c0_64 = arith.constant 0 : index
    %c0_65 = arith.constant 0 : index
    %134 = vector.load %arg4[%c1_63, %c0_64, %c0_65] : memref<8x64x576xbf16, #tpu.memory_space<vmem>>, vector<1x64x576xbf16>
    %135 = vector.shape_cast %134 : vector<1x64x576xbf16> to vector<64x576xbf16>
    %c1_66 = arith.constant 1 : index
    %c0_67 = arith.constant 0 : index
    %c0_68 = arith.constant 0 : index
    %136 = vector.load %arg5[%c1_66, %c0_67, %c0_68] : memref<8x1x64xf32, #tpu.memory_space<vmem>>, vector<1x1x64xf32>
    %137 = vector.shape_cast %136 : vector<1x1x64xf32> to vector<1x64xf32>
    %138 = arith.truncf %133 : vector<32x64xf32> to vector<32x64xbf16>
    %cst_69 = arith.constant dense<0.000000e+00> : vector<32x576xf32>
    %139 = tpu.matmul %138, %135, %cst_69 {dimension_numbers = #tpu.dot_dimension_numbers<[1], [0], [0], [1], [0, 0, 1, 1], [], []>} : vector<32x64xbf16>, vector<64x576xbf16>, vector<32x576xf32> -> vector<32x576xf32>
    %140 = vector.extract_strided_slice %139 {offsets = [0, 256], sizes = [32, 64], strides = [1, 1]} : vector<32x576xf32> to vector<32x64xf32>
    %141 = vector.extract_strided_slice %139 {offsets = [0, 0], sizes = [32, 64], strides = [1, 1]} : vector<32x576xf32> to vector<32x64xf32>
    %c5_i32_70 = arith.constant 5 : i32
    %142 = tpu.dynamic_rotate %141 by %c5_i32_70 dim 0 : vector<32x64xf32>, i32 -> vector<32x64xf32>
    %c0_71 = arith.constant 0 : index
    %c0_72 = arith.constant 0 : index
    %c0_73 = arith.constant 0 : index
    %143 = vector.load %arg1[%c0_71, %c0_72, %c0_73] : memref<9x32x1xf32, #tpu.memory_space<vmem>>, vector<1x32x1xf32>
    %144 = vector.shape_cast %143 : vector<1x32x1xf32> to vector<32x1xf32>
    %145 = vector.broadcast %144 : vector<32x1xf32> to vector<32x64xf32>
    %146 = arith.mulf %142, %145 : vector<32x64xf32>
    %147 = arith.addf %140, %146 : vector<32x64xf32>
    %148 = vector.extract_strided_slice %139 {offsets = [0, 64], sizes = [32, 64], strides = [1, 1]} : vector<32x576xf32> to vector<32x64xf32>
    %c4_i32_74 = arith.constant 4 : i32
    %149 = tpu.dynamic_rotate %148 by %c4_i32_74 dim 0 : vector<32x64xf32>, i32 -> vector<32x64xf32>
    %c1_75 = arith.constant 1 : index
    %c0_76 = arith.constant 0 : index
    %c0_77 = arith.constant 0 : index
    %150 = vector.load %arg1[%c1_75, %c0_76, %c0_77] : memref<9x32x1xf32, #tpu.memory_space<vmem>>, vector<1x32x1xf32>
    %151 = vector.shape_cast %150 : vector<1x32x1xf32> to vector<32x1xf32>
    %152 = vector.broadcast %151 : vector<32x1xf32> to vector<32x64xf32>
    %153 = arith.mulf %149, %152 : vector<32x64xf32>
    %154 = arith.addf %147, %153 : vector<32x64xf32>
    %155 = vector.extract_strided_slice %139 {offsets = [0, 128], sizes = [32, 64], strides = [1, 1]} : vector<32x576xf32> to vector<32x64xf32>
    %c3_i32_78 = arith.constant 3 : i32
    %156 = tpu.dynamic_rotate %155 by %c3_i32_78 dim 0 : vector<32x64xf32>, i32 -> vector<32x64xf32>
    %c2_79 = arith.constant 2 : index
    %c0_80 = arith.constant 0 : index
    %c0_81 = arith.constant 0 : index
    %157 = vector.load %arg1[%c2_79, %c0_80, %c0_81] : memref<9x32x1xf32, #tpu.memory_space<vmem>>, vector<1x32x1xf32>
    %158 = vector.shape_cast %157 : vector<1x32x1xf32> to vector<32x1xf32>
    %159 = vector.broadcast %158 : vector<32x1xf32> to vector<32x64xf32>
    %160 = arith.mulf %156, %159 : vector<32x64xf32>
    %161 = arith.addf %154, %160 : vector<32x64xf32>
    %162 = vector.extract_strided_slice %139 {offsets = [0, 192], sizes = [32, 64], strides = [1, 1]} : vector<32x576xf32> to vector<32x64xf32>
    %c1_i32_82 = arith.constant 1 : i32
    %163 = tpu.dynamic_rotate %162 by %c1_i32_82 dim 0 : vector<32x64xf32>, i32 -> vector<32x64xf32>
    %c3_83 = arith.constant 3 : index
    %c0_84 = arith.constant 0 : index
    %c0_85 = arith.constant 0 : index
    %164 = vector.load %arg1[%c3_83, %c0_84, %c0_85] : memref<9x32x1xf32, #tpu.memory_space<vmem>>, vector<1x32x1xf32>
    %165 = vector.shape_cast %164 : vector<1x32x1xf32> to vector<32x1xf32>
    %166 = vector.broadcast %165 : vector<32x1xf32> to vector<32x64xf32>
    %167 = arith.mulf %163, %166 : vector<32x64xf32>
    %168 = arith.addf %161, %167 : vector<32x64xf32>
    %169 = vector.extract_strided_slice %139 {offsets = [0, 320], sizes = [32, 64], strides = [1, 1]} : vector<32x576xf32> to vector<32x64xf32>
    %c31_i32_86 = arith.constant 31 : i32
    %170 = tpu.dynamic_rotate %169 by %c31_i32_86 dim 0 : vector<32x64xf32>, i32 -> vector<32x64xf32>
    %c5_87 = arith.constant 5 : index
    %c0_88 = arith.constant 0 : index
    %c0_89 = arith.constant 0 : index
    %171 = vector.load %arg1[%c5_87, %c0_88, %c0_89] : memref<9x32x1xf32, #tpu.memory_space<vmem>>, vector<1x32x1xf32>
    %172 = vector.shape_cast %171 : vector<1x32x1xf32> to vector<32x1xf32>
    %173 = vector.broadcast %172 : vector<32x1xf32> to vector<32x64xf32>
    %174 = arith.mulf %170, %173 : vector<32x64xf32>
    %175 = arith.addf %168, %174 : vector<32x64xf32>
    %176 = vector.extract_strided_slice %139 {offsets = [0, 384], sizes = [32, 64], strides = [1, 1]} : vector<32x576xf32> to vector<32x64xf32>
    %c29_i32_90 = arith.constant 29 : i32
    %177 = tpu.dynamic_rotate %176 by %c29_i32_90 dim 0 : vector<32x64xf32>, i32 -> vector<32x64xf32>
    %c6_91 = arith.constant 6 : index
    %c0_92 = arith.constant 0 : index
    %c0_93 = arith.constant 0 : index
    %178 = vector.load %arg1[%c6_91, %c0_92, %c0_93] : memref<9x32x1xf32, #tpu.memory_space<vmem>>, vector<1x32x1xf32>
    %179 = vector.shape_cast %178 : vector<1x32x1xf32> to vector<32x1xf32>
    %180 = vector.broadcast %179 : vector<32x1xf32> to vector<32x64xf32>
    %181 = arith.mulf %177, %180 : vector<32x64xf32>
    %182 = arith.addf %175, %181 : vector<32x64xf32>
    %183 = vector.extract_strided_slice %139 {offsets = [0, 448], sizes = [32, 64], strides = [1, 1]} : vector<32x576xf32> to vector<32x64xf32>
    %c28_i32_94 = arith.constant 28 : i32
    %184 = tpu.dynamic_rotate %183 by %c28_i32_94 dim 0 : vector<32x64xf32>, i32 -> vector<32x64xf32>
    %c7_95 = arith.constant 7 : index
    %c0_96 = arith.constant 0 : index
    %c0_97 = arith.constant 0 : index
    %185 = vector.load %arg1[%c7_95, %c0_96, %c0_97] : memref<9x32x1xf32, #tpu.memory_space<vmem>>, vector<1x32x1xf32>
    %186 = vector.shape_cast %185 : vector<1x32x1xf32> to vector<32x1xf32>
    %187 = vector.broadcast %186 : vector<32x1xf32> to vector<32x64xf32>
    %188 = arith.mulf %184, %187 : vector<32x64xf32>
    %189 = arith.addf %182, %188 : vector<32x64xf32>
    %190 = vector.extract_strided_slice %139 {offsets = [0, 512], sizes = [32, 64], strides = [1, 1]} : vector<32x576xf32> to vector<32x64xf32>
    %c27_i32_98 = arith.constant 27 : i32
    %191 = tpu.dynamic_rotate %190 by %c27_i32_98 dim 0 : vector<32x64xf32>, i32 -> vector<32x64xf32>
    %c8_99 = arith.constant 8 : index
    %c0_100 = arith.constant 0 : index
    %c0_101 = arith.constant 0 : index
    %192 = vector.load %arg1[%c8_99, %c0_100, %c0_101] : memref<9x32x1xf32, #tpu.memory_space<vmem>>, vector<1x32x1xf32>
    %193 = vector.shape_cast %192 : vector<1x32x1xf32> to vector<32x1xf32>
    %194 = vector.broadcast %193 : vector<32x1xf32> to vector<32x64xf32>
    %195 = arith.mulf %191, %194 : vector<32x64xf32>
    %196 = arith.addf %189, %195 : vector<32x64xf32>
    %197 = vector.broadcast %137 : vector<1x64xf32> to vector<32x64xf32>
    %198 = arith.addf %196, %197 : vector<32x64xf32>
    %199 = arith.addf %198, %65 : vector<32x64xf32>
    %c2_102 = arith.constant 2 : index
    %c0_103 = arith.constant 0 : index
    %c0_104 = arith.constant 0 : index
    %200 = vector.load %arg4[%c2_102, %c0_103, %c0_104] : memref<8x64x576xbf16, #tpu.memory_space<vmem>>, vector<1x64x576xbf16>
    %201 = vector.shape_cast %200 : vector<1x64x576xbf16> to vector<64x576xbf16>
    %c2_105 = arith.constant 2 : index
    %c0_106 = arith.constant 0 : index
    %c0_107 = arith.constant 0 : index
    %202 = vector.load %arg5[%c2_105, %c0_106, %c0_107] : memref<8x1x64xf32, #tpu.memory_space<vmem>>, vector<1x1x64xf32>
    %203 = vector.shape_cast %202 : vector<1x1x64xf32> to vector<1x64xf32>
    %204 = arith.truncf %199 : vector<32x64xf32> to vector<32x64xbf16>
    %cst_108 = arith.constant dense<0.000000e+00> : vector<32x576xf32>
    %205 = tpu.matmul %204, %201, %cst_108 {dimension_numbers = #tpu.dot_dimension_numbers<[1], [0], [0], [1], [0, 0, 1, 1], [], []>} : vector<32x64xbf16>, vector<64x576xbf16>, vector<32x576xf32> -> vector<32x576xf32>
    %206 = vector.extract_strided_slice %205 {offsets = [0, 256], sizes = [32, 64], strides = [1, 1]} : vector<32x576xf32> to vector<32x64xf32>
    %207 = vector.extract_strided_slice %205 {offsets = [0, 0], sizes = [32, 64], strides = [1, 1]} : vector<32x576xf32> to vector<32x64xf32>
    %c5_i32_109 = arith.constant 5 : i32
    %208 = tpu.dynamic_rotate %207 by %c5_i32_109 dim 0 : vector<32x64xf32>, i32 -> vector<32x64xf32>
    %c0_110 = arith.constant 0 : index
    %c0_111 = arith.constant 0 : index
    %c0_112 = arith.constant 0 : index
    %209 = vector.load %arg1[%c0_110, %c0_111, %c0_112] : memref<9x32x1xf32, #tpu.memory_space<vmem>>, vector<1x32x1xf32>
    %210 = vector.shape_cast %209 : vector<1x32x1xf32> to vector<32x1xf32>
    %211 = vector.broadcast %210 : vector<32x1xf32> to vector<32x64xf32>
    %212 = arith.mulf %208, %211 : vector<32x64xf32>
    %213 = arith.addf %206, %212 : vector<32x64xf32>
    %214 = vector.extract_strided_slice %205 {offsets = [0, 64], sizes = [32, 64], strides = [1, 1]} : vector<32x576xf32> to vector<32x64xf32>
    %c4_i32_113 = arith.constant 4 : i32
    %215 = tpu.dynamic_rotate %214 by %c4_i32_113 dim 0 : vector<32x64xf32>, i32 -> vector<32x64xf32>
    %c1_114 = arith.constant 1 : index
    %c0_115 = arith.constant 0 : index
    %c0_116 = arith.constant 0 : index
    %216 = vector.load %arg1[%c1_114, %c0_115, %c0_116] : memref<9x32x1xf32, #tpu.memory_space<vmem>>, vector<1x32x1xf32>
    %217 = vector.shape_cast %216 : vector<1x32x1xf32> to vector<32x1xf32>
    %218 = vector.broadcast %217 : vector<32x1xf32> to vector<32x64xf32>
    %219 = arith.mulf %215, %218 : vector<32x64xf32>
    %220 = arith.addf %213, %219 : vector<32x64xf32>
    %221 = vector.extract_strided_slice %205 {offsets = [0, 128], sizes = [32, 64], strides = [1, 1]} : vector<32x576xf32> to vector<32x64xf32>
    %c3_i32_117 = arith.constant 3 : i32
    %222 = tpu.dynamic_rotate %221 by %c3_i32_117 dim 0 : vector<32x64xf32>, i32 -> vector<32x64xf32>
    %c2_118 = arith.constant 2 : index
    %c0_119 = arith.constant 0 : index
    %c0_120 = arith.constant 0 : index
    %223 = vector.load %arg1[%c2_118, %c0_119, %c0_120] : memref<9x32x1xf32, #tpu.memory_space<vmem>>, vector<1x32x1xf32>
    %224 = vector.shape_cast %223 : vector<1x32x1xf32> to vector<32x1xf32>
    %225 = vector.broadcast %224 : vector<32x1xf32> to vector<32x64xf32>
    %226 = arith.mulf %222, %225 : vector<32x64xf32>
    %227 = arith.addf %220, %226 : vector<32x64xf32>
    %228 = vector.extract_strided_slice %205 {offsets = [0, 192], sizes = [32, 64], strides = [1, 1]} : vector<32x576xf32> to vector<32x64xf32>
    %c1_i32_121 = arith.constant 1 : i32
    %229 = tpu.dynamic_rotate %228 by %c1_i32_121 dim 0 : vector<32x64xf32>, i32 -> vector<32x64xf32>
    %c3_122 = arith.constant 3 : index
    %c0_123 = arith.constant 0 : index
    %c0_124 = arith.constant 0 : index
    %230 = vector.load %arg1[%c3_122, %c0_123, %c0_124] : memref<9x32x1xf32, #tpu.memory_space<vmem>>, vector<1x32x1xf32>
    %231 = vector.shape_cast %230 : vector<1x32x1xf32> to vector<32x1xf32>
    %232 = vector.broadcast %231 : vector<32x1xf32> to vector<32x64xf32>
    %233 = arith.mulf %229, %232 : vector<32x64xf32>
    %234 = arith.addf %227, %233 : vector<32x64xf32>
    %235 = vector.extract_strided_slice %205 {offsets = [0, 320], sizes = [32, 64], strides = [1, 1]} : vector<32x576xf32> to vector<32x64xf32>
    %c31_i32_125 = arith.constant 31 : i32
    %236 = tpu.dynamic_rotate %235 by %c31_i32_125 dim 0 : vector<32x64xf32>, i32 -> vector<32x64xf32>
    %c5_126 = arith.constant 5 : index
    %c0_127 = arith.constant 0 : index
    %c0_128 = arith.constant 0 : index
    %237 = vector.load %arg1[%c5_126, %c0_127, %c0_128] : memref<9x32x1xf32, #tpu.memory_space<vmem>>, vector<1x32x1xf32>
    %238 = vector.shape_cast %237 : vector<1x32x1xf32> to vector<32x1xf32>
    %239 = vector.broadcast %238 : vector<32x1xf32> to vector<32x64xf32>
    %240 = arith.mulf %236, %239 : vector<32x64xf32>
    %241 = arith.addf %234, %240 : vector<32x64xf32>
    %242 = vector.extract_strided_slice %205 {offsets = [0, 384], sizes = [32, 64], strides = [1, 1]} : vector<32x576xf32> to vector<32x64xf32>
    %c29_i32_129 = arith.constant 29 : i32
    %243 = tpu.dynamic_rotate %242 by %c29_i32_129 dim 0 : vector<32x64xf32>, i32 -> vector<32x64xf32>
    %c6_130 = arith.constant 6 : index
    %c0_131 = arith.constant 0 : index
    %c0_132 = arith.constant 0 : index
    %244 = vector.load %arg1[%c6_130, %c0_131, %c0_132] : memref<9x32x1xf32, #tpu.memory_space<vmem>>, vector<1x32x1xf32>
    %245 = vector.shape_cast %244 : vector<1x32x1xf32> to vector<32x1xf32>
    %246 = vector.broadcast %245 : vector<32x1xf32> to vector<32x64xf32>
    %247 = arith.mulf %243, %246 : vector<32x64xf32>
    %248 = arith.addf %241, %247 : vector<32x64xf32>
    %249 = vector.extract_strided_slice %205 {offsets = [0, 448], sizes = [32, 64], strides = [1, 1]} : vector<32x576xf32> to vector<32x64xf32>
    %c28_i32_133 = arith.constant 28 : i32
    %250 = tpu.dynamic_rotate %249 by %c28_i32_133 dim 0 : vector<32x64xf32>, i32 -> vector<32x64xf32>
    %c7_134 = arith.constant 7 : index
    %c0_135 = arith.constant 0 : index
    %c0_136 = arith.constant 0 : index
    %251 = vector.load %arg1[%c7_134, %c0_135, %c0_136] : memref<9x32x1xf32, #tpu.memory_space<vmem>>, vector<1x32x1xf32>
    %252 = vector.shape_cast %251 : vector<1x32x1xf32> to vector<32x1xf32>
    %253 = vector.broadcast %252 : vector<32x1xf32> to vector<32x64xf32>
    %254 = arith.mulf %250, %253 : vector<32x64xf32>
    %255 = arith.addf %248, %254 : vector<32x64xf32>
    %256 = vector.extract_strided_slice %205 {offsets = [0, 512], sizes = [32, 64], strides = [1, 1]} : vector<32x576xf32> to vector<32x64xf32>
    %c27_i32_137 = arith.constant 27 : i32
    %257 = tpu.dynamic_rotate %256 by %c27_i32_137 dim 0 : vector<32x64xf32>, i32 -> vector<32x64xf32>
    %c8_138 = arith.constant 8 : index
    %c0_139 = arith.constant 0 : index
    %c0_140 = arith.constant 0 : index
    %258 = vector.load %arg1[%c8_138, %c0_139, %c0_140] : memref<9x32x1xf32, #tpu.memory_space<vmem>>, vector<1x32x1xf32>
    %259 = vector.shape_cast %258 : vector<1x32x1xf32> to vector<32x1xf32>
    %260 = vector.broadcast %259 : vector<32x1xf32> to vector<32x64xf32>
    %261 = arith.mulf %257, %260 : vector<32x64xf32>
    %262 = arith.addf %255, %261 : vector<32x64xf32>
    %263 = vector.broadcast %203 : vector<1x64xf32> to vector<32x64xf32>
    %264 = arith.addf %262, %263 : vector<32x64xf32>
    %cst_141 = arith.constant 1.000000e-01 : f32
    %265 = vector.broadcast %cst_141 : f32 to vector<32x64xf32>
    %266 = arith.mulf %265, %264 : vector<32x64xf32>
    %267 = arith.maximumf %264, %266 : vector<32x64xf32>
    %c3_142 = arith.constant 3 : index
    %c0_143 = arith.constant 0 : index
    %c0_144 = arith.constant 0 : index
    %268 = vector.load %arg4[%c3_142, %c0_143, %c0_144] : memref<8x64x576xbf16, #tpu.memory_space<vmem>>, vector<1x64x576xbf16>
    %269 = vector.shape_cast %268 : vector<1x64x576xbf16> to vector<64x576xbf16>
    %c3_145 = arith.constant 3 : index
    %c0_146 = arith.constant 0 : index
    %c0_147 = arith.constant 0 : index
    %270 = vector.load %arg5[%c3_145, %c0_146, %c0_147] : memref<8x1x64xf32, #tpu.memory_space<vmem>>, vector<1x1x64xf32>
    %271 = vector.shape_cast %270 : vector<1x1x64xf32> to vector<1x64xf32>
    %272 = arith.truncf %267 : vector<32x64xf32> to vector<32x64xbf16>
    %cst_148 = arith.constant dense<0.000000e+00> : vector<32x576xf32>
    %273 = tpu.matmul %272, %269, %cst_148 {dimension_numbers = #tpu.dot_dimension_numbers<[1], [0], [0], [1], [0, 0, 1, 1], [], []>} : vector<32x64xbf16>, vector<64x576xbf16>, vector<32x576xf32> -> vector<32x576xf32>
    %274 = vector.extract_strided_slice %273 {offsets = [0, 256], sizes = [32, 64], strides = [1, 1]} : vector<32x576xf32> to vector<32x64xf32>
    %275 = vector.extract_strided_slice %273 {offsets = [0, 0], sizes = [32, 64], strides = [1, 1]} : vector<32x576xf32> to vector<32x64xf32>
    %c5_i32_149 = arith.constant 5 : i32
    %276 = tpu.dynamic_rotate %275 by %c5_i32_149 dim 0 : vector<32x64xf32>, i32 -> vector<32x64xf32>
    %c0_150 = arith.constant 0 : index
    %c0_151 = arith.constant 0 : index
    %c0_152 = arith.constant 0 : index
    %277 = vector.load %arg1[%c0_150, %c0_151, %c0_152] : memref<9x32x1xf32, #tpu.memory_space<vmem>>, vector<1x32x1xf32>
    %278 = vector.shape_cast %277 : vector<1x32x1xf32> to vector<32x1xf32>
    %279 = vector.broadcast %278 : vector<32x1xf32> to vector<32x64xf32>
    %280 = arith.mulf %276, %279 : vector<32x64xf32>
    %281 = arith.addf %274, %280 : vector<32x64xf32>
    %282 = vector.extract_strided_slice %273 {offsets = [0, 64], sizes = [32, 64], strides = [1, 1]} : vector<32x576xf32> to vector<32x64xf32>
    %c4_i32_153 = arith.constant 4 : i32
    %283 = tpu.dynamic_rotate %282 by %c4_i32_153 dim 0 : vector<32x64xf32>, i32 -> vector<32x64xf32>
    %c1_154 = arith.constant 1 : index
    %c0_155 = arith.constant 0 : index
    %c0_156 = arith.constant 0 : index
    %284 = vector.load %arg1[%c1_154, %c0_155, %c0_156] : memref<9x32x1xf32, #tpu.memory_space<vmem>>, vector<1x32x1xf32>
    %285 = vector.shape_cast %284 : vector<1x32x1xf32> to vector<32x1xf32>
    %286 = vector.broadcast %285 : vector<32x1xf32> to vector<32x64xf32>
    %287 = arith.mulf %283, %286 : vector<32x64xf32>
    %288 = arith.addf %281, %287 : vector<32x64xf32>
    %289 = vector.extract_strided_slice %273 {offsets = [0, 128], sizes = [32, 64], strides = [1, 1]} : vector<32x576xf32> to vector<32x64xf32>
    %c3_i32_157 = arith.constant 3 : i32
    %290 = tpu.dynamic_rotate %289 by %c3_i32_157 dim 0 : vector<32x64xf32>, i32 -> vector<32x64xf32>
    %c2_158 = arith.constant 2 : index
    %c0_159 = arith.constant 0 : index
    %c0_160 = arith.constant 0 : index
    %291 = vector.load %arg1[%c2_158, %c0_159, %c0_160] : memref<9x32x1xf32, #tpu.memory_space<vmem>>, vector<1x32x1xf32>
    %292 = vector.shape_cast %291 : vector<1x32x1xf32> to vector<32x1xf32>
    %293 = vector.broadcast %292 : vector<32x1xf32> to vector<32x64xf32>
    %294 = arith.mulf %290, %293 : vector<32x64xf32>
    %295 = arith.addf %288, %294 : vector<32x64xf32>
    %296 = vector.extract_strided_slice %273 {offsets = [0, 192], sizes = [32, 64], strides = [1, 1]} : vector<32x576xf32> to vector<32x64xf32>
    %c1_i32_161 = arith.constant 1 : i32
    %297 = tpu.dynamic_rotate %296 by %c1_i32_161 dim 0 : vector<32x64xf32>, i32 -> vector<32x64xf32>
    %c3_162 = arith.constant 3 : index
    %c0_163 = arith.constant 0 : index
    %c0_164 = arith.constant 0 : index
    %298 = vector.load %arg1[%c3_162, %c0_163, %c0_164] : memref<9x32x1xf32, #tpu.memory_space<vmem>>, vector<1x32x1xf32>
    %299 = vector.shape_cast %298 : vector<1x32x1xf32> to vector<32x1xf32>
    %300 = vector.broadcast %299 : vector<32x1xf32> to vector<32x64xf32>
    %301 = arith.mulf %297, %300 : vector<32x64xf32>
    %302 = arith.addf %295, %301 : vector<32x64xf32>
    %303 = vector.extract_strided_slice %273 {offsets = [0, 320], sizes = [32, 64], strides = [1, 1]} : vector<32x576xf32> to vector<32x64xf32>
    %c31_i32_165 = arith.constant 31 : i32
    %304 = tpu.dynamic_rotate %303 by %c31_i32_165 dim 0 : vector<32x64xf32>, i32 -> vector<32x64xf32>
    %c5_166 = arith.constant 5 : index
    %c0_167 = arith.constant 0 : index
    %c0_168 = arith.constant 0 : index
    %305 = vector.load %arg1[%c5_166, %c0_167, %c0_168] : memref<9x32x1xf32, #tpu.memory_space<vmem>>, vector<1x32x1xf32>
    %306 = vector.shape_cast %305 : vector<1x32x1xf32> to vector<32x1xf32>
    %307 = vector.broadcast %306 : vector<32x1xf32> to vector<32x64xf32>
    %308 = arith.mulf %304, %307 : vector<32x64xf32>
    %309 = arith.addf %302, %308 : vector<32x64xf32>
    %310 = vector.extract_strided_slice %273 {offsets = [0, 384], sizes = [32, 64], strides = [1, 1]} : vector<32x576xf32> to vector<32x64xf32>
    %c29_i32_169 = arith.constant 29 : i32
    %311 = tpu.dynamic_rotate %310 by %c29_i32_169 dim 0 : vector<32x64xf32>, i32 -> vector<32x64xf32>
    %c6_170 = arith.constant 6 : index
    %c0_171 = arith.constant 0 : index
    %c0_172 = arith.constant 0 : index
    %312 = vector.load %arg1[%c6_170, %c0_171, %c0_172] : memref<9x32x1xf32, #tpu.memory_space<vmem>>, vector<1x32x1xf32>
    %313 = vector.shape_cast %312 : vector<1x32x1xf32> to vector<32x1xf32>
    %314 = vector.broadcast %313 : vector<32x1xf32> to vector<32x64xf32>
    %315 = arith.mulf %311, %314 : vector<32x64xf32>
    %316 = arith.addf %309, %315 : vector<32x64xf32>
    %317 = vector.extract_strided_slice %273 {offsets = [0, 448], sizes = [32, 64], strides = [1, 1]} : vector<32x576xf32> to vector<32x64xf32>
    %c28_i32_173 = arith.constant 28 : i32
    %318 = tpu.dynamic_rotate %317 by %c28_i32_173 dim 0 : vector<32x64xf32>, i32 -> vector<32x64xf32>
    %c7_174 = arith.constant 7 : index
    %c0_175 = arith.constant 0 : index
    %c0_176 = arith.constant 0 : index
    %319 = vector.load %arg1[%c7_174, %c0_175, %c0_176] : memref<9x32x1xf32, #tpu.memory_space<vmem>>, vector<1x32x1xf32>
    %320 = vector.shape_cast %319 : vector<1x32x1xf32> to vector<32x1xf32>
    %321 = vector.broadcast %320 : vector<32x1xf32> to vector<32x64xf32>
    %322 = arith.mulf %318, %321 : vector<32x64xf32>
    %323 = arith.addf %316, %322 : vector<32x64xf32>
    %324 = vector.extract_strided_slice %273 {offsets = [0, 512], sizes = [32, 64], strides = [1, 1]} : vector<32x576xf32> to vector<32x64xf32>
    %c27_i32_177 = arith.constant 27 : i32
    %325 = tpu.dynamic_rotate %324 by %c27_i32_177 dim 0 : vector<32x64xf32>, i32 -> vector<32x64xf32>
    %c8_178 = arith.constant 8 : index
    %c0_179 = arith.constant 0 : index
    %c0_180 = arith.constant 0 : index
    %326 = vector.load %arg1[%c8_178, %c0_179, %c0_180] : memref<9x32x1xf32, #tpu.memory_space<vmem>>, vector<1x32x1xf32>
    %327 = vector.shape_cast %326 : vector<1x32x1xf32> to vector<32x1xf32>
    %328 = vector.broadcast %327 : vector<32x1xf32> to vector<32x64xf32>
    %329 = arith.mulf %325, %328 : vector<32x64xf32>
    %330 = arith.addf %323, %329 : vector<32x64xf32>
    %331 = vector.broadcast %271 : vector<1x64xf32> to vector<32x64xf32>
    %332 = arith.addf %330, %331 : vector<32x64xf32>
    %333 = arith.addf %332, %199 : vector<32x64xf32>
    %c4 = arith.constant 4 : index
    %c0_181 = arith.constant 0 : index
    %c0_182 = arith.constant 0 : index
    %334 = vector.load %arg4[%c4, %c0_181, %c0_182] : memref<8x64x576xbf16, #tpu.memory_space<vmem>>, vector<1x64x576xbf16>
    %335 = vector.shape_cast %334 : vector<1x64x576xbf16> to vector<64x576xbf16>
    %c4_183 = arith.constant 4 : index
    %c0_184 = arith.constant 0 : index
    %c0_185 = arith.constant 0 : index
    %336 = vector.load %arg5[%c4_183, %c0_184, %c0_185] : memref<8x1x64xf32, #tpu.memory_space<vmem>>, vector<1x1x64xf32>
    %337 = vector.shape_cast %336 : vector<1x1x64xf32> to vector<1x64xf32>
    %338 = arith.truncf %333 : vector<32x64xf32> to vector<32x64xbf16>
    %cst_186 = arith.constant dense<0.000000e+00> : vector<32x576xf32>
    %339 = tpu.matmul %338, %335, %cst_186 {dimension_numbers = #tpu.dot_dimension_numbers<[1], [0], [0], [1], [0, 0, 1, 1], [], []>} : vector<32x64xbf16>, vector<64x576xbf16>, vector<32x576xf32> -> vector<32x576xf32>
    %340 = vector.extract_strided_slice %339 {offsets = [0, 256], sizes = [32, 64], strides = [1, 1]} : vector<32x576xf32> to vector<32x64xf32>
    %341 = vector.extract_strided_slice %339 {offsets = [0, 0], sizes = [32, 64], strides = [1, 1]} : vector<32x576xf32> to vector<32x64xf32>
    %c5_i32_187 = arith.constant 5 : i32
    %342 = tpu.dynamic_rotate %341 by %c5_i32_187 dim 0 : vector<32x64xf32>, i32 -> vector<32x64xf32>
    %c0_188 = arith.constant 0 : index
    %c0_189 = arith.constant 0 : index
    %c0_190 = arith.constant 0 : index
    %343 = vector.load %arg1[%c0_188, %c0_189, %c0_190] : memref<9x32x1xf32, #tpu.memory_space<vmem>>, vector<1x32x1xf32>
    %344 = vector.shape_cast %343 : vector<1x32x1xf32> to vector<32x1xf32>
    %345 = vector.broadcast %344 : vector<32x1xf32> to vector<32x64xf32>
    %346 = arith.mulf %342, %345 : vector<32x64xf32>
    %347 = arith.addf %340, %346 : vector<32x64xf32>
    %348 = vector.extract_strided_slice %339 {offsets = [0, 64], sizes = [32, 64], strides = [1, 1]} : vector<32x576xf32> to vector<32x64xf32>
    %c4_i32_191 = arith.constant 4 : i32
    %349 = tpu.dynamic_rotate %348 by %c4_i32_191 dim 0 : vector<32x64xf32>, i32 -> vector<32x64xf32>
    %c1_192 = arith.constant 1 : index
    %c0_193 = arith.constant 0 : index
    %c0_194 = arith.constant 0 : index
    %350 = vector.load %arg1[%c1_192, %c0_193, %c0_194] : memref<9x32x1xf32, #tpu.memory_space<vmem>>, vector<1x32x1xf32>
    %351 = vector.shape_cast %350 : vector<1x32x1xf32> to vector<32x1xf32>
    %352 = vector.broadcast %351 : vector<32x1xf32> to vector<32x64xf32>
    %353 = arith.mulf %349, %352 : vector<32x64xf32>
    %354 = arith.addf %347, %353 : vector<32x64xf32>
    %355 = vector.extract_strided_slice %339 {offsets = [0, 128], sizes = [32, 64], strides = [1, 1]} : vector<32x576xf32> to vector<32x64xf32>
    %c3_i32_195 = arith.constant 3 : i32
    %356 = tpu.dynamic_rotate %355 by %c3_i32_195 dim 0 : vector<32x64xf32>, i32 -> vector<32x64xf32>
    %c2_196 = arith.constant 2 : index
    %c0_197 = arith.constant 0 : index
    %c0_198 = arith.constant 0 : index
    %357 = vector.load %arg1[%c2_196, %c0_197, %c0_198] : memref<9x32x1xf32, #tpu.memory_space<vmem>>, vector<1x32x1xf32>
    %358 = vector.shape_cast %357 : vector<1x32x1xf32> to vector<32x1xf32>
    %359 = vector.broadcast %358 : vector<32x1xf32> to vector<32x64xf32>
    %360 = arith.mulf %356, %359 : vector<32x64xf32>
    %361 = arith.addf %354, %360 : vector<32x64xf32>
    %362 = vector.extract_strided_slice %339 {offsets = [0, 192], sizes = [32, 64], strides = [1, 1]} : vector<32x576xf32> to vector<32x64xf32>
    %c1_i32_199 = arith.constant 1 : i32
    %363 = tpu.dynamic_rotate %362 by %c1_i32_199 dim 0 : vector<32x64xf32>, i32 -> vector<32x64xf32>
    %c3_200 = arith.constant 3 : index
    %c0_201 = arith.constant 0 : index
    %c0_202 = arith.constant 0 : index
    %364 = vector.load %arg1[%c3_200, %c0_201, %c0_202] : memref<9x32x1xf32, #tpu.memory_space<vmem>>, vector<1x32x1xf32>
    %365 = vector.shape_cast %364 : vector<1x32x1xf32> to vector<32x1xf32>
    %366 = vector.broadcast %365 : vector<32x1xf32> to vector<32x64xf32>
    %367 = arith.mulf %363, %366 : vector<32x64xf32>
    %368 = arith.addf %361, %367 : vector<32x64xf32>
    %369 = vector.extract_strided_slice %339 {offsets = [0, 320], sizes = [32, 64], strides = [1, 1]} : vector<32x576xf32> to vector<32x64xf32>
    %c31_i32_203 = arith.constant 31 : i32
    %370 = tpu.dynamic_rotate %369 by %c31_i32_203 dim 0 : vector<32x64xf32>, i32 -> vector<32x64xf32>
    %c5_204 = arith.constant 5 : index
    %c0_205 = arith.constant 0 : index
    %c0_206 = arith.constant 0 : index
    %371 = vector.load %arg1[%c5_204, %c0_205, %c0_206] : memref<9x32x1xf32, #tpu.memory_space<vmem>>, vector<1x32x1xf32>
    %372 = vector.shape_cast %371 : vector<1x32x1xf32> to vector<32x1xf32>
    %373 = vector.broadcast %372 : vector<32x1xf32> to vector<32x64xf32>
    %374 = arith.mulf %370, %373 : vector<32x64xf32>
    %375 = arith.addf %368, %374 : vector<32x64xf32>
    %376 = vector.extract_strided_slice %339 {offsets = [0, 384], sizes = [32, 64], strides = [1, 1]} : vector<32x576xf32> to vector<32x64xf32>
    %c29_i32_207 = arith.constant 29 : i32
    %377 = tpu.dynamic_rotate %376 by %c29_i32_207 dim 0 : vector<32x64xf32>, i32 -> vector<32x64xf32>
    %c6_208 = arith.constant 6 : index
    %c0_209 = arith.constant 0 : index
    %c0_210 = arith.constant 0 : index
    %378 = vector.load %arg1[%c6_208, %c0_209, %c0_210] : memref<9x32x1xf32, #tpu.memory_space<vmem>>, vector<1x32x1xf32>
    %379 = vector.shape_cast %378 : vector<1x32x1xf32> to vector<32x1xf32>
    %380 = vector.broadcast %379 : vector<32x1xf32> to vector<32x64xf32>
    %381 = arith.mulf %377, %380 : vector<32x64xf32>
    %382 = arith.addf %375, %381 : vector<32x64xf32>
    %383 = vector.extract_strided_slice %339 {offsets = [0, 448], sizes = [32, 64], strides = [1, 1]} : vector<32x576xf32> to vector<32x64xf32>
    %c28_i32_211 = arith.constant 28 : i32
    %384 = tpu.dynamic_rotate %383 by %c28_i32_211 dim 0 : vector<32x64xf32>, i32 -> vector<32x64xf32>
    %c7_212 = arith.constant 7 : index
    %c0_213 = arith.constant 0 : index
    %c0_214 = arith.constant 0 : index
    %385 = vector.load %arg1[%c7_212, %c0_213, %c0_214] : memref<9x32x1xf32, #tpu.memory_space<vmem>>, vector<1x32x1xf32>
    %386 = vector.shape_cast %385 : vector<1x32x1xf32> to vector<32x1xf32>
    %387 = vector.broadcast %386 : vector<32x1xf32> to vector<32x64xf32>
    %388 = arith.mulf %384, %387 : vector<32x64xf32>
    %389 = arith.addf %382, %388 : vector<32x64xf32>
    %390 = vector.extract_strided_slice %339 {offsets = [0, 512], sizes = [32, 64], strides = [1, 1]} : vector<32x576xf32> to vector<32x64xf32>
    %c27_i32_215 = arith.constant 27 : i32
    %391 = tpu.dynamic_rotate %390 by %c27_i32_215 dim 0 : vector<32x64xf32>, i32 -> vector<32x64xf32>
    %c8_216 = arith.constant 8 : index
    %c0_217 = arith.constant 0 : index
    %c0_218 = arith.constant 0 : index
    %392 = vector.load %arg1[%c8_216, %c0_217, %c0_218] : memref<9x32x1xf32, #tpu.memory_space<vmem>>, vector<1x32x1xf32>
    %393 = vector.shape_cast %392 : vector<1x32x1xf32> to vector<32x1xf32>
    %394 = vector.broadcast %393 : vector<32x1xf32> to vector<32x64xf32>
    %395 = arith.mulf %391, %394 : vector<32x64xf32>
    %396 = arith.addf %389, %395 : vector<32x64xf32>
    %397 = vector.broadcast %337 : vector<1x64xf32> to vector<32x64xf32>
    %398 = arith.addf %396, %397 : vector<32x64xf32>
    %cst_219 = arith.constant 1.000000e-01 : f32
    %399 = vector.broadcast %cst_219 : f32 to vector<32x64xf32>
    %400 = arith.mulf %399, %398 : vector<32x64xf32>
    %401 = arith.maximumf %398, %400 : vector<32x64xf32>
    %c5_220 = arith.constant 5 : index
    %c0_221 = arith.constant 0 : index
    %c0_222 = arith.constant 0 : index
    %402 = vector.load %arg4[%c5_220, %c0_221, %c0_222] : memref<8x64x576xbf16, #tpu.memory_space<vmem>>, vector<1x64x576xbf16>
    %403 = vector.shape_cast %402 : vector<1x64x576xbf16> to vector<64x576xbf16>
    %c5_223 = arith.constant 5 : index
    %c0_224 = arith.constant 0 : index
    %c0_225 = arith.constant 0 : index
    %404 = vector.load %arg5[%c5_223, %c0_224, %c0_225] : memref<8x1x64xf32, #tpu.memory_space<vmem>>, vector<1x1x64xf32>
    %405 = vector.shape_cast %404 : vector<1x1x64xf32> to vector<1x64xf32>
    %406 = arith.truncf %401 : vector<32x64xf32> to vector<32x64xbf16>
    %cst_226 = arith.constant dense<0.000000e+00> : vector<32x576xf32>
    %407 = tpu.matmul %406, %403, %cst_226 {dimension_numbers = #tpu.dot_dimension_numbers<[1], [0], [0], [1], [0, 0, 1, 1], [], []>} : vector<32x64xbf16>, vector<64x576xbf16>, vector<32x576xf32> -> vector<32x576xf32>
    %408 = vector.extract_strided_slice %407 {offsets = [0, 256], sizes = [32, 64], strides = [1, 1]} : vector<32x576xf32> to vector<32x64xf32>
    %409 = vector.extract_strided_slice %407 {offsets = [0, 0], sizes = [32, 64], strides = [1, 1]} : vector<32x576xf32> to vector<32x64xf32>
    %c5_i32_227 = arith.constant 5 : i32
    %410 = tpu.dynamic_rotate %409 by %c5_i32_227 dim 0 : vector<32x64xf32>, i32 -> vector<32x64xf32>
    %c0_228 = arith.constant 0 : index
    %c0_229 = arith.constant 0 : index
    %c0_230 = arith.constant 0 : index
    %411 = vector.load %arg1[%c0_228, %c0_229, %c0_230] : memref<9x32x1xf32, #tpu.memory_space<vmem>>, vector<1x32x1xf32>
    %412 = vector.shape_cast %411 : vector<1x32x1xf32> to vector<32x1xf32>
    %413 = vector.broadcast %412 : vector<32x1xf32> to vector<32x64xf32>
    %414 = arith.mulf %410, %413 : vector<32x64xf32>
    %415 = arith.addf %408, %414 : vector<32x64xf32>
    %416 = vector.extract_strided_slice %407 {offsets = [0, 64], sizes = [32, 64], strides = [1, 1]} : vector<32x576xf32> to vector<32x64xf32>
    %c4_i32_231 = arith.constant 4 : i32
    %417 = tpu.dynamic_rotate %416 by %c4_i32_231 dim 0 : vector<32x64xf32>, i32 -> vector<32x64xf32>
    %c1_232 = arith.constant 1 : index
    %c0_233 = arith.constant 0 : index
    %c0_234 = arith.constant 0 : index
    %418 = vector.load %arg1[%c1_232, %c0_233, %c0_234] : memref<9x32x1xf32, #tpu.memory_space<vmem>>, vector<1x32x1xf32>
    %419 = vector.shape_cast %418 : vector<1x32x1xf32> to vector<32x1xf32>
    %420 = vector.broadcast %419 : vector<32x1xf32> to vector<32x64xf32>
    %421 = arith.mulf %417, %420 : vector<32x64xf32>
    %422 = arith.addf %415, %421 : vector<32x64xf32>
    %423 = vector.extract_strided_slice %407 {offsets = [0, 128], sizes = [32, 64], strides = [1, 1]} : vector<32x576xf32> to vector<32x64xf32>
    %c3_i32_235 = arith.constant 3 : i32
    %424 = tpu.dynamic_rotate %423 by %c3_i32_235 dim 0 : vector<32x64xf32>, i32 -> vector<32x64xf32>
    %c2_236 = arith.constant 2 : index
    %c0_237 = arith.constant 0 : index
    %c0_238 = arith.constant 0 : index
    %425 = vector.load %arg1[%c2_236, %c0_237, %c0_238] : memref<9x32x1xf32, #tpu.memory_space<vmem>>, vector<1x32x1xf32>
    %426 = vector.shape_cast %425 : vector<1x32x1xf32> to vector<32x1xf32>
    %427 = vector.broadcast %426 : vector<32x1xf32> to vector<32x64xf32>
    %428 = arith.mulf %424, %427 : vector<32x64xf32>
    %429 = arith.addf %422, %428 : vector<32x64xf32>
    %430 = vector.extract_strided_slice %407 {offsets = [0, 192], sizes = [32, 64], strides = [1, 1]} : vector<32x576xf32> to vector<32x64xf32>
    %c1_i32_239 = arith.constant 1 : i32
    %431 = tpu.dynamic_rotate %430 by %c1_i32_239 dim 0 : vector<32x64xf32>, i32 -> vector<32x64xf32>
    %c3_240 = arith.constant 3 : index
    %c0_241 = arith.constant 0 : index
    %c0_242 = arith.constant 0 : index
    %432 = vector.load %arg1[%c3_240, %c0_241, %c0_242] : memref<9x32x1xf32, #tpu.memory_space<vmem>>, vector<1x32x1xf32>
    %433 = vector.shape_cast %432 : vector<1x32x1xf32> to vector<32x1xf32>
    %434 = vector.broadcast %433 : vector<32x1xf32> to vector<32x64xf32>
    %435 = arith.mulf %431, %434 : vector<32x64xf32>
    %436 = arith.addf %429, %435 : vector<32x64xf32>
    %437 = vector.extract_strided_slice %407 {offsets = [0, 320], sizes = [32, 64], strides = [1, 1]} : vector<32x576xf32> to vector<32x64xf32>
    %c31_i32_243 = arith.constant 31 : i32
    %438 = tpu.dynamic_rotate %437 by %c31_i32_243 dim 0 : vector<32x64xf32>, i32 -> vector<32x64xf32>
    %c5_244 = arith.constant 5 : index
    %c0_245 = arith.constant 0 : index
    %c0_246 = arith.constant 0 : index
    %439 = vector.load %arg1[%c5_244, %c0_245, %c0_246] : memref<9x32x1xf32, #tpu.memory_space<vmem>>, vector<1x32x1xf32>
    %440 = vector.shape_cast %439 : vector<1x32x1xf32> to vector<32x1xf32>
    %441 = vector.broadcast %440 : vector<32x1xf32> to vector<32x64xf32>
    %442 = arith.mulf %438, %441 : vector<32x64xf32>
    %443 = arith.addf %436, %442 : vector<32x64xf32>
    %444 = vector.extract_strided_slice %407 {offsets = [0, 384], sizes = [32, 64], strides = [1, 1]} : vector<32x576xf32> to vector<32x64xf32>
    %c29_i32_247 = arith.constant 29 : i32
    %445 = tpu.dynamic_rotate %444 by %c29_i32_247 dim 0 : vector<32x64xf32>, i32 -> vector<32x64xf32>
    %c6_248 = arith.constant 6 : index
    %c0_249 = arith.constant 0 : index
    %c0_250 = arith.constant 0 : index
    %446 = vector.load %arg1[%c6_248, %c0_249, %c0_250] : memref<9x32x1xf32, #tpu.memory_space<vmem>>, vector<1x32x1xf32>
    %447 = vector.shape_cast %446 : vector<1x32x1xf32> to vector<32x1xf32>
    %448 = vector.broadcast %447 : vector<32x1xf32> to vector<32x64xf32>
    %449 = arith.mulf %445, %448 : vector<32x64xf32>
    %450 = arith.addf %443, %449 : vector<32x64xf32>
    %451 = vector.extract_strided_slice %407 {offsets = [0, 448], sizes = [32, 64], strides = [1, 1]} : vector<32x576xf32> to vector<32x64xf32>
    %c28_i32_251 = arith.constant 28 : i32
    %452 = tpu.dynamic_rotate %451 by %c28_i32_251 dim 0 : vector<32x64xf32>, i32 -> vector<32x64xf32>
    %c7_252 = arith.constant 7 : index
    %c0_253 = arith.constant 0 : index
    %c0_254 = arith.constant 0 : index
    %453 = vector.load %arg1[%c7_252, %c0_253, %c0_254] : memref<9x32x1xf32, #tpu.memory_space<vmem>>, vector<1x32x1xf32>
    %454 = vector.shape_cast %453 : vector<1x32x1xf32> to vector<32x1xf32>
    %455 = vector.broadcast %454 : vector<32x1xf32> to vector<32x64xf32>
    %456 = arith.mulf %452, %455 : vector<32x64xf32>
    %457 = arith.addf %450, %456 : vector<32x64xf32>
    %458 = vector.extract_strided_slice %407 {offsets = [0, 512], sizes = [32, 64], strides = [1, 1]} : vector<32x576xf32> to vector<32x64xf32>
    %c27_i32_255 = arith.constant 27 : i32
    %459 = tpu.dynamic_rotate %458 by %c27_i32_255 dim 0 : vector<32x64xf32>, i32 -> vector<32x64xf32>
    %c8_256 = arith.constant 8 : index
    %c0_257 = arith.constant 0 : index
    %c0_258 = arith.constant 0 : index
    %460 = vector.load %arg1[%c8_256, %c0_257, %c0_258] : memref<9x32x1xf32, #tpu.memory_space<vmem>>, vector<1x32x1xf32>
    %461 = vector.shape_cast %460 : vector<1x32x1xf32> to vector<32x1xf32>
    %462 = vector.broadcast %461 : vector<32x1xf32> to vector<32x64xf32>
    %463 = arith.mulf %459, %462 : vector<32x64xf32>
    %464 = arith.addf %457, %463 : vector<32x64xf32>
    %465 = vector.broadcast %405 : vector<1x64xf32> to vector<32x64xf32>
    %466 = arith.addf %464, %465 : vector<32x64xf32>
    %467 = arith.addf %466, %333 : vector<32x64xf32>
    %c6_259 = arith.constant 6 : index
    %c0_260 = arith.constant 0 : index
    %c0_261 = arith.constant 0 : index
    %468 = vector.load %arg4[%c6_259, %c0_260, %c0_261] : memref<8x64x576xbf16, #tpu.memory_space<vmem>>, vector<1x64x576xbf16>
    %469 = vector.shape_cast %468 : vector<1x64x576xbf16> to vector<64x576xbf16>
    %c6_262 = arith.constant 6 : index
    %c0_263 = arith.constant 0 : index
    %c0_264 = arith.constant 0 : index
    %470 = vector.load %arg5[%c6_262, %c0_263, %c0_264] : memref<8x1x64xf32, #tpu.memory_space<vmem>>, vector<1x1x64xf32>
    %471 = vector.shape_cast %470 : vector<1x1x64xf32> to vector<1x64xf32>
    %472 = arith.truncf %467 : vector<32x64xf32> to vector<32x64xbf16>
    %cst_265 = arith.constant dense<0.000000e+00> : vector<32x576xf32>
    %473 = tpu.matmul %472, %469, %cst_265 {dimension_numbers = #tpu.dot_dimension_numbers<[1], [0], [0], [1], [0, 0, 1, 1], [], []>} : vector<32x64xbf16>, vector<64x576xbf16>, vector<32x576xf32> -> vector<32x576xf32>
    %474 = vector.extract_strided_slice %473 {offsets = [0, 256], sizes = [32, 64], strides = [1, 1]} : vector<32x576xf32> to vector<32x64xf32>
    %475 = vector.extract_strided_slice %473 {offsets = [0, 0], sizes = [32, 64], strides = [1, 1]} : vector<32x576xf32> to vector<32x64xf32>
    %c5_i32_266 = arith.constant 5 : i32
    %476 = tpu.dynamic_rotate %475 by %c5_i32_266 dim 0 : vector<32x64xf32>, i32 -> vector<32x64xf32>
    %c0_267 = arith.constant 0 : index
    %c0_268 = arith.constant 0 : index
    %c0_269 = arith.constant 0 : index
    %477 = vector.load %arg1[%c0_267, %c0_268, %c0_269] : memref<9x32x1xf32, #tpu.memory_space<vmem>>, vector<1x32x1xf32>
    %478 = vector.shape_cast %477 : vector<1x32x1xf32> to vector<32x1xf32>
    %479 = vector.broadcast %478 : vector<32x1xf32> to vector<32x64xf32>
    %480 = arith.mulf %476, %479 : vector<32x64xf32>
    %481 = arith.addf %474, %480 : vector<32x64xf32>
    %482 = vector.extract_strided_slice %473 {offsets = [0, 64], sizes = [32, 64], strides = [1, 1]} : vector<32x576xf32> to vector<32x64xf32>
    %c4_i32_270 = arith.constant 4 : i32
    %483 = tpu.dynamic_rotate %482 by %c4_i32_270 dim 0 : vector<32x64xf32>, i32 -> vector<32x64xf32>
    %c1_271 = arith.constant 1 : index
    %c0_272 = arith.constant 0 : index
    %c0_273 = arith.constant 0 : index
    %484 = vector.load %arg1[%c1_271, %c0_272, %c0_273] : memref<9x32x1xf32, #tpu.memory_space<vmem>>, vector<1x32x1xf32>
    %485 = vector.shape_cast %484 : vector<1x32x1xf32> to vector<32x1xf32>
    %486 = vector.broadcast %485 : vector<32x1xf32> to vector<32x64xf32>
    %487 = arith.mulf %483, %486 : vector<32x64xf32>
    %488 = arith.addf %481, %487 : vector<32x64xf32>
    %489 = vector.extract_strided_slice %473 {offsets = [0, 128], sizes = [32, 64], strides = [1, 1]} : vector<32x576xf32> to vector<32x64xf32>
    %c3_i32_274 = arith.constant 3 : i32
    %490 = tpu.dynamic_rotate %489 by %c3_i32_274 dim 0 : vector<32x64xf32>, i32 -> vector<32x64xf32>
    %c2_275 = arith.constant 2 : index
    %c0_276 = arith.constant 0 : index
    %c0_277 = arith.constant 0 : index
    %491 = vector.load %arg1[%c2_275, %c0_276, %c0_277] : memref<9x32x1xf32, #tpu.memory_space<vmem>>, vector<1x32x1xf32>
    %492 = vector.shape_cast %491 : vector<1x32x1xf32> to vector<32x1xf32>
    %493 = vector.broadcast %492 : vector<32x1xf32> to vector<32x64xf32>
    %494 = arith.mulf %490, %493 : vector<32x64xf32>
    %495 = arith.addf %488, %494 : vector<32x64xf32>
    %496 = vector.extract_strided_slice %473 {offsets = [0, 192], sizes = [32, 64], strides = [1, 1]} : vector<32x576xf32> to vector<32x64xf32>
    %c1_i32_278 = arith.constant 1 : i32
    %497 = tpu.dynamic_rotate %496 by %c1_i32_278 dim 0 : vector<32x64xf32>, i32 -> vector<32x64xf32>
    %c3_279 = arith.constant 3 : index
    %c0_280 = arith.constant 0 : index
    %c0_281 = arith.constant 0 : index
    %498 = vector.load %arg1[%c3_279, %c0_280, %c0_281] : memref<9x32x1xf32, #tpu.memory_space<vmem>>, vector<1x32x1xf32>
    %499 = vector.shape_cast %498 : vector<1x32x1xf32> to vector<32x1xf32>
    %500 = vector.broadcast %499 : vector<32x1xf32> to vector<32x64xf32>
    %501 = arith.mulf %497, %500 : vector<32x64xf32>
    %502 = arith.addf %495, %501 : vector<32x64xf32>
    %503 = vector.extract_strided_slice %473 {offsets = [0, 320], sizes = [32, 64], strides = [1, 1]} : vector<32x576xf32> to vector<32x64xf32>
    %c31_i32_282 = arith.constant 31 : i32
    %504 = tpu.dynamic_rotate %503 by %c31_i32_282 dim 0 : vector<32x64xf32>, i32 -> vector<32x64xf32>
    %c5_283 = arith.constant 5 : index
    %c0_284 = arith.constant 0 : index
    %c0_285 = arith.constant 0 : index
    %505 = vector.load %arg1[%c5_283, %c0_284, %c0_285] : memref<9x32x1xf32, #tpu.memory_space<vmem>>, vector<1x32x1xf32>
    %506 = vector.shape_cast %505 : vector<1x32x1xf32> to vector<32x1xf32>
    %507 = vector.broadcast %506 : vector<32x1xf32> to vector<32x64xf32>
    %508 = arith.mulf %504, %507 : vector<32x64xf32>
    %509 = arith.addf %502, %508 : vector<32x64xf32>
    %510 = vector.extract_strided_slice %473 {offsets = [0, 384], sizes = [32, 64], strides = [1, 1]} : vector<32x576xf32> to vector<32x64xf32>
    %c29_i32_286 = arith.constant 29 : i32
    %511 = tpu.dynamic_rotate %510 by %c29_i32_286 dim 0 : vector<32x64xf32>, i32 -> vector<32x64xf32>
    %c6_287 = arith.constant 6 : index
    %c0_288 = arith.constant 0 : index
    %c0_289 = arith.constant 0 : index
    %512 = vector.load %arg1[%c6_287, %c0_288, %c0_289] : memref<9x32x1xf32, #tpu.memory_space<vmem>>, vector<1x32x1xf32>
    %513 = vector.shape_cast %512 : vector<1x32x1xf32> to vector<32x1xf32>
    %514 = vector.broadcast %513 : vector<32x1xf32> to vector<32x64xf32>
    %515 = arith.mulf %511, %514 : vector<32x64xf32>
    %516 = arith.addf %509, %515 : vector<32x64xf32>
    %517 = vector.extract_strided_slice %473 {offsets = [0, 448], sizes = [32, 64], strides = [1, 1]} : vector<32x576xf32> to vector<32x64xf32>
    %c28_i32_290 = arith.constant 28 : i32
    %518 = tpu.dynamic_rotate %517 by %c28_i32_290 dim 0 : vector<32x64xf32>, i32 -> vector<32x64xf32>
    %c7_291 = arith.constant 7 : index
    %c0_292 = arith.constant 0 : index
    %c0_293 = arith.constant 0 : index
    %519 = vector.load %arg1[%c7_291, %c0_292, %c0_293] : memref<9x32x1xf32, #tpu.memory_space<vmem>>, vector<1x32x1xf32>
    %520 = vector.shape_cast %519 : vector<1x32x1xf32> to vector<32x1xf32>
    %521 = vector.broadcast %520 : vector<32x1xf32> to vector<32x64xf32>
    %522 = arith.mulf %518, %521 : vector<32x64xf32>
    %523 = arith.addf %516, %522 : vector<32x64xf32>
    %524 = vector.extract_strided_slice %473 {offsets = [0, 512], sizes = [32, 64], strides = [1, 1]} : vector<32x576xf32> to vector<32x64xf32>
    %c27_i32_294 = arith.constant 27 : i32
    %525 = tpu.dynamic_rotate %524 by %c27_i32_294 dim 0 : vector<32x64xf32>, i32 -> vector<32x64xf32>
    %c8_295 = arith.constant 8 : index
    %c0_296 = arith.constant 0 : index
    %c0_297 = arith.constant 0 : index
    %526 = vector.load %arg1[%c8_295, %c0_296, %c0_297] : memref<9x32x1xf32, #tpu.memory_space<vmem>>, vector<1x32x1xf32>
    %527 = vector.shape_cast %526 : vector<1x32x1xf32> to vector<32x1xf32>
    %528 = vector.broadcast %527 : vector<32x1xf32> to vector<32x64xf32>
    %529 = arith.mulf %525, %528 : vector<32x64xf32>
    %530 = arith.addf %523, %529 : vector<32x64xf32>
    %531 = vector.broadcast %471 : vector<1x64xf32> to vector<32x64xf32>
    %532 = arith.addf %530, %531 : vector<32x64xf32>
    %cst_298 = arith.constant 1.000000e-01 : f32
    %533 = vector.broadcast %cst_298 : f32 to vector<32x64xf32>
    %534 = arith.mulf %533, %532 : vector<32x64xf32>
    %535 = arith.maximumf %532, %534 : vector<32x64xf32>
    %c7_299 = arith.constant 7 : index
    %c0_300 = arith.constant 0 : index
    %c0_301 = arith.constant 0 : index
    %536 = vector.load %arg4[%c7_299, %c0_300, %c0_301] : memref<8x64x576xbf16, #tpu.memory_space<vmem>>, vector<1x64x576xbf16>
    %537 = vector.shape_cast %536 : vector<1x64x576xbf16> to vector<64x576xbf16>
    %c7_302 = arith.constant 7 : index
    %c0_303 = arith.constant 0 : index
    %c0_304 = arith.constant 0 : index
    %538 = vector.load %arg5[%c7_302, %c0_303, %c0_304] : memref<8x1x64xf32, #tpu.memory_space<vmem>>, vector<1x1x64xf32>
    %539 = vector.shape_cast %538 : vector<1x1x64xf32> to vector<1x64xf32>
    %540 = arith.truncf %535 : vector<32x64xf32> to vector<32x64xbf16>
    %cst_305 = arith.constant dense<0.000000e+00> : vector<32x576xf32>
    %541 = tpu.matmul %540, %537, %cst_305 {dimension_numbers = #tpu.dot_dimension_numbers<[1], [0], [0], [1], [0, 0, 1, 1], [], []>} : vector<32x64xbf16>, vector<64x576xbf16>, vector<32x576xf32> -> vector<32x576xf32>
    %542 = vector.extract_strided_slice %541 {offsets = [0, 256], sizes = [32, 64], strides = [1, 1]} : vector<32x576xf32> to vector<32x64xf32>
    %543 = vector.extract_strided_slice %541 {offsets = [0, 0], sizes = [32, 64], strides = [1, 1]} : vector<32x576xf32> to vector<32x64xf32>
    %c5_i32_306 = arith.constant 5 : i32
    %544 = tpu.dynamic_rotate %543 by %c5_i32_306 dim 0 : vector<32x64xf32>, i32 -> vector<32x64xf32>
    %c0_307 = arith.constant 0 : index
    %c0_308 = arith.constant 0 : index
    %c0_309 = arith.constant 0 : index
    %545 = vector.load %arg1[%c0_307, %c0_308, %c0_309] : memref<9x32x1xf32, #tpu.memory_space<vmem>>, vector<1x32x1xf32>
    %546 = vector.shape_cast %545 : vector<1x32x1xf32> to vector<32x1xf32>
    %547 = vector.broadcast %546 : vector<32x1xf32> to vector<32x64xf32>
    %548 = arith.mulf %544, %547 : vector<32x64xf32>
    %549 = arith.addf %542, %548 : vector<32x64xf32>
    %550 = vector.extract_strided_slice %541 {offsets = [0, 64], sizes = [32, 64], strides = [1, 1]} : vector<32x576xf32> to vector<32x64xf32>
    %c4_i32_310 = arith.constant 4 : i32
    %551 = tpu.dynamic_rotate %550 by %c4_i32_310 dim 0 : vector<32x64xf32>, i32 -> vector<32x64xf32>
    %c1_311 = arith.constant 1 : index
    %c0_312 = arith.constant 0 : index
    %c0_313 = arith.constant 0 : index
    %552 = vector.load %arg1[%c1_311, %c0_312, %c0_313] : memref<9x32x1xf32, #tpu.memory_space<vmem>>, vector<1x32x1xf32>
    %553 = vector.shape_cast %552 : vector<1x32x1xf32> to vector<32x1xf32>
    %554 = vector.broadcast %553 : vector<32x1xf32> to vector<32x64xf32>
    %555 = arith.mulf %551, %554 : vector<32x64xf32>
    %556 = arith.addf %549, %555 : vector<32x64xf32>
    %557 = vector.extract_strided_slice %541 {offsets = [0, 128], sizes = [32, 64], strides = [1, 1]} : vector<32x576xf32> to vector<32x64xf32>
    %c3_i32_314 = arith.constant 3 : i32
    %558 = tpu.dynamic_rotate %557 by %c3_i32_314 dim 0 : vector<32x64xf32>, i32 -> vector<32x64xf32>
    %c2_315 = arith.constant 2 : index
    %c0_316 = arith.constant 0 : index
    %c0_317 = arith.constant 0 : index
    %559 = vector.load %arg1[%c2_315, %c0_316, %c0_317] : memref<9x32x1xf32, #tpu.memory_space<vmem>>, vector<1x32x1xf32>
    %560 = vector.shape_cast %559 : vector<1x32x1xf32> to vector<32x1xf32>
    %561 = vector.broadcast %560 : vector<32x1xf32> to vector<32x64xf32>
    %562 = arith.mulf %558, %561 : vector<32x64xf32>
    %563 = arith.addf %556, %562 : vector<32x64xf32>
    %564 = vector.extract_strided_slice %541 {offsets = [0, 192], sizes = [32, 64], strides = [1, 1]} : vector<32x576xf32> to vector<32x64xf32>
    %c1_i32_318 = arith.constant 1 : i32
    %565 = tpu.dynamic_rotate %564 by %c1_i32_318 dim 0 : vector<32x64xf32>, i32 -> vector<32x64xf32>
    %c3_319 = arith.constant 3 : index
    %c0_320 = arith.constant 0 : index
    %c0_321 = arith.constant 0 : index
    %566 = vector.load %arg1[%c3_319, %c0_320, %c0_321] : memref<9x32x1xf32, #tpu.memory_space<vmem>>, vector<1x32x1xf32>
    %567 = vector.shape_cast %566 : vector<1x32x1xf32> to vector<32x1xf32>
    %568 = vector.broadcast %567 : vector<32x1xf32> to vector<32x64xf32>
    %569 = arith.mulf %565, %568 : vector<32x64xf32>
    %570 = arith.addf %563, %569 : vector<32x64xf32>
    %571 = vector.extract_strided_slice %541 {offsets = [0, 320], sizes = [32, 64], strides = [1, 1]} : vector<32x576xf32> to vector<32x64xf32>
    %c31_i32_322 = arith.constant 31 : i32
    %572 = tpu.dynamic_rotate %571 by %c31_i32_322 dim 0 : vector<32x64xf32>, i32 -> vector<32x64xf32>
    %c5_323 = arith.constant 5 : index
    %c0_324 = arith.constant 0 : index
    %c0_325 = arith.constant 0 : index
    %573 = vector.load %arg1[%c5_323, %c0_324, %c0_325] : memref<9x32x1xf32, #tpu.memory_space<vmem>>, vector<1x32x1xf32>
    %574 = vector.shape_cast %573 : vector<1x32x1xf32> to vector<32x1xf32>
    %575 = vector.broadcast %574 : vector<32x1xf32> to vector<32x64xf32>
    %576 = arith.mulf %572, %575 : vector<32x64xf32>
    %577 = arith.addf %570, %576 : vector<32x64xf32>
    %578 = vector.extract_strided_slice %541 {offsets = [0, 384], sizes = [32, 64], strides = [1, 1]} : vector<32x576xf32> to vector<32x64xf32>
    %c29_i32_326 = arith.constant 29 : i32
    %579 = tpu.dynamic_rotate %578 by %c29_i32_326 dim 0 : vector<32x64xf32>, i32 -> vector<32x64xf32>
    %c6_327 = arith.constant 6 : index
    %c0_328 = arith.constant 0 : index
    %c0_329 = arith.constant 0 : index
    %580 = vector.load %arg1[%c6_327, %c0_328, %c0_329] : memref<9x32x1xf32, #tpu.memory_space<vmem>>, vector<1x32x1xf32>
    %581 = vector.shape_cast %580 : vector<1x32x1xf32> to vector<32x1xf32>
    %582 = vector.broadcast %581 : vector<32x1xf32> to vector<32x64xf32>
    %583 = arith.mulf %579, %582 : vector<32x64xf32>
    %584 = arith.addf %577, %583 : vector<32x64xf32>
    %585 = vector.extract_strided_slice %541 {offsets = [0, 448], sizes = [32, 64], strides = [1, 1]} : vector<32x576xf32> to vector<32x64xf32>
    %c28_i32_330 = arith.constant 28 : i32
    %586 = tpu.dynamic_rotate %585 by %c28_i32_330 dim 0 : vector<32x64xf32>, i32 -> vector<32x64xf32>
    %c7_331 = arith.constant 7 : index
    %c0_332 = arith.constant 0 : index
    %c0_333 = arith.constant 0 : index
    %587 = vector.load %arg1[%c7_331, %c0_332, %c0_333] : memref<9x32x1xf32, #tpu.memory_space<vmem>>, vector<1x32x1xf32>
    %588 = vector.shape_cast %587 : vector<1x32x1xf32> to vector<32x1xf32>
    %589 = vector.broadcast %588 : vector<32x1xf32> to vector<32x64xf32>
    %590 = arith.mulf %586, %589 : vector<32x64xf32>
    %591 = arith.addf %584, %590 : vector<32x64xf32>
    %592 = vector.extract_strided_slice %541 {offsets = [0, 512], sizes = [32, 64], strides = [1, 1]} : vector<32x576xf32> to vector<32x64xf32>
    %c27_i32_334 = arith.constant 27 : i32
    %593 = tpu.dynamic_rotate %592 by %c27_i32_334 dim 0 : vector<32x64xf32>, i32 -> vector<32x64xf32>
    %c8_335 = arith.constant 8 : index
    %c0_336 = arith.constant 0 : index
    %c0_337 = arith.constant 0 : index
    %594 = vector.load %arg1[%c8_335, %c0_336, %c0_337] : memref<9x32x1xf32, #tpu.memory_space<vmem>>, vector<1x32x1xf32>
    %595 = vector.shape_cast %594 : vector<1x32x1xf32> to vector<32x1xf32>
    %596 = vector.broadcast %595 : vector<32x1xf32> to vector<32x64xf32>
    %597 = arith.mulf %593, %596 : vector<32x64xf32>
    %598 = arith.addf %591, %597 : vector<32x64xf32>
    %599 = vector.broadcast %539 : vector<1x64xf32> to vector<32x64xf32>
    %600 = arith.addf %598, %599 : vector<32x64xf32>
    %601 = arith.addf %600, %467 : vector<32x64xf32>
    %c0_338 = arith.constant 0 : index
    %c0_339 = arith.constant 0 : index
    %602 = vector.load %arg6[%c0_338, %c0_339] : memref<64x1152xbf16, #tpu.memory_space<vmem>>, vector<64x1152xbf16>
    %c0_340 = arith.constant 0 : index
    %c0_341 = arith.constant 0 : index
    %603 = vector.load %arg7[%c0_340, %c0_341] : memref<1x128xf32, #tpu.memory_space<vmem>>, vector<1x128xf32>
    %604 = arith.truncf %601 : vector<32x64xf32> to vector<32x64xbf16>
    %cst_342 = arith.constant dense<0.000000e+00> : vector<32x1152xf32>
    %605 = tpu.matmul %604, %602, %cst_342 {dimension_numbers = #tpu.dot_dimension_numbers<[1], [0], [0], [1], [0, 0, 1, 1], [], []>} : vector<32x64xbf16>, vector<64x1152xbf16>, vector<32x1152xf32> -> vector<32x1152xf32>
    %606 = vector.extract_strided_slice %605 {offsets = [0, 512], sizes = [32, 128], strides = [1, 1]} : vector<32x1152xf32> to vector<32x128xf32>
    %607 = vector.extract_strided_slice %605 {offsets = [0, 0], sizes = [32, 128], strides = [1, 1]} : vector<32x1152xf32> to vector<32x128xf32>
    %c5_i32_343 = arith.constant 5 : i32
    %608 = tpu.dynamic_rotate %607 by %c5_i32_343 dim 0 : vector<32x128xf32>, i32 -> vector<32x128xf32>
    %c0_344 = arith.constant 0 : index
    %c0_345 = arith.constant 0 : index
    %c0_346 = arith.constant 0 : index
    %609 = vector.load %arg1[%c0_344, %c0_345, %c0_346] : memref<9x32x1xf32, #tpu.memory_space<vmem>>, vector<1x32x1xf32>
    %610 = vector.shape_cast %609 : vector<1x32x1xf32> to vector<32x1xf32>
    %611 = vector.broadcast %610 : vector<32x1xf32> to vector<32x128xf32>
    %612 = arith.mulf %608, %611 : vector<32x128xf32>
    %613 = arith.addf %606, %612 : vector<32x128xf32>
    %614 = vector.extract_strided_slice %605 {offsets = [0, 128], sizes = [32, 128], strides = [1, 1]} : vector<32x1152xf32> to vector<32x128xf32>
    %c4_i32_347 = arith.constant 4 : i32
    %615 = tpu.dynamic_rotate %614 by %c4_i32_347 dim 0 : vector<32x128xf32>, i32 -> vector<32x128xf32>
    %c1_348 = arith.constant 1 : index
    %c0_349 = arith.constant 0 : index
    %c0_350 = arith.constant 0 : index
    %616 = vector.load %arg1[%c1_348, %c0_349, %c0_350] : memref<9x32x1xf32, #tpu.memory_space<vmem>>, vector<1x32x1xf32>
    %617 = vector.shape_cast %616 : vector<1x32x1xf32> to vector<32x1xf32>
    %618 = vector.broadcast %617 : vector<32x1xf32> to vector<32x128xf32>
    %619 = arith.mulf %615, %618 : vector<32x128xf32>
    %620 = arith.addf %613, %619 : vector<32x128xf32>
    %621 = vector.extract_strided_slice %605 {offsets = [0, 256], sizes = [32, 128], strides = [1, 1]} : vector<32x1152xf32> to vector<32x128xf32>
    %c3_i32_351 = arith.constant 3 : i32
    %622 = tpu.dynamic_rotate %621 by %c3_i32_351 dim 0 : vector<32x128xf32>, i32 -> vector<32x128xf32>
    %c2_352 = arith.constant 2 : index
    %c0_353 = arith.constant 0 : index
    %c0_354 = arith.constant 0 : index
    %623 = vector.load %arg1[%c2_352, %c0_353, %c0_354] : memref<9x32x1xf32, #tpu.memory_space<vmem>>, vector<1x32x1xf32>
    %624 = vector.shape_cast %623 : vector<1x32x1xf32> to vector<32x1xf32>
    %625 = vector.broadcast %624 : vector<32x1xf32> to vector<32x128xf32>
    %626 = arith.mulf %622, %625 : vector<32x128xf32>
    %627 = arith.addf %620, %626 : vector<32x128xf32>
    %628 = vector.extract_strided_slice %605 {offsets = [0, 384], sizes = [32, 128], strides = [1, 1]} : vector<32x1152xf32> to vector<32x128xf32>
    %c1_i32_355 = arith.constant 1 : i32
    %629 = tpu.dynamic_rotate %628 by %c1_i32_355 dim 0 : vector<32x128xf32>, i32 -> vector<32x128xf32>
    %c3_356 = arith.constant 3 : index
    %c0_357 = arith.constant 0 : index
    %c0_358 = arith.constant 0 : index
    %630 = vector.load %arg1[%c3_356, %c0_357, %c0_358] : memref<9x32x1xf32, #tpu.memory_space<vmem>>, vector<1x32x1xf32>
    %631 = vector.shape_cast %630 : vector<1x32x1xf32> to vector<32x1xf32>
    %632 = vector.broadcast %631 : vector<32x1xf32> to vector<32x128xf32>
    %633 = arith.mulf %629, %632 : vector<32x128xf32>
    %634 = arith.addf %627, %633 : vector<32x128xf32>
    %635 = vector.extract_strided_slice %605 {offsets = [0, 640], sizes = [32, 128], strides = [1, 1]} : vector<32x1152xf32> to vector<32x128xf32>
    %c31_i32_359 = arith.constant 31 : i32
    %636 = tpu.dynamic_rotate %635 by %c31_i32_359 dim 0 : vector<32x128xf32>, i32 -> vector<32x128xf32>
    %c5_360 = arith.constant 5 : index
    %c0_361 = arith.constant 0 : index
    %c0_362 = arith.constant 0 : index
    %637 = vector.load %arg1[%c5_360, %c0_361, %c0_362] : memref<9x32x1xf32, #tpu.memory_space<vmem>>, vector<1x32x1xf32>
    %638 = vector.shape_cast %637 : vector<1x32x1xf32> to vector<32x1xf32>
    %639 = vector.broadcast %638 : vector<32x1xf32> to vector<32x128xf32>
    %640 = arith.mulf %636, %639 : vector<32x128xf32>
    %641 = arith.addf %634, %640 : vector<32x128xf32>
    %642 = vector.extract_strided_slice %605 {offsets = [0, 768], sizes = [32, 128], strides = [1, 1]} : vector<32x1152xf32> to vector<32x128xf32>
    %c29_i32_363 = arith.constant 29 : i32
    %643 = tpu.dynamic_rotate %642 by %c29_i32_363 dim 0 : vector<32x128xf32>, i32 -> vector<32x128xf32>
    %c6_364 = arith.constant 6 : index
    %c0_365 = arith.constant 0 : index
    %c0_366 = arith.constant 0 : index
    %644 = vector.load %arg1[%c6_364, %c0_365, %c0_366] : memref<9x32x1xf32, #tpu.memory_space<vmem>>, vector<1x32x1xf32>
    %645 = vector.shape_cast %644 : vector<1x32x1xf32> to vector<32x1xf32>
    %646 = vector.broadcast %645 : vector<32x1xf32> to vector<32x128xf32>
    %647 = arith.mulf %643, %646 : vector<32x128xf32>
    %648 = arith.addf %641, %647 : vector<32x128xf32>
    %649 = vector.extract_strided_slice %605 {offsets = [0, 896], sizes = [32, 128], strides = [1, 1]} : vector<32x1152xf32> to vector<32x128xf32>
    %c28_i32_367 = arith.constant 28 : i32
    %650 = tpu.dynamic_rotate %649 by %c28_i32_367 dim 0 : vector<32x128xf32>, i32 -> vector<32x128xf32>
    %c7_368 = arith.constant 7 : index
    %c0_369 = arith.constant 0 : index
    %c0_370 = arith.constant 0 : index
    %651 = vector.load %arg1[%c7_368, %c0_369, %c0_370] : memref<9x32x1xf32, #tpu.memory_space<vmem>>, vector<1x32x1xf32>
    %652 = vector.shape_cast %651 : vector<1x32x1xf32> to vector<32x1xf32>
    %653 = vector.broadcast %652 : vector<32x1xf32> to vector<32x128xf32>
    %654 = arith.mulf %650, %653 : vector<32x128xf32>
    %655 = arith.addf %648, %654 : vector<32x128xf32>
    %656 = vector.extract_strided_slice %605 {offsets = [0, 1024], sizes = [32, 128], strides = [1, 1]} : vector<32x1152xf32> to vector<32x128xf32>
    %c27_i32_371 = arith.constant 27 : i32
    %657 = tpu.dynamic_rotate %656 by %c27_i32_371 dim 0 : vector<32x128xf32>, i32 -> vector<32x128xf32>
    %c8_372 = arith.constant 8 : index
    %c0_373 = arith.constant 0 : index
    %c0_374 = arith.constant 0 : index
    %658 = vector.load %arg1[%c8_372, %c0_373, %c0_374] : memref<9x32x1xf32, #tpu.memory_space<vmem>>, vector<1x32x1xf32>
    %659 = vector.shape_cast %658 : vector<1x32x1xf32> to vector<32x1xf32>
    %660 = vector.broadcast %659 : vector<32x1xf32> to vector<32x128xf32>
    %661 = arith.mulf %657, %660 : vector<32x128xf32>
    %662 = arith.addf %655, %661 : vector<32x128xf32>
    %663 = vector.broadcast %603 : vector<1x128xf32> to vector<32x128xf32>
    %664 = arith.addf %662, %663 : vector<32x128xf32>
    %cst_375 = arith.constant 1.000000e-01 : f32
    %665 = vector.broadcast %cst_375 : f32 to vector<32x128xf32>
    %666 = arith.mulf %665, %664 : vector<32x128xf32>
    %667 = arith.maximumf %664, %666 : vector<32x128xf32>
    %c0_376 = arith.constant 0 : index
    %c0_377 = arith.constant 0 : index
    %668 = vector.load %arg8[%c0_376, %c0_377] : memref<128x1152xbf16, #tpu.memory_space<vmem>>, vector<128x1152xbf16>
    %c0_378 = arith.constant 0 : index
    %c0_379 = arith.constant 0 : index
    %669 = vector.load %arg9[%c0_378, %c0_379] : memref<1x128xf32, #tpu.memory_space<vmem>>, vector<1x128xf32>
    %670 = arith.truncf %667 : vector<32x128xf32> to vector<32x128xbf16>
    %cst_380 = arith.constant dense<0.000000e+00> : vector<32x1152xf32>
    %671 = tpu.matmul %670, %668, %cst_380 {dimension_numbers = #tpu.dot_dimension_numbers<[1], [0], [0], [1], [0, 0, 1, 1], [], []>} : vector<32x128xbf16>, vector<128x1152xbf16>, vector<32x1152xf32> -> vector<32x1152xf32>
    %672 = vector.extract_strided_slice %671 {offsets = [0, 512], sizes = [32, 128], strides = [1, 1]} : vector<32x1152xf32> to vector<32x128xf32>
    %673 = vector.extract_strided_slice %671 {offsets = [0, 0], sizes = [32, 128], strides = [1, 1]} : vector<32x1152xf32> to vector<32x128xf32>
    %c5_i32_381 = arith.constant 5 : i32
    %674 = tpu.dynamic_rotate %673 by %c5_i32_381 dim 0 : vector<32x128xf32>, i32 -> vector<32x128xf32>
    %c0_382 = arith.constant 0 : index
    %c0_383 = arith.constant 0 : index
    %c0_384 = arith.constant 0 : index
    %675 = vector.load %arg1[%c0_382, %c0_383, %c0_384] : memref<9x32x1xf32, #tpu.memory_space<vmem>>, vector<1x32x1xf32>
    %676 = vector.shape_cast %675 : vector<1x32x1xf32> to vector<32x1xf32>
    %677 = vector.broadcast %676 : vector<32x1xf32> to vector<32x128xf32>
    %678 = arith.mulf %674, %677 : vector<32x128xf32>
    %679 = arith.addf %672, %678 : vector<32x128xf32>
    %680 = vector.extract_strided_slice %671 {offsets = [0, 128], sizes = [32, 128], strides = [1, 1]} : vector<32x1152xf32> to vector<32x128xf32>
    %c4_i32_385 = arith.constant 4 : i32
    %681 = tpu.dynamic_rotate %680 by %c4_i32_385 dim 0 : vector<32x128xf32>, i32 -> vector<32x128xf32>
    %c1_386 = arith.constant 1 : index
    %c0_387 = arith.constant 0 : index
    %c0_388 = arith.constant 0 : index
    %682 = vector.load %arg1[%c1_386, %c0_387, %c0_388] : memref<9x32x1xf32, #tpu.memory_space<vmem>>, vector<1x32x1xf32>
    %683 = vector.shape_cast %682 : vector<1x32x1xf32> to vector<32x1xf32>
    %684 = vector.broadcast %683 : vector<32x1xf32> to vector<32x128xf32>
    %685 = arith.mulf %681, %684 : vector<32x128xf32>
    %686 = arith.addf %679, %685 : vector<32x128xf32>
    %687 = vector.extract_strided_slice %671 {offsets = [0, 256], sizes = [32, 128], strides = [1, 1]} : vector<32x1152xf32> to vector<32x128xf32>
    %c3_i32_389 = arith.constant 3 : i32
    %688 = tpu.dynamic_rotate %687 by %c3_i32_389 dim 0 : vector<32x128xf32>, i32 -> vector<32x128xf32>
    %c2_390 = arith.constant 2 : index
    %c0_391 = arith.constant 0 : index
    %c0_392 = arith.constant 0 : index
    %689 = vector.load %arg1[%c2_390, %c0_391, %c0_392] : memref<9x32x1xf32, #tpu.memory_space<vmem>>, vector<1x32x1xf32>
    %690 = vector.shape_cast %689 : vector<1x32x1xf32> to vector<32x1xf32>
    %691 = vector.broadcast %690 : vector<32x1xf32> to vector<32x128xf32>
    %692 = arith.mulf %688, %691 : vector<32x128xf32>
    %693 = arith.addf %686, %692 : vector<32x128xf32>
    %694 = vector.extract_strided_slice %671 {offsets = [0, 384], sizes = [32, 128], strides = [1, 1]} : vector<32x1152xf32> to vector<32x128xf32>
    %c1_i32_393 = arith.constant 1 : i32
    %695 = tpu.dynamic_rotate %694 by %c1_i32_393 dim 0 : vector<32x128xf32>, i32 -> vector<32x128xf32>
    %c3_394 = arith.constant 3 : index
    %c0_395 = arith.constant 0 : index
    %c0_396 = arith.constant 0 : index
    %696 = vector.load %arg1[%c3_394, %c0_395, %c0_396] : memref<9x32x1xf32, #tpu.memory_space<vmem>>, vector<1x32x1xf32>
    %697 = vector.shape_cast %696 : vector<1x32x1xf32> to vector<32x1xf32>
    %698 = vector.broadcast %697 : vector<32x1xf32> to vector<32x128xf32>
    %699 = arith.mulf %695, %698 : vector<32x128xf32>
    %700 = arith.addf %693, %699 : vector<32x128xf32>
    %701 = vector.extract_strided_slice %671 {offsets = [0, 640], sizes = [32, 128], strides = [1, 1]} : vector<32x1152xf32> to vector<32x128xf32>
    %c31_i32_397 = arith.constant 31 : i32
    %702 = tpu.dynamic_rotate %701 by %c31_i32_397 dim 0 : vector<32x128xf32>, i32 -> vector<32x128xf32>
    %c5_398 = arith.constant 5 : index
    %c0_399 = arith.constant 0 : index
    %c0_400 = arith.constant 0 : index
    %703 = vector.load %arg1[%c5_398, %c0_399, %c0_400] : memref<9x32x1xf32, #tpu.memory_space<vmem>>, vector<1x32x1xf32>
    %704 = vector.shape_cast %703 : vector<1x32x1xf32> to vector<32x1xf32>
    %705 = vector.broadcast %704 : vector<32x1xf32> to vector<32x128xf32>
    %706 = arith.mulf %702, %705 : vector<32x128xf32>
    %707 = arith.addf %700, %706 : vector<32x128xf32>
    %708 = vector.extract_strided_slice %671 {offsets = [0, 768], sizes = [32, 128], strides = [1, 1]} : vector<32x1152xf32> to vector<32x128xf32>
    %c29_i32_401 = arith.constant 29 : i32
    %709 = tpu.dynamic_rotate %708 by %c29_i32_401 dim 0 : vector<32x128xf32>, i32 -> vector<32x128xf32>
    %c6_402 = arith.constant 6 : index
    %c0_403 = arith.constant 0 : index
    %c0_404 = arith.constant 0 : index
    %710 = vector.load %arg1[%c6_402, %c0_403, %c0_404] : memref<9x32x1xf32, #tpu.memory_space<vmem>>, vector<1x32x1xf32>
    %711 = vector.shape_cast %710 : vector<1x32x1xf32> to vector<32x1xf32>
    %712 = vector.broadcast %711 : vector<32x1xf32> to vector<32x128xf32>
    %713 = arith.mulf %709, %712 : vector<32x128xf32>
    %714 = arith.addf %707, %713 : vector<32x128xf32>
    %715 = vector.extract_strided_slice %671 {offsets = [0, 896], sizes = [32, 128], strides = [1, 1]} : vector<32x1152xf32> to vector<32x128xf32>
    %c28_i32_405 = arith.constant 28 : i32
    %716 = tpu.dynamic_rotate %715 by %c28_i32_405 dim 0 : vector<32x128xf32>, i32 -> vector<32x128xf32>
    %c7_406 = arith.constant 7 : index
    %c0_407 = arith.constant 0 : index
    %c0_408 = arith.constant 0 : index
    %717 = vector.load %arg1[%c7_406, %c0_407, %c0_408] : memref<9x32x1xf32, #tpu.memory_space<vmem>>, vector<1x32x1xf32>
    %718 = vector.shape_cast %717 : vector<1x32x1xf32> to vector<32x1xf32>
    %719 = vector.broadcast %718 : vector<32x1xf32> to vector<32x128xf32>
    %720 = arith.mulf %716, %719 : vector<32x128xf32>
    %721 = arith.addf %714, %720 : vector<32x128xf32>
    %722 = vector.extract_strided_slice %671 {offsets = [0, 1024], sizes = [32, 128], strides = [1, 1]} : vector<32x1152xf32> to vector<32x128xf32>
    %c27_i32_409 = arith.constant 27 : i32
    %723 = tpu.dynamic_rotate %722 by %c27_i32_409 dim 0 : vector<32x128xf32>, i32 -> vector<32x128xf32>
    %c8_410 = arith.constant 8 : index
    %c0_411 = arith.constant 0 : index
    %c0_412 = arith.constant 0 : index
    %724 = vector.load %arg1[%c8_410, %c0_411, %c0_412] : memref<9x32x1xf32, #tpu.memory_space<vmem>>, vector<1x32x1xf32>
    %725 = vector.shape_cast %724 : vector<1x32x1xf32> to vector<32x1xf32>
    %726 = vector.broadcast %725 : vector<32x1xf32> to vector<32x128xf32>
    %727 = arith.mulf %723, %726 : vector<32x128xf32>
    %728 = arith.addf %721, %727 : vector<32x128xf32>
    %729 = vector.broadcast %669 : vector<1x128xf32> to vector<32x128xf32>
    %730 = arith.addf %728, %729 : vector<32x128xf32>
    %cst_413 = arith.constant 1.000000e-01 : f32
    %731 = vector.broadcast %cst_413 : f32 to vector<32x128xf32>
    %732 = arith.mulf %731, %730 : vector<32x128xf32>
    %733 = arith.maximumf %730, %732 : vector<32x128xf32>
    %c0_414 = arith.constant 0 : index
    %c0_415 = arith.constant 0 : index
    %734 = vector.load %arg10[%c0_414, %c0_415] : memref<128x2304xbf16, #tpu.memory_space<vmem>>, vector<128x2304xbf16>
    %c0_416 = arith.constant 0 : index
    %c0_417 = arith.constant 0 : index
    %735 = vector.load %arg11[%c0_416, %c0_417] : memref<1x256xf32, #tpu.memory_space<vmem>>, vector<1x256xf32>
    %736 = arith.truncf %733 : vector<32x128xf32> to vector<32x128xbf16>
    %cst_418 = arith.constant dense<0.000000e+00> : vector<32x2304xf32>
    %737 = tpu.matmul %736, %734, %cst_418 {dimension_numbers = #tpu.dot_dimension_numbers<[1], [0], [0], [1], [0, 0, 1, 1], [], []>} : vector<32x128xbf16>, vector<128x2304xbf16>, vector<32x2304xf32> -> vector<32x2304xf32>
    %738 = vector.extract_strided_slice %737 {offsets = [0, 1024], sizes = [32, 256], strides = [1, 1]} : vector<32x2304xf32> to vector<32x256xf32>
    %739 = vector.extract_strided_slice %737 {offsets = [0, 0], sizes = [32, 256], strides = [1, 1]} : vector<32x2304xf32> to vector<32x256xf32>
    %c5_i32_419 = arith.constant 5 : i32
    %740 = tpu.dynamic_rotate %739 by %c5_i32_419 dim 0 : vector<32x256xf32>, i32 -> vector<32x256xf32>
    %c0_420 = arith.constant 0 : index
    %c0_421 = arith.constant 0 : index
    %c0_422 = arith.constant 0 : index
    %741 = vector.load %arg1[%c0_420, %c0_421, %c0_422] : memref<9x32x1xf32, #tpu.memory_space<vmem>>, vector<1x32x1xf32>
    %742 = vector.shape_cast %741 : vector<1x32x1xf32> to vector<32x1xf32>
    %743 = vector.broadcast %742 : vector<32x1xf32> to vector<32x256xf32>
    %744 = arith.mulf %740, %743 : vector<32x256xf32>
    %745 = arith.addf %738, %744 : vector<32x256xf32>
    %746 = vector.extract_strided_slice %737 {offsets = [0, 256], sizes = [32, 256], strides = [1, 1]} : vector<32x2304xf32> to vector<32x256xf32>
    %c4_i32_423 = arith.constant 4 : i32
    %747 = tpu.dynamic_rotate %746 by %c4_i32_423 dim 0 : vector<32x256xf32>, i32 -> vector<32x256xf32>
    %c1_424 = arith.constant 1 : index
    %c0_425 = arith.constant 0 : index
    %c0_426 = arith.constant 0 : index
    %748 = vector.load %arg1[%c1_424, %c0_425, %c0_426] : memref<9x32x1xf32, #tpu.memory_space<vmem>>, vector<1x32x1xf32>
    %749 = vector.shape_cast %748 : vector<1x32x1xf32> to vector<32x1xf32>
    %750 = vector.broadcast %749 : vector<32x1xf32> to vector<32x256xf32>
    %751 = arith.mulf %747, %750 : vector<32x256xf32>
    %752 = arith.addf %745, %751 : vector<32x256xf32>
    %753 = vector.extract_strided_slice %737 {offsets = [0, 512], sizes = [32, 256], strides = [1, 1]} : vector<32x2304xf32> to vector<32x256xf32>
    %c3_i32_427 = arith.constant 3 : i32
    %754 = tpu.dynamic_rotate %753 by %c3_i32_427 dim 0 : vector<32x256xf32>, i32 -> vector<32x256xf32>
    %c2_428 = arith.constant 2 : index
    %c0_429 = arith.constant 0 : index
    %c0_430 = arith.constant 0 : index
    %755 = vector.load %arg1[%c2_428, %c0_429, %c0_430] : memref<9x32x1xf32, #tpu.memory_space<vmem>>, vector<1x32x1xf32>
    %756 = vector.shape_cast %755 : vector<1x32x1xf32> to vector<32x1xf32>
    %757 = vector.broadcast %756 : vector<32x1xf32> to vector<32x256xf32>
    %758 = arith.mulf %754, %757 : vector<32x256xf32>
    %759 = arith.addf %752, %758 : vector<32x256xf32>
    %760 = vector.extract_strided_slice %737 {offsets = [0, 768], sizes = [32, 256], strides = [1, 1]} : vector<32x2304xf32> to vector<32x256xf32>
    %c1_i32_431 = arith.constant 1 : i32
    %761 = tpu.dynamic_rotate %760 by %c1_i32_431 dim 0 : vector<32x256xf32>, i32 -> vector<32x256xf32>
    %c3_432 = arith.constant 3 : index
    %c0_433 = arith.constant 0 : index
    %c0_434 = arith.constant 0 : index
    %762 = vector.load %arg1[%c3_432, %c0_433, %c0_434] : memref<9x32x1xf32, #tpu.memory_space<vmem>>, vector<1x32x1xf32>
    %763 = vector.shape_cast %762 : vector<1x32x1xf32> to vector<32x1xf32>
    %764 = vector.broadcast %763 : vector<32x1xf32> to vector<32x256xf32>
    %765 = arith.mulf %761, %764 : vector<32x256xf32>
    %766 = arith.addf %759, %765 : vector<32x256xf32>
    %767 = vector.extract_strided_slice %737 {offsets = [0, 1280], sizes = [32, 256], strides = [1, 1]} : vector<32x2304xf32> to vector<32x256xf32>
    %c31_i32_435 = arith.constant 31 : i32
    %768 = tpu.dynamic_rotate %767 by %c31_i32_435 dim 0 : vector<32x256xf32>, i32 -> vector<32x256xf32>
    %c5_436 = arith.constant 5 : index
    %c0_437 = arith.constant 0 : index
    %c0_438 = arith.constant 0 : index
    %769 = vector.load %arg1[%c5_436, %c0_437, %c0_438] : memref<9x32x1xf32, #tpu.memory_space<vmem>>, vector<1x32x1xf32>
    %770 = vector.shape_cast %769 : vector<1x32x1xf32> to vector<32x1xf32>
    %771 = vector.broadcast %770 : vector<32x1xf32> to vector<32x256xf32>
    %772 = arith.mulf %768, %771 : vector<32x256xf32>
    %773 = arith.addf %766, %772 : vector<32x256xf32>
    %774 = vector.extract_strided_slice %737 {offsets = [0, 1536], sizes = [32, 256], strides = [1, 1]} : vector<32x2304xf32> to vector<32x256xf32>
    %c29_i32_439 = arith.constant 29 : i32
    %775 = tpu.dynamic_rotate %774 by %c29_i32_439 dim 0 : vector<32x256xf32>, i32 -> vector<32x256xf32>
    %c6_440 = arith.constant 6 : index
    %c0_441 = arith.constant 0 : index
    %c0_442 = arith.constant 0 : index
    %776 = vector.load %arg1[%c6_440, %c0_441, %c0_442] : memref<9x32x1xf32, #tpu.memory_space<vmem>>, vector<1x32x1xf32>
    %777 = vector.shape_cast %776 : vector<1x32x1xf32> to vector<32x1xf32>
    %778 = vector.broadcast %777 : vector<32x1xf32> to vector<32x256xf32>
    %779 = arith.mulf %775, %778 : vector<32x256xf32>
    %780 = arith.addf %773, %779 : vector<32x256xf32>
    %781 = vector.extract_strided_slice %737 {offsets = [0, 1792], sizes = [32, 256], strides = [1, 1]} : vector<32x2304xf32> to vector<32x256xf32>
    %c28_i32_443 = arith.constant 28 : i32
    %782 = tpu.dynamic_rotate %781 by %c28_i32_443 dim 0 : vector<32x256xf32>, i32 -> vector<32x256xf32>
    %c7_444 = arith.constant 7 : index
    %c0_445 = arith.constant 0 : index
    %c0_446 = arith.constant 0 : index
    %783 = vector.load %arg1[%c7_444, %c0_445, %c0_446] : memref<9x32x1xf32, #tpu.memory_space<vmem>>, vector<1x32x1xf32>
    %784 = vector.shape_cast %783 : vector<1x32x1xf32> to vector<32x1xf32>
    %785 = vector.broadcast %784 : vector<32x1xf32> to vector<32x256xf32>
    %786 = arith.mulf %782, %785 : vector<32x256xf32>
    %787 = arith.addf %780, %786 : vector<32x256xf32>
    %788 = vector.extract_strided_slice %737 {offsets = [0, 2048], sizes = [32, 256], strides = [1, 1]} : vector<32x2304xf32> to vector<32x256xf32>
    %c27_i32_447 = arith.constant 27 : i32
    %789 = tpu.dynamic_rotate %788 by %c27_i32_447 dim 0 : vector<32x256xf32>, i32 -> vector<32x256xf32>
    %c8_448 = arith.constant 8 : index
    %c0_449 = arith.constant 0 : index
    %c0_450 = arith.constant 0 : index
    %790 = vector.load %arg1[%c8_448, %c0_449, %c0_450] : memref<9x32x1xf32, #tpu.memory_space<vmem>>, vector<1x32x1xf32>
    %791 = vector.shape_cast %790 : vector<1x32x1xf32> to vector<32x1xf32>
    %792 = vector.broadcast %791 : vector<32x1xf32> to vector<32x256xf32>
    %793 = arith.mulf %789, %792 : vector<32x256xf32>
    %794 = arith.addf %787, %793 : vector<32x256xf32>
    %795 = vector.broadcast %735 : vector<1x256xf32> to vector<32x256xf32>
    %796 = arith.addf %794, %795 : vector<32x256xf32>
    %cst_451 = arith.constant 1.000000e-01 : f32
    %797 = vector.broadcast %cst_451 : f32 to vector<32x256xf32>
    %798 = arith.mulf %797, %796 : vector<32x256xf32>
    %799 = arith.maximumf %796, %798 : vector<32x256xf32>
    %800 = vector.shape_cast %799 : vector<32x256xf32> to vector<2x16x256xf32>
    %cst_452 = arith.constant dense<0.000000e+00> : vector<2x256xf32>
    %801 = vector.multi_reduction <add>, %800, %cst_452 [1] : vector<2x16x256xf32> to vector<2x256xf32>
    %cst_453 = arith.constant 6.250000e-02 : f32
    %802 = vector.broadcast %cst_453 : f32 to vector<2x256xf32>
    %803 = arith.mulf %801, %802 : vector<2x256xf32>
    %804 = arith.truncf %803 : vector<2x256xf32> to vector<2x256xbf16>
    %c0_454 = arith.constant 0 : index
    %c0_455 = arith.constant 0 : index
    %805 = vector.load %arg12[%c0_454, %c0_455] : memref<256x256xbf16, #tpu.memory_space<vmem>>, vector<256x256xbf16>
    %cst_456 = arith.constant dense<0.000000e+00> : vector<2x256xf32>
    %806 = tpu.matmul %804, %805, %cst_456 {dimension_numbers = #tpu.dot_dimension_numbers<[1], [0], [0], [1], [0, 0, 1, 1], [], []>} : vector<2x256xbf16>, vector<256x256xbf16>, vector<2x256xf32> -> vector<2x256xf32>
    %c0_457 = arith.constant 0 : index
    %c0_458 = arith.constant 0 : index
    %807 = vector.load %arg13[%c0_457, %c0_458] : memref<1x256xf32, #tpu.memory_space<vmem>>, vector<1x256xf32>
    %808 = vector.broadcast %807 : vector<1x256xf32> to vector<2x256xf32>
    %809 = arith.addf %806, %808 : vector<2x256xf32>
    %cst_459 = arith.constant 1.000000e-01 : f32
    %810 = vector.broadcast %cst_459 : f32 to vector<2x256xf32>
    %811 = arith.mulf %810, %809 : vector<2x256xf32>
    %812 = arith.maximumf %809, %811 : vector<2x256xf32>
    %813 = arith.truncf %812 : vector<2x256xf32> to vector<2x256xbf16>
    %c0_460 = arith.constant 0 : index
    %c0_461 = arith.constant 0 : index
    %814 = vector.load %arg14[%c0_460, %c0_461] : memref<256x256xbf16, #tpu.memory_space<vmem>>, vector<256x256xbf16>
    %cst_462 = arith.constant dense<0.000000e+00> : vector<2x256xf32>
    %815 = tpu.matmul %813, %814, %cst_462 {dimension_numbers = #tpu.dot_dimension_numbers<[1], [0], [0], [1], [0, 0, 1, 1], [], []>} : vector<2x256xbf16>, vector<256x256xbf16>, vector<2x256xf32> -> vector<2x256xf32>
    %c0_463 = arith.constant 0 : index
    %c0_464 = arith.constant 0 : index
    %816 = vector.load %arg15[%c0_463, %c0_464] : memref<1x256xf32, #tpu.memory_space<vmem>>, vector<1x256xf32>
    %817 = vector.broadcast %816 : vector<1x256xf32> to vector<2x256xf32>
    %818 = arith.addf %815, %817 : vector<2x256xf32>
    %cst_465 = arith.constant 0.000000e+00 : f32
    %819 = vector.broadcast %cst_465 : f32 to vector<2x256xf32>
    %820 = arith.subf %819, %818 : vector<2x256xf32>
    %821 = math.exp %820 : vector<2x256xf32>
    %cst_466 = arith.constant 1.000000e+00 : f32
    %822 = vector.broadcast %cst_466 : f32 to vector<2x256xf32>
    %823 = arith.addf %822, %821 : vector<2x256xf32>
    %cst_467 = arith.constant 1.000000e+00 : f32
    %824 = vector.broadcast %cst_467 : f32 to vector<2x256xf32>
    %825 = arith.divf %824, %823 : vector<2x256xf32>
    %826 = arith.truncf %825 : vector<2x256xf32> to vector<2x256xbf16>
    %c0_468 = arith.constant 0 : index
    %c0_469 = arith.constant 0 : index
    %827 = vector.load %arg16[%c0_468, %c0_469] : memref<256x256xbf16, #tpu.memory_space<vmem>>, vector<256x256xbf16>
    %cst_470 = arith.constant dense<0.000000e+00> : vector<2x256xf32>
    %828 = tpu.matmul %826, %827, %cst_470 {dimension_numbers = #tpu.dot_dimension_numbers<[1], [0], [0], [1], [0, 0, 1, 1], [], []>} : vector<2x256xbf16>, vector<256x256xbf16>, vector<2x256xf32> -> vector<2x256xf32>
    %c0_471 = arith.constant 0 : index
    %c0_472 = arith.constant 0 : index
    %829 = vector.load %arg19[%c0_471, %c0_472] : memref<1x256xf32, #tpu.memory_space<vmem>>, vector<1x256xf32>
    %830 = vector.broadcast %829 : vector<1x256xf32> to vector<2x256xf32>
    %831 = arith.addf %828, %830 : vector<2x256xf32>
    %c0_473 = arith.constant 0 : index
    %c0_474 = arith.constant 0 : index
    %832 = vector.load %arg17[%c0_473, %c0_474] : memref<1x256xf32, #tpu.memory_space<vmem>>, vector<1x256xf32>
    %c0_475 = arith.constant 0 : index
    %c0_476 = arith.constant 0 : index
    %833 = vector.load %arg18[%c0_475, %c0_476] : memref<256x256xbf16, #tpu.memory_space<vmem>>, vector<256x256xbf16>
    %c0_477 = arith.constant 0 : index
    %c0_478 = arith.constant 0 : index
    %834 = vector.load %arg20[%c0_477, %c0_478] : memref<256x256xbf16, #tpu.memory_space<vmem>>, vector<256x256xbf16>
    %c0_479 = arith.constant 0 : index
    %c0_480 = arith.constant 0 : index
    %835 = vector.load %arg21[%c0_479, %c0_480] : memref<1x256xf32, #tpu.memory_space<vmem>>, vector<1x256xf32>
    %c0_481 = arith.constant 0 : index
    %c0_482 = arith.constant 0 : index
    %836 = vector.load %arg22[%c0_481, %c0_482] : memref<2x256xf32, #tpu.memory_space<vmem>>, vector<2x256xf32>
    %cst_483 = arith.constant 9.000000e-02 : f32
    %837 = vector.broadcast %cst_483 : f32 to vector<1x256xf32>
    %838 = arith.mulf %837, %832 : vector<1x256xf32>
    %839 = vector.broadcast %838 : vector<1x256xf32> to vector<2x256xf32>
    %840 = arith.addf %831, %839 : vector<2x256xf32>
    %841 = arith.truncf %836 : vector<2x256xf32> to vector<2x256xbf16>
    %cst_484 = arith.constant dense<0.000000e+00> : vector<2x256xf32>
    %842 = tpu.matmul %841, %833, %cst_484 {dimension_numbers = #tpu.dot_dimension_numbers<[1], [0], [0], [1], [0, 0, 1, 1], [], []>} : vector<2x256xbf16>, vector<256x256xbf16>, vector<2x256xf32> -> vector<2x256xf32>
    %843 = arith.addf %840, %842 : vector<2x256xf32>
    %cst_485 = arith.constant 1.000000e-01 : f32
    %844 = vector.broadcast %cst_485 : f32 to vector<2x256xf32>
    %845 = arith.mulf %844, %843 : vector<2x256xf32>
    %846 = arith.maximumf %843, %845 : vector<2x256xf32>
    %847 = arith.truncf %846 : vector<2x256xf32> to vector<2x256xbf16>
    %cst_486 = arith.constant dense<0.000000e+00> : vector<2x256xf32>
    %848 = tpu.matmul %847, %834, %cst_486 {dimension_numbers = #tpu.dot_dimension_numbers<[1], [0], [0], [1], [0, 0, 1, 1], [], []>} : vector<2x256xbf16>, vector<256x256xbf16>, vector<2x256xf32> -> vector<2x256xf32>
    %849 = vector.broadcast %835 : vector<1x256xf32> to vector<2x256xf32>
    %850 = arith.addf %848, %849 : vector<2x256xf32>
    %cst_487 = arith.constant 1.000000e-01 : f32
    %851 = vector.broadcast %cst_487 : f32 to vector<2x256xf32>
    %852 = arith.mulf %851, %850 : vector<2x256xf32>
    %853 = arith.maximumf %850, %852 : vector<2x256xf32>
    %cst_488 = arith.constant 0.0490019657 : f32
    %854 = vector.broadcast %cst_488 : f32 to vector<2x256xf32>
    %855 = arith.mulf %854, %853 : vector<2x256xf32>
    %cst_489 = arith.constant 0.0997574627 : f32
    %856 = vector.broadcast %cst_489 : f32 to vector<2x256xf32>
    %857 = arith.mulf %856, %836 : vector<2x256xf32>
    %858 = arith.addf %855, %857 : vector<2x256xf32>
    %cst_490 = arith.constant 8.000000e-02 : f32
    %859 = vector.broadcast %cst_490 : f32 to vector<1x256xf32>
    %860 = arith.mulf %859, %832 : vector<1x256xf32>
    %861 = vector.broadcast %860 : vector<1x256xf32> to vector<2x256xf32>
    %862 = arith.addf %831, %861 : vector<2x256xf32>
    %863 = arith.truncf %858 : vector<2x256xf32> to vector<2x256xbf16>
    %cst_491 = arith.constant dense<0.000000e+00> : vector<2x256xf32>
    %864 = tpu.matmul %863, %833, %cst_491 {dimension_numbers = #tpu.dot_dimension_numbers<[1], [0], [0], [1], [0, 0, 1, 1], [], []>} : vector<2x256xbf16>, vector<256x256xbf16>, vector<2x256xf32> -> vector<2x256xf32>
    %865 = arith.addf %862, %864 : vector<2x256xf32>
    %cst_492 = arith.constant 1.000000e-01 : f32
    %866 = vector.broadcast %cst_492 : f32 to vector<2x256xf32>
    %867 = arith.mulf %866, %865 : vector<2x256xf32>
    %868 = arith.maximumf %865, %867 : vector<2x256xf32>
    %869 = arith.truncf %868 : vector<2x256xf32> to vector<2x256xbf16>
    %cst_493 = arith.constant dense<0.000000e+00> : vector<2x256xf32>
    %870 = tpu.matmul %869, %834, %cst_493 {dimension_numbers = #tpu.dot_dimension_numbers<[1], [0], [0], [1], [0, 0, 1, 1], [], []>} : vector<2x256xbf16>, vector<256x256xbf16>, vector<2x256xf32> -> vector<2x256xf32>
    %871 = vector.broadcast %835 : vector<1x256xf32> to vector<2x256xf32>
    %872 = arith.addf %870, %871 : vector<2x256xf32>
    %cst_494 = arith.constant 1.000000e-01 : f32
    %873 = vector.broadcast %cst_494 : f32 to vector<2x256xf32>
    %874 = arith.mulf %873, %872 : vector<2x256xf32>
    %875 = arith.maximumf %872, %874 : vector<2x256xf32>
    %cst_495 = arith.constant 0.106780127 : f32
    %876 = vector.broadcast %cst_495 : f32 to vector<2x256xf32>
    %877 = arith.mulf %876, %875 : vector<2x256xf32>
    %cst_496 = arith.constant 0.387641788 : f32
    %878 = vector.broadcast %cst_496 : f32 to vector<2x256xf32>
    %879 = arith.mulf %878, %858 : vector<2x256xf32>
    %880 = arith.addf %877, %879 : vector<2x256xf32>
    %cst_497 = arith.constant 7.000000e-02 : f32
    %881 = vector.broadcast %cst_497 : f32 to vector<1x256xf32>
    %882 = arith.mulf %881, %832 : vector<1x256xf32>
    %883 = vector.broadcast %882 : vector<1x256xf32> to vector<2x256xf32>
    %884 = arith.addf %831, %883 : vector<2x256xf32>
    %885 = arith.truncf %880 : vector<2x256xf32> to vector<2x256xbf16>
    %cst_498 = arith.constant dense<0.000000e+00> : vector<2x256xf32>
    %886 = tpu.matmul %885, %833, %cst_498 {dimension_numbers = #tpu.dot_dimension_numbers<[1], [0], [0], [1], [0, 0, 1, 1], [], []>} : vector<2x256xbf16>, vector<256x256xbf16>, vector<2x256xf32> -> vector<2x256xf32>
    %887 = arith.addf %884, %886 : vector<2x256xf32>
    %cst_499 = arith.constant 1.000000e-01 : f32
    %888 = vector.broadcast %cst_499 : f32 to vector<2x256xf32>
    %889 = arith.mulf %888, %887 : vector<2x256xf32>
    %890 = arith.maximumf %887, %889 : vector<2x256xf32>
    %891 = arith.truncf %890 : vector<2x256xf32> to vector<2x256xbf16>
    %cst_500 = arith.constant dense<0.000000e+00> : vector<2x256xf32>
    %892 = tpu.matmul %891, %834, %cst_500 {dimension_numbers = #tpu.dot_dimension_numbers<[1], [0], [0], [1], [0, 0, 1, 1], [], []>} : vector<2x256xbf16>, vector<256x256xbf16>, vector<2x256xf32> -> vector<2x256xf32>
    %893 = vector.broadcast %835 : vector<1x256xf32> to vector<2x256xf32>
    %894 = arith.addf %892, %893 : vector<2x256xf32>
    %cst_501 = arith.constant 1.000000e-01 : f32
    %895 = vector.broadcast %cst_501 : f32 to vector<2x256xf32>
    %896 = arith.mulf %895, %894 : vector<2x256xf32>
    %897 = arith.maximumf %894, %896 : vector<2x256xf32>
    %cst_502 = arith.constant 0.170135364 : f32
    %898 = vector.broadcast %cst_502 : f32 to vector<2x256xf32>
    %899 = arith.mulf %898, %897 : vector<2x256xf32>
    %cst_503 = arith.constant 0.514672577 : f32
    %900 = vector.broadcast %cst_503 : f32 to vector<2x256xf32>
    %901 = arith.mulf %900, %880 : vector<2x256xf32>
    %902 = arith.addf %899, %901 : vector<2x256xf32>
    %cst_504 = arith.constant 6.000000e-02 : f32
    %903 = vector.broadcast %cst_504 : f32 to vector<1x256xf32>
    %904 = arith.mulf %903, %832 : vector<1x256xf32>
    %905 = vector.broadcast %904 : vector<1x256xf32> to vector<2x256xf32>
    %906 = arith.addf %831, %905 : vector<2x256xf32>
    %907 = arith.truncf %902 : vector<2x256xf32> to vector<2x256xbf16>
    %cst_505 = arith.constant dense<0.000000e+00> : vector<2x256xf32>
    %908 = tpu.matmul %907, %833, %cst_505 {dimension_numbers = #tpu.dot_dimension_numbers<[1], [0], [0], [1], [0, 0, 1, 1], [], []>} : vector<2x256xbf16>, vector<256x256xbf16>, vector<2x256xf32> -> vector<2x256xf32>
    %909 = arith.addf %906, %908 : vector<2x256xf32>
    %cst_506 = arith.constant 1.000000e-01 : f32
    %910 = vector.broadcast %cst_506 : f32 to vector<2x256xf32>
    %911 = arith.mulf %910, %909 : vector<2x256xf32>
    %912 = arith.maximumf %909, %911 : vector<2x256xf32>
    %913 = arith.truncf %912 : vector<2x256xf32> to vector<2x256xbf16>
    %cst_507 = arith.constant dense<0.000000e+00> : vector<2x256xf32>
    %914 = tpu.matmul %913, %834, %cst_507 {dimension_numbers = #tpu.dot_dimension_numbers<[1], [0], [0], [1], [0, 0, 1, 1], [], []>} : vector<2x256xbf16>, vector<256x256xbf16>, vector<2x256xf32> -> vector<2x256xf32>
    %915 = vector.broadcast %835 : vector<1x256xf32> to vector<2x256xf32>
    %916 = arith.addf %914, %915 : vector<2x256xf32>
    %cst_508 = arith.constant 1.000000e-01 : f32
    %917 = vector.broadcast %cst_508 : f32 to vector<2x256xf32>
    %918 = arith.mulf %917, %916 : vector<2x256xf32>
    %919 = arith.maximumf %916, %918 : vector<2x256xf32>
    %cst_509 = arith.constant 0.229792982 : f32
    %920 = vector.broadcast %cst_509 : f32 to vector<2x256xf32>
    %921 = arith.mulf %920, %919 : vector<2x256xf32>
    %cst_510 = arith.constant 0.585574627 : f32
    %922 = vector.broadcast %cst_510 : f32 to vector<2x256xf32>
    %923 = arith.mulf %922, %902 : vector<2x256xf32>
    %924 = arith.addf %921, %923 : vector<2x256xf32>
    %cst_511 = arith.constant 5.000000e-02 : f32
    %925 = vector.broadcast %cst_511 : f32 to vector<1x256xf32>
    %926 = arith.mulf %925, %832 : vector<1x256xf32>
    %927 = vector.broadcast %926 : vector<1x256xf32> to vector<2x256xf32>
    %928 = arith.addf %831, %927 : vector<2x256xf32>
    %929 = arith.truncf %924 : vector<2x256xf32> to vector<2x256xbf16>
    %cst_512 = arith.constant dense<0.000000e+00> : vector<2x256xf32>
    %930 = tpu.matmul %929, %833, %cst_512 {dimension_numbers = #tpu.dot_dimension_numbers<[1], [0], [0], [1], [0, 0, 1, 1], [], []>} : vector<2x256xbf16>, vector<256x256xbf16>, vector<2x256xf32> -> vector<2x256xf32>
    %931 = arith.addf %928, %930 : vector<2x256xf32>
    %cst_513 = arith.constant 1.000000e-01 : f32
    %932 = vector.broadcast %cst_513 : f32 to vector<2x256xf32>
    %933 = arith.mulf %932, %931 : vector<2x256xf32>
    %934 = arith.maximumf %931, %933 : vector<2x256xf32>
    %935 = arith.truncf %934 : vector<2x256xf32> to vector<2x256xbf16>
    %cst_514 = arith.constant dense<0.000000e+00> : vector<2x256xf32>
    %936 = tpu.matmul %935, %834, %cst_514 {dimension_numbers = #tpu.dot_dimension_numbers<[1], [0], [0], [1], [0, 0, 1, 1], [], []>} : vector<2x256xbf16>, vector<256x256xbf16>, vector<2x256xf32> -> vector<2x256xf32>
    %937 = vector.broadcast %835 : vector<1x256xf32> to vector<2x256xf32>
    %938 = arith.addf %936, %937 : vector<2x256xf32>
    %cst_515 = arith.constant 1.000000e-01 : f32
    %939 = vector.broadcast %cst_515 : f32 to vector<2x256xf32>
    %940 = arith.mulf %939, %938 : vector<2x256xf32>
    %941 = arith.maximumf %938, %940 : vector<2x256xf32>
    %cst_516 = arith.constant 0.28329429 : f32
    %942 = vector.broadcast %cst_516 : f32 to vector<2x256xf32>
    %943 = arith.mulf %942, %941 : vector<2x256xf32>
    %cst_517 = arith.constant 0.616555572 : f32
    %944 = vector.broadcast %cst_517 : f32 to vector<2x256xf32>
    %945 = arith.mulf %944, %924 : vector<2x256xf32>
    %946 = arith.addf %943, %945 : vector<2x256xf32>
    %cst_518 = arith.constant 4.000000e-02 : f32
    %947 = vector.broadcast %cst_518 : f32 to vector<1x256xf32>
    %948 = arith.mulf %947, %832 : vector<1x256xf32>
    %949 = vector.broadcast %948 : vector<1x256xf32> to vector<2x256xf32>
    %950 = arith.addf %831, %949 : vector<2x256xf32>
    %951 = arith.truncf %946 : vector<2x256xf32> to vector<2x256xbf16>
    %cst_519 = arith.constant dense<0.000000e+00> : vector<2x256xf32>
    %952 = tpu.matmul %951, %833, %cst_519 {dimension_numbers = #tpu.dot_dimension_numbers<[1], [0], [0], [1], [0, 0, 1, 1], [], []>} : vector<2x256xbf16>, vector<256x256xbf16>, vector<2x256xf32> -> vector<2x256xf32>
    %953 = arith.addf %950, %952 : vector<2x256xf32>
    %cst_520 = arith.constant 1.000000e-01 : f32
    %954 = vector.broadcast %cst_520 : f32 to vector<2x256xf32>
    %955 = arith.mulf %954, %953 : vector<2x256xf32>
    %956 = arith.maximumf %953, %955 : vector<2x256xf32>
    %957 = arith.truncf %956 : vector<2x256xf32> to vector<2x256xbf16>
    %cst_521 = arith.constant dense<0.000000e+00> : vector<2x256xf32>
    %958 = tpu.matmul %957, %834, %cst_521 {dimension_numbers = #tpu.dot_dimension_numbers<[1], [0], [0], [1], [0, 0, 1, 1], [], []>} : vector<2x256xbf16>, vector<256x256xbf16>, vector<2x256xf32> -> vector<2x256xf32>
    %959 = vector.broadcast %835 : vector<1x256xf32> to vector<2x256xf32>
    %960 = arith.addf %958, %959 : vector<2x256xf32>
    %cst_522 = arith.constant 1.000000e-01 : f32
    %961 = vector.broadcast %cst_522 : f32 to vector<2x256xf32>
    %962 = arith.mulf %961, %960 : vector<2x256xf32>
    %963 = arith.maximumf %960, %962 : vector<2x256xf32>
    %cst_523 = arith.constant 0.334492654 : f32
    %964 = vector.broadcast %cst_523 : f32 to vector<2x256xf32>
    %965 = arith.mulf %964, %963 : vector<2x256xf32>
    %cst_524 = arith.constant 0.61573106 : f32
    %966 = vector.broadcast %cst_524 : f32 to vector<2x256xf32>
    %967 = arith.mulf %966, %946 : vector<2x256xf32>
    %968 = arith.addf %965, %967 : vector<2x256xf32>
    %cst_525 = arith.constant 3.000000e-02 : f32
    %969 = vector.broadcast %cst_525 : f32 to vector<1x256xf32>
    %970 = arith.mulf %969, %832 : vector<1x256xf32>
    %971 = vector.broadcast %970 : vector<1x256xf32> to vector<2x256xf32>
    %972 = arith.addf %831, %971 : vector<2x256xf32>
    %973 = arith.truncf %968 : vector<2x256xf32> to vector<2x256xbf16>
    %cst_526 = arith.constant dense<0.000000e+00> : vector<2x256xf32>
    %974 = tpu.matmul %973, %833, %cst_526 {dimension_numbers = #tpu.dot_dimension_numbers<[1], [0], [0], [1], [0, 0, 1, 1], [], []>} : vector<2x256xbf16>, vector<256x256xbf16>, vector<2x256xf32> -> vector<2x256xf32>
    %975 = arith.addf %972, %974 : vector<2x256xf32>
    %cst_527 = arith.constant 1.000000e-01 : f32
    %976 = vector.broadcast %cst_527 : f32 to vector<2x256xf32>
    %977 = arith.mulf %976, %975 : vector<2x256xf32>
    %978 = arith.maximumf %975, %977 : vector<2x256xf32>
    %979 = arith.truncf %978 : vector<2x256xf32> to vector<2x256xbf16>
    %cst_528 = arith.constant dense<0.000000e+00> : vector<2x256xf32>
    %980 = tpu.matmul %979, %834, %cst_528 {dimension_numbers = #tpu.dot_dimension_numbers<[1], [0], [0], [1], [0, 0, 1, 1], [], []>} : vector<2x256xbf16>, vector<256x256xbf16>, vector<2x256xf32> -> vector<2x256xf32>
    %981 = vector.broadcast %835 : vector<1x256xf32> to vector<2x256xf32>
    %982 = arith.addf %980, %981 : vector<2x256xf32>
    %cst_529 = arith.constant 1.000000e-01 : f32
    %983 = vector.broadcast %cst_529 : f32 to vector<2x256xf32>
    %984 = arith.mulf %983, %982 : vector<2x256xf32>
    %985 = arith.maximumf %982, %984 : vector<2x256xf32>
    %cst_530 = arith.constant 0.391904593 : f32
    %986 = vector.broadcast %cst_530 : f32 to vector<2x256xf32>
    %987 = arith.mulf %986, %985 : vector<2x256xf32>
    %cst_531 = arith.constant 0.58595854 : f32
    %988 = vector.broadcast %cst_531 : f32 to vector<2x256xf32>
    %989 = arith.mulf %988, %968 : vector<2x256xf32>
    %990 = arith.addf %987, %989 : vector<2x256xf32>
    %cst_532 = arith.constant 2.000000e-02 : f32
    %991 = vector.broadcast %cst_532 : f32 to vector<1x256xf32>
    %992 = arith.mulf %991, %832 : vector<1x256xf32>
    %993 = vector.broadcast %992 : vector<1x256xf32> to vector<2x256xf32>
    %994 = arith.addf %831, %993 : vector<2x256xf32>
    %995 = arith.truncf %990 : vector<2x256xf32> to vector<2x256xbf16>
    %cst_533 = arith.constant dense<0.000000e+00> : vector<2x256xf32>
    %996 = tpu.matmul %995, %833, %cst_533 {dimension_numbers = #tpu.dot_dimension_numbers<[1], [0], [0], [1], [0, 0, 1, 1], [], []>} : vector<2x256xbf16>, vector<256x256xbf16>, vector<2x256xf32> -> vector<2x256xf32>
    %997 = arith.addf %994, %996 : vector<2x256xf32>
    %cst_534 = arith.constant 1.000000e-01 : f32
    %998 = vector.broadcast %cst_534 : f32 to vector<2x256xf32>
    %999 = arith.mulf %998, %997 : vector<2x256xf32>
    %1000 = arith.maximumf %997, %999 : vector<2x256xf32>
    %1001 = arith.truncf %1000 : vector<2x256xf32> to vector<2x256xbf16>
    %cst_535 = arith.constant dense<0.000000e+00> : vector<2x256xf32>
    %1002 = tpu.matmul %1001, %834, %cst_535 {dimension_numbers = #tpu.dot_dimension_numbers<[1], [0], [0], [1], [0, 0, 1, 1], [], []>} : vector<2x256xbf16>, vector<256x256xbf16>, vector<2x256xf32> -> vector<2x256xf32>
    %1003 = vector.broadcast %835 : vector<1x256xf32> to vector<2x256xf32>
    %1004 = arith.addf %1002, %1003 : vector<2x256xf32>
    %cst_536 = arith.constant 1.000000e-01 : f32
    %1005 = vector.broadcast %cst_536 : f32 to vector<2x256xf32>
    %1006 = arith.mulf %1005, %1004 : vector<2x256xf32>
    %1007 = arith.maximumf %1004, %1006 : vector<2x256xf32>
    %cst_537 = arith.constant 0.47102946 : f32
    %1008 = vector.broadcast %cst_537 : f32 to vector<2x256xf32>
    %1009 = arith.mulf %1008, %1007 : vector<2x256xf32>
    %cst_538 = arith.constant 0.520665467 : f32
    %1010 = vector.broadcast %cst_538 : f32 to vector<2x256xf32>
    %1011 = arith.mulf %1010, %990 : vector<2x256xf32>
    %1012 = arith.addf %1009, %1011 : vector<2x256xf32>
    %cst_539 = arith.constant 0.00999999977 : f32
    %1013 = vector.broadcast %cst_539 : f32 to vector<1x256xf32>
    %1014 = arith.mulf %1013, %832 : vector<1x256xf32>
    %1015 = vector.broadcast %1014 : vector<1x256xf32> to vector<2x256xf32>
    %1016 = arith.addf %831, %1015 : vector<2x256xf32>
    %1017 = arith.truncf %1012 : vector<2x256xf32> to vector<2x256xbf16>
    %cst_540 = arith.constant dense<0.000000e+00> : vector<2x256xf32>
    %1018 = tpu.matmul %1017, %833, %cst_540 {dimension_numbers = #tpu.dot_dimension_numbers<[1], [0], [0], [1], [0, 0, 1, 1], [], []>} : vector<2x256xbf16>, vector<256x256xbf16>, vector<2x256xf32> -> vector<2x256xf32>
    %1019 = arith.addf %1016, %1018 : vector<2x256xf32>
    %cst_541 = arith.constant 1.000000e-01 : f32
    %1020 = vector.broadcast %cst_541 : f32 to vector<2x256xf32>
    %1021 = arith.mulf %1020, %1019 : vector<2x256xf32>
    %1022 = arith.maximumf %1019, %1021 : vector<2x256xf32>
    %1023 = arith.truncf %1022 : vector<2x256xf32> to vector<2x256xbf16>
    %cst_542 = arith.constant dense<0.000000e+00> : vector<2x256xf32>
    %1024 = tpu.matmul %1023, %834, %cst_542 {dimension_numbers = #tpu.dot_dimension_numbers<[1], [0], [0], [1], [0, 0, 1, 1], [], []>} : vector<2x256xbf16>, vector<256x256xbf16>, vector<2x256xf32> -> vector<2x256xf32>
    %1025 = vector.broadcast %835 : vector<1x256xf32> to vector<2x256xf32>
    %1026 = arith.addf %1024, %1025 : vector<2x256xf32>
    %cst_543 = arith.constant 1.000000e-01 : f32
    %1027 = vector.broadcast %cst_543 : f32 to vector<2x256xf32>
    %1028 = arith.mulf %1027, %1026 : vector<2x256xf32>
    %1029 = arith.maximumf %1026, %1028 : vector<2x256xf32>
    %cst_544 = arith.constant 0.61128503 : f32
    %1030 = vector.broadcast %cst_544 : f32 to vector<2x256xf32>
    %1031 = arith.mulf %1030, %1029 : vector<2x256xf32>
    %cst_545 = arith.constant 0.386526167 : f32
    %1032 = vector.broadcast %cst_545 : f32 to vector<2x256xf32>
    %1033 = arith.mulf %1032, %1012 : vector<2x256xf32>
    %1034 = arith.addf %1031, %1033 : vector<2x256xf32>
    %cst_546 = arith.constant 0.000000e+00 : f32
    %1035 = vector.broadcast %cst_546 : f32 to vector<1x256xf32>
    %1036 = arith.mulf %1035, %832 : vector<1x256xf32>
    %1037 = vector.broadcast %1036 : vector<1x256xf32> to vector<2x256xf32>
    %1038 = arith.addf %831, %1037 : vector<2x256xf32>
    %1039 = arith.truncf %1034 : vector<2x256xf32> to vector<2x256xbf16>
    %cst_547 = arith.constant dense<0.000000e+00> : vector<2x256xf32>
    %1040 = tpu.matmul %1039, %833, %cst_547 {dimension_numbers = #tpu.dot_dimension_numbers<[1], [0], [0], [1], [0, 0, 1, 1], [], []>} : vector<2x256xbf16>, vector<256x256xbf16>, vector<2x256xf32> -> vector<2x256xf32>
    %1041 = arith.addf %1038, %1040 : vector<2x256xf32>
    %cst_548 = arith.constant 1.000000e-01 : f32
    %1042 = vector.broadcast %cst_548 : f32 to vector<2x256xf32>
    %1043 = arith.mulf %1042, %1041 : vector<2x256xf32>
    %1044 = arith.maximumf %1041, %1043 : vector<2x256xf32>
    %1045 = arith.truncf %1044 : vector<2x256xf32> to vector<2x256xbf16>
    %cst_549 = arith.constant dense<0.000000e+00> : vector<2x256xf32>
    %1046 = tpu.matmul %1045, %834, %cst_549 {dimension_numbers = #tpu.dot_dimension_numbers<[1], [0], [0], [1], [0, 0, 1, 1], [], []>} : vector<2x256xbf16>, vector<256x256xbf16>, vector<2x256xf32> -> vector<2x256xf32>
    %1047 = vector.broadcast %835 : vector<1x256xf32> to vector<2x256xf32>
    %1048 = arith.addf %1046, %1047 : vector<2x256xf32>
    %cst_550 = arith.constant 1.000000e-01 : f32
    %1049 = vector.broadcast %cst_550 : f32 to vector<2x256xf32>
    %1050 = arith.mulf %1049, %1048 : vector<2x256xf32>
    %1051 = arith.maximumf %1048, %1050 : vector<2x256xf32>
    %cst_551 = arith.constant 1.000000e+00 : f32
    %1052 = vector.broadcast %cst_551 : f32 to vector<2x256xf32>
    %1053 = arith.mulf %1052, %1051 : vector<2x256xf32>
    %cst_552 = arith.constant 0.000000e+00 : f32
    %1054 = vector.broadcast %cst_552 : f32 to vector<2x256xf32>
    %1055 = arith.mulf %1054, %1034 : vector<2x256xf32>
    %1056 = arith.addf %1053, %1055 : vector<2x256xf32>
    %c0_553 = arith.constant 0 : index
    %c0_554 = arith.constant 0 : index
    %1057 = vector.load %arg23[%c0_553, %c0_554] : memref<2x256xf32, #tpu.memory_space<vmem>>, vector<2x256xf32>
    tpu.vector_store %arg23[%c0_553, %c0_554], %1056 {strides = array<i32>} : memref<2x256xf32, #tpu.memory_space<vmem>>, vector<2x256xf32>,
    return
  }
}

</mosaic_0001>

<llo_original>
// kernel: _lambda_.1
$region0: #{_lambda_.1}
  #allocation0 [shape = 'u32[]', space=smem, size = 0x4, offset = 0x4, fixed_abs, tag = 'smem constant byte address 0x4 - core index']
  #allocation1 [shape = 'u32[144,128]{1,0:T(1,128)}', space=vmem, size = 0x12000, scoped, tag = 'internal scratch']
  %s0 = inlined_call_operand.vmem [shape: bf16[32,144], index: 0, kind: input, shape index: {}]
  %s1 = inlined_call_operand.vmem [shape: f32[9,32,1], index: 1, kind: input, shape index: {}]
  %s2 = inlined_call_operand.vmem [shape: bf16[144,576], index: 2, kind: input, shape index: {}]
  %s3 = inlined_call_operand.vmem [shape: f32[1,64], index: 3, kind: input, shape index: {}]
  %s4 = inlined_call_operand.vmem [shape: bf16[8,64,576], index: 4, kind: input, shape index: {}]
  %s5 = inlined_call_operand.vmem [shape: f32[8,1,64], index: 5, kind: input, shape index: {}]
  %s6 = inlined_call_operand.vmem [shape: bf16[64,1152], index: 6, kind: input, shape index: {}]
  %s7 = inlined_call_operand.vmem [shape: f32[1,128], index: 7, kind: input, shape index: {}]
  %s8 = inlined_call_operand.vmem [shape: bf16[128,1152], index: 8, kind: input, shape index: {}]
  %s9 = inlined_call_operand.vmem [shape: f32[1,128], index: 9, kind: input, shape index: {}]
  %s10 = inlined_call_operand.vmem [shape: bf16[128,2304], index: 10, kind: input, shape index: {}]
  %s11 = inlined_call_operand.vmem [shape: f32[1,256], index: 11, kind: input, shape index: {}]
  %s12 = inlined_call_operand.vmem [shape: bf16[256,256], index: 12, kind: input, shape index: {}]
  %s13 = inlined_call_operand.vmem [shape: f32[1,256], index: 13, kind: input, shape index: {}]
  %s14 = inlined_call_operand.vmem [shape: bf16[256,256], index: 14, kind: input, shape index: {}]
  %s15 = inlined_call_operand.vmem [shape: f32[1,256], index: 15, kind: input, shape index: {}]
  %s16 = inlined_call_operand.vmem [shape: bf16[256,256], index: 16, kind: input, shape index: {}]
  %s17 = inlined_call_operand.vmem [shape: f32[1,256], index: 17, kind: input, shape index: {}]
  %s18 = inlined_call_operand.vmem [shape: bf16[256,256], index: 18, kind: input, shape index: {}]
  %s19 = inlined_call_operand.vmem [shape: f32[1,256], index: 19, kind: input, shape index: {}]
  %s20 = inlined_call_operand.vmem [shape: bf16[256,256], index: 20, kind: input, shape index: {}]
  %s21 = inlined_call_operand.vmem [shape: f32[1,256], index: 21, kind: input, shape index: {}]
  %s22 = inlined_call_operand.vmem [shape: f32[2,256], index: 22, kind: input, shape index: {}]
  %s23 = inlined_call_operand.hbm [shape: f32[2,256], index: 23, kind: output, shape index: {}]
  %s24 = sld [smem:[#allocation0]]
  $region102: #{_lambda_.1} parent=0
    _
  %s26 = ssub.s32 1, %s24
  %s27 = scalar_select 0, %s26, %s24
  $region1: #{_lambda_.1} parent=0
    #allocation2 [shape = 'u8[2048]{0}', space=vmem, size = 0x800, scoped, tag = 'output window, operand 0, single buffered']
    #allocation3 [shape = 's32[1]{0}', space=sflag, size = 0x4, scoped, tag = 'scoped memory for _lambda_.1']
    %28 = vsyncpa [#allocation3], 0
    // Predicated region
    $region2: #{_lambda_.1} parent=1 // pred_check
      _
    $region3: #{_lambda_.1} parent=1 // pred_check_branch
      %30 = sbr.rel (0) target = $region5
    $region4: #{_lambda_.1} parent=1 // pred_region
      _
    $region5: #{_lambda_.1} parent=1 // pred_fallthru
      _
    // Predicated region
    $region6: #{_lambda_.1} parent=1 // pred_check
      _
    $region7: #{_lambda_.1} parent=1 // pred_check_branch
      %32 = sbr.rel (0) target = $region9
    $region8: #{_lambda_.1} parent=1 // pred_region
      _
    $region9: #{_lambda_.1} parent=1 // pred_fallthru
      _
    // Predicated region
    $region10: #{_lambda_.1} parent=1 // pred_check
      _
    $region11: #{_lambda_.1} parent=1 // pred_check_branch
      %34 = sbr.rel (0) target = $region13
    $region12: #{_lambda_.1} parent=1 // pred_region
      _
    $region13: #{_lambda_.1} parent=1 // pred_fallthru
      _
    // Predicated region
    $region14: #{_lambda_.1} parent=1 // pred_check
      _
    $region15: #{_lambda_.1} parent=1 // pred_check_branch
      %36 = sbr.rel (0) target = $region17
    $region16: #{_lambda_.1} parent=1 // pred_region
      _
    $region17: #{_lambda_.1} parent=1 // pred_fallthru
      _
    // Predicated region
    $region18: #{_lambda_.1} parent=1 // pred_check
      _
    $region19: #{_lambda_.1} parent=1 // pred_check_branch
      %38 = sbr.rel (0) target = $region21
    $region20: #{_lambda_.1} parent=1 // pred_region
      _
    $region21: #{_lambda_.1} parent=1 // pred_fallthru
      _
    // Predicated region
    $region22: #{_lambda_.1} parent=1 // pred_check
      _
    $region23: #{_lambda_.1} parent=1 // pred_check_branch
      %40 = sbr.rel (0) target = $region25
    $region24: #{_lambda_.1} parent=1 // pred_region
      _
    $region25: #{_lambda_.1} parent=1 // pred_fallthru
      _
    // Predicated region
    $region26: #{_lambda_.1} parent=1 // pred_check
      _
    $region27: #{_lambda_.1} parent=1 // pred_check_branch
      %42 = sbr.rel (0) target = $region29
    $region28: #{_lambda_.1} parent=1 // pred_region
      _
    $region29: #{_lambda_.1} parent=1 // pred_fallthru
      _
    // Predicated region
    $region30: #{_lambda_.1} parent=1 // pred_check
      _
    $region31: #{_lambda_.1} parent=1 // pred_check_branch
      %44 = sbr.rel (0) target = $region33
    $region32: #{_lambda_.1} parent=1 // pred_region
      _
    $region33: #{_lambda_.1} parent=1 // pred_fallthru
      _
    // Predicated region
    $region34: #{_lambda_.1} parent=1 // pred_check
      _
    $region35: #{_lambda_.1} parent=1 // pred_check_branch
      %46 = sbr.rel (0) target = $region37
    $region36: #{_lambda_.1} parent=1 // pred_region
      _
    $region37: #{_lambda_.1} parent=1 // pred_fallthru
      _
    // Predicated region
    $region38: #{_lambda_.1} parent=1 // pred_check
      _
    $region39: #{_lambda_.1} parent=1 // pred_check_branch
      %48 = sbr.rel (0) target = $region41
    $region40: #{_lambda_.1} parent=1 // pred_region
      _
    $region41: #{_lambda_.1} parent=1 // pred_fallthru
      _
    // Predicated region
    $region42: #{_lambda_.1} parent=1 // pred_check
      _
    $region43: #{_lambda_.1} parent=1 // pred_check_branch
      %50 = sbr.rel (0) target = $region45
    $region44: #{_lambda_.1} parent=1 // pred_region
      _
    $region45: #{_lambda_.1} parent=1 // pred_fallthru
      _
    // Predicated region
    $region46: #{_lambda_.1} parent=1 // pred_check
      _
    $region47: #{_lambda_.1} parent=1 // pred_check_branch
      %52 = sbr.rel (0) target = $region49
    $region48: #{_lambda_.1} parent=1 // pred_region
      _
    $region49: #{_lambda_.1} parent=1 // pred_fallthru
      _
    // Predicated region
    $region50: #{_lambda_.1} parent=1 // pred_check
      _
    $region51: #{_lambda_.1} parent=1 // pred_check_branch
      %54 = sbr.rel (0) target = $region53
    $region52: #{_lambda_.1} parent=1 // pred_region
      _
    $region53: #{_lambda_.1} parent=1 // pred_fallthru
      _
    // Predicated region
    $region54: #{_lambda_.1} parent=1 // pred_check
      _
    $region55: #{_lambda_.1} parent=1 // pred_check_branch
      %56 = sbr.rel (0) target = $region57
    $region56: #{_lambda_.1} parent=1 // pred_region
      _
    $region57: #{_lambda_.1} parent=1 // pred_fallthru
      _
    // Predicated region
    $region58: #{_lambda_.1} parent=1 // pred_check
      _
    $region59: #{_lambda_.1} parent=1 // pred_check_branch
      %58 = sbr.rel (0) target = $region61
    $region60: #{_lambda_.1} parent=1 // pred_region
      _
    $region61: #{_lambda_.1} parent=1 // pred_fallthru
      _
    // Predicated region
    $region62: #{_lambda_.1} parent=1 // pred_check
      _
    $region63: #{_lambda_.1} parent=1 // pred_check_branch
      %60 = sbr.rel (0) target = $region65
    $region64: #{_lambda_.1} parent=1 // pred_region
      _
    $region65: #{_lambda_.1} parent=1 // pred_fallthru
      _
    // Predicated region
    $region66: #{_lambda_.1} parent=1 // pred_check
      _
    $region67: #{_lambda_.1} parent=1 // pred_check_branch
      %62 = sbr.rel (0) target = $region69
    $region68: #{_lambda_.1} parent=1 // pred_region
      _
    $region69: #{_lambda_.1} parent=1 // pred_fallthru
      _
    // Predicated region
    $region70: #{_lambda_.1} parent=1 // pred_check
      _
    $region71: #{_lambda_.1} parent=1 // pred_check_branch
      %64 = sbr.rel (0) target = $region73
    $region72: #{_lambda_.1} parent=1 // pred_region
      _
    $region73: #{_lambda_.1} parent=1 // pred_fallthru
      _
    // Predicated region
    $region74: #{_lambda_.1} parent=1 // pred_check
      _
    $region75: #{_lambda_.1} parent=1 // pred_check_branch
      %66 = sbr.rel (0) target = $region77
    $region76: #{_lambda_.1} parent=1 // pred_region
      _
    $region77: #{_lambda_.1} parent=1 // pred_fallthru
      _
    // Predicated region
    $region78: #{_lambda_.1} parent=1 // pred_check
      _
    $region79: #{_lambda_.1} parent=1 // pred_check_branch
      %68 = sbr.rel (0) target = $region81
    $region80: #{_lambda_.1} parent=1 // pred_region
      _
    $region81: #{_lambda_.1} parent=1 // pred_fallthru
      _
    // Predicated region
    $region82: #{_lambda_.1} parent=1 // pred_check
      _
    $region83: #{_lambda_.1} parent=1 // pred_check_branch
      %70 = sbr.rel (0) target = $region85
    $region84: #{_lambda_.1} parent=1 // pred_region
      _
    $region85: #{_lambda_.1} parent=1 // pred_fallthru
      _
    // Predicated region
    $region86: #{_lambda_.1} parent=1 // pred_check
      _
    $region87: #{_lambda_.1} parent=1 // pred_check_branch
      %72 = sbr.rel (0) target = $region89
    $region88: #{_lambda_.1} parent=1 // pred_region
      _
    $region89: #{_lambda_.1} parent=1 // pred_fallthru
      _
    // Predicated region
    $region90: #{_lambda_.1} parent=1 // pred_check
      _
    $region91: #{_lambda_.1} parent=1 // pred_check_branch
      %74 = sbr.rel (0) target = $region93
    $region92: #{_lambda_.1} parent=1 // pred_region
      _
    $region93: #{_lambda_.1} parent=1 // pred_fallthru
      _
    %v76 = vld [vmem:[%s0] sm:$0xff]
    %v77 = vld [vmem:[%s0 + $0x8] sm:$0xff]
    %v78 = vld [vmem:[%s0 + $0x10] sm:$0xff]
    %v79 = vld [vmem:[%s0 + $0x18] sm:$0xff]
    %v80 = vld [vmem:[%s2] sm:$0xff]
    %v81 = vld [vmem:[%s2 + $0x8] sm:$0xff]
    %v82 = vld [vmem:[%s2 + $0x10] sm:$0xf]
    %v83 = vld [vmem:[%s2 + $0x14] sm:$0xff]
    %v84 = vld [vmem:[%s2 + $0x1c] sm:$0xff]
    %v85 = vld [vmem:[%s2 + $0x24] sm:$0xf]
    %v86 = vld [vmem:[%s2 + $0x28] sm:$0xff]
    %v87 = vld [vmem:[%s2 + $0x30] sm:$0xff]
    %v88 = vld [vmem:[%s2 + $0x38] sm:$0xf]
    %v89 = vld [vmem:[%s2 + $0x3c] sm:$0xff]
    %v90 = vld [vmem:[%s2 + $0x44] sm:$0xff]
    %v91 = vld [vmem:[%s2 + $0x4c] sm:$0xf]
    %v92 = vld [vmem:[%s2 + $0x50] sm:$0xff]
    %v93 = vld [vmem:[%s2 + $0x58] sm:$0xff]
    %v94 = vld [vmem:[%s2 + $0x60] sm:$0xf]
    %v95 = vld [vmem:[%s2 + $0x64] sm:$0xff]
    %v96 = vld [vmem:[%s2 + $0x6c] sm:$0xff]
    %v97 = vld [vmem:[%s2 + $0x74] sm:$0xf]
    %v98 = vld [vmem:[%s2 + $0x78] sm:$0xff]
    %v99 = vld [vmem:[%s2 + $0x80] sm:$0xff]
    %v100 = vld [vmem:[%s2 + $0x88] sm:$0xf]
    %v101 = vld [vmem:[%s2 + $0x8c] sm:$0xff]
    %v102 = vld [vmem:[%s2 + $0x94] sm:$0xff]
    %v103 = vld [vmem:[%s2 + $0x9c] sm:$0xf]
    %v104 = vld [vmem:[%s2 + $0xa0] sm:$0xff]
    %v105 = vld [vmem:[%s2 + $0xa8] sm:$0xff]
    %v106 = vld [vmem:[%s2 + $0xb0] sm:$0xf]
    %v107 = vld [vmem:[%s2 + $0xb4] sm:$0xff]
    %v108 = vld [vmem:[%s2 + $0xbc] sm:$0xff]
    %v109 = vld [vmem:[%s2 + $0xc4] sm:$0xf]
    %v110 = vld [vmem:[%s2 + $0xc8] sm:$0xff]
    %v111 = vld [vmem:[%s2 + $0xd0] sm:$0xff]
    %v112 = vld [vmem:[%s2 + $0xd8] sm:$0xf]
    %v113 = vld [vmem:[%s2 + $0xdc] sm:$0xff]
    %v114 = vld [vmem:[%s2 + $0xe4] sm:$0xff]
    %v115 = vld [vmem:[%s2 + $0xec] sm:$0xf]
    %v116 = vld [vmem:[%s2 + $0xf0] sm:$0xff]
    %v117 = vld [vmem:[%s2 + $0xf8] sm:$0xff]
    %v118 = vld [vmem:[%s2 + $0x100] sm:$0xf]
    %v119 = vld [vmem:[%s2 + $0x104] sm:$0xff]
    %v120 = vld [vmem:[%s2 + $0x10c] sm:$0xff]
    %v121 = vld [vmem:[%s2 + $0x114] sm:$0xf]
    %v122 = vld [vmem:[%s2 + $0x118] sm:$0xff]
    %v123 = vld [vmem:[%s2 + $0x120] sm:$0xff]
    %v124 = vld [vmem:[%s2 + $0x128] sm:$0xf]
    %v125 = vld [vmem:[%s2 + $0x12c] sm:$0xff]
    %v126 = vld [vmem:[%s2 + $0x134] sm:$0xff]
    %v127 = vld [vmem:[%s2 + $0x13c] sm:$0xf]
    %v128 = vld [vmem:[%s2 + $0x140] sm:$0xff]
    %v129 = vld [vmem:[%s2 + $0x148] sm:$0xff]
    %v130 = vld [vmem:[%s2 + $0x150] sm:$0xf]
    %v131 = vld [vmem:[%s2 + $0x154] sm:$0xff]
    %v132 = vld [vmem:[%s2 + $0x15c] sm:$0xff]
    %v133 = vld [vmem:[%s2 + $0x164] sm:$0xf]
    %v134 = vld [vmem:[%s3] sm:$0x1]
    %v139 = vunpack.c.l.b16 %v76
    %v140 = vunpack.c.h.b16 %v76
    %v141 = vunpack.c.l.b16 %v77
    %v142 = vunpack.c.h.b16 %v77
    %v143 = vunpack.c.l.b16 %v78
    %v144 = vunpack.c.h.b16 %v78
    %v145 = vunpack.c.l.b16 %v79
    %v146 = vunpack.c.h.b16 %v79
    %v147 = vpack.c.b16 %v141, %v139
    %v148 = vpack.c.b16 %v142, %v140
    %v149 = vpack.c.b16 %v145, %v143
    %v150 = vpack.c.b16 %v146, %v144
    %v207 = vunpack.c.l.b16 %v80
    %v208 = vunpack.c.h.b16 %v80
    %v209 = vunpack.c.l.b16 %v81
    %v210 = vunpack.c.h.b16 %v81
    %v211 = vunpack.c.l.b16 %v82
    %v212 = vunpack.c.l.b16 %v83
    %v213 = vunpack.c.h.b16 %v83
    %v214 = vunpack.c.l.b16 %v84
    %v215 = vunpack.c.h.b16 %v84
    %v216 = vunpack.c.l.b16 %v85
    %v217 = vunpack.c.l.b16 %v86
    %v218 = vunpack.c.h.b16 %v86
    %v219 = vunpack.c.l.b16 %v87
    %v220 = vunpack.c.h.b16 %v87
    %v221 = vunpack.c.l.b16 %v88
    %v222 = vunpack.c.l.b16 %v89
    %v223 = vunpack.c.h.b16 %v89
    %v224 = vunpack.c.l.b16 %v90
    %v225 = vunpack.c.h.b16 %v90
    %v226 = vunpack.c.l.b16 %v91
    %v227 = vunpack.c.l.b16 %v92
    %v228 = vunpack.c.h.b16 %v92
    %v229 = vunpack.c.l.b16 %v93
    %v230 = vunpack.c.h.b16 %v93
    %v231 = vunpack.c.l.b16 %v94
    %v232 = vunpack.c.l.b16 %v95
    %v233 = vunpack.c.h.b16 %v95
    %v234 = vunpack.c.l.b16 %v96
    %v235 = vunpack.c.h.b16 %v96
    %v236 = vunpack.c.l.b16 %v97
    %v237 = vunpack.c.l.b16 %v98
    %v238 = vunpack.c.h.b16 %v98
    %v239 = vunpack.c.l.b16 %v99
    %v240 = vunpack.c.h.b16 %v99
    %v241 = vunpack.c.l.b16 %v100
    %v242 = vunpack.c.l.b16 %v101
    %v243 = vunpack.c.h.b16 %v101
    %v244 = vunpack.c.l.b16 %v102
    %v245 = vunpack.c.h.b16 %v102
    %v246 = vunpack.c.l.b16 %v103
    %v247 = vunpack.c.l.b16 %v104
    %v248 = vunpack.c.h.b16 %v104
    %v249 = vunpack.c.l.b16 %v105
    %v250 = vunpack.c.h.b16 %v105
    %v251 = vunpack.c.l.b16 %v106
    %v252 = vunpack.c.l.b16 %v107
    %v253 = vunpack.c.h.b16 %v107
    %v254 = vunpack.c.l.b16 %v108
    %v255 = vunpack.c.h.b16 %v108
    %v256 = vunpack.c.l.b16 %v109
    %v257 = vunpack.c.l.b16 %v110
    %v258 = vunpack.c.h.b16 %v110
    %v259 = vunpack.c.l.b16 %v111
    %v260 = vunpack.c.h.b16 %v111
    %v261 = vunpack.c.l.b16 %v112
    %v262 = vunpack.c.l.b16 %v113
    %v263 = vunpack.c.h.b16 %v113
    %v264 = vunpack.c.l.b16 %v114
    %v265 = vunpack.c.h.b16 %v114
    %v266 = vunpack.c.l.b16 %v115
    %v267 = vunpack.c.l.b16 %v116
    %v268 = vunpack.c.h.b16 %v116
    %v269 = vunpack.c.l.b16 %v117
    %v270 = vunpack.c.h.b16 %v117
    %v271 = vunpack.c.l.b16 %v118
    %v272 = vunpack.c.l.b16 %v119
    %v273 = vunpack.c.h.b16 %v119
    %v274 = vunpack.c.l.b16 %v120
    %v275 = vunpack.c.h.b16 %v120
    %v276 = vunpack.c.l.b16 %v121
    %v277 = vunpack.c.l.b16 %v122
    %v278 = vunpack.c.h.b16 %v122
    %v279 = vunpack.c.l.b16 %v123
    %v280 = vunpack.c.h.b16 %v123
    %v281 = vunpack.c.l.b16 %v124
    %v282 = vunpack.c.l.b16 %v125
    %v283 = vunpack.c.h.b16 %v125
    %v284 = vunpack.c.l.b16 %v126
    %v285 = vunpack.c.h.b16 %v126
    %v286 = vunpack.c.l.b16 %v127
    %v287 = vunpack.c.l.b16 %v128
    %v288 = vunpack.c.h.b16 %v128
    %v289 = vunpack.c.l.b16 %v129
    %v290 = vunpack.c.h.b16 %v129
    %v291 = vunpack.c.l.b16 %v130
    %v292 = vunpack.c.l.b16 %v131
    %v293 = vunpack.c.h.b16 %v131
    %v294 = vunpack.c.l.b16 %v132
    %v295 = vunpack.c.h.b16 %v132
    %v296 = vunpack.c.l.b16 %v133
    %v297 = vpack.c.b16 %v212, %v207
    %v298 = vpack.c.b16 %v213, %v208
    %v299 = vpack.c.b16 %v214, %v209
    %v300 = vpack.c.b16 %v215, %v210
    %v301 = vpack.c.b16 %v216, %v211
    %v302 = vpack.c.b16 %v222, %v217
    %v303 = vpack.c.b16 %v223, %v218
    %v304 = vpack.c.b16 %v224, %v219
    %v305 = vpack.c.b16 %v225, %v220
    %v306 = vpack.c.b16 %v226, %v221
    %v307 = vpack.c.b16 %v232, %v227
    %v308 = vpack.c.b16 %v233, %v228
    %v309 = vpack.c.b16 %v234, %v229
    %v310 = vpack.c.b16 %v235, %v230
    %v311 = vpack.c.b16 %v236, %v231
    %v312 = vpack.c.b16 %v242, %v237
    %v313 = vpack.c.b16 %v243, %v238
    %v314 = vpack.c.b16 %v244, %v239
    %v315 = vpack.c.b16 %v245, %v240
    %v316 = vpack.c.b16 %v246, %v241
    %v317 = vpack.c.b16 %v252, %v247
    %v318 = vpack.c.b16 %v253, %v248
    %v319 = vpack.c.b16 %v254, %v249
    %v320 = vpack.c.b16 %v255, %v250
    %v321 = vpack.c.b16 %v256, %v251
    %v322 = vpack.c.b16 %v262, %v257
    %v323 = vpack.c.b16 %v263, %v258
    %v324 = vpack.c.b16 %v264, %v259
    %v325 = vpack.c.b16 %v265, %v260
    %v326 = vpack.c.b16 %v266, %v261
    %v327 = vpack.c.b16 %v272, %v267
    %v328 = vpack.c.b16 %v273, %v268
    %v329 = vpack.c.b16 %v274, %v269
    %v330 = vpack.c.b16 %v275, %v270
    %v331 = vpack.c.b16 %v276, %v271
    %v332 = vpack.c.b16 %v282, %v277
    %v333 = vpack.c.b16 %v283, %v278
    %v334 = vpack.c.b16 %v284, %v279
    %v335 = vpack.c.b16 %v285, %v280
    %v336 = vpack.c.b16 %v286, %v281
    %v337 = vpack.c.b16 %v292, %v287
    %v338 = vpack.c.b16 %v293, %v288
    %v339 = vpack.c.b16 %v294, %v289
    %v340 = vpack.c.b16 %v295, %v290
    %v341 = vpack.c.b16 %v296, %v291
    %vm387 = vcmask 130048
    %v389 = vsel %vm387, %v148, 0
    %v392 = vsel %vm387, %v150, 0
    %394 = vmatprep.subr.bf16.mxu0 %v298
    %395 = vmatpush1.bf16.msra.mxu0 %v297
    %396 = vmatprep.subr.bf16.mxu0 %v303
    %397 = vmatpush1.bf16.msra.mxu0 %v302
    %398 = vmatprep.subr.bf16.mxu0 %v308
    %399 = vmatpush1.bf16.msra.mxu0 %v307
    %400 = vmatprep.subr.bf16.mxu0 %v313
    %401 = vmatpush1.bf16.msra.mxu0 %v312
    %402 = vmatprep.subr.bf16.mxu0 %v318
    %403 = vmatpush1.bf16.msra.mxu0 %v317
    %404 = vmatprep.subr.bf16.mxu0 %v323
    %405 = vmatpush1.bf16.msra.mxu0 %v322
    %406 = vmatprep.subr.bf16.mxu0 %v328
    %407 = vmatpush1.bf16.msra.mxu0 %v327
    %408 = vmatprep.subr.bf16.mxu0 %v333
    %409 = vmatpush1.bf16.msra.mxu0 %v332
    %410 = vmatprep.subr.bf16.mxu0 %v338
    %411 = vmatpush1.bf16.msra.mxu0 %v337
    %412 = vmatprep.subr.bf16.mxu0 0
    %413 = vmatpush1.bf16.msra.mxu0 0
    %414 = vmatprep.subr.bf16.mxu0 0
    %415 = vmatpush1.bf16.msra.mxu0 0
    %416 = vmatprep.subr.bf16.mxu0 0
    %417 = vmatpush1.bf16.msra.mxu0 0
    %418 = vmatprep.subr.bf16.mxu0 0
    %419 = vmatpush1.bf16.msra.mxu0 0
    %420 = vmatprep.subr.bf16.mxu0 0
    %421 = vmatpush1.bf16.msra.mxu0 0
    %422 = vmatprep.subr.bf16.mxu0 0
    %423 = vmatpush1.bf16.msra.mxu0 0
    %424 = vmatprep.subr.bf16.mxu0 0
    %425 = vmatpush1.bf16.msra.mxu0 0
    %426 = vmatprep.mubr.bf16.mxu0 %v389
    %427 = vmatmul.mubr.bf16.gmra.mrb[0].mxu0 %v147
    %v428 = vpop.f32.mrb[0].mxu0
    %v429 = vadd.f32 0.0, %v428
    %v430 = vpop.f32.mrb[0].mxu0
    %v431 = vadd.f32 0.0, %v430
    %v432 = vpop.f32.mrb[0].mxu0
    %v433 = vadd.f32 0.0, %v432
    %v434 = vpop.f32.mrb[0].mxu0
    %v435 = vadd.f32 0.0, %v434
    %436 = vmatprep.mubr.bf16.mxu0 %v392
    %437 = vmatmul.mubr.bf16.gmra.mrb[0].mxu0 %v149
    %v438 = vpop.f32.mrb[0].mxu0
    %v439 = vadd.f32 0.0, %v438
    %v440 = vpop.f32.mrb[0].mxu0
    %v441 = vadd.f32 0.0, %v440
    %v442 = vpop.f32.mrb[0].mxu0
    %v443 = vadd.f32 0.0, %v442
    %v444 = vpop.f32.mrb[0].mxu0
    %v445 = vadd.f32 0.0, %v444
    %446 = vdwg.mxu0
    %447 = vmatprep.subr.bf16.mxu0 %v300
    %448 = vmatpush1.bf16.msra.mxu0 %v299
    %449 = vmatprep.subr.bf16.mxu0 %v305
    %450 = vmatpush1.bf16.msra.mxu0 %v304
    %451 = vmatprep.subr.bf16.mxu0 %v310
    %452 = vmatpush1.bf16.msra.mxu0 %v309
    %453 = vmatprep.subr.bf16.mxu0 %v315
    %454 = vmatpush1.bf16.msra.mxu0 %v314
    %455 = vmatprep.subr.bf16.mxu0 %v320
    %456 = vmatpush1.bf16.msra.mxu0 %v319
    %457 = vmatprep.subr.bf16.mxu0 %v325
    %458 = vmatpush1.bf16.msra.mxu0 %v324
    %459 = vmatprep.subr.bf16.mxu0 %v330
    %460 = vmatpush1.bf16.msra.mxu0 %v329
    %461 = vmatprep.subr.bf16.mxu0 %v335
    %462 = vmatpush1.bf16.msra.mxu0 %v334
    %463 = vmatprep.subr.bf16.mxu0 %v340
    %464 = vmatpush1.bf16.msra.mxu0 %v339
    %465 = vmatprep.subr.bf16.mxu0 0
    %466 = vmatpush1.bf16.msra.mxu0 0
    %467 = vmatprep.subr.bf16.mxu0 0
    %468 = vmatpush1.bf16.msra.mxu0 0
    %469 = vmatprep.subr.bf16.mxu0 0
    %470 = vmatpush1.bf16.msra.mxu0 0
    %471 = vmatprep.subr.bf16.mxu0 0
    %472 = vmatpush1.bf16.msra.mxu0 0
    %473 = vmatprep.subr.bf16.mxu0 0
    %474 = vmatpush1.bf16.msra.mxu0 0
    %475 = vmatprep.subr.bf16.mxu0 0
    %476 = vmatpush1.bf16.msra.mxu0 0
    %477 = vmatprep.subr.bf16.mxu0 0
    %478 = vmatpush1.bf16.msra.mxu0 0
    %479 = vmatprep.mubr.bf16.mxu0 %v389
    %480 = vmatmul.mubr.bf16.gmra.mrb[0].mxu0 %v147
    %v481 = vpop.f32.mrb[0].mxu0
    %v482 = vadd.f32 0.0, %v481
    %v483 = vpop.f32.mrb[0].mxu0
    %v484 = vadd.f32 0.0, %v483
    %v485 = vpop.f32.mrb[0].mxu0
    %v486 = vadd.f32 0.0, %v485
    %v487 = vpop.f32.mrb[0].mxu0
    %v488 = vadd.f32 0.0, %v487
    %489 = vmatprep.mubr.bf16.mxu0 %v392
    %490 = vmatmul.mubr.bf16.gmra.mrb[0].mxu0 %v149
    %v491 = vpop.f32.mrb[0].mxu0
    %v492 = vadd.f32 0.0, %v491
    %v493 = vpop.f32.mrb[0].mxu0
    %v494 = vadd.f32 0.0, %v493
    %v495 = vpop.f32.mrb[0].mxu0
    %v496 = vadd.f32 0.0, %v495
    %v497 = vpop.f32.mrb[0].mxu0
    %v498 = vadd.f32 0.0, %v497
    %499 = vdwg.mxu0
    %500 = vmatprep.subr.bf16.mxu0 0
    %501 = vmatpush1.bf16.msra.mxu0 %v301
    %502 = vmatprep.subr.bf16.mxu0 0
    %503 = vmatpush1.bf16.msra.mxu0 %v306
    %504 = vmatprep.subr.bf16.mxu0 0
    %505 = vmatpush1.bf16.msra.mxu0 %v311
    %506 = vmatprep.subr.bf16.mxu0 0
    %507 = vmatpush1.bf16.msra.mxu0 %v316
    %508 = vmatprep.subr.bf16.mxu0 0
    %509 = vmatpush1.bf16.msra.mxu0 %v321
    %510 = vmatprep.subr.bf16.mxu0 0
    %511 = vmatpush1.bf16.msra.mxu0 %v326
    %512 = vmatprep.subr.bf16.mxu0 0
    %513 = vmatpush1.bf16.msra.mxu0 %v331
    %514 = vmatprep.subr.bf16.mxu0 0
    %515 = vmatpush1.bf16.msra.mxu0 %v336
    %516 = vmatprep.subr.bf16.mxu0 0
    %517 = vmatpush1.bf16.msra.mxu0 %v341
    %518 = vmatprep.subr.bf16.mxu0 0
    %519 = vmatpush1.bf16.msra.mxu0 0
    %520 = vmatprep.subr.bf16.mxu0 0
    %521 = vmatpush1.bf16.msra.mxu0 0
    %522 = vmatprep.subr.bf16.mxu0 0
    %523 = vmatpush1.bf16.msra.mxu0 0
    %524 = vmatprep.subr.bf16.mxu0 0
    %525 = vmatpush1.bf16.msra.mxu0 0
    %526 = vmatprep.subr.bf16.mxu0 0
    %527 = vmatpush1.bf16.msra.mxu0 0
    %528 = vmatprep.subr.bf16.mxu0 0
    %529 = vmatpush1.bf16.msra.mxu0 0
    %530 = vmatprep.subr.bf16.mxu0 0
    %531 = vmatpush1.bf16.msra.mxu0 0
    %532 = vmatprep.mubr.bf16.mxu0 %v389
    %533 = vmatmul.mubr.bf16.gmra.mrb[0].mxu0 %v147
    %v534 = vpop.f32.mrb[0].mxu0
    %v535 = vadd.f32 0.0, %v534
    %v536 = vpop.f32.mrb[0].mxu0
    %v537 = vpop.f32.mrb[0].mxu0
    %v538 = vadd.f32 0.0, %v537
    %v539 = vpop.f32.mrb[0].mxu0
    %540 = vmatprep.mubr.bf16.mxu0 %v392
    %541 = vmatmul.mubr.bf16.gmra.mrb[0].mxu0 %v149
    %v542 = vpop.f32.mrb[0].mxu0
    %v543 = vadd.f32 0.0, %v542
    %v544 = vpop.f32.mrb[0].mxu0
    %v545 = vpop.f32.mrb[0].mxu0
    %v546 = vadd.f32 0.0, %v545
    %v547 = vpop.f32.mrb[0].mxu0
    %548 = vdwg.mxu0
    %v549 = vrot.slane %v429, 3
    %v550 = vrot.slane %v433, 3
    %v551 = vrot.slane %v439, 3
    %v552 = vrot.slane %v443, 3
    %v553 = vlaneseq
    %v554 = vshrl.u32 %v553, 7
    %vm555 = vcmp.lt.s32.totalorder %v554, 5
    %v556 = vsel %vm555, %v551, %v552
    %v557 = vsel %vm555, %v550, %v551
    %v558 = vsel %vm555, %v549, %v550
    %v559 = vsel %vm555, %v552, %v549
    %v560 = vld [vmem:[%s1] sm:$0xff]
    %v561 = vld [vmem:[%s1 + $0x8] sm:$0xff]
    %v562 = vld [vmem:[%s1 + $0x10] sm:$0xff]
    %v563 = vld [vmem:[%s1 + $0x18] sm:$0xff]
    %565 = vset.pattern.permute.xlu0 0
    %566 = vperm.xlu0 %565, %v560
    %v567 = vpop.permute.xlu0 %566
    %570 = vset.pattern.permute.xlu0 0
    %571 = vperm.xlu0 %570, %v561
    %v572 = vpop.permute.xlu0 %571
    %575 = vset.pattern.permute.xlu0 0
    %576 = vperm.xlu0 %575, %v562
    %v577 = vpop.permute.xlu0 %576
    %580 = vset.pattern.permute.xlu0 0
    %581 = vperm.xlu0 %580, %v563
    %v582 = vpop.permute.xlu0 %581
    %v584 = vmul.f32 %v559, %v567
    %v585 = vmul.f32 %v558, %v572
    %v586 = vmul.f32 %v557, %v577
    %v587 = vmul.f32 %v556, %v582
    %v588 = vadd.f32 %v482, %v584
    %v589 = vadd.f32 %v486, %v585
    %v590 = vadd.f32 %v492, %v586
    %v591 = vadd.f32 %v496, %v587
    %596 = vrot.lane.b32.xlu0 %v429, 64
    %v597 = vpop.permute.xlu0 %596
    %598 = vrot.lane.b32.xlu0 %v433, 64
    %v599 = vpop.permute.xlu0 %598
    %600 = vrot.lane.b32.xlu0 %v439, 64
    %v601 = vpop.permute.xlu0 %600
    %602 = vrot.lane.b32.xlu0 %v443, 64
    %v603 = vpop.permute.xlu0 %602
    %v608 = vrot.slane %v597, 4
    %v609 = vrot.slane %v599, 4
    %v610 = vrot.slane %v601, 4
    %v611 = vrot.slane %v603, 4
    %vm612 = vcmp.lt.s32.totalorder %v554, 4
    %v613 = vsel %vm612, %v610, %v611
    %v614 = vsel %vm612, %v609, %v610
    %v615 = vsel %vm612, %v608, %v609
    %v616 = vsel %vm612, %v611, %v608
    %s617 = scalar_lea.vmem %s1, 32
    %v618 = vld [vmem:[%s617] sm:$0xff]
    %v619 = vld [vmem:[%s617 + $0x8] sm:$0xff]
    %v620 = vld [vmem:[%s617 + $0x10] sm:$0xff]
    %v621 = vld [vmem:[%s617 + $0x18] sm:$0xff]
    %623 = vset.pattern.permute.xlu0 0
    %624 = vperm.xlu0 %623, %v618
    %v625 = vpop.permute.xlu0 %624
    %628 = vset.pattern.permute.xlu0 0
    %629 = vperm.xlu0 %628, %v619
    %v630 = vpop.permute.xlu0 %629
    %633 = vset.pattern.permute.xlu0 0
    %634 = vperm.xlu0 %633, %v620
    %v635 = vpop.permute.xlu0 %634
    %638 = vset.pattern.permute.xlu0 0
    %639 = vperm.xlu0 %638, %v621
    %v640 = vpop.permute.xlu0 %639
    %v642 = vmul.f32 %v616, %v625
    %v643 = vmul.f32 %v615, %v630
    %v644 = vmul.f32 %v614, %v635
    %v645 = vmul.f32 %v613, %v640
    %v646 = vadd.f32 %v588, %v642
    %v647 = vadd.f32 %v589, %v643
    %v648 = vadd.f32 %v590, %v644
    %v649 = vadd.f32 %v591, %v645
    %v650 = vrot.slane %v431, 5
    %v651 = vrot.slane %v435, 5
    %v652 = vrot.slane %v441, 5
    %v653 = vrot.slane %v445, 5
    %vm654 = vcmp.lt.s32.totalorder %v554, 3
    %v655 = vsel %vm654, %v652, %v653
    %v656 = vsel %vm654, %v651, %v652
    %v657 = vsel %vm654, %v650, %v651
    %v658 = vsel %vm654, %v653, %v650
    %s659 = scalar_lea.vmem %s1, 64
    %v660 = vld [vmem:[%s659] sm:$0xff]
    %v661 = vld [vmem:[%s659 + $0x8] sm:$0xff]
    %v662 = vld [vmem:[%s659 + $0x10] sm:$0xff]
    %v663 = vld [vmem:[%s659 + $0x18] sm:$0xff]
    %665 = vset.pattern.permute.xlu0 0
    %666 = vperm.xlu0 %665, %v660
    %v667 = vpop.permute.xlu0 %666
    %670 = vset.pattern.permute.xlu0 0
    %671 = vperm.xlu0 %670, %v661
    %v672 = vpop.permute.xlu0 %671
    %675 = vset.pattern.permute.xlu0 0
    %676 = vperm.xlu0 %675, %v662
    %v677 = vpop.permute.xlu0 %676
    %680 = vset.pattern.permute.xlu0 0
    %681 = vperm.xlu0 %680, %v663
    %v682 = vpop.permute.xlu0 %681
    %v684 = vmul.f32 %v658, %v667
    %v685 = vmul.f32 %v657, %v672
    %v686 = vmul.f32 %v656, %v677
    %v687 = vmul.f32 %v655, %v682
    %v688 = vadd.f32 %v646, %v684
    %v689 = vadd.f32 %v647, %v685
    %v690 = vadd.f32 %v648, %v686
    %v691 = vadd.f32 %v649, %v687
    %696 = vrot.lane.b32.xlu0 %v431, 64
    %v697 = vpop.permute.xlu0 %696
    %698 = vrot.lane.b32.xlu0 %v435, 64
    %v699 = vpop.permute.xlu0 %698
    %700 = vrot.lane.b32.xlu0 %v441, 64
    %v701 = vpop.permute.xlu0 %700
    %702 = vrot.lane.b32.xlu0 %v445, 64
    %v703 = vpop.permute.xlu0 %702
    %v708 = vrot.slane %v697, 7
    %v709 = vrot.slane %v699, 7
    %v710 = vrot.slane %v701, 7
    %v711 = vrot.slane %v703, 7
    %vm712 = vcmp.lt.s32.totalorder %v554, 1
    %v713 = vsel %vm712, %v710, %v711
    %v714 = vsel %vm712, %v709, %v710
    %v715 = vsel %vm712, %v708, %v709
    %v716 = vsel %vm712, %v711, %v708
    %s717 = scalar_lea.vmem %s1, 96
    %v718 = vld [vmem:[%s717] sm:$0xff]
    %v719 = vld [vmem:[%s717 + $0x8] sm:$0xff]
    %v720 = vld [vmem:[%s717 + $0x10] sm:$0xff]
    %v721 = vld [vmem:[%s717 + $0x18] sm:$0xff]
    %723 = vset.pattern.permute.xlu0 0
    %724 = vperm.xlu0 %723, %v718
    %v725 = vpop.permute.xlu0 %724
    %728 = vset.pattern.permute.xlu0 0
    %729 = vperm.xlu0 %728, %v719
    %v730 = vpop.permute.xlu0 %729
    %733 = vset.pattern.permute.xlu0 0
    %734 = vperm.xlu0 %733, %v720
    %v735 = vpop.permute.xlu0 %734
    %738 = vset.pattern.permute.xlu0 0
    %739 = vperm.xlu0 %738, %v721
    %v740 = vpop.permute.xlu0 %739
    %v742 = vmul.f32 %v716, %v725
    %v743 = vmul.f32 %v715, %v730
    %v744 = vmul.f32 %v714, %v735
    %v745 = vmul.f32 %v713, %v740
    %v746 = vadd.f32 %v688, %v742
    %v747 = vadd.f32 %v689, %v743
    %v748 = vadd.f32 %v690, %v744
    %v749 = vadd.f32 %v691, %v745
    %754 = vrot.lane.b32.xlu0 %v482, 64
    %v755 = vpop.permute.xlu0 %754
    %756 = vrot.lane.b32.xlu0 %v486, 64
    %v757 = vpop.permute.xlu0 %756
    %758 = vrot.lane.b32.xlu0 %v492, 64
    %v759 = vpop.permute.xlu0 %758
    %760 = vrot.lane.b32.xlu0 %v496, 64
    %v761 = vpop.permute.xlu0 %760
    %v766 = vrot.slane %v755, 1
    %v767 = vrot.slane %v757, 1
    %v768 = vrot.slane %v759, 1
    %v769 = vrot.slane %v761, 1
    %vm770 = vcmp.lt.s32.totalorder %v554, 7
    %v771 = vsel %vm770, %v768, %v769
    %v772 = vsel %vm770, %v767, %v768
    %v773 = vsel %vm770, %v766, %v767
    %v774 = vsel %vm770, %v769, %v766
    %s775 = scalar_lea.vmem %s1, 160
    %v776 = vld [vmem:[%s775] sm:$0xff]
    %v777 = vld [vmem:[%s775 + $0x8] sm:$0xff]
    %v778 = vld [vmem:[%s775 + $0x10] sm:$0xff]
    %v779 = vld [vmem:[%s775 + $0x18] sm:$0xff]
    %781 = vset.pattern.permute.xlu0 0
    %782 = vperm.xlu0 %781, %v776
    %v783 = vpop.permute.xlu0 %782
    %786 = vset.pattern.permute.xlu0 0
    %787 = vperm.xlu0 %786, %v777
    %v788 = vpop.permute.xlu0 %787
    %791 = vset.pattern.permute.xlu0 0
    %792 = vperm.xlu0 %791, %v778
    %v793 = vpop.permute.xlu0 %792
    %796 = vset.pattern.permute.xlu0 0
    %797 = vperm.xlu0 %796, %v779
    %v798 = vpop.permute.xlu0 %797
    %v800 = vmul.f32 %v773, %v783
    %v801 = vmul.f32 %v772, %v788
    %v802 = vmul.f32 %v771, %v793
    %v803 = vmul.f32 %v774, %v798
    %v804 = vadd.f32 %v746, %v800
    %v805 = vadd.f32 %v747, %v801
    %v806 = vadd.f32 %v748, %v802
    %v807 = vadd.f32 %v749, %v803
    %v808 = vrot.slane %v484, 3
    %v809 = vrot.slane %v488, 3
    %v810 = vrot.slane %v494, 3
    %v811 = vrot.slane %v498, 3
    %v812 = vsel %vm555, %v810, %v811
    %v813 = vsel %vm555, %v809, %v810
    %v814 = vsel %vm555, %v808, %v809
    %v815 = vsel %vm555, %v811, %v808
    %s816 = scalar_lea.vmem %s1, 192
    %v817 = vld [vmem:[%s816] sm:$0xff]
    %v818 = vld [vmem:[%s816 + $0x8] sm:$0xff]
    %v819 = vld [vmem:[%s816 + $0x10] sm:$0xff]
    %v820 = vld [vmem:[%s816 + $0x18] sm:$0xff]
    %822 = vset.pattern.permute.xlu0 0
    %823 = vperm.xlu0 %822, %v817
    %v824 = vpop.permute.xlu0 %823
    %827 = vset.pattern.permute.xlu0 0
    %828 = vperm.xlu0 %827, %v818
    %v829 = vpop.permute.xlu0 %828
    %832 = vset.pattern.permute.xlu0 0
    %833 = vperm.xlu0 %832, %v819
    %v834 = vpop.permute.xlu0 %833
    %837 = vset.pattern.permute.xlu0 0
    %838 = vperm.xlu0 %837, %v820
    %v839 = vpop.permute.xlu0 %838
    %v841 = vmul.f32 %v814, %v824
    %v842 = vmul.f32 %v813, %v829
    %v843 = vmul.f32 %v812, %v834
    %v844 = vmul.f32 %v815, %v839
    %v845 = vadd.f32 %v804, %v841
    %v846 = vadd.f32 %v805, %v842
    %v847 = vadd.f32 %v806, %v843
    %v848 = vadd.f32 %v807, %v844
    %853 = vrot.lane.b32.xlu0 %v484, 64
    %v854 = vpop.permute.xlu0 %853
    %855 = vrot.lane.b32.xlu0 %v488, 64
    %v856 = vpop.permute.xlu0 %855
    %857 = vrot.lane.b32.xlu0 %v494, 64
    %v858 = vpop.permute.xlu0 %857
    %859 = vrot.lane.b32.xlu0 %v498, 64
    %v860 = vpop.permute.xlu0 %859
    %v865 = vrot.slane %v854, 4
    %v866 = vrot.slane %v856, 4
    %v867 = vrot.slane %v858, 4
    %v868 = vrot.slane %v860, 4
    %v869 = vsel %vm612, %v867, %v868
    %v870 = vsel %vm612, %v866, %v867
    %v871 = vsel %vm612, %v865, %v866
    %v872 = vsel %vm612, %v868, %v865
    %s873 = scalar_lea.vmem %s1, 224
    %v874 = vld [vmem:[%s873] sm:$0xff]
    %v875 = vld [vmem:[%s873 + $0x8] sm:$0xff]
    %v876 = vld [vmem:[%s873 + $0x10] sm:$0xff]
    %v877 = vld [vmem:[%s873 + $0x18] sm:$0xff]
    %879 = vset.pattern.permute.xlu0 0
    %880 = vperm.xlu0 %879, %v874
    %v881 = vpop.permute.xlu0 %880
    %884 = vset.pattern.permute.xlu0 0
    %885 = vperm.xlu0 %884, %v875
    %v886 = vpop.permute.xlu0 %885
    %889 = vset.pattern.permute.xlu0 0
    %890 = vperm.xlu0 %889, %v876
    %v891 = vpop.permute.xlu0 %890
    %894 = vset.pattern.permute.xlu0 0
    %895 = vperm.xlu0 %894, %v877
    %v896 = vpop.permute.xlu0 %895
    %v898 = vmul.f32 %v871, %v881
    %v899 = vmul.f32 %v870, %v886
    %v900 = vmul.f32 %v869, %v891
    %v901 = vmul.f32 %v872, %v896
    %v902 = vadd.f32 %v845, %v898
    %v903 = vadd.f32 %v846, %v899
    %v904 = vadd.f32 %v847, %v900
    %v905 = vadd.f32 %v848, %v901
    %v906 = vrot.slane %v535, 5
    %v907 = vrot.slane %v538, 5
    %v908 = vrot.slane %v543, 5
    %v909 = vrot.slane %v546, 5
    %v910 = vsel %vm654, %v908, %v909
    %v911 = vsel %vm654, %v907, %v908
    %v912 = vsel %vm654, %v906, %v907
    %v913 = vsel %vm654, %v909, %v906
    %s914 = scalar_lea.vmem %s1, 256
    %v915 = vld [vmem:[%s914] sm:$0xff]
    %v916 = vld [vmem:[%s914 + $0x8] sm:$0xff]
    %v917 = vld [vmem:[%s914 + $0x10] sm:$0xff]
    %v918 = vld [vmem:[%s914 + $0x18] sm:$0xff]
    %920 = vset.pattern.permute.xlu0 0
    %921 = vperm.xlu0 %920, %v915
    %v922 = vpop.permute.xlu0 %921
    %925 = vset.pattern.permute.xlu0 0
    %926 = vperm.xlu0 %925, %v916
    %v927 = vpop.permute.xlu0 %926
    %930 = vset.pattern.permute.xlu0 0
    %931 = vperm.xlu0 %930, %v917
    %v932 = vpop.permute.xlu0 %931
    %935 = vset.pattern.permute.xlu0 0
    %936 = vperm.xlu0 %935, %v918
    %v937 = vpop.permute.xlu0 %936
    %v939 = vmul.f32 %v912, %v922
    %v940 = vmul.f32 %v911, %v927
    %v941 = vmul.f32 %v910, %v932
    %v942 = vmul.f32 %v913, %v937
    %v943 = vadd.f32 %v902, %v939
    %v944 = vadd.f32 %v903, %v940
    %v945 = vadd.f32 %v904, %v941
    %v946 = vadd.f32 %v905, %v942
    %v948 = vlaneseq
    %v949 = vshrl.u32 %v948, 7
    %v950 = vsub.s32 0, %v949
    %v951 = vrot.slane %v134, %v950
    %v953 = vadd.f32 %v943, %v951
    %v954 = vadd.f32 %v944, %v951
    %v955 = vadd.f32 %v945, %v951
    %v956 = vadd.f32 %v946, %v951
    %v957 = vmul.f32 %v953, 0.1
    %v958 = vmul.f32 %v954, 0.1
    %v959 = vmul.f32 %v955, 0.1
    %v960 = vmul.f32 %v956, 0.1
    %v961 = vmax.f32 %v953, %v957
    %v962 = vmax.f32 %v954, %v958
    %v963 = vmax.f32 %v955, %v959
    %v964 = vmax.f32 %v956, %v960
    %v965 = vld [vmem:[%s4] sm:$0xff]
    %v966 = vld [vmem:[%s4 + $0x8] sm:$0xff]
    %v967 = vld [vmem:[%s4 + $0x10] sm:$0xf]
    %v968 = vld [vmem:[%s4 + $0x14] sm:$0xff]
    %v969 = vld [vmem:[%s4 + $0x1c] sm:$0xff]
    %v970 = vld [vmem:[%s4 + $0x24] sm:$0xf]
    %v971 = vld [vmem:[%s4 + $0x28] sm:$0xff]
    %v972 = vld [vmem:[%s4 + $0x30] sm:$0xff]
    %v973 = vld [vmem:[%s4 + $0x38] sm:$0xf]
    %v974 = vld [vmem:[%s4 + $0x3c] sm:$0xff]
    %v975 = vld [vmem:[%s4 + $0x44] sm:$0xff]
    %v976 = vld [vmem:[%s4 + $0x4c] sm:$0xf]
    %v977 = vld [vmem:[%s4 + $0x50] sm:$0xff]
    %v978 = vld [vmem:[%s4 + $0x58] sm:$0xff]
    %v979 = vld [vmem:[%s4 + $0x60] sm:$0xf]
    %v980 = vld [vmem:[%s4 + $0x64] sm:$0xff]
    %v981 = vld [vmem:[%s4 + $0x6c] sm:$0xff]
    %v982 = vld [vmem:[%s4 + $0x74] sm:$0xf]
    %v983 = vld [vmem:[%s4 + $0x78] sm:$0xff]
    %v984 = vld [vmem:[%s4 + $0x80] sm:$0xff]
    %v985 = vld [vmem:[%s4 + $0x88] sm:$0xf]
    %v986 = vld [vmem:[%s4 + $0x8c] sm:$0xff]
    %v987 = vld [vmem:[%s4 + $0x94] sm:$0xff]
    %v988 = vld [vmem:[%s4 + $0x9c] sm:$0xf]
    %v989 = vld [vmem:[%s5] sm:$0x1]
    %v990 = vpack.c.bf16 %v962, %v961
    %v991 = vpack.c.bf16 %v964, %v963
    %v1016 = vunpack.c.l.b16 %v965
    %v1017 = vunpack.c.h.b16 %v965
    %v1018 = vunpack.c.l.b16 %v966
    %v1019 = vunpack.c.h.b16 %v966
    %v1020 = vunpack.c.l.b16 %v967
    %v1021 = vunpack.c.l.b16 %v968
    %v1022 = vunpack.c.h.b16 %v968
    %v1023 = vunpack.c.l.b16 %v969
    %v1024 = vunpack.c.h.b16 %v969
    %v1025 = vunpack.c.l.b16 %v970
    %v1026 = vunpack.c.l.b16 %v971
    %v1027 = vunpack.c.h.b16 %v971
    %v1028 = vunpack.c.l.b16 %v972
    %v1029 = vunpack.c.h.b16 %v972
    %v1030 = vunpack.c.l.b16 %v973
    %v1031 = vunpack.c.l.b16 %v974
    %v1032 = vunpack.c.h.b16 %v974
    %v1033 = vunpack.c.l.b16 %v975
    %v1034 = vunpack.c.h.b16 %v975
    %v1035 = vunpack.c.l.b16 %v976
    %v1036 = vunpack.c.l.b16 %v977
    %v1037 = vunpack.c.h.b16 %v977
    %v1038 = vunpack.c.l.b16 %v978
    %v1039 = vunpack.c.h.b16 %v978
    %v1040 = vunpack.c.l.b16 %v979
    %v1041 = vunpack.c.l.b16 %v980
    %v1042 = vunpack.c.h.b16 %v980
    %v1043 = vunpack.c.l.b16 %v981
    %v1044 = vunpack.c.h.b16 %v981
    %v1045 = vunpack.c.l.b16 %v982
    %v1046 = vunpack.c.l.b16 %v983
    %v1047 = vunpack.c.h.b16 %v983
    %v1048 = vunpack.c.l.b16 %v984
    %v1049 = vunpack.c.h.b16 %v984
    %v1050 = vunpack.c.l.b16 %v985
    %v1051 = vunpack.c.l.b16 %v986
    %v1052 = vunpack.c.h.b16 %v986
    %v1053 = vunpack.c.l.b16 %v987
    %v1054 = vunpack.c.h.b16 %v987
    %v1055 = vunpack.c.l.b16 %v988
    %v1056 = vpack.c.b16 %v1021, %v1016
    %v1057 = vpack.c.b16 %v1022, %v1017
    %v1058 = vpack.c.b16 %v1023, %v1018
    %v1059 = vpack.c.b16 %v1024, %v1019
    %v1060 = vpack.c.b16 %v1025, %v1020
    %v1061 = vpack.c.b16 %v1031, %v1026
    %v1062 = vpack.c.b16 %v1032, %v1027
    %v1063 = vpack.c.b16 %v1033, %v1028
    %v1064 = vpack.c.b16 %v1034, %v1029
    %v1065 = vpack.c.b16 %v1035, %v1030
    %v1066 = vpack.c.b16 %v1041, %v1036
    %v1067 = vpack.c.b16 %v1042, %v1037
    %v1068 = vpack.c.b16 %v1043, %v1038
    %v1069 = vpack.c.b16 %v1044, %v1039
    %v1070 = vpack.c.b16 %v1045, %v1040
    %v1071 = vpack.c.b16 %v1051, %v1046
    %v1072 = vpack.c.b16 %v1052, %v1047
    %v1073 = vpack.c.b16 %v1053, %v1048
    %v1074 = vpack.c.b16 %v1054, %v1049
    %v1075 = vpack.c.b16 %v1055, %v1050
    %vm1096 = vcmask 523264
    %v1098 = vsel %vm1096, %v990, 0
    %v1101 = vsel %vm1096, %v991, 0
    %1103 = vmatprep.subr.bf16.mxu0 %v1057
    %1104 = vmatpush1.bf16.msra.mxu0 %v1056
    %1105 = vmatprep.subr.bf16.mxu0 %v1062
    %1106 = vmatpush1.bf16.msra.mxu0 %v1061
    %1107 = vmatprep.subr.bf16.mxu0 %v1067
    %1108 = vmatpush1.bf16.msra.mxu0 %v1066
    %1109 = vmatprep.subr.bf16.mxu0 %v1072
    %1110 = vmatpush1.bf16.msra.mxu0 %v1071
    %1111 = vmatprep.subr.bf16.mxu0 0
    %1112 = vmatpush1.bf16.msra.mxu0 0
    %1113 = vmatprep.subr.bf16.mxu0 0
    %1114 = vmatpush1.bf16.msra.mxu0 0
    %1115 = vmatprep.subr.bf16.mxu0 0
    %1116 = vmatpush1.bf16.msra.mxu0 0
    %1117 = vmatprep.subr.bf16.mxu0 0
    %1118 = vmatpush1.bf16.msra.mxu0 0
    %1119 = vmatprep.subr.bf16.mxu0 0
    %1120 = vmatpush1.bf16.msra.mxu0 0
    %1121 = vmatprep.subr.bf16.mxu0 0
    %1122 = vmatpush1.bf16.msra.mxu0 0
    %1123 = vmatprep.subr.bf16.mxu0 0
    %1124 = vmatpush1.bf16.msra.mxu0 0
    %1125 = vmatprep.subr.bf16.mxu0 0
    %1126 = vmatpush1.bf16.msra.mxu0 0
    %1127 = vmatprep.subr.bf16.mxu0 0
    %1128 = vmatpush1.bf16.msra.mxu0 0
    %1129 = vmatprep.subr.bf16.mxu0 0
    %1130 = vmatpush1.bf16.msra.mxu0 0
    %1131 = vmatprep.subr.bf16.mxu0 0
    %1132 = vmatpush1.bf16.msra.mxu0 0
    %1133 = vmatprep.subr.bf16.mxu0 0
    %1134 = vmatpush1.bf16.msra.mxu0 0
    %1135 = vmatprep.mubr.bf16.mxu0 0
    %1136 = vmatmul.mubr.bf16.gmra.mrb[0].mxu0 %v1098
    %v1137 = vpop.f32.mrb[0].mxu0
    %v1138 = vadd.f32 0.0, %v1137
    %v1139 = vpop.f32.mrb[0].mxu0
    %v1140 = vadd.f32 0.0, %v1139
    %v1141 = vpop.f32.mrb[0].mxu0
    %v1142 = vadd.f32 0.0, %v1141
    %v1143 = vpop.f32.mrb[0].mxu0
    %v1144 = vadd.f32 0.0, %v1143
    %1145 = vmatprep.mubr.bf16.mxu0 0
    %1146 = vmatmul.mubr.bf16.gmra.mrb[0].mxu0 %v1101
    %v1147 = vpop.f32.mrb[0].mxu0
    %v1148 = vadd.f32 0.0, %v1147
    %v1149 = vpop.f32.mrb[0].mxu0
    %v1150 = vadd.f32 0.0, %v1149
    %v1151 = vpop.f32.mrb[0].mxu0
    %v1152 = vadd.f32 0.0, %v1151
    %v1153 = vpop.f32.mrb[0].mxu0
    %v1154 = vadd.f32 0.0, %v1153
    %1155 = vdwg.mxu0
    %1156 = vmatprep.subr.bf16.mxu0 %v1059
    %1157 = vmatpush1.bf16.msra.mxu0 %v1058
    %1158 = vmatprep.subr.bf16.mxu0 %v1064
    %1159 = vmatpush1.bf16.msra.mxu0 %v1063
    %1160 = vmatprep.subr.bf16.mxu0 %v1069
    %1161 = vmatpush1.bf16.msra.mxu0 %v1068
    %1162 = vmatprep.subr.bf16.mxu0 %v1074
    %1163 = vmatpush1.bf16.msra.mxu0 %v1073
    %1164 = vmatprep.subr.bf16.mxu0 0
    %1165 = vmatpush1.bf16.msra.mxu0 0
    %1166 = vmatprep.subr.bf16.mxu0 0
    %1167 = vmatpush1.bf16.msra.mxu0 0
    %1168 = vmatprep.subr.bf16.mxu0 0
    %1169 = vmatpush1.bf16.msra.mxu0 0
    %1170 = vmatprep.subr.bf16.mxu0 0
    %1171 = vmatpush1.bf16.msra.mxu0 0
    %1172 = vmatprep.subr.bf16.mxu0 0
    %1173 = vmatpush1.bf16.msra.mxu0 0
    %1174 = vmatprep.subr.bf16.mxu0 0
    %1175 = vmatpush1.bf16.msra.mxu0 0
    %1176 = vmatprep.subr.bf16.mxu0 0
    %1177 = vmatpush1.bf16.msra.mxu0 0
    %1178 = vmatprep.subr.bf16.mxu0 0
    %1179 = vmatpush1.bf16.msra.mxu0 0
    %1180 = vmatprep.subr.bf16.mxu0 0
    %1181 = vmatpush1.bf16.msra.mxu0 0
    %1182 = vmatprep.subr.bf16.mxu0 0
    %1183 = vmatpush1.bf16.msra.mxu0 0
    %1184 = vmatprep.subr.bf16.mxu0 0
    %1185 = vmatpush1.bf16.msra.mxu0 0
    %1186 = vmatprep.subr.bf16.mxu0 0
    %1187 = vmatpush1.bf16.msra.mxu0 0
    %1188 = vmatprep.mubr.bf16.mxu0 0
    %1189 = vmatmul.mubr.bf16.gmra.mrb[0].mxu0 %v1098
    %v1190 = vpop.f32.mrb[0].mxu0
    %v1191 = vadd.f32 0.0, %v1190
    %v1192 = vpop.f32.mrb[0].mxu0
    %v1193 = vadd.f32 0.0, %v1192
    %v1194 = vpop.f32.mrb[0].mxu0
    %v1195 = vadd.f32 0.0, %v1194
    %v1196 = vpop.f32.mrb[0].mxu0
    %v1197 = vadd.f32 0.0, %v1196
    %1198 = vmatprep.mubr.bf16.mxu0 0
    %1199 = vmatmul.mubr.bf16.gmra.mrb[0].mxu0 %v1101
    %v1200 = vpop.f32.mrb[0].mxu0
    %v1201 = vadd.f32 0.0, %v1200
    %v1202 = vpop.f32.mrb[0].mxu0
    %v1203 = vadd.f32 0.0, %v1202
    %v1204 = vpop.f32.mrb[0].mxu0
    %v1205 = vadd.f32 0.0, %v1204
    %v1206 = vpop.f32.mrb[0].mxu0
    %v1207 = vadd.f32 0.0, %v1206
    %1208 = vdwg.mxu0
    %1209 = vmatprep.subr.bf16.mxu0 0
    %1210 = vmatpush1.bf16.msra.mxu0 %v1060
    %1211 = vmatprep.subr.bf16.mxu0 0
    %1212 = vmatpush1.bf16.msra.mxu0 %v1065
    %1213 = vmatprep.subr.bf16.mxu0 0
    %1214 = vmatpush1.bf16.msra.mxu0 %v1070
    %1215 = vmatprep.subr.bf16.mxu0 0
    %1216 = vmatpush1.bf16.msra.mxu0 %v1075
    %1217 = vmatprep.subr.bf16.mxu0 0
    %1218 = vmatpush1.bf16.msra.mxu0 0
    %1219 = vmatprep.subr.bf16.mxu0 0
    %1220 = vmatpush1.bf16.msra.mxu0 0
    %1221 = vmatprep.subr.bf16.mxu0 0
    %1222 = vmatpush1.bf16.msra.mxu0 0
    %1223 = vmatprep.subr.bf16.mxu0 0
    %1224 = vmatpush1.bf16.msra.mxu0 0
    %1225 = vmatprep.subr.bf16.mxu0 0
    %1226 = vmatpush1.bf16.msra.mxu0 0
    %1227 = vmatprep.subr.bf16.mxu0 0
    %1228 = vmatpush1.bf16.msra.mxu0 0
    %1229 = vmatprep.subr.bf16.mxu0 0
    %1230 = vmatpush1.bf16.msra.mxu0 0
    %1231 = vmatprep.subr.bf16.mxu0 0
    %1232 = vmatpush1.bf16.msra.mxu0 0
    %1233 = vmatprep.subr.bf16.mxu0 0
    %1234 = vmatpush1.bf16.msra.mxu0 0
    %1235 = vmatprep.subr.bf16.mxu0 0
    %1236 = vmatpush1.bf16.msra.mxu0 0
    %1237 = vmatprep.subr.bf16.mxu0 0
    %1238 = vmatpush1.bf16.msra.mxu0 0
    %1239 = vmatprep.subr.bf16.mxu0 0
    %1240 = vmatpush1.bf16.msra.mxu0 0
    %1241 = vmatprep.mubr.bf16.mxu0 0
    %1242 = vmatmul.mubr.bf16.gmra.mrb[0].mxu0 %v1098
    %v1243 = vpop.f32.mrb[0].mxu0
    %v1244 = vadd.f32 0.0, %v1243
    %v1245 = vpop.f32.mrb[0].mxu0
    %v1246 = vpop.f32.mrb[0].mxu0
    %v1247 = vadd.f32 0.0, %v1246
    %v1248 = vpop.f32.mrb[0].mxu0
    %1249 = vmatprep.mubr.bf16.mxu0 0
    %1250 = vmatmul.mubr.bf16.gmra.mrb[0].mxu0 %v1101
    %v1251 = vpop.f32.mrb[0].mxu0
    %v1252 = vadd.f32 0.0, %v1251
    %v1253 = vpop.f32.mrb[0].mxu0
    %v1254 = vpop.f32.mrb[0].mxu0
    %v1255 = vadd.f32 0.0, %v1254
    %v1256 = vpop.f32.mrb[0].mxu0
    %1257 = vdwg.mxu0
    %v1258 = vrot.slane %v1138, 3
    %v1259 = vrot.slane %v1142, 3
    %v1260 = vrot.slane %v1148, 3
    %v1261 = vrot.slane %v1152, 3
    %v1262 = vsel %vm555, %v1260, %v1261
    %v1263 = vsel %vm555, %v1259, %v1260
    %v1264 = vsel %vm555, %v1258, %v1259
    %v1265 = vsel %vm555, %v1261, %v1258
    %v1266 = vmul.f32 %v1265, %v567
    %v1267 = vmul.f32 %v1264, %v572
    %v1268 = vmul.f32 %v1263, %v577
    %v1269 = vmul.f32 %v1262, %v582
    %v1270 = vadd.f32 %v1191, %v1266
    %v1271 = vadd.f32 %v1195, %v1267
    %v1272 = vadd.f32 %v1201, %v1268
    %v1273 = vadd.f32 %v1205, %v1269
    %1278 = vrot.lane.b32.xlu0 %v1138, 64
    %v1279 = vpop.permute.xlu0 %1278
    %1280 = vrot.lane.b32.xlu0 %v1142, 64
    %v1281 = vpop.permute.xlu0 %1280
    %1282 = vrot.lane.b32.xlu0 %v1148, 64
    %v1283 = vpop.permute.xlu0 %1282
    %1284 = vrot.lane.b32.xlu0 %v1152, 64
    %v1285 = vpop.permute.xlu0 %1284
    %v1290 = vrot.slane %v1279, 4
    %v1291 = vrot.slane %v1281, 4
    %v1292 = vrot.slane %v1283, 4
    %v1293 = vrot.slane %v1285, 4
    %v1294 = vsel %vm612, %v1292, %v1293
    %v1295 = vsel %vm612, %v1291, %v1292
    %v1296 = vsel %vm612, %v1290, %v1291
    %v1297 = vsel %vm612, %v1293, %v1290
    %v1298 = vmul.f32 %v1297, %v625
    %v1299 = vmul.f32 %v1296, %v630
    %v1300 = vmul.f32 %v1295, %v635
    %v1301 = vmul.f32 %v1294, %v640
    %v1302 = vadd.f32 %v1270, %v1298
    %v1303 = vadd.f32 %v1271, %v1299
    %v1304 = vadd.f32 %v1272, %v1300
    %v1305 = vadd.f32 %v1273, %v1301
    %v1306 = vrot.slane %v1140, 5
    %v1307 = vrot.slane %v1144, 5
    %v1308 = vrot.slane %v1150, 5
    %v1309 = vrot.slane %v1154, 5
    %v1310 = vsel %vm654, %v1308, %v1309
    %v1311 = vsel %vm654, %v1307, %v1308
    %v1312 = vsel %vm654, %v1306, %v1307
    %v1313 = vsel %vm654, %v1309, %v1306
    %v1314 = vmul.f32 %v1313, %v667
    %v1315 = vmul.f32 %v1312, %v672
    %v1316 = vmul.f32 %v1311, %v677
    %v1317 = vmul.f32 %v1310, %v682
    %v1318 = vadd.f32 %v1302, %v1314
    %v1319 = vadd.f32 %v1303, %v1315
    %v1320 = vadd.f32 %v1304, %v1316
    %v1321 = vadd.f32 %v1305, %v1317
    %1326 = vrot.lane.b32.xlu0 %v1140, 64
    %v1327 = vpop.permute.xlu0 %1326
    %1328 = vrot.lane.b32.xlu0 %v1144, 64
    %v1329 = vpop.permute.xlu0 %1328
    %1330 = vrot.lane.b32.xlu0 %v1150, 64
    %v1331 = vpop.permute.xlu0 %1330
    %1332 = vrot.lane.b32.xlu0 %v1154, 64
    %v1333 = vpop.permute.xlu0 %1332
    %v1338 = vrot.slane %v1327, 7
    %v1339 = vrot.slane %v1329, 7
    %v1340 = vrot.slane %v1331, 7
    %v1341 = vrot.slane %v1333, 7
    %v1342 = vsel %vm712, %v1340, %v1341
    %v1343 = vsel %vm712, %v1339, %v1340
    %v1344 = vsel %vm712, %v1338, %v1339
    %v1345 = vsel %vm712, %v1341, %v1338
    %v1346 = vmul.f32 %v1345, %v725
    %v1347 = vmul.f32 %v1344, %v730
    %v1348 = vmul.f32 %v1343, %v735
    %v1349 = vmul.f32 %v1342, %v740
    %v1350 = vadd.f32 %v1318, %v1346
    %v1351 = vadd.f32 %v1319, %v1347
    %v1352 = vadd.f32 %v1320, %v1348
    %v1353 = vadd.f32 %v1321, %v1349
    %1358 = vrot.lane.b32.xlu0 %v1191, 64
    %v1359 = vpop.permute.xlu0 %1358
    %1360 = vrot.lane.b32.xlu0 %v1195, 64
    %v1361 = vpop.permute.xlu0 %1360
    %1362 = vrot.lane.b32.xlu0 %v1201, 64
    %v1363 = vpop.permute.xlu0 %1362
    %1364 = vrot.lane.b32.xlu0 %v1205, 64
    %v1365 = vpop.permute.xlu0 %1364
    %v1370 = vrot.slane %v1359, 1
    %v1371 = vrot.slane %v1361, 1
    %v1372 = vrot.slane %v1363, 1
    %v1373 = vrot.slane %v1365, 1
    %v1374 = vsel %vm770, %v1372, %v1373
    %v1375 = vsel %vm770, %v1371, %v1372
    %v1376 = vsel %vm770, %v1370, %v1371
    %v1377 = vsel %vm770, %v1373, %v1370
    %v1378 = vmul.f32 %v1376, %v783
    %v1379 = vmul.f32 %v1375, %v788
    %v1380 = vmul.f32 %v1374, %v793
    %v1381 = vmul.f32 %v1377, %v798
    %v1382 = vadd.f32 %v1350, %v1378
    %v1383 = vadd.f32 %v1351, %v1379
    %v1384 = vadd.f32 %v1352, %v1380
    %v1385 = vadd.f32 %v1353, %v1381
    %v1386 = vrot.slane %v1193, 3
    %v1387 = vrot.slane %v1197, 3
    %v1388 = vrot.slane %v1203, 3
    %v1389 = vrot.slane %v1207, 3
    %v1390 = vsel %vm555, %v1388, %v1389
    %v1391 = vsel %vm555, %v1387, %v1388
    %v1392 = vsel %vm555, %v1386, %v1387
    %v1393 = vsel %vm555, %v1389, %v1386
    %v1394 = vmul.f32 %v1392, %v824
    %v1395 = vmul.f32 %v1391, %v829
    %v1396 = vmul.f32 %v1390, %v834
    %v1397 = vmul.f32 %v1393, %v839
    %v1398 = vadd.f32 %v1382, %v1394
    %v1399 = vadd.f32 %v1383, %v1395
    %v1400 = vadd.f32 %v1384, %v1396
    %v1401 = vadd.f32 %v1385, %v1397
    %1406 = vrot.lane.b32.xlu0 %v1193, 64
    %v1407 = vpop.permute.xlu0 %1406
    %1408 = vrot.lane.b32.xlu0 %v1197, 64
    %v1409 = vpop.permute.xlu0 %1408
    %1410 = vrot.lane.b32.xlu0 %v1203, 64
    %v1411 = vpop.permute.xlu0 %1410
    %1412 = vrot.lane.b32.xlu0 %v1207, 64
    %v1413 = vpop.permute.xlu0 %1412
    %v1418 = vrot.slane %v1407, 4
    %v1419 = vrot.slane %v1409, 4
    %v1420 = vrot.slane %v1411, 4
    %v1421 = vrot.slane %v1413, 4
    %v1422 = vsel %vm612, %v1420, %v1421
    %v1423 = vsel %vm612, %v1419, %v1420
    %v1424 = vsel %vm612, %v1418, %v1419
    %v1425 = vsel %vm612, %v1421, %v1418
    %v1426 = vmul.f32 %v1424, %v881
    %v1427 = vmul.f32 %v1423, %v886
    %v1428 = vmul.f32 %v1422, %v891
    %v1429 = vmul.f32 %v1425, %v896
    %v1430 = vadd.f32 %v1398, %v1426
    %v1431 = vadd.f32 %v1399, %v1427
    %v1432 = vadd.f32 %v1400, %v1428
    %v1433 = vadd.f32 %v1401, %v1429
    %v1434 = vrot.slane %v1244, 5
    %v1435 = vrot.slane %v1247, 5
    %v1436 = vrot.slane %v1252, 5
    %v1437 = vrot.slane %v1255, 5
    %v1438 = vsel %vm654, %v1436, %v1437
    %v1439 = vsel %vm654, %v1435, %v1436
    %v1440 = vsel %vm654, %v1434, %v1435
    %v1441 = vsel %vm654, %v1437, %v1434
    %v1442 = vmul.f32 %v1440, %v922
    %v1443 = vmul.f32 %v1439, %v927
    %v1444 = vmul.f32 %v1438, %v932
    %v1445 = vmul.f32 %v1441, %v937
    %v1446 = vadd.f32 %v1430, %v1442
    %v1447 = vadd.f32 %v1431, %v1443
    %v1448 = vadd.f32 %v1432, %v1444
    %v1449 = vadd.f32 %v1433, %v1445
    %v1451 = vlaneseq
    %v1452 = vshrl.u32 %v1451, 7
    %v1453 = vsub.s32 0, %v1452
    %v1454 = vrot.slane %v989, %v1453
    %v1456 = vadd.f32 %v1446, %v1454
    %v1457 = vadd.f32 %v1447, %v1454
    %v1458 = vadd.f32 %v1448, %v1454
    %v1459 = vadd.f32 %v1449, %v1454
    %v1460 = vmul.f32 %v1456, 0.1
    %v1461 = vmul.f32 %v1457, 0.1
    %v1462 = vmul.f32 %v1458, 0.1
    %v1463 = vmul.f32 %v1459, 0.1
    %v1464 = vmax.f32 %v1456, %v1460
    %v1465 = vmax.f32 %v1457, %v1461
    %v1466 = vmax.f32 %v1458, %v1462
    %v1467 = vmax.f32 %v1459, %v1463
    %s1468 = scalar_lea.vmem %s4, 160
    %v1469 = vld [vmem:[%s1468] sm:$0xff]
    %v1470 = vld [vmem:[%s1468 + $0x8] sm:$0xff]
    %v1471 = vld [vmem:[%s1468 + $0x10] sm:$0xf]
    %v1472 = vld [vmem:[%s1468 + $0x14] sm:$0xff]
    %v1473 = vld [vmem:[%s1468 + $0x1c] sm:$0xff]
    %v1474 = vld [vmem:[%s1468 + $0x24] sm:$0xf]
    %v1475 = vld [vmem:[%s1468 + $0x28] sm:$0xff]
    %v1476 = vld [vmem:[%s1468 + $0x30] sm:$0xff]
    %v1477 = vld [vmem:[%s1468 + $0x38] sm:$0xf]
    %v1478 = vld [vmem:[%s1468 + $0x3c] sm:$0xff]
    %v1479 = vld [vmem:[%s1468 + $0x44] sm:$0xff]
    %v1480 = vld [vmem:[%s1468 + $0x4c] sm:$0xf]
    %v1481 = vld [vmem:[%s1468 + $0x50] sm:$0xff]
    %v1482 = vld [vmem:[%s1468 + $0x58] sm:$0xff]
    %v1483 = vld [vmem:[%s1468 + $0x60] sm:$0xf]
    %v1484 = vld [vmem:[%s1468 + $0x64] sm:$0xff]
    %v1485 = vld [vmem:[%s1468 + $0x6c] sm:$0xff]
    %v1486 = vld [vmem:[%s1468 + $0x74] sm:$0xf]
    %v1487 = vld [vmem:[%s1468 + $0x78] sm:$0xff]
    %v1488 = vld [vmem:[%s1468 + $0x80] sm:$0xff]
    %v1489 = vld [vmem:[%s1468 + $0x88] sm:$0xf]
    %v1490 = vld [vmem:[%s1468 + $0x8c] sm:$0xff]
    %v1491 = vld [vmem:[%s1468 + $0x94] sm:$0xff]
    %v1492 = vld [vmem:[%s1468 + $0x9c] sm:$0xf]
    %s1493 = scalar_lea.vmem %s5, 1
    %v1494 = vld [vmem:[%s1493] sm:$0x1]
    %v1495 = vpack.c.bf16 %v1465, %v1464
    %v1496 = vpack.c.bf16 %v1467, %v1466
    %v1521 = vunpack.c.l.b16 %v1469
    %v1522 = vunpack.c.h.b16 %v1469
    %v1523 = vunpack.c.l.b16 %v1470
    %v1524 = vunpack.c.h.b16 %v1470
    %v1525 = vunpack.c.l.b16 %v1471
    %v1526 = vunpack.c.l.b16 %v1472
    %v1527 = vunpack.c.h.b16 %v1472
    %v1528 = vunpack.c.l.b16 %v1473
    %v1529 = vunpack.c.h.b16 %v1473
    %v1530 = vunpack.c.l.b16 %v1474
    %v1531 = vunpack.c.l.b16 %v1475
    %v1532 = vunpack.c.h.b16 %v1475
    %v1533 = vunpack.c.l.b16 %v1476
    %v1534 = vunpack.c.h.b16 %v1476
    %v1535 = vunpack.c.l.b16 %v1477
    %v1536 = vunpack.c.l.b16 %v1478
    %v1537 = vunpack.c.h.b16 %v1478
    %v1538 = vunpack.c.l.b16 %v1479
    %v1539 = vunpack.c.h.b16 %v1479
    %v1540 = vunpack.c.l.b16 %v1480
    %v1541 = vunpack.c.l.b16 %v1481
    %v1542 = vunpack.c.h.b16 %v1481
    %v1543 = vunpack.c.l.b16 %v1482
    %v1544 = vunpack.c.h.b16 %v1482
    %v1545 = vunpack.c.l.b16 %v1483
    %v1546 = vunpack.c.l.b16 %v1484
    %v1547 = vunpack.c.h.b16 %v1484
    %v1548 = vunpack.c.l.b16 %v1485
    %v1549 = vunpack.c.h.b16 %v1485
    %v1550 = vunpack.c.l.b16 %v1486
    %v1551 = vunpack.c.l.b16 %v1487
    %v1552 = vunpack.c.h.b16 %v1487
    %v1553 = vunpack.c.l.b16 %v1488
    %v1554 = vunpack.c.h.b16 %v1488
    %v1555 = vunpack.c.l.b16 %v1489
    %v1556 = vunpack.c.l.b16 %v1490
    %v1557 = vunpack.c.h.b16 %v1490
    %v1558 = vunpack.c.l.b16 %v1491
    %v1559 = vunpack.c.h.b16 %v1491
    %v1560 = vunpack.c.l.b16 %v1492
    %v1561 = vpack.c.b16 %v1526, %v1521
    %v1562 = vpack.c.b16 %v1527, %v1522
    %v1563 = vpack.c.b16 %v1528, %v1523
    %v1564 = vpack.c.b16 %v1529, %v1524
    %v1565 = vpack.c.b16 %v1530, %v1525
    %v1566 = vpack.c.b16 %v1536, %v1531
    %v1567 = vpack.c.b16 %v1537, %v1532
    %v1568 = vpack.c.b16 %v1538, %v1533
    %v1569 = vpack.c.b16 %v1539, %v1534
    %v1570 = vpack.c.b16 %v1540, %v1535
    %v1571 = vpack.c.b16 %v1546, %v1541
    %v1572 = vpack.c.b16 %v1547, %v1542
    %v1573 = vpack.c.b16 %v1548, %v1543
    %v1574 = vpack.c.b16 %v1549, %v1544
    %v1575 = vpack.c.b16 %v1550, %v1545
    %v1576 = vpack.c.b16 %v1556, %v1551
    %v1577 = vpack.c.b16 %v1557, %v1552
    %v1578 = vpack.c.b16 %v1558, %v1553
    %v1579 = vpack.c.b16 %v1559, %v1554
    %v1580 = vpack.c.b16 %v1560, %v1555
    %v1602 = vsel %vm1096, %v1495, 0
    %v1605 = vsel %vm1096, %v1496, 0
    %1607 = vmatprep.subr.bf16.mxu0 %v1562
    %1608 = vmatpush1.bf16.msra.mxu0 %v1561
    %1609 = vmatprep.subr.bf16.mxu0 %v1567
    %1610 = vmatpush1.bf16.msra.mxu0 %v1566
    %1611 = vmatprep.subr.bf16.mxu0 %v1572
    %1612 = vmatpush1.bf16.msra.mxu0 %v1571
    %1613 = vmatprep.subr.bf16.mxu0 %v1577
    %1614 = vmatpush1.bf16.msra.mxu0 %v1576
    %1615 = vmatprep.subr.bf16.mxu0 0
    %1616 = vmatpush1.bf16.msra.mxu0 0
    %1617 = vmatprep.subr.bf16.mxu0 0
    %1618 = vmatpush1.bf16.msra.mxu0 0
    %1619 = vmatprep.subr.bf16.mxu0 0
    %1620 = vmatpush1.bf16.msra.mxu0 0
    %1621 = vmatprep.subr.bf16.mxu0 0
    %1622 = vmatpush1.bf16.msra.mxu0 0
    %1623 = vmatprep.subr.bf16.mxu0 0
    %1624 = vmatpush1.bf16.msra.mxu0 0
    %1625 = vmatprep.subr.bf16.mxu0 0
    %1626 = vmatpush1.bf16.msra.mxu0 0
    %1627 = vmatprep.subr.bf16.mxu0 0
    %1628 = vmatpush1.bf16.msra.mxu0 0
    %1629 = vmatprep.subr.bf16.mxu0 0
    %1630 = vmatpush1.bf16.msra.mxu0 0
    %1631 = vmatprep.subr.bf16.mxu0 0
    %1632 = vmatpush1.bf16.msra.mxu0 0
    %1633 = vmatprep.subr.bf16.mxu0 0
    %1634 = vmatpush1.bf16.msra.mxu0 0
    %1635 = vmatprep.subr.bf16.mxu0 0
    %1636 = vmatpush1.bf16.msra.mxu0 0
    %1637 = vmatprep.subr.bf16.mxu0 0
    %1638 = vmatpush1.bf16.msra.mxu0 0
    %1639 = vmatprep.mubr.bf16.mxu0 0
    %1640 = vmatmul.mubr.bf16.gmra.mrb[0].mxu0 %v1602
    %v1641 = vpop.f32.mrb[0].mxu0
    %v1642 = vadd.f32 0.0, %v1641
    %v1643 = vpop.f32.mrb[0].mxu0
    %v1644 = vadd.f32 0.0, %v1643
    %v1645 = vpop.f32.mrb[0].mxu0
    %v1646 = vadd.f32 0.0, %v1645
    %v1647 = vpop.f32.mrb[0].mxu0
    %v1648 = vadd.f32 0.0, %v1647
    %1649 = vmatprep.mubr.bf16.mxu0 0
    %1650 = vmatmul.mubr.bf16.gmra.mrb[0].mxu0 %v1605
    %v1651 = vpop.f32.mrb[0].mxu0
    %v1652 = vadd.f32 0.0, %v1651
    %v1653 = vpop.f32.mrb[0].mxu0
    %v1654 = vadd.f32 0.0, %v1653
    %v1655 = vpop.f32.mrb[0].mxu0
    %v1656 = vadd.f32 0.0, %v1655
    %v1657 = vpop.f32.mrb[0].mxu0
    %v1658 = vadd.f32 0.0, %v1657
    %1659 = vdwg.mxu0
    %1660 = vmatprep.subr.bf16.mxu0 %v1564
    %1661 = vmatpush1.bf16.msra.mxu0 %v1563
    %1662 = vmatprep.subr.bf16.mxu0 %v1569
    %1663 = vmatpush1.bf16.msra.mxu0 %v1568
    %1664 = vmatprep.subr.bf16.mxu0 %v1574
    %1665 = vmatpush1.bf16.msra.mxu0 %v1573
    %1666 = vmatprep.subr.bf16.mxu0 %v1579
    %1667 = vmatpush1.bf16.msra.mxu0 %v1578
    %1668 = vmatprep.subr.bf16.mxu0 0
    %1669 = vmatpush1.bf16.msra.mxu0 0
    %1670 = vmatprep.subr.bf16.mxu0 0
    %1671 = vmatpush1.bf16.msra.mxu0 0
    %1672 = vmatprep.subr.bf16.mxu0 0
    %1673 = vmatpush1.bf16.msra.mxu0 0
    %1674 = vmatprep.subr.bf16.mxu0 0
    %1675 = vmatpush1.bf16.msra.mxu0 0
    %1676 = vmatprep.subr.bf16.mxu0 0
    %1677 = vmatpush1.bf16.msra.mxu0 0
    %1678 = vmatprep.subr.bf16.mxu0 0
    %1679 = vmatpush1.bf16.msra.mxu0 0
    %1680 = vmatprep.subr.bf16.mxu0 0
    %1681 = vmatpush1.bf16.msra.mxu0 0
    %1682 = vmatprep.subr.bf16.mxu0 0
    %1683 = vmatpush1.bf16.msra.mxu0 0
    %1684 = vmatprep.subr.bf16.mxu0 0
    %1685 = vmatpush1.bf16.msra.mxu0 0
    %1686 = vmatprep.subr.bf16.mxu0 0
    %1687 = vmatpush1.bf16.msra.mxu0 0
    %1688 = vmatprep.subr.bf16.mxu0 0
    %1689 = vmatpush1.bf16.msra.mxu0 0
    %1690 = vmatprep.subr.bf16.mxu0 0
    %1691 = vmatpush1.bf16.msra.mxu0 0
    %1692 = vmatprep.mubr.bf16.mxu0 0
    %1693 = vmatmul.mubr.bf16.gmra.mrb[0].mxu0 %v1602
    %v1694 = vpop.f32.mrb[0].mxu0
    %v1695 = vadd.f32 0.0, %v1694
    %v1696 = vpop.f32.mrb[0].mxu0
    %v1697 = vadd.f32 0.0, %v1696
    %v1698 = vpop.f32.mrb[0].mxu0
    %v1699 = vadd.f32 0.0, %v1698
    %v1700 = vpop.f32.mrb[0].mxu0
    %v1701 = vadd.f32 0.0, %v1700
    %1702 = vmatprep.mubr.bf16.mxu0 0
    %1703 = vmatmul.mubr.bf16.gmra.mrb[0].mxu0 %v1605
    %v1704 = vpop.f32.mrb[0].mxu0
    %v1705 = vadd.f32 0.0, %v1704
    %v1706 = vpop.f32.mrb[0].mxu0
    %v1707 = vadd.f32 0.0, %v1706
    %v1708 = vpop.f32.mrb[0].mxu0
    %v1709 = vadd.f32 0.0, %v1708
    %v1710 = vpop.f32.mrb[0].mxu0
    %v1711 = vadd.f32 0.0, %v1710
    %1712 = vdwg.mxu0
    %1713 = vmatprep.subr.bf16.mxu0 0
    %1714 = vmatpush1.bf16.msra.mxu0 %v1565
    %1715 = vmatprep.subr.bf16.mxu0 0
    %1716 = vmatpush1.bf16.msra.mxu0 %v1570
    %1717 = vmatprep.subr.bf16.mxu0 0
    %1718 = vmatpush1.bf16.msra.mxu0 %v1575
    %1719 = vmatprep.subr.bf16.mxu0 0
    %1720 = vmatpush1.bf16.msra.mxu0 %v1580
    %1721 = vmatprep.subr.bf16.mxu0 0
    %1722 = vmatpush1.bf16.msra.mxu0 0
    %1723 = vmatprep.subr.bf16.mxu0 0
    %1724 = vmatpush1.bf16.msra.mxu0 0
    %1725 = vmatprep.subr.bf16.mxu0 0
    %1726 = vmatpush1.bf16.msra.mxu0 0
    %1727 = vmatprep.subr.bf16.mxu0 0
    %1728 = vmatpush1.bf16.msra.mxu0 0
    %1729 = vmatprep.subr.bf16.mxu0 0
    %1730 = vmatpush1.bf16.msra.mxu0 0
    %1731 = vmatprep.subr.bf16.mxu0 0
    %1732 = vmatpush1.bf16.msra.mxu0 0
    %1733 = vmatprep.subr.bf16.mxu0 0
    %1734 = vmatpush1.bf16.msra.mxu0 0
    %1735 = vmatprep.subr.bf16.mxu0 0
    %1736 = vmatpush1.bf16.msra.mxu0 0
    %1737 = vmatprep.subr.bf16.mxu0 0
    %1738 = vmatpush1.bf16.msra.mxu0 0
    %1739 = vmatprep.subr.bf16.mxu0 0
    %1740 = vmatpush1.bf16.msra.mxu0 0
    %1741 = vmatprep.subr.bf16.mxu0 0
    %1742 = vmatpush1.bf16.msra.mxu0 0
    %1743 = vmatprep.subr.bf16.mxu0 0
    %1744 = vmatpush1.bf16.msra.mxu0 0
    %1745 = vmatprep.mubr.bf16.mxu0 0
    %1746 = vmatmul.mubr.bf16.gmra.mrb[0].mxu0 %v1602
    %v1747 = vpop.f32.mrb[0].mxu0
    %v1748 = vadd.f32 0.0, %v1747
    %v1749 = vpop.f32.mrb[0].mxu0
    %v1750 = vpop.f32.mrb[0].mxu0
    %v1751 = vadd.f32 0.0, %v1750
    %v1752 = vpop.f32.mrb[0].mxu0
    %1753 = vmatprep.mubr.bf16.mxu0 0
    %1754 = vmatmul.mubr.bf16.gmra.mrb[0].mxu0 %v1605
    %v1755 = vpop.f32.mrb[0].mxu0
    %v1756 = vadd.f32 0.0, %v1755
    %v1757 = vpop.f32.mrb[0].mxu0
    %v1758 = vpop.f32.mrb[0].mxu0
    %v1759 = vadd.f32 0.0, %v1758
    %v1760 = vpop.f32.mrb[0].mxu0
    %1761 = vdwg.mxu0
    %v1762 = vrot.slane %v1642, 3
    %v1763 = vrot.slane %v1646, 3
    %v1764 = vrot.slane %v1652, 3
    %v1765 = vrot.slane %v1656, 3
    %v1766 = vsel %vm555, %v1764, %v1765
    %v1767 = vsel %vm555, %v1763, %v1764
    %v1768 = vsel %vm555, %v1762, %v1763
    %v1769 = vsel %vm555, %v1765, %v1762
    %v1770 = vmul.f32 %v1769, %v567
    %v1771 = vmul.f32 %v1768, %v572
    %v1772 = vmul.f32 %v1767, %v577
    %v1773 = vmul.f32 %v1766, %v582
    %v1774 = vadd.f32 %v1695, %v1770
    %v1775 = vadd.f32 %v1699, %v1771
    %v1776 = vadd.f32 %v1705, %v1772
    %v1777 = vadd.f32 %v1709, %v1773
    %1782 = vrot.lane.b32.xlu0 %v1642, 64
    %v1783 = vpop.permute.xlu0 %1782
    %1784 = vrot.lane.b32.xlu0 %v1646, 64
    %v1785 = vpop.permute.xlu0 %1784
    %1786 = vrot.lane.b32.xlu0 %v1652, 64
    %v1787 = vpop.permute.xlu0 %1786
    %1788 = vrot.lane.b32.xlu0 %v1656, 64
    %v1789 = vpop.permute.xlu0 %1788
    %v1794 = vrot.slane %v1783, 4
    %v1795 = vrot.slane %v1785, 4
    %v1796 = vrot.slane %v1787, 4
    %v1797 = vrot.slane %v1789, 4
    %v1798 = vsel %vm612, %v1796, %v1797
    %v1799 = vsel %vm612, %v1795, %v1796
    %v1800 = vsel %vm612, %v1794, %v1795
    %v1801 = vsel %vm612, %v1797, %v1794
    %v1802 = vmul.f32 %v1801, %v625
    %v1803 = vmul.f32 %v1800, %v630
    %v1804 = vmul.f32 %v1799, %v635
    %v1805 = vmul.f32 %v1798, %v640
    %v1806 = vadd.f32 %v1774, %v1802
    %v1807 = vadd.f32 %v1775, %v1803
    %v1808 = vadd.f32 %v1776, %v1804
    %v1809 = vadd.f32 %v1777, %v1805
    %v1810 = vrot.slane %v1644, 5
    %v1811 = vrot.slane %v1648, 5
    %v1812 = vrot.slane %v1654, 5
    %v1813 = vrot.slane %v1658, 5
    %v1814 = vsel %vm654, %v1812, %v1813
    %v1815 = vsel %vm654, %v1811, %v1812
    %v1816 = vsel %vm654, %v1810, %v1811
    %v1817 = vsel %vm654, %v1813, %v1810
    %v1818 = vmul.f32 %v1817, %v667
    %v1819 = vmul.f32 %v1816, %v672
    %v1820 = vmul.f32 %v1815, %v677
    %v1821 = vmul.f32 %v1814, %v682
    %v1822 = vadd.f32 %v1806, %v1818
    %v1823 = vadd.f32 %v1807, %v1819
    %v1824 = vadd.f32 %v1808, %v1820
    %v1825 = vadd.f32 %v1809, %v1821
    %1830 = vrot.lane.b32.xlu0 %v1644, 64
    %v1831 = vpop.permute.xlu0 %1830
    %1832 = vrot.lane.b32.xlu0 %v1648, 64
    %v1833 = vpop.permute.xlu0 %1832
    %1834 = vrot.lane.b32.xlu0 %v1654, 64
    %v1835 = vpop.permute.xlu0 %1834
    %1836 = vrot.lane.b32.xlu0 %v1658, 64
    %v1837 = vpop.permute.xlu0 %1836
    %v1842 = vrot.slane %v1831, 7
    %v1843 = vrot.slane %v1833, 7
    %v1844 = vrot.slane %v1835, 7
    %v1845 = vrot.slane %v1837, 7
    %v1846 = vsel %vm712, %v1844, %v1845
    %v1847 = vsel %vm712, %v1843, %v1844
    %v1848 = vsel %vm712, %v1842, %v1843
    %v1849 = vsel %vm712, %v1845, %v1842
    %v1850 = vmul.f32 %v1849, %v725
    %v1851 = vmul.f32 %v1848, %v730
    %v1852 = vmul.f32 %v1847, %v735
    %v1853 = vmul.f32 %v1846, %v740
    %v1854 = vadd.f32 %v1822, %v1850
    %v1855 = vadd.f32 %v1823, %v1851
    %v1856 = vadd.f32 %v1824, %v1852
    %v1857 = vadd.f32 %v1825, %v1853
    %1862 = vrot.lane.b32.xlu0 %v1695, 64
    %v1863 = vpop.permute.xlu0 %1862
    %1864 = vrot.lane.b32.xlu0 %v1699, 64
    %v1865 = vpop.permute.xlu0 %1864
    %1866 = vrot.lane.b32.xlu0 %v1705, 64
    %v1867 = vpop.permute.xlu0 %1866
    %1868 = vrot.lane.b32.xlu0 %v1709, 64
    %v1869 = vpop.permute.xlu0 %1868
    %v1874 = vrot.slane %v1863, 1
    %v1875 = vrot.slane %v1865, 1
    %v1876 = vrot.slane %v1867, 1
    %v1877 = vrot.slane %v1869, 1
    %v1878 = vsel %vm770, %v1876, %v1877
    %v1879 = vsel %vm770, %v1875, %v1876
    %v1880 = vsel %vm770, %v1874, %v1875
    %v1881 = vsel %vm770, %v1877, %v1874
    %v1882 = vmul.f32 %v1880, %v783
    %v1883 = vmul.f32 %v1879, %v788
    %v1884 = vmul.f32 %v1878, %v793
    %v1885 = vmul.f32 %v1881, %v798
    %v1886 = vadd.f32 %v1854, %v1882
    %v1887 = vadd.f32 %v1855, %v1883
    %v1888 = vadd.f32 %v1856, %v1884
    %v1889 = vadd.f32 %v1857, %v1885
    %v1890 = vrot.slane %v1697, 3
    %v1891 = vrot.slane %v1701, 3
    %v1892 = vrot.slane %v1707, 3
    %v1893 = vrot.slane %v1711, 3
    %v1894 = vsel %vm555, %v1892, %v1893
    %v1895 = vsel %vm555, %v1891, %v1892
    %v1896 = vsel %vm555, %v1890, %v1891
    %v1897 = vsel %vm555, %v1893, %v1890
    %v1898 = vmul.f32 %v1896, %v824
    %v1899 = vmul.f32 %v1895, %v829
    %v1900 = vmul.f32 %v1894, %v834
    %v1901 = vmul.f32 %v1897, %v839
    %v1902 = vadd.f32 %v1886, %v1898
    %v1903 = vadd.f32 %v1887, %v1899
    %v1904 = vadd.f32 %v1888, %v1900
    %v1905 = vadd.f32 %v1889, %v1901
    %1910 = vrot.lane.b32.xlu0 %v1697, 64
    %v1911 = vpop.permute.xlu0 %1910
    %1912 = vrot.lane.b32.xlu0 %v1701, 64
    %v1913 = vpop.permute.xlu0 %1912
    %1914 = vrot.lane.b32.xlu0 %v1707, 64
    %v1915 = vpop.permute.xlu0 %1914
    %1916 = vrot.lane.b32.xlu0 %v1711, 64
    %v1917 = vpop.permute.xlu0 %1916
    %v1922 = vrot.slane %v1911, 4
    %v1923 = vrot.slane %v1913, 4
    %v1924 = vrot.slane %v1915, 4
    %v1925 = vrot.slane %v1917, 4
    %v1926 = vsel %vm612, %v1924, %v1925
    %v1927 = vsel %vm612, %v1923, %v1924
    %v1928 = vsel %vm612, %v1922, %v1923
    %v1929 = vsel %vm612, %v1925, %v1922
    %v1930 = vmul.f32 %v1928, %v881
    %v1931 = vmul.f32 %v1927, %v886
    %v1932 = vmul.f32 %v1926, %v891
    %v1933 = vmul.f32 %v1929, %v896
    %v1934 = vadd.f32 %v1902, %v1930
    %v1935 = vadd.f32 %v1903, %v1931
    %v1936 = vadd.f32 %v1904, %v1932
    %v1937 = vadd.f32 %v1905, %v1933
    %v1938 = vrot.slane %v1748, 5
    %v1939 = vrot.slane %v1751, 5
    %v1940 = vrot.slane %v1756, 5
    %v1941 = vrot.slane %v1759, 5
    %v1942 = vsel %vm654, %v1940, %v1941
    %v1943 = vsel %vm654, %v1939, %v1940
    %v1944 = vsel %vm654, %v1938, %v1939
    %v1945 = vsel %vm654, %v1941, %v1938
    %v1946 = vmul.f32 %v1944, %v922
    %v1947 = vmul.f32 %v1943, %v927
    %v1948 = vmul.f32 %v1942, %v932
    %v1949 = vmul.f32 %v1945, %v937
    %v1950 = vadd.f32 %v1934, %v1946
    %v1951 = vadd.f32 %v1935, %v1947
    %v1952 = vadd.f32 %v1936, %v1948
    %v1953 = vadd.f32 %v1937, %v1949
    %v1955 = vlaneseq
    %v1956 = vshrl.u32 %v1955, 7
    %v1957 = vsub.s32 0, %v1956
    %v1958 = vrot.slane %v1494, %v1957
    %v1960 = vadd.f32 %v1950, %v1958
    %v1961 = vadd.f32 %v1951, %v1958
    %v1962 = vadd.f32 %v1952, %v1958
    %v1963 = vadd.f32 %v1953, %v1958
    %v1964 = vadd.f32 %v1960, %v961
    %v1965 = vadd.f32 %v1961, %v962
    %v1966 = vadd.f32 %v1962, %v963
    %v1967 = vadd.f32 %v1963, %v964
    %s1968 = scalar_lea.vmem %s4, 320
    %v1969 = vld [vmem:[%s1968] sm:$0xff]
    %v1970 = vld [vmem:[%s1968 + $0x8] sm:$0xff]
    %v1971 = vld [vmem:[%s1968 + $0x10] sm:$0xf]
    %v1972 = vld [vmem:[%s1968 + $0x14] sm:$0xff]
    %v1973 = vld [vmem:[%s1968 + $0x1c] sm:$0xff]
    %v1974 = vld [vmem:[%s1968 + $0x24] sm:$0xf]
    %v1975 = vld [vmem:[%s1968 + $0x28] sm:$0xff]
    %v1976 = vld [vmem:[%s1968 + $0x30] sm:$0xff]
    %v1977 = vld [vmem:[%s1968 + $0x38] sm:$0xf]
    %v1978 = vld [vmem:[%s1968 + $0x3c] sm:$0xff]
    %v1979 = vld [vmem:[%s1968 + $0x44] sm:$0xff]
    %v1980 = vld [vmem:[%s1968 + $0x4c] sm:$0xf]
    %v1981 = vld [vmem:[%s1968 + $0x50] sm:$0xff]
    %v1982 = vld [vmem:[%s1968 + $0x58] sm:$0xff]
    %v1983 = vld [vmem:[%s1968 + $0x60] sm:$0xf]
    %v1984 = vld [vmem:[%s1968 + $0x64] sm:$0xff]
    %v1985 = vld [vmem:[%s1968 + $0x6c] sm:$0xff]
    %v1986 = vld [vmem:[%s1968 + $0x74] sm:$0xf]
    %v1987 = vld [vmem:[%s1968 + $0x78] sm:$0xff]
    %v1988 = vld [vmem:[%s1968 + $0x80] sm:$0xff]
    %v1989 = vld [vmem:[%s1968 + $0x88] sm:$0xf]
    %v1990 = vld [vmem:[%s1968 + $0x8c] sm:$0xff]
    %v1991 = vld [vmem:[%s1968 + $0x94] sm:$0xff]
    %v1992 = vld [vmem:[%s1968 + $0x9c] sm:$0xf]
    %s1993 = scalar_lea.vmem %s5, 2
    %v1994 = vld [vmem:[%s1993] sm:$0x1]
    %v1995 = vpack.c.bf16 %v1965, %v1964
    %v1996 = vpack.c.bf16 %v1967, %v1966
    %v2021 = vunpack.c.l.b16 %v1969
    %v2022 = vunpack.c.h.b16 %v1969
    %v2023 = vunpack.c.l.b16 %v1970
    %v2024 = vunpack.c.h.b16 %v1970
    %v2025 = vunpack.c.l.b16 %v1971
    %v2026 = vunpack.c.l.b16 %v1972
    %v2027 = vunpack.c.h.b16 %v1972
    %v2028 = vunpack.c.l.b16 %v1973
    %v2029 = vunpack.c.h.b16 %v1973
    %v2030 = vunpack.c.l.b16 %v1974
    %v2031 = vunpack.c.l.b16 %v1975
    %v2032 = vunpack.c.h.b16 %v1975
    %v2033 = vunpack.c.l.b16 %v1976
    %v2034 = vunpack.c.h.b16 %v1976
    %v2035 = vunpack.c.l.b16 %v1977
    %v2036 = vunpack.c.l.b16 %v1978
    %v2037 = vunpack.c.h.b16 %v1978
    %v2038 = vunpack.c.l.b16 %v1979
    %v2039 = vunpack.c.h.b16 %v1979
    %v2040 = vunpack.c.l.b16 %v1980
    %v2041 = vunpack.c.l.b16 %v1981
    %v2042 = vunpack.c.h.b16 %v1981
    %v2043 = vunpack.c.l.b16 %v1982
    %v2044 = vunpack.c.h.b16 %v1982
    %v2045 = vunpack.c.l.b16 %v1983
    %v2046 = vunpack.c.l.b16 %v1984
    %v2047 = vunpack.c.h.b16 %v1984
    %v2048 = vunpack.c.l.b16 %v1985
    %v2049 = vunpack.c.h.b16 %v1985
    %v2050 = vunpack.c.l.b16 %v1986
    %v2051 = vunpack.c.l.b16 %v1987
    %v2052 = vunpack.c.h.b16 %v1987
    %v2053 = vunpack.c.l.b16 %v1988
    %v2054 = vunpack.c.h.b16 %v1988
    %v2055 = vunpack.c.l.b16 %v1989
    %v2056 = vunpack.c.l.b16 %v1990
    %v2057 = vunpack.c.h.b16 %v1990
    %v2058 = vunpack.c.l.b16 %v1991
    %v2059 = vunpack.c.h.b16 %v1991
    %v2060 = vunpack.c.l.b16 %v1992
    %v2061 = vpack.c.b16 %v2026, %v2021
    %v2062 = vpack.c.b16 %v2027, %v2022
    %v2063 = vpack.c.b16 %v2028, %v2023
    %v2064 = vpack.c.b16 %v2029, %v2024
    %v2065 = vpack.c.b16 %v2030, %v2025
    %v2066 = vpack.c.b16 %v2036, %v2031
    %v2067 = vpack.c.b16 %v2037, %v2032
    %v2068 = vpack.c.b16 %v2038, %v2033
    %v2069 = vpack.c.b16 %v2039, %v2034
    %v2070 = vpack.c.b16 %v2040, %v2035
    %v2071 = vpack.c.b16 %v2046, %v2041
    %v2072 = vpack.c.b16 %v2047, %v2042
    %v2073 = vpack.c.b16 %v2048, %v2043
    %v2074 = vpack.c.b16 %v2049, %v2044
    %v2075 = vpack.c.b16 %v2050, %v2045
    %v2076 = vpack.c.b16 %v2056, %v2051
    %v2077 = vpack.c.b16 %v2057, %v2052
    %v2078 = vpack.c.b16 %v2058, %v2053
    %v2079 = vpack.c.b16 %v2059, %v2054
    %v2080 = vpack.c.b16 %v2060, %v2055
    %v2102 = vsel %vm1096, %v1995, 0
    %v2105 = vsel %vm1096, %v1996, 0
    %2107 = vmatprep.subr.bf16.mxu0 %v2062
    %2108 = vmatpush1.bf16.msra.mxu0 %v2061
    %2109 = vmatprep.subr.bf16.mxu0 %v2067
    %2110 = vmatpush1.bf16.msra.mxu0 %v2066
    %2111 = vmatprep.subr.bf16.mxu0 %v2072
    %2112 = vmatpush1.bf16.msra.mxu0 %v2071
    %2113 = vmatprep.subr.bf16.mxu0 %v2077
    %2114 = vmatpush1.bf16.msra.mxu0 %v2076
    %2115 = vmatprep.subr.bf16.mxu0 0
    %2116 = vmatpush1.bf16.msra.mxu0 0
    %2117 = vmatprep.subr.bf16.mxu0 0
    %2118 = vmatpush1.bf16.msra.mxu0 0
    %2119 = vmatprep.subr.bf16.mxu0 0
    %2120 = vmatpush1.bf16.msra.mxu0 0
    %2121 = vmatprep.subr.bf16.mxu0 0
    %2122 = vmatpush1.bf16.msra.mxu0 0
    %2123 = vmatprep.subr.bf16.mxu0 0
    %2124 = vmatpush1.bf16.msra.mxu0 0
    %2125 = vmatprep.subr.bf16.mxu0 0
    %2126 = vmatpush1.bf16.msra.mxu0 0
    %2127 = vmatprep.subr.bf16.mxu0 0
    %2128 = vmatpush1.bf16.msra.mxu0 0
    %2129 = vmatprep.subr.bf16.mxu0 0
    %2130 = vmatpush1.bf16.msra.mxu0 0
    %2131 = vmatprep.subr.bf16.mxu0 0
    %2132 = vmatpush1.bf16.msra.mxu0 0
    %2133 = vmatprep.subr.bf16.mxu0 0
    %2134 = vmatpush1.bf16.msra.mxu0 0
    %2135 = vmatprep.subr.bf16.mxu0 0
    %2136 = vmatpush1.bf16.msra.mxu0 0
    %2137 = vmatprep.subr.bf16.mxu0 0
    %2138 = vmatpush1.bf16.msra.mxu0 0
    %2139 = vmatprep.mubr.bf16.mxu0 0
    %2140 = vmatmul.mubr.bf16.gmra.mrb[0].mxu0 %v2102
    %v2141 = vpop.f32.mrb[0].mxu0
    %v2142 = vadd.f32 0.0, %v2141
    %v2143 = vpop.f32.mrb[0].mxu0
    %v2144 = vadd.f32 0.0, %v2143
    %v2145 = vpop.f32.mrb[0].mxu0
    %v2146 = vadd.f32 0.0, %v2145
    %v2147 = vpop.f32.mrb[0].mxu0
    %v2148 = vadd.f32 0.0, %v2147
    %2149 = vmatprep.mubr.bf16.mxu0 0
    %2150 = vmatmul.mubr.bf16.gmra.mrb[0].mxu0 %v2105
    %v2151 = vpop.f32.mrb[0].mxu0
    %v2152 = vadd.f32 0.0, %v2151
    %v2153 = vpop.f32.mrb[0].mxu0
    %v2154 = vadd.f32 0.0, %v2153
    %v2155 = vpop.f32.mrb[0].mxu0
    %v2156 = vadd.f32 0.0, %v2155
    %v2157 = vpop.f32.mrb[0].mxu0
    %v2158 = vadd.f32 0.0, %v2157
    %2159 = vdwg.mxu0
    %2160 = vmatprep.subr.bf16.mxu0 %v2064
    %2161 = vmatpush1.bf16.msra.mxu0 %v2063
    %2162 = vmatprep.subr.bf16.mxu0 %v2069
    %2163 = vmatpush1.bf16.msra.mxu0 %v2068
    %2164 = vmatprep.subr.bf16.mxu0 %v2074
    %2165 = vmatpush1.bf16.msra.mxu0 %v2073
    %2166 = vmatprep.subr.bf16.mxu0 %v2079
    %2167 = vmatpush1.bf16.msra.mxu0 %v2078
    %2168 = vmatprep.subr.bf16.mxu0 0
    %2169 = vmatpush1.bf16.msra.mxu0 0
    %2170 = vmatprep.subr.bf16.mxu0 0
    %2171 = vmatpush1.bf16.msra.mxu0 0
    %2172 = vmatprep.subr.bf16.mxu0 0
    %2173 = vmatpush1.bf16.msra.mxu0 0
    %2174 = vmatprep.subr.bf16.mxu0 0
    %2175 = vmatpush1.bf16.msra.mxu0 0
    %2176 = vmatprep.subr.bf16.mxu0 0
    %2177 = vmatpush1.bf16.msra.mxu0 0
    %2178 = vmatprep.subr.bf16.mxu0 0
    %2179 = vmatpush1.bf16.msra.mxu0 0
    %2180 = vmatprep.subr.bf16.mxu0 0
    %2181 = vmatpush1.bf16.msra.mxu0 0
    %2182 = vmatprep.subr.bf16.mxu0 0
    %2183 = vmatpush1.bf16.msra.mxu0 0
    %2184 = vmatprep.subr.bf16.mxu0 0
    %2185 = vmatpush1.bf16.msra.mxu0 0
    %2186 = vmatprep.subr.bf16.mxu0 0
    %2187 = vmatpush1.bf16.msra.mxu0 0
    %2188 = vmatprep.subr.bf16.mxu0 0
    %2189 = vmatpush1.bf16.msra.mxu0 0
    %2190 = vmatprep.subr.bf16.mxu0 0
    %2191 = vmatpush1.bf16.msra.mxu0 0
    %2192 = vmatprep.mubr.bf16.mxu0 0
    %2193 = vmatmul.mubr.bf16.gmra.mrb[0].mxu0 %v2102
    %v2194 = vpop.f32.mrb[0].mxu0
    %v2195 = vadd.f32 0.0, %v2194
    %v2196 = vpop.f32.mrb[0].mxu0
    %v2197 = vadd.f32 0.0, %v2196
    %v2198 = vpop.f32.mrb[0].mxu0
    %v2199 = vadd.f32 0.0, %v2198
    %v2200 = vpop.f32.mrb[0].mxu0
    %v2201 = vadd.f32 0.0, %v2200
    %2202 = vmatprep.mubr.bf16.mxu0 0
    %2203 = vmatmul.mubr.bf16.gmra.mrb[0].mxu0 %v2105
    %v2204 = vpop.f32.mrb[0].mxu0
    %v2205 = vadd.f32 0.0, %v2204
    %v2206 = vpop.f32.mrb[0].mxu0
    %v2207 = vadd.f32 0.0, %v2206
    %v2208 = vpop.f32.mrb[0].mxu0
    %v2209 = vadd.f32 0.0, %v2208
    %v2210 = vpop.f32.mrb[0].mxu0
    %v2211 = vadd.f32 0.0, %v2210
    %2212 = vdwg.mxu0
    %2213 = vmatprep.subr.bf16.mxu0 0
    %2214 = vmatpush1.bf16.msra.mxu0 %v2065
    %2215 = vmatprep.subr.bf16.mxu0 0
    %2216 = vmatpush1.bf16.msra.mxu0 %v2070
    %2217 = vmatprep.subr.bf16.mxu0 0
    %2218 = vmatpush1.bf16.msra.mxu0 %v2075
    %2219 = vmatprep.subr.bf16.mxu0 0
    %2220 = vmatpush1.bf16.msra.mxu0 %v2080
    %2221 = vmatprep.subr.bf16.mxu0 0
    %2222 = vmatpush1.bf16.msra.mxu0 0
    %2223 = vmatprep.subr.bf16.mxu0 0
    %2224 = vmatpush1.bf16.msra.mxu0 0
    %2225 = vmatprep.subr.bf16.mxu0 0
    %2226 = vmatpush1.bf16.msra.mxu0 0
    %2227 = vmatprep.subr.bf16.mxu0 0
    %2228 = vmatpush1.bf16.msra.mxu0 0
    %2229 = vmatprep.subr.bf16.mxu0 0
    %2230 = vmatpush1.bf16.msra.mxu0 0
    %2231 = vmatprep.subr.bf16.mxu0 0
    %2232 = vmatpush1.bf16.msra.mxu0 0
    %2233 = vmatprep.subr.bf16.mxu0 0
    %2234 = vmatpush1.bf16.msra.mxu0 0
    %2235 = vmatprep.subr.bf16.mxu0 0
    %2236 = vmatpush1.bf16.msra.mxu0 0
    %2237 = vmatprep.subr.bf16.mxu0 0
    %2238 = vmatpush1.bf16.msra.mxu0 0
    %2239 = vmatprep.subr.bf16.mxu0 0
    %2240 = vmatpush1.bf16.msra.mxu0 0
    %2241 = vmatprep.subr.bf16.mxu0 0
    %2242 = vmatpush1.bf16.msra.mxu0 0
    %2243 = vmatprep.subr.bf16.mxu0 0
    %2244 = vmatpush1.bf16.msra.mxu0 0
    %2245 = vmatprep.mubr.bf16.mxu0 0
    %2246 = vmatmul.mubr.bf16.gmra.mrb[0].mxu0 %v2102
    %v2247 = vpop.f32.mrb[0].mxu0
    %v2248 = vadd.f32 0.0, %v2247
    %v2249 = vpop.f32.mrb[0].mxu0
    %v2250 = vpop.f32.mrb[0].mxu0
    %v2251 = vadd.f32 0.0, %v2250
    %v2252 = vpop.f32.mrb[0].mxu0
    %2253 = vmatprep.mubr.bf16.mxu0 0
    %2254 = vmatmul.mubr.bf16.gmra.mrb[0].mxu0 %v2105
    %v2255 = vpop.f32.mrb[0].mxu0
    %v2256 = vadd.f32 0.0, %v2255
    %v2257 = vpop.f32.mrb[0].mxu0
    %v2258 = vpop.f32.mrb[0].mxu0
    %v2259 = vadd.f32 0.0, %v2258
    %v2260 = vpop.f32.mrb[0].mxu0
    %2261 = vdwg.mxu0
    %v2262 = vrot.slane %v2142, 3
    %v2263 = vrot.slane %v2146, 3
    %v2264 = vrot.slane %v2152, 3
    %v2265 = vrot.slane %v2156, 3
    %v2266 = vsel %vm555, %v2264, %v2265
    %v2267 = vsel %vm555, %v2263, %v2264
    %v2268 = vsel %vm555, %v2262, %v2263
    %v2269 = vsel %vm555, %v2265, %v2262
    %v2270 = vmul.f32 %v2269, %v567
    %v2271 = vmul.f32 %v2268, %v572
    %v2272 = vmul.f32 %v2267, %v577
    %v2273 = vmul.f32 %v2266, %v582
    %v2274 = vadd.f32 %v2195, %v2270
    %v2275 = vadd.f32 %v2199, %v2271
    %v2276 = vadd.f32 %v2205, %v2272
    %v2277 = vadd.f32 %v2209, %v2273
    %2282 = vrot.lane.b32.xlu0 %v2142, 64
    %v2283 = vpop.permute.xlu0 %2282
    %2284 = vrot.lane.b32.xlu0 %v2146, 64
    %v2285 = vpop.permute.xlu0 %2284
    %2286 = vrot.lane.b32.xlu0 %v2152, 64
    %v2287 = vpop.permute.xlu0 %2286
    %2288 = vrot.lane.b32.xlu0 %v2156, 64
    %v2289 = vpop.permute.xlu0 %2288
    %v2294 = vrot.slane %v2283, 4
    %v2295 = vrot.slane %v2285, 4
    %v2296 = vrot.slane %v2287, 4
    %v2297 = vrot.slane %v2289, 4
    %v2298 = vsel %vm612, %v2296, %v2297
    %v2299 = vsel %vm612, %v2295, %v2296
    %v2300 = vsel %vm612, %v2294, %v2295
    %v2301 = vsel %vm612, %v2297, %v2294
    %v2302 = vmul.f32 %v2301, %v625
    %v2303 = vmul.f32 %v2300, %v630
    %v2304 = vmul.f32 %v2299, %v635
    %v2305 = vmul.f32 %v2298, %v640
    %v2306 = vadd.f32 %v2274, %v2302
    %v2307 = vadd.f32 %v2275, %v2303
    %v2308 = vadd.f32 %v2276, %v2304
    %v2309 = vadd.f32 %v2277, %v2305
    %v2310 = vrot.slane %v2144, 5
    %v2311 = vrot.slane %v2148, 5
    %v2312 = vrot.slane %v2154, 5
    %v2313 = vrot.slane %v2158, 5
    %v2314 = vsel %vm654, %v2312, %v2313
    %v2315 = vsel %vm654, %v2311, %v2312
    %v2316 = vsel %vm654, %v2310, %v2311
    %v2317 = vsel %vm654, %v2313, %v2310
    %v2318 = vmul.f32 %v2317, %v667
    %v2319 = vmul.f32 %v2316, %v672
    %v2320 = vmul.f32 %v2315, %v677
    %v2321 = vmul.f32 %v2314, %v682
    %v2322 = vadd.f32 %v2306, %v2318
    %v2323 = vadd.f32 %v2307, %v2319
    %v2324 = vadd.f32 %v2308, %v2320
    %v2325 = vadd.f32 %v2309, %v2321
    %2330 = vrot.lane.b32.xlu0 %v2144, 64
    %v2331 = vpop.permute.xlu0 %2330
    %2332 = vrot.lane.b32.xlu0 %v2148, 64
    %v2333 = vpop.permute.xlu0 %2332
    %2334 = vrot.lane.b32.xlu0 %v2154, 64
    %v2335 = vpop.permute.xlu0 %2334
    %2336 = vrot.lane.b32.xlu0 %v2158, 64
    %v2337 = vpop.permute.xlu0 %2336
    %v2342 = vrot.slane %v2331, 7
    %v2343 = vrot.slane %v2333, 7
    %v2344 = vrot.slane %v2335, 7
    %v2345 = vrot.slane %v2337, 7
    %v2346 = vsel %vm712, %v2344, %v2345
    %v2347 = vsel %vm712, %v2343, %v2344
    %v2348 = vsel %vm712, %v2342, %v2343
    %v2349 = vsel %vm712, %v2345, %v2342
    %v2350 = vmul.f32 %v2349, %v725
    %v2351 = vmul.f32 %v2348, %v730
    %v2352 = vmul.f32 %v2347, %v735
    %v2353 = vmul.f32 %v2346, %v740
    %v2354 = vadd.f32 %v2322, %v2350
    %v2355 = vadd.f32 %v2323, %v2351
    %v2356 = vadd.f32 %v2324, %v2352
    %v2357 = vadd.f32 %v2325, %v2353
    %2362 = vrot.lane.b32.xlu0 %v2195, 64
    %v2363 = vpop.permute.xlu0 %2362
    %2364 = vrot.lane.b32.xlu0 %v2199, 64
    %v2365 = vpop.permute.xlu0 %2364
    %2366 = vrot.lane.b32.xlu0 %v2205, 64
    %v2367 = vpop.permute.xlu0 %2366
    %2368 = vrot.lane.b32.xlu0 %v2209, 64
    %v2369 = vpop.permute.xlu0 %2368
    %v2374 = vrot.slane %v2363, 1
    %v2375 = vrot.slane %v2365, 1
    %v2376 = vrot.slane %v2367, 1
    %v2377 = vrot.slane %v2369, 1
    %v2378 = vsel %vm770, %v2376, %v2377
    %v2379 = vsel %vm770, %v2375, %v2376
    %v2380 = vsel %vm770, %v2374, %v2375
    %v2381 = vsel %vm770, %v2377, %v2374
    %v2382 = vmul.f32 %v2380, %v783
    %v2383 = vmul.f32 %v2379, %v788
    %v2384 = vmul.f32 %v2378, %v793
    %v2385 = vmul.f32 %v2381, %v798
    %v2386 = vadd.f32 %v2354, %v2382
    %v2387 = vadd.f32 %v2355, %v2383
    %v2388 = vadd.f32 %v2356, %v2384
    %v2389 = vadd.f32 %v2357, %v2385
    %v2390 = vrot.slane %v2197, 3
    %v2391 = vrot.slane %v2201, 3
    %v2392 = vrot.slane %v2207, 3
    %v2393 = vrot.slane %v2211, 3
    %v2394 = vsel %vm555, %v2392, %v2393
    %v2395 = vsel %vm555, %v2391, %v2392
    %v2396 = vsel %vm555, %v2390, %v2391
    %v2397 = vsel %vm555, %v2393, %v2390
    %v2398 = vmul.f32 %v2396, %v824
    %v2399 = vmul.f32 %v2395, %v829
    %v2400 = vmul.f32 %v2394, %v834
    %v2401 = vmul.f32 %v2397, %v839
    %v2402 = vadd.f32 %v2386, %v2398
    %v2403 = vadd.f32 %v2387, %v2399
    %v2404 = vadd.f32 %v2388, %v2400
    %v2405 = vadd.f32 %v2389, %v2401
    %2410 = vrot.lane.b32.xlu0 %v2197, 64
    %v2411 = vpop.permute.xlu0 %2410
    %2412 = vrot.lane.b32.xlu0 %v2201, 64
    %v2413 = vpop.permute.xlu0 %2412
    %2414 = vrot.lane.b32.xlu0 %v2207, 64
    %v2415 = vpop.permute.xlu0 %2414
    %2416 = vrot.lane.b32.xlu0 %v2211, 64
    %v2417 = vpop.permute.xlu0 %2416
    %v2422 = vrot.slane %v2411, 4
    %v2423 = vrot.slane %v2413, 4
    %v2424 = vrot.slane %v2415, 4
    %v2425 = vrot.slane %v2417, 4
    %v2426 = vsel %vm612, %v2424, %v2425
    %v2427 = vsel %vm612, %v2423, %v2424
    %v2428 = vsel %vm612, %v2422, %v2423
    %v2429 = vsel %vm612, %v2425, %v2422
    %v2430 = vmul.f32 %v2428, %v881
    %v2431 = vmul.f32 %v2427, %v886
    %v2432 = vmul.f32 %v2426, %v891
    %v2433 = vmul.f32 %v2429, %v896
    %v2434 = vadd.f32 %v2402, %v2430
    %v2435 = vadd.f32 %v2403, %v2431
    %v2436 = vadd.f32 %v2404, %v2432
    %v2437 = vadd.f32 %v2405, %v2433
    %v2438 = vrot.slane %v2248, 5
    %v2439 = vrot.slane %v2251, 5
    %v2440 = vrot.slane %v2256, 5
    %v2441 = vrot.slane %v2259, 5
    %v2442 = vsel %vm654, %v2440, %v2441
    %v2443 = vsel %vm654, %v2439, %v2440
    %v2444 = vsel %vm654, %v2438, %v2439
    %v2445 = vsel %vm654, %v2441, %v2438
    %v2446 = vmul.f32 %v2444, %v922
    %v2447 = vmul.f32 %v2443, %v927
    %v2448 = vmul.f32 %v2442, %v932
    %v2449 = vmul.f32 %v2445, %v937
    %v2450 = vadd.f32 %v2434, %v2446
    %v2451 = vadd.f32 %v2435, %v2447
    %v2452 = vadd.f32 %v2436, %v2448
    %v2453 = vadd.f32 %v2437, %v2449
    %v2455 = vlaneseq
    %v2456 = vshrl.u32 %v2455, 7
    %v2457 = vsub.s32 0, %v2456
    %v2458 = vrot.slane %v1994, %v2457
    %v2460 = vadd.f32 %v2450, %v2458
    %v2461 = vadd.f32 %v2451, %v2458
    %v2462 = vadd.f32 %v2452, %v2458
    %v2463 = vadd.f32 %v2453, %v2458
    %v2464 = vmul.f32 %v2460, 0.1
    %v2465 = vmul.f32 %v2461, 0.1
    %v2466 = vmul.f32 %v2462, 0.1
    %v2467 = vmul.f32 %v2463, 0.1
    %v2468 = vmax.f32 %v2460, %v2464
    %v2469 = vmax.f32 %v2461, %v2465
    %v2470 = vmax.f32 %v2462, %v2466
    %v2471 = vmax.f32 %v2463, %v2467
    %s2472 = scalar_lea.vmem %s4, 480
    %v2473 = vld [vmem:[%s2472] sm:$0xff]
    %v2474 = vld [vmem:[%s2472 + $0x8] sm:$0xff]
    %v2475 = vld [vmem:[%s2472 + $0x10] sm:$0xf]
    %v2476 = vld [vmem:[%s2472 + $0x14] sm:$0xff]
    %v2477 = vld [vmem:[%s2472 + $0x1c] sm:$0xff]
    %v2478 = vld [vmem:[%s2472 + $0x24] sm:$0xf]
    %v2479 = vld [vmem:[%s2472 + $0x28] sm:$0xff]
    %v2480 = vld [vmem:[%s2472 + $0x30] sm:$0xff]
    %v2481 = vld [vmem:[%s2472 + $0x38] sm:$0xf]
    %v2482 = vld [vmem:[%s2472 + $0x3c] sm:$0xff]
    %v2483 = vld [vmem:[%s2472 + $0x44] sm:$0xff]
    %v2484 = vld [vmem:[%s2472 + $0x4c] sm:$0xf]
    %v2485 = vld [vmem:[%s2472 + $0x50] sm:$0xff]
    %v2486 = vld [vmem:[%s2472 + $0x58] sm:$0xff]
    %v2487 = vld [vmem:[%s2472 + $0x60] sm:$0xf]
    %v2488 = vld [vmem:[%s2472 + $0x64] sm:$0xff]
    %v2489 = vld [vmem:[%s2472 + $0x6c] sm:$0xff]
    %v2490 = vld [vmem:[%s2472 + $0x74] sm:$0xf]
    %v2491 = vld [vmem:[%s2472 + $0x78] sm:$0xff]
    %v2492 = vld [vmem:[%s2472 + $0x80] sm:$0xff]
    %v2493 = vld [vmem:[%s2472 + $0x88] sm:$0xf]
    %v2494 = vld [vmem:[%s2472 + $0x8c] sm:$0xff]
    %v2495 = vld [vmem:[%s2472 + $0x94] sm:$0xff]
    %v2496 = vld [vmem:[%s2472 + $0x9c] sm:$0xf]
    %s2497 = scalar_lea.vmem %s5, 3
    %v2498 = vld [vmem:[%s2497] sm:$0x1]
    %v2499 = vpack.c.bf16 %v2469, %v2468
    %v2500 = vpack.c.bf16 %v2471, %v2470
    %v2525 = vunpack.c.l.b16 %v2473
    %v2526 = vunpack.c.h.b16 %v2473
    %v2527 = vunpack.c.l.b16 %v2474
    %v2528 = vunpack.c.h.b16 %v2474
    %v2529 = vunpack.c.l.b16 %v2475
    %v2530 = vunpack.c.l.b16 %v2476
    %v2531 = vunpack.c.h.b16 %v2476
    %v2532 = vunpack.c.l.b16 %v2477
    %v2533 = vunpack.c.h.b16 %v2477
    %v2534 = vunpack.c.l.b16 %v2478
    %v2535 = vunpack.c.l.b16 %v2479
    %v2536 = vunpack.c.h.b16 %v2479
    %v2537 = vunpack.c.l.b16 %v2480
    %v2538 = vunpack.c.h.b16 %v2480
    %v2539 = vunpack.c.l.b16 %v2481
    %v2540 = vunpack.c.l.b16 %v2482
    %v2541 = vunpack.c.h.b16 %v2482
    %v2542 = vunpack.c.l.b16 %v2483
    %v2543 = vunpack.c.h.b16 %v2483
    %v2544 = vunpack.c.l.b16 %v2484
    %v2545 = vunpack.c.l.b16 %v2485
    %v2546 = vunpack.c.h.b16 %v2485
    %v2547 = vunpack.c.l.b16 %v2486
    %v2548 = vunpack.c.h.b16 %v2486
    %v2549 = vunpack.c.l.b16 %v2487
    %v2550 = vunpack.c.l.b16 %v2488
    %v2551 = vunpack.c.h.b16 %v2488
    %v2552 = vunpack.c.l.b16 %v2489
    %v2553 = vunpack.c.h.b16 %v2489
    %v2554 = vunpack.c.l.b16 %v2490
    %v2555 = vunpack.c.l.b16 %v2491
    %v2556 = vunpack.c.h.b16 %v2491
    %v2557 = vunpack.c.l.b16 %v2492
    %v2558 = vunpack.c.h.b16 %v2492
    %v2559 = vunpack.c.l.b16 %v2493
    %v2560 = vunpack.c.l.b16 %v2494
    %v2561 = vunpack.c.h.b16 %v2494
    %v2562 = vunpack.c.l.b16 %v2495
    %v2563 = vunpack.c.h.b16 %v2495
    %v2564 = vunpack.c.l.b16 %v2496
    %v2565 = vpack.c.b16 %v2530, %v2525
    %v2566 = vpack.c.b16 %v2531, %v2526
    %v2567 = vpack.c.b16 %v2532, %v2527
    %v2568 = vpack.c.b16 %v2533, %v2528
    %v2569 = vpack.c.b16 %v2534, %v2529
    %v2570 = vpack.c.b16 %v2540, %v2535
    %v2571 = vpack.c.b16 %v2541, %v2536
    %v2572 = vpack.c.b16 %v2542, %v2537
    %v2573 = vpack.c.b16 %v2543, %v2538
    %v2574 = vpack.c.b16 %v2544, %v2539
    %v2575 = vpack.c.b16 %v2550, %v2545
    %v2576 = vpack.c.b16 %v2551, %v2546
    %v2577 = vpack.c.b16 %v2552, %v2547
    %v2578 = vpack.c.b16 %v2553, %v2548
    %v2579 = vpack.c.b16 %v2554, %v2549
    %v2580 = vpack.c.b16 %v2560, %v2555
    %v2581 = vpack.c.b16 %v2561, %v2556
    %v2582 = vpack.c.b16 %v2562, %v2557
    %v2583 = vpack.c.b16 %v2563, %v2558
    %v2584 = vpack.c.b16 %v2564, %v2559
    %v2606 = vsel %vm1096, %v2499, 0
    %v2609 = vsel %vm1096, %v2500, 0
    %2611 = vmatprep.subr.bf16.mxu0 %v2566
    %2612 = vmatpush1.bf16.msra.mxu0 %v2565
    %2613 = vmatprep.subr.bf16.mxu0 %v2571
    %2614 = vmatpush1.bf16.msra.mxu0 %v2570
    %2615 = vmatprep.subr.bf16.mxu0 %v2576
    %2616 = vmatpush1.bf16.msra.mxu0 %v2575
    %2617 = vmatprep.subr.bf16.mxu0 %v2581
    %2618 = vmatpush1.bf16.msra.mxu0 %v2580
    %2619 = vmatprep.subr.bf16.mxu0 0
    %2620 = vmatpush1.bf16.msra.mxu0 0
    %2621 = vmatprep.subr.bf16.mxu0 0
    %2622 = vmatpush1.bf16.msra.mxu0 0
    %2623 = vmatprep.subr.bf16.mxu0 0
    %2624 = vmatpush1.bf16.msra.mxu0 0
    %2625 = vmatprep.subr.bf16.mxu0 0
    %2626 = vmatpush1.bf16.msra.mxu0 0
    %2627 = vmatprep.subr.bf16.mxu0 0
    %2628 = vmatpush1.bf16.msra.mxu0 0
    %2629 = vmatprep.subr.bf16.mxu0 0
    %2630 = vmatpush1.bf16.msra.mxu0 0
    %2631 = vmatprep.subr.bf16.mxu0 0
    %2632 = vmatpush1.bf16.msra.mxu0 0
    %2633 = vmatprep.subr.bf16.mxu0 0
    %2634 = vmatpush1.bf16.msra.mxu0 0
    %2635 = vmatprep.subr.bf16.mxu0 0
    %2636 = vmatpush1.bf16.msra.mxu0 0
    %2637 = vmatprep.subr.bf16.mxu0 0
    %2638 = vmatpush1.bf16.msra.mxu0 0
    %2639 = vmatprep.subr.bf16.mxu0 0
    %2640 = vmatpush1.bf16.msra.mxu0 0
    %2641 = vmatprep.subr.bf16.mxu0 0
    %2642 = vmatpush1.bf16.msra.mxu0 0
    %2643 = vmatprep.mubr.bf16.mxu0 0
    %2644 = vmatmul.mubr.bf16.gmra.mrb[0].mxu0 %v2606
    %v2645 = vpop.f32.mrb[0].mxu0
    %v2646 = vadd.f32 0.0, %v2645
    %v2647 = vpop.f32.mrb[0].mxu0
    %v2648 = vadd.f32 0.0, %v2647
    %v2649 = vpop.f32.mrb[0].mxu0
    %v2650 = vadd.f32 0.0, %v2649
    %v2651 = vpop.f32.mrb[0].mxu0
    %v2652 = vadd.f32 0.0, %v2651
    %2653 = vmatprep.mubr.bf16.mxu0 0
    %2654 = vmatmul.mubr.bf16.gmra.mrb[0].mxu0 %v2609
    %v2655 = vpop.f32.mrb[0].mxu0
    %v2656 = vadd.f32 0.0, %v2655
    %v2657 = vpop.f32.mrb[0].mxu0
    %v2658 = vadd.f32 0.0, %v2657
    %v2659 = vpop.f32.mrb[0].mxu0
    %v2660 = vadd.f32 0.0, %v2659
    %v2661 = vpop.f32.mrb[0].mxu0
    %v2662 = vadd.f32 0.0, %v2661
    %2663 = vdwg.mxu0
    %2664 = vmatprep.subr.bf16.mxu0 %v2568
    %2665 = vmatpush1.bf16.msra.mxu0 %v2567
    %2666 = vmatprep.subr.bf16.mxu0 %v2573
    %2667 = vmatpush1.bf16.msra.mxu0 %v2572
    %2668 = vmatprep.subr.bf16.mxu0 %v2578
    %2669 = vmatpush1.bf16.msra.mxu0 %v2577
    %2670 = vmatprep.subr.bf16.mxu0 %v2583
    %2671 = vmatpush1.bf16.msra.mxu0 %v2582
    %2672 = vmatprep.subr.bf16.mxu0 0
    %2673 = vmatpush1.bf16.msra.mxu0 0
    %2674 = vmatprep.subr.bf16.mxu0 0
    %2675 = vmatpush1.bf16.msra.mxu0 0
    %2676 = vmatprep.subr.bf16.mxu0 0
    %2677 = vmatpush1.bf16.msra.mxu0 0
    %2678 = vmatprep.subr.bf16.mxu0 0
    %2679 = vmatpush1.bf16.msra.mxu0 0
    %2680 = vmatprep.subr.bf16.mxu0 0
    %2681 = vmatpush1.bf16.msra.mxu0 0
    %2682 = vmatprep.subr.bf16.mxu0 0
    %2683 = vmatpush1.bf16.msra.mxu0 0
    %2684 = vmatprep.subr.bf16.mxu0 0
    %2685 = vmatpush1.bf16.msra.mxu0 0
    %2686 = vmatprep.subr.bf16.mxu0 0
    %2687 = vmatpush1.bf16.msra.mxu0 0
    %2688 = vmatprep.subr.bf16.mxu0 0
    %2689 = vmatpush1.bf16.msra.mxu0 0
    %2690 = vmatprep.subr.bf16.mxu0 0
    %2691 = vmatpush1.bf16.msra.mxu0 0
    %2692 = vmatprep.subr.bf16.mxu0 0
    %2693 = vmatpush1.bf16.msra.mxu0 0
    %2694 = vmatprep.subr.bf16.mxu0 0
    %2695 = vmatpush1.bf16.msra.mxu0 0
    %2696 = vmatprep.mubr.bf16.mxu0 0
    %2697 = vmatmul.mubr.bf16.gmra.mrb[0].mxu0 %v2606
    %v2698 = vpop.f32.mrb[0].mxu0
    %v2699 = vadd.f32 0.0, %v2698
    %v2700 = vpop.f32.mrb[0].mxu0
    %v2701 = vadd.f32 0.0, %v2700
    %v2702 = vpop.f32.mrb[0].mxu0
    %v2703 = vadd.f32 0.0, %v2702
    %v2704 = vpop.f32.mrb[0].mxu0
    %v2705 = vadd.f32 0.0, %v2704
    %2706 = vmatprep.mubr.bf16.mxu0 0
    %2707 = vmatmul.mubr.bf16.gmra.mrb[0].mxu0 %v2609
    %v2708 = vpop.f32.mrb[0].mxu0
    %v2709 = vadd.f32 0.0, %v2708
    %v2710 = vpop.f32.mrb[0].mxu0
    %v2711 = vadd.f32 0.0, %v2710
    %v2712 = vpop.f32.mrb[0].mxu0
    %v2713 = vadd.f32 0.0, %v2712
    %v2714 = vpop.f32.mrb[0].mxu0
    %v2715 = vadd.f32 0.0, %v2714
    %2716 = vdwg.mxu0
    %2717 = vmatprep.subr.bf16.mxu0 0
    %2718 = vmatpush1.bf16.msra.mxu0 %v2569
    %2719 = vmatprep.subr.bf16.mxu0 0
    %2720 = vmatpush1.bf16.msra.mxu0 %v2574
    %2721 = vmatprep.subr.bf16.mxu0 0
    %2722 = vmatpush1.bf16.msra.mxu0 %v2579
    %2723 = vmatprep.subr.bf16.mxu0 0
    %2724 = vmatpush1.bf16.msra.mxu0 %v2584
    %2725 = vmatprep.subr.bf16.mxu0 0
    %2726 = vmatpush1.bf16.msra.mxu0 0
    %2727 = vmatprep.subr.bf16.mxu0 0
    %2728 = vmatpush1.bf16.msra.mxu0 0
    %2729 = vmatprep.subr.bf16.mxu0 0
    %2730 = vmatpush1.bf16.msra.mxu0 0
    %2731 = vmatprep.subr.bf16.mxu0 0
    %2732 = vmatpush1.bf16.msra.mxu0 0
    %2733 = vmatprep.subr.bf16.mxu0 0
    %2734 = vmatpush1.bf16.msra.mxu0 0
    %2735 = vmatprep.subr.bf16.mxu0 0
    %2736 = vmatpush1.bf16.msra.mxu0 0
    %2737 = vmatprep.subr.bf16.mxu0 0
    %2738 = vmatpush1.bf16.msra.mxu0 0
    %2739 = vmatprep.subr.bf16.mxu0 0
    %2740 = vmatpush1.bf16.msra.mxu0 0
    %2741 = vmatprep.subr.bf16.mxu0 0
    %2742 = vmatpush1.bf16.msra.mxu0 0
    %2743 = vmatprep.subr.bf16.mxu0 0
    %2744 = vmatpush1.bf16.msra.mxu0 0
    %2745 = vmatprep.subr.bf16.mxu0 0
    %2746 = vmatpush1.bf16.msra.mxu0 0
    %2747 = vmatprep.subr.bf16.mxu0 0
    %2748 = vmatpush1.bf16.msra.mxu0 0
    %2749 = vmatprep.mubr.bf16.mxu0 0
    %2750 = vmatmul.mubr.bf16.gmra.mrb[0].mxu0 %v2606
    %v2751 = vpop.f32.mrb[0].mxu0
    %v2752 = vadd.f32 0.0, %v2751
    %v2753 = vpop.f32.mrb[0].mxu0
    %v2754 = vpop.f32.mrb[0].mxu0
    %v2755 = vadd.f32 0.0, %v2754
    %v2756 = vpop.f32.mrb[0].mxu0
    %2757 = vmatprep.mubr.bf16.mxu0 0
    %2758 = vmatmul.mubr.bf16.gmra.mrb[0].mxu0 %v2609
    %v2759 = vpop.f32.mrb[0].mxu0
    %v2760 = vadd.f32 0.0, %v2759
    %v2761 = vpop.f32.mrb[0].mxu0
    %v2762 = vpop.f32.mrb[0].mxu0
    %v2763 = vadd.f32 0.0, %v2762
    %v2764 = vpop.f32.mrb[0].mxu0
    %2765 = vdwg.mxu0
    %v2766 = vrot.slane %v2646, 3
    %v2767 = vrot.slane %v2650, 3
    %v2768 = vrot.slane %v2656, 3
    %v2769 = vrot.slane %v2660, 3
    %v2770 = vsel %vm555, %v2768, %v2769
    %v2771 = vsel %vm555, %v2767, %v2768
    %v2772 = vsel %vm555, %v2766, %v2767
    %v2773 = vsel %vm555, %v2769, %v2766
    %v2774 = vmul.f32 %v2773, %v567
    %v2775 = vmul.f32 %v2772, %v572
    %v2776 = vmul.f32 %v2771, %v577
    %v2777 = vmul.f32 %v2770, %v582
    %v2778 = vadd.f32 %v2699, %v2774
    %v2779 = vadd.f32 %v2703, %v2775
    %v2780 = vadd.f32 %v2709, %v2776
    %v2781 = vadd.f32 %v2713, %v2777
    %2786 = vrot.lane.b32.xlu0 %v2646, 64
    %v2787 = vpop.permute.xlu0 %2786
    %2788 = vrot.lane.b32.xlu0 %v2650, 64
    %v2789 = vpop.permute.xlu0 %2788
    %2790 = vrot.lane.b32.xlu0 %v2656, 64
    %v2791 = vpop.permute.xlu0 %2790
    %2792 = vrot.lane.b32.xlu0 %v2660, 64
    %v2793 = vpop.permute.xlu0 %2792
    %v2798 = vrot.slane %v2787, 4
    %v2799 = vrot.slane %v2789, 4
    %v2800 = vrot.slane %v2791, 4
    %v2801 = vrot.slane %v2793, 4
    %v2802 = vsel %vm612, %v2800, %v2801
    %v2803 = vsel %vm612, %v2799, %v2800
    %v2804 = vsel %vm612, %v2798, %v2799
    %v2805 = vsel %vm612, %v2801, %v2798
    %v2806 = vmul.f32 %v2805, %v625
    %v2807 = vmul.f32 %v2804, %v630
    %v2808 = vmul.f32 %v2803, %v635
    %v2809 = vmul.f32 %v2802, %v640
    %v2810 = vadd.f32 %v2778, %v2806
    %v2811 = vadd.f32 %v2779, %v2807
    %v2812 = vadd.f32 %v2780, %v2808
    %v2813 = vadd.f32 %v2781, %v2809
    %v2814 = vrot.slane %v2648, 5
    %v2815 = vrot.slane %v2652, 5
    %v2816 = vrot.slane %v2658, 5
    %v2817 = vrot.slane %v2662, 5
    %v2818 = vsel %vm654, %v2816, %v2817
    %v2819 = vsel %vm654, %v2815, %v2816
    %v2820 = vsel %vm654, %v2814, %v2815
    %v2821 = vsel %vm654, %v2817, %v2814
    %v2822 = vmul.f32 %v2821, %v667
    %v2823 = vmul.f32 %v2820, %v672
    %v2824 = vmul.f32 %v2819, %v677
    %v2825 = vmul.f32 %v2818, %v682
    %v2826 = vadd.f32 %v2810, %v2822
    %v2827 = vadd.f32 %v2811, %v2823
    %v2828 = vadd.f32 %v2812, %v2824
    %v2829 = vadd.f32 %v2813, %v2825
    %2834 = vrot.lane.b32.xlu0 %v2648, 64
    %v2835 = vpop.permute.xlu0 %2834
    %2836 = vrot.lane.b32.xlu0 %v2652, 64
    %v2837 = vpop.permute.xlu0 %2836
    %2838 = vrot.lane.b32.xlu0 %v2658, 64
    %v2839 = vpop.permute.xlu0 %2838
    %2840 = vrot.lane.b32.xlu0 %v2662, 64
    %v2841 = vpop.permute.xlu0 %2840
    %v2846 = vrot.slane %v2835, 7
    %v2847 = vrot.slane %v2837, 7
    %v2848 = vrot.slane %v2839, 7
    %v2849 = vrot.slane %v2841, 7
    %v2850 = vsel %vm712, %v2848, %v2849
    %v2851 = vsel %vm712, %v2847, %v2848
    %v2852 = vsel %vm712, %v2846, %v2847
    %v2853 = vsel %vm712, %v2849, %v2846
    %v2854 = vmul.f32 %v2853, %v725
    %v2855 = vmul.f32 %v2852, %v730
    %v2856 = vmul.f32 %v2851, %v735
    %v2857 = vmul.f32 %v2850, %v740
    %v2858 = vadd.f32 %v2826, %v2854
    %v2859 = vadd.f32 %v2827, %v2855
    %v2860 = vadd.f32 %v2828, %v2856
    %v2861 = vadd.f32 %v2829, %v2857
    %2866 = vrot.lane.b32.xlu0 %v2699, 64
    %v2867 = vpop.permute.xlu0 %2866
    %2868 = vrot.lane.b32.xlu0 %v2703, 64
    %v2869 = vpop.permute.xlu0 %2868
    %2870 = vrot.lane.b32.xlu0 %v2709, 64
    %v2871 = vpop.permute.xlu0 %2870
    %2872 = vrot.lane.b32.xlu0 %v2713, 64
    %v2873 = vpop.permute.xlu0 %2872
    %v2878 = vrot.slane %v2867, 1
    %v2879 = vrot.slane %v2869, 1
    %v2880 = vrot.slane %v2871, 1
    %v2881 = vrot.slane %v2873, 1
    %v2882 = vsel %vm770, %v2880, %v2881
    %v2883 = vsel %vm770, %v2879, %v2880
    %v2884 = vsel %vm770, %v2878, %v2879
    %v2885 = vsel %vm770, %v2881, %v2878
    %v2886 = vmul.f32 %v2884, %v783
    %v2887 = vmul.f32 %v2883, %v788
    %v2888 = vmul.f32 %v2882, %v793
    %v2889 = vmul.f32 %v2885, %v798
    %v2890 = vadd.f32 %v2858, %v2886
    %v2891 = vadd.f32 %v2859, %v2887
    %v2892 = vadd.f32 %v2860, %v2888
    %v2893 = vadd.f32 %v2861, %v2889
    %v2894 = vrot.slane %v2701, 3
    %v2895 = vrot.slane %v2705, 3
    %v2896 = vrot.slane %v2711, 3
    %v2897 = vrot.slane %v2715, 3
    %v2898 = vsel %vm555, %v2896, %v2897
    %v2899 = vsel %vm555, %v2895, %v2896
    %v2900 = vsel %vm555, %v2894, %v2895
    %v2901 = vsel %vm555, %v2897, %v2894
    %v2902 = vmul.f32 %v2900, %v824
    %v2903 = vmul.f32 %v2899, %v829
    %v2904 = vmul.f32 %v2898, %v834
    %v2905 = vmul.f32 %v2901, %v839
    %v2906 = vadd.f32 %v2890, %v2902
    %v2907 = vadd.f32 %v2891, %v2903
    %v2908 = vadd.f32 %v2892, %v2904
    %v2909 = vadd.f32 %v2893, %v2905
    %2914 = vrot.lane.b32.xlu0 %v2701, 64
    %v2915 = vpop.permute.xlu0 %2914
    %2916 = vrot.lane.b32.xlu0 %v2705, 64
    %v2917 = vpop.permute.xlu0 %2916
    %2918 = vrot.lane.b32.xlu0 %v2711, 64
    %v2919 = vpop.permute.xlu0 %2918
    %2920 = vrot.lane.b32.xlu0 %v2715, 64
    %v2921 = vpop.permute.xlu0 %2920
    %v2926 = vrot.slane %v2915, 4
    %v2927 = vrot.slane %v2917, 4
    %v2928 = vrot.slane %v2919, 4
    %v2929 = vrot.slane %v2921, 4
    %v2930 = vsel %vm612, %v2928, %v2929
    %v2931 = vsel %vm612, %v2927, %v2928
    %v2932 = vsel %vm612, %v2926, %v2927
    %v2933 = vsel %vm612, %v2929, %v2926
    %v2934 = vmul.f32 %v2932, %v881
    %v2935 = vmul.f32 %v2931, %v886
    %v2936 = vmul.f32 %v2930, %v891
    %v2937 = vmul.f32 %v2933, %v896
    %v2938 = vadd.f32 %v2906, %v2934
    %v2939 = vadd.f32 %v2907, %v2935
    %v2940 = vadd.f32 %v2908, %v2936
    %v2941 = vadd.f32 %v2909, %v2937
    %v2942 = vrot.slane %v2752, 5
    %v2943 = vrot.slane %v2755, 5
    %v2944 = vrot.slane %v2760, 5
    %v2945 = vrot.slane %v2763, 5
    %v2946 = vsel %vm654, %v2944, %v2945
    %v2947 = vsel %vm654, %v2943, %v2944
    %v2948 = vsel %vm654, %v2942, %v2943
    %v2949 = vsel %vm654, %v2945, %v2942
    %v2950 = vmul.f32 %v2948, %v922
    %v2951 = vmul.f32 %v2947, %v927
    %v2952 = vmul.f32 %v2946, %v932
    %v2953 = vmul.f32 %v2949, %v937
    %v2954 = vadd.f32 %v2938, %v2950
    %v2955 = vadd.f32 %v2939, %v2951
    %v2956 = vadd.f32 %v2940, %v2952
    %v2957 = vadd.f32 %v2941, %v2953
    %v2959 = vlaneseq
    %v2960 = vshrl.u32 %v2959, 7
    %v2961 = vsub.s32 0, %v2960
    %v2962 = vrot.slane %v2498, %v2961
    %v2964 = vadd.f32 %v2954, %v2962
    %v2965 = vadd.f32 %v2955, %v2962
    %v2966 = vadd.f32 %v2956, %v2962
    %v2967 = vadd.f32 %v2957, %v2962
    %v2968 = vadd.f32 %v2964, %v1964
    %v2969 = vadd.f32 %v2965, %v1965
    %v2970 = vadd.f32 %v2966, %v1966
    %v2971 = vadd.f32 %v2967, %v1967
    %s2972 = scalar_lea.vmem %s4, 640
    %v2973 = vld [vmem:[%s2972] sm:$0xff]
    %v2974 = vld [vmem:[%s2972 + $0x8] sm:$0xff]
    %v2975 = vld [vmem:[%s2972 + $0x10] sm:$0xf]
    %v2976 = vld [vmem:[%s2972 + $0x14] sm:$0xff]
    %v2977 = vld [vmem:[%s2972 + $0x1c] sm:$0xff]
    %v2978 = vld [vmem:[%s2972 + $0x24] sm:$0xf]
    %v2979 = vld [vmem:[%s2972 + $0x28] sm:$0xff]
    %v2980 = vld [vmem:[%s2972 + $0x30] sm:$0xff]
    %v2981 = vld [vmem:[%s2972 + $0x38] sm:$0xf]
    %v2982 = vld [vmem:[%s2972 + $0x3c] sm:$0xff]
    %v2983 = vld [vmem:[%s2972 + $0x44] sm:$0xff]
    %v2984 = vld [vmem:[%s2972 + $0x4c] sm:$0xf]
    %v2985 = vld [vmem:[%s2972 + $0x50] sm:$0xff]
    %v2986 = vld [vmem:[%s2972 + $0x58] sm:$0xff]
    %v2987 = vld [vmem:[%s2972 + $0x60] sm:$0xf]
    %v2988 = vld [vmem:[%s2972 + $0x64] sm:$0xff]
    %v2989 = vld [vmem:[%s2972 + $0x6c] sm:$0xff]
    %v2990 = vld [vmem:[%s2972 + $0x74] sm:$0xf]
    %v2991 = vld [vmem:[%s2972 + $0x78] sm:$0xff]
    %v2992 = vld [vmem:[%s2972 + $0x80] sm:$0xff]
    %v2993 = vld [vmem:[%s2972 + $0x88] sm:$0xf]
    %v2994 = vld [vmem:[%s2972 + $0x8c] sm:$0xff]
    %v2995 = vld [vmem:[%s2972 + $0x94] sm:$0xff]
    %v2996 = vld [vmem:[%s2972 + $0x9c] sm:$0xf]
    %s2997 = scalar_lea.vmem %s5, 4
    %v2998 = vld [vmem:[%s2997] sm:$0x1]
    %v2999 = vpack.c.bf16 %v2969, %v2968
    %v3000 = vpack.c.bf16 %v2971, %v2970
    %v3025 = vunpack.c.l.b16 %v2973
    %v3026 = vunpack.c.h.b16 %v2973
    %v3027 = vunpack.c.l.b16 %v2974
    %v3028 = vunpack.c.h.b16 %v2974
    %v3029 = vunpack.c.l.b16 %v2975
    %v3030 = vunpack.c.l.b16 %v2976
    %v3031 = vunpack.c.h.b16 %v2976
    %v3032 = vunpack.c.l.b16 %v2977
    %v3033 = vunpack.c.h.b16 %v2977
    %v3034 = vunpack.c.l.b16 %v2978
    %v3035 = vunpack.c.l.b16 %v2979
    %v3036 = vunpack.c.h.b16 %v2979
    %v3037 = vunpack.c.l.b16 %v2980
    %v3038 = vunpack.c.h.b16 %v2980
    %v3039 = vunpack.c.l.b16 %v2981
    %v3040 = vunpack.c.l.b16 %v2982
    %v3041 = vunpack.c.h.b16 %v2982
    %v3042 = vunpack.c.l.b16 %v2983
    %v3043 = vunpack.c.h.b16 %v2983
    %v3044 = vunpack.c.l.b16 %v2984
    %v3045 = vunpack.c.l.b16 %v2985
    %v3046 = vunpack.c.h.b16 %v2985
    %v3047 = vunpack.c.l.b16 %v2986
    %v3048 = vunpack.c.h.b16 %v2986
    %v3049 = vunpack.c.l.b16 %v2987
    %v3050 = vunpack.c.l.b16 %v2988
    %v3051 = vunpack.c.h.b16 %v2988
    %v3052 = vunpack.c.l.b16 %v2989
    %v3053 = vunpack.c.h.b16 %v2989
    %v3054 = vunpack.c.l.b16 %v2990
    %v3055 = vunpack.c.l.b16 %v2991
    %v3056 = vunpack.c.h.b16 %v2991
    %v3057 = vunpack.c.l.b16 %v2992
    %v3058 = vunpack.c.h.b16 %v2992
    %v3059 = vunpack.c.l.b16 %v2993
    %v3060 = vunpack.c.l.b16 %v2994
    %v3061 = vunpack.c.h.b16 %v2994
    %v3062 = vunpack.c.l.b16 %v2995
    %v3063 = vunpack.c.h.b16 %v2995
    %v3064 = vunpack.c.l.b16 %v2996
    %v3065 = vpack.c.b16 %v3030, %v3025
    %v3066 = vpack.c.b16 %v3031, %v3026
    %v3067 = vpack.c.b16 %v3032, %v3027
    %v3068 = vpack.c.b16 %v3033, %v3028
    %v3069 = vpack.c.b16 %v3034, %v3029
    %v3070 = vpack.c.b16 %v3040, %v3035
    %v3071 = vpack.c.b16 %v3041, %v3036
    %v3072 = vpack.c.b16 %v3042, %v3037
    %v3073 = vpack.c.b16 %v3043, %v3038
    %v3074 = vpack.c.b16 %v3044, %v3039
    %v3075 = vpack.c.b16 %v3050, %v3045
    %v3076 = vpack.c.b16 %v3051, %v3046
    %v3077 = vpack.c.b16 %v3052, %v3047
    %v3078 = vpack.c.b16 %v3053, %v3048
    %v3079 = vpack.c.b16 %v3054, %v3049
    %v3080 = vpack.c.b16 %v3060, %v3055
    %v3081 = vpack.c.b16 %v3061, %v3056
    %v3082 = vpack.c.b16 %v3062, %v3057
    %v3083 = vpack.c.b16 %v3063, %v3058
    %v3084 = vpack.c.b16 %v3064, %v3059
    %v3106 = vsel %vm1096, %v2999, 0
    %v3109 = vsel %vm1096, %v3000, 0
    %3111 = vmatprep.subr.bf16.mxu0 %v3066
    %3112 = vmatpush1.bf16.msra.mxu0 %v3065
    %3113 = vmatprep.subr.bf16.mxu0 %v3071
    %3114 = vmatpush1.bf16.msra.mxu0 %v3070
    %3115 = vmatprep.subr.bf16.mxu0 %v3076
    %3116 = vmatpush1.bf16.msra.mxu0 %v3075
    %3117 = vmatprep.subr.bf16.mxu0 %v3081
    %3118 = vmatpush1.bf16.msra.mxu0 %v3080
    %3119 = vmatprep.subr.bf16.mxu0 0
    %3120 = vmatpush1.bf16.msra.mxu0 0
    %3121 = vmatprep.subr.bf16.mxu0 0
    %3122 = vmatpush1.bf16.msra.mxu0 0
    %3123 = vmatprep.subr.bf16.mxu0 0
    %3124 = vmatpush1.bf16.msra.mxu0 0
    %3125 = vmatprep.subr.bf16.mxu0 0
    %3126 = vmatpush1.bf16.msra.mxu0 0
    %3127 = vmatprep.subr.bf16.mxu0 0
    %3128 = vmatpush1.bf16.msra.mxu0 0
    %3129 = vmatprep.subr.bf16.mxu0 0
    %3130 = vmatpush1.bf16.msra.mxu0 0
    %3131 = vmatprep.subr.bf16.mxu0 0
    %3132 = vmatpush1.bf16.msra.mxu0 0
    %3133 = vmatprep.subr.bf16.mxu0 0
    %3134 = vmatpush1.bf16.msra.mxu0 0
    %3135 = vmatprep.subr.bf16.mxu0 0
    %3136 = vmatpush1.bf16.msra.mxu0 0
    %3137 = vmatprep.subr.bf16.mxu0 0
    %3138 = vmatpush1.bf16.msra.mxu0 0
    %3139 = vmatprep.subr.bf16.mxu0 0
    %3140 = vmatpush1.bf16.msra.mxu0 0
    %3141 = vmatprep.subr.bf16.mxu0 0
    %3142 = vmatpush1.bf16.msra.mxu0 0
    %3143 = vmatprep.mubr.bf16.mxu0 0
    %3144 = vmatmul.mubr.bf16.gmra.mrb[0].mxu0 %v3106
    %v3145 = vpop.f32.mrb[0].mxu0
    %v3146 = vadd.f32 0.0, %v3145
    %v3147 = vpop.f32.mrb[0].mxu0
    %v3148 = vadd.f32 0.0, %v3147
    %v3149 = vpop.f32.mrb[0].mxu0
    %v3150 = vadd.f32 0.0, %v3149
    %v3151 = vpop.f32.mrb[0].mxu0
    %v3152 = vadd.f32 0.0, %v3151
    %3153 = vmatprep.mubr.bf16.mxu0 0
    %3154 = vmatmul.mubr.bf16.gmra.mrb[0].mxu0 %v3109
    %v3155 = vpop.f32.mrb[0].mxu0
    %v3156 = vadd.f32 0.0, %v3155
    %v3157 = vpop.f32.mrb[0].mxu0
    %v3158 = vadd.f32 0.0, %v3157
    %v3159 = vpop.f32.mrb[0].mxu0
    %v3160 = vadd.f32 0.0, %v3159
    %v3161 = vpop.f32.mrb[0].mxu0
    %v3162 = vadd.f32 0.0, %v3161
    %3163 = vdwg.mxu0
    %3164 = vmatprep.subr.bf16.mxu0 %v3068
    %3165 = vmatpush1.bf16.msra.mxu0 %v3067
    %3166 = vmatprep.subr.bf16.mxu0 %v3073
    %3167 = vmatpush1.bf16.msra.mxu0 %v3072
    %3168 = vmatprep.subr.bf16.mxu0 %v3078
    %3169 = vmatpush1.bf16.msra.mxu0 %v3077
    %3170 = vmatprep.subr.bf16.mxu0 %v3083
    %3171 = vmatpush1.bf16.msra.mxu0 %v3082
    %3172 = vmatprep.subr.bf16.mxu0 0
    %3173 = vmatpush1.bf16.msra.mxu0 0
    %3174 = vmatprep.subr.bf16.mxu0 0
    %3175 = vmatpush1.bf16.msra.mxu0 0
    %3176 = vmatprep.subr.bf16.mxu0 0
    %3177 = vmatpush1.bf16.msra.mxu0 0
    %3178 = vmatprep.subr.bf16.mxu0 0
    %3179 = vmatpush1.bf16.msra.mxu0 0
    %3180 = vmatprep.subr.bf16.mxu0 0
    %3181 = vmatpush1.bf16.msra.mxu0 0
    %3182 = vmatprep.subr.bf16.mxu0 0
    %3183 = vmatpush1.bf16.msra.mxu0 0
    %3184 = vmatprep.subr.bf16.mxu0 0
    %3185 = vmatpush1.bf16.msra.mxu0 0
    %3186 = vmatprep.subr.bf16.mxu0 0
    %3187 = vmatpush1.bf16.msra.mxu0 0
    %3188 = vmatprep.subr.bf16.mxu0 0
    %3189 = vmatpush1.bf16.msra.mxu0 0
    %3190 = vmatprep.subr.bf16.mxu0 0
    %3191 = vmatpush1.bf16.msra.mxu0 0
    %3192 = vmatprep.subr.bf16.mxu0 0
    %3193 = vmatpush1.bf16.msra.mxu0 0
    %3194 = vmatprep.subr.bf16.mxu0 0
    %3195 = vmatpush1.bf16.msra.mxu0 0
    %3196 = vmatprep.mubr.bf16.mxu0 0
    %3197 = vmatmul.mubr.bf16.gmra.mrb[0].mxu0 %v3106
    %v3198 = vpop.f32.mrb[0].mxu0
    %v3199 = vadd.f32 0.0, %v3198
    %v3200 = vpop.f32.mrb[0].mxu0
    %v3201 = vadd.f32 0.0, %v3200
    %v3202 = vpop.f32.mrb[0].mxu0
    %v3203 = vadd.f32 0.0, %v3202
    %v3204 = vpop.f32.mrb[0].mxu0
    %v3205 = vadd.f32 0.0, %v3204
    %3206 = vmatprep.mubr.bf16.mxu0 0
    %3207 = vmatmul.mubr.bf16.gmra.mrb[0].mxu0 %v3109
    %v3208 = vpop.f32.mrb[0].mxu0
    %v3209 = vadd.f32 0.0, %v3208
    %v3210 = vpop.f32.mrb[0].mxu0
    %v3211 = vadd.f32 0.0, %v3210
    %v3212 = vpop.f32.mrb[0].mxu0
    %v3213 = vadd.f32 0.0, %v3212
    %v3214 = vpop.f32.mrb[0].mxu0
    %v3215 = vadd.f32 0.0, %v3214
    %3216 = vdwg.mxu0
    %3217 = vmatprep.subr.bf16.mxu0 0
    %3218 = vmatpush1.bf16.msra.mxu0 %v3069
    %3219 = vmatprep.subr.bf16.mxu0 0
    %3220 = vmatpush1.bf16.msra.mxu0 %v3074
    %3221 = vmatprep.subr.bf16.mxu0 0
    %3222 = vmatpush1.bf16.msra.mxu0 %v3079
    %3223 = vmatprep.subr.bf16.mxu0 0
    %3224 = vmatpush1.bf16.msra.mxu0 %v3084
    %3225 = vmatprep.subr.bf16.mxu0 0
    %3226 = vmatpush1.bf16.msra.mxu0 0
    %3227 = vmatprep.subr.bf16.mxu0 0
    %3228 = vmatpush1.bf16.msra.mxu0 0
    %3229 = vmatprep.subr.bf16.mxu0 0
    %3230 = vmatpush1.bf16.msra.mxu0 0
    %3231 = vmatprep.subr.bf16.mxu0 0
    %3232 = vmatpush1.bf16.msra.mxu0 0
    %3233 = vmatprep.subr.bf16.mxu0 0
    %3234 = vmatpush1.bf16.msra.mxu0 0
    %3235 = vmatprep.subr.bf16.mxu0 0
    %3236 = vmatpush1.bf16.msra.mxu0 0
    %3237 = vmatprep.subr.bf16.mxu0 0
    %3238 = vmatpush1.bf16.msra.mxu0 0
    %3239 = vmatprep.subr.bf16.mxu0 0
    %3240 = vmatpush1.bf16.msra.mxu0 0
    %3241 = vmatprep.subr.bf16.mxu0 0
    %3242 = vmatpush1.bf16.msra.mxu0 0
    %3243 = vmatprep.subr.bf16.mxu0 0
    %3244 = vmatpush1.bf16.msra.mxu0 0
    %3245 = vmatprep.subr.bf16.mxu0 0
    %3246 = vmatpush1.bf16.msra.mxu0 0
    %3247 = vmatprep.subr.bf16.mxu0 0
    %3248 = vmatpush1.bf16.msra.mxu0 0
    %3249 = vmatprep.mubr.bf16.mxu0 0
    %3250 = vmatmul.mubr.bf16.gmra.mrb[0].mxu0 %v3106
    %v3251 = vpop.f32.mrb[0].mxu0
    %v3252 = vadd.f32 0.0, %v3251
    %v3253 = vpop.f32.mrb[0].mxu0
    %v3254 = vpop.f32.mrb[0].mxu0
    %v3255 = vadd.f32 0.0, %v3254
    %v3256 = vpop.f32.mrb[0].mxu0
    %3257 = vmatprep.mubr.bf16.mxu0 0
    %3258 = vmatmul.mubr.bf16.gmra.mrb[0].mxu0 %v3109
    %v3259 = vpop.f32.mrb[0].mxu0
    %v3260 = vadd.f32 0.0, %v3259
    %v3261 = vpop.f32.mrb[0].mxu0
    %v3262 = vpop.f32.mrb[0].mxu0
    %v3263 = vadd.f32 0.0, %v3262
    %v3264 = vpop.f32.mrb[0].mxu0
    %3265 = vdwg.mxu0
    %v3266 = vrot.slane %v3146, 3
    %v3267 = vrot.slane %v3150, 3
    %v3268 = vrot.slane %v3156, 3
    %v3269 = vrot.slane %v3160, 3
    %v3270 = vsel %vm555, %v3268, %v3269
    %v3271 = vsel %vm555, %v3267, %v3268
    %v3272 = vsel %vm555, %v3266, %v3267
    %v3273 = vsel %vm555, %v3269, %v3266
    %v3274 = vmul.f32 %v3273, %v567
    %v3275 = vmul.f32 %v3272, %v572
    %v3276 = vmul.f32 %v3271, %v577
    %v3277 = vmul.f32 %v3270, %v582
    %v3278 = vadd.f32 %v3199, %v3274
    %v3279 = vadd.f32 %v3203, %v3275
    %v3280 = vadd.f32 %v3209, %v3276
    %v3281 = vadd.f32 %v3213, %v3277
    %3286 = vrot.lane.b32.xlu0 %v3146, 64
    %v3287 = vpop.permute.xlu0 %3286
    %3288 = vrot.lane.b32.xlu0 %v3150, 64
    %v3289 = vpop.permute.xlu0 %3288
    %3290 = vrot.lane.b32.xlu0 %v3156, 64
    %v3291 = vpop.permute.xlu0 %3290
    %3292 = vrot.lane.b32.xlu0 %v3160, 64
    %v3293 = vpop.permute.xlu0 %3292
    %v3298 = vrot.slane %v3287, 4
    %v3299 = vrot.slane %v3289, 4
    %v3300 = vrot.slane %v3291, 4
    %v3301 = vrot.slane %v3293, 4
    %v3302 = vsel %vm612, %v3300, %v3301
    %v3303 = vsel %vm612, %v3299, %v3300
    %v3304 = vsel %vm612, %v3298, %v3299
    %v3305 = vsel %vm612, %v3301, %v3298
    %v3306 = vmul.f32 %v3305, %v625
    %v3307 = vmul.f32 %v3304, %v630
    %v3308 = vmul.f32 %v3303, %v635
    %v3309 = vmul.f32 %v3302, %v640
    %v3310 = vadd.f32 %v3278, %v3306
    %v3311 = vadd.f32 %v3279, %v3307
    %v3312 = vadd.f32 %v3280, %v3308
    %v3313 = vadd.f32 %v3281, %v3309
    %v3314 = vrot.slane %v3148, 5
    %v3315 = vrot.slane %v3152, 5
    %v3316 = vrot.slane %v3158, 5
    %v3317 = vrot.slane %v3162, 5
    %v3318 = vsel %vm654, %v3316, %v3317
    %v3319 = vsel %vm654, %v3315, %v3316
    %v3320 = vsel %vm654, %v3314, %v3315
    %v3321 = vsel %vm654, %v3317, %v3314
    %v3322 = vmul.f32 %v3321, %v667
    %v3323 = vmul.f32 %v3320, %v672
    %v3324 = vmul.f32 %v3319, %v677
    %v3325 = vmul.f32 %v3318, %v682
    %v3326 = vadd.f32 %v3310, %v3322
    %v3327 = vadd.f32 %v3311, %v3323
    %v3328 = vadd.f32 %v3312, %v3324
    %v3329 = vadd.f32 %v3313, %v3325
    %3334 = vrot.lane.b32.xlu0 %v3148, 64
    %v3335 = vpop.permute.xlu0 %3334
    %3336 = vrot.lane.b32.xlu0 %v3152, 64
    %v3337 = vpop.permute.xlu0 %3336
    %3338 = vrot.lane.b32.xlu0 %v3158, 64
    %v3339 = vpop.permute.xlu0 %3338
    %3340 = vrot.lane.b32.xlu0 %v3162, 64
    %v3341 = vpop.permute.xlu0 %3340
    %v3346 = vrot.slane %v3335, 7
    %v3347 = vrot.slane %v3337, 7
    %v3348 = vrot.slane %v3339, 7
    %v3349 = vrot.slane %v3341, 7
    %v3350 = vsel %vm712, %v3348, %v3349
    %v3351 = vsel %vm712, %v3347, %v3348
    %v3352 = vsel %vm712, %v3346, %v3347
    %v3353 = vsel %vm712, %v3349, %v3346
    %v3354 = vmul.f32 %v3353, %v725
    %v3355 = vmul.f32 %v3352, %v730
    %v3356 = vmul.f32 %v3351, %v735
    %v3357 = vmul.f32 %v3350, %v740
    %v3358 = vadd.f32 %v3326, %v3354
    %v3359 = vadd.f32 %v3327, %v3355
    %v3360 = vadd.f32 %v3328, %v3356
    %v3361 = vadd.f32 %v3329, %v3357
    %3366 = vrot.lane.b32.xlu0 %v3199, 64
    %v3367 = vpop.permute.xlu0 %3366
    %3368 = vrot.lane.b32.xlu0 %v3203, 64
    %v3369 = vpop.permute.xlu0 %3368
    %3370 = vrot.lane.b32.xlu0 %v3209, 64
    %v3371 = vpop.permute.xlu0 %3370
    %3372 = vrot.lane.b32.xlu0 %v3213, 64
    %v3373 = vpop.permute.xlu0 %3372
    %v3378 = vrot.slane %v3367, 1
    %v3379 = vrot.slane %v3369, 1
    %v3380 = vrot.slane %v3371, 1
    %v3381 = vrot.slane %v3373, 1
    %v3382 = vsel %vm770, %v3380, %v3381
    %v3383 = vsel %vm770, %v3379, %v3380
    %v3384 = vsel %vm770, %v3378, %v3379
    %v3385 = vsel %vm770, %v3381, %v3378
    %v3386 = vmul.f32 %v3384, %v783
    %v3387 = vmul.f32 %v3383, %v788
    %v3388 = vmul.f32 %v3382, %v793
    %v3389 = vmul.f32 %v3385, %v798
    %v3390 = vadd.f32 %v3358, %v3386
    %v3391 = vadd.f32 %v3359, %v3387
    %v3392 = vadd.f32 %v3360, %v3388
    %v3393 = vadd.f32 %v3361, %v3389
    %v3394 = vrot.slane %v3201, 3
    %v3395 = vrot.slane %v3205, 3
    %v3396 = vrot.slane %v3211, 3
    %v3397 = vrot.slane %v3215, 3
    %v3398 = vsel %vm555, %v3396, %v3397
    %v3399 = vsel %vm555, %v3395, %v3396
    %v3400 = vsel %vm555, %v3394, %v3395
    %v3401 = vsel %vm555, %v3397, %v3394
    %v3402 = vmul.f32 %v3400, %v824
    %v3403 = vmul.f32 %v3399, %v829
    %v3404 = vmul.f32 %v3398, %v834
    %v3405 = vmul.f32 %v3401, %v839
    %v3406 = vadd.f32 %v3390, %v3402
    %v3407 = vadd.f32 %v3391, %v3403
    %v3408 = vadd.f32 %v3392, %v3404
    %v3409 = vadd.f32 %v3393, %v3405
    %3414 = vrot.lane.b32.xlu0 %v3201, 64
    %v3415 = vpop.permute.xlu0 %3414
    %3416 = vrot.lane.b32.xlu0 %v3205, 64
    %v3417 = vpop.permute.xlu0 %3416
    %3418 = vrot.lane.b32.xlu0 %v3211, 64
    %v3419 = vpop.permute.xlu0 %3418
    %3420 = vrot.lane.b32.xlu0 %v3215, 64
    %v3421 = vpop.permute.xlu0 %3420
    %v3426 = vrot.slane %v3415, 4
    %v3427 = vrot.slane %v3417, 4
    %v3428 = vrot.slane %v3419, 4
    %v3429 = vrot.slane %v3421, 4
    %v3430 = vsel %vm612, %v3428, %v3429
    %v3431 = vsel %vm612, %v3427, %v3428
    %v3432 = vsel %vm612, %v3426, %v3427
    %v3433 = vsel %vm612, %v3429, %v3426
    %v3434 = vmul.f32 %v3432, %v881
    %v3435 = vmul.f32 %v3431, %v886
    %v3436 = vmul.f32 %v3430, %v891
    %v3437 = vmul.f32 %v3433, %v896
    %v3438 = vadd.f32 %v3406, %v3434
    %v3439 = vadd.f32 %v3407, %v3435
    %v3440 = vadd.f32 %v3408, %v3436
    %v3441 = vadd.f32 %v3409, %v3437
    %v3442 = vrot.slane %v3252, 5
    %v3443 = vrot.slane %v3255, 5
    %v3444 = vrot.slane %v3260, 5
    %v3445 = vrot.slane %v3263, 5
    %v3446 = vsel %vm654, %v3444, %v3445
    %v3447 = vsel %vm654, %v3443, %v3444
    %v3448 = vsel %vm654, %v3442, %v3443
    %v3449 = vsel %vm654, %v3445, %v3442
    %v3450 = vmul.f32 %v3448, %v922
    %v3451 = vmul.f32 %v3447, %v927
    %v3452 = vmul.f32 %v3446, %v932
    %v3453 = vmul.f32 %v3449, %v937
    %v3454 = vadd.f32 %v3438, %v3450
    %v3455 = vadd.f32 %v3439, %v3451
    %v3456 = vadd.f32 %v3440, %v3452
    %v3457 = vadd.f32 %v3441, %v3453
    %v3459 = vlaneseq
    %v3460 = vshrl.u32 %v3459, 7
    %v3461 = vsub.s32 0, %v3460
    %v3462 = vrot.slane %v2998, %v3461
    %v3464 = vadd.f32 %v3454, %v3462
    %v3465 = vadd.f32 %v3455, %v3462
    %v3466 = vadd.f32 %v3456, %v3462
    %v3467 = vadd.f32 %v3457, %v3462
    %v3468 = vmul.f32 %v3464, 0.1
    %v3469 = vmul.f32 %v3465, 0.1
    %v3470 = vmul.f32 %v3466, 0.1
    %v3471 = vmul.f32 %v3467, 0.1
    %v3472 = vmax.f32 %v3464, %v3468
    %v3473 = vmax.f32 %v3465, %v3469
    %v3474 = vmax.f32 %v3466, %v3470
    %v3475 = vmax.f32 %v3467, %v3471
    %s3476 = scalar_lea.vmem %s4, 800
    %v3477 = vld [vmem:[%s3476] sm:$0xff]
    %v3478 = vld [vmem:[%s3476 + $0x8] sm:$0xff]
    %v3479 = vld [vmem:[%s3476 + $0x10] sm:$0xf]
    %v3480 = vld [vmem:[%s3476 + $0x14] sm:$0xff]
    %v3481 = vld [vmem:[%s3476 + $0x1c] sm:$0xff]
    %v3482 = vld [vmem:[%s3476 + $0x24] sm:$0xf]
    %v3483 = vld [vmem:[%s3476 + $0x28] sm:$0xff]
    %v3484 = vld [vmem:[%s3476 + $0x30] sm:$0xff]
    %v3485 = vld [vmem:[%s3476 + $0x38] sm:$0xf]
    %v3486 = vld [vmem:[%s3476 + $0x3c] sm:$0xff]
    %v3487 = vld [vmem:[%s3476 + $0x44] sm:$0xff]
    %v3488 = vld [vmem:[%s3476 + $0x4c] sm:$0xf]
    %v3489 = vld [vmem:[%s3476 + $0x50] sm:$0xff]
    %v3490 = vld [vmem:[%s3476 + $0x58] sm:$0xff]
    %v3491 = vld [vmem:[%s3476 + $0x60] sm:$0xf]
    %v3492 = vld [vmem:[%s3476 + $0x64] sm:$0xff]
    %v3493 = vld [vmem:[%s3476 + $0x6c] sm:$0xff]
    %v3494 = vld [vmem:[%s3476 + $0x74] sm:$0xf]
    %v3495 = vld [vmem:[%s3476 + $0x78] sm:$0xff]
    %v3496 = vld [vmem:[%s3476 + $0x80] sm:$0xff]
    %v3497 = vld [vmem:[%s3476 + $0x88] sm:$0xf]
    %v3498 = vld [vmem:[%s3476 + $0x8c] sm:$0xff]
    %v3499 = vld [vmem:[%s3476 + $0x94] sm:$0xff]
    %v3500 = vld [vmem:[%s3476 + $0x9c] sm:$0xf]
    %s3501 = scalar_lea.vmem %s5, 5
    %v3502 = vld [vmem:[%s3501] sm:$0x1]
    %v3503 = vpack.c.bf16 %v3473, %v3472
    %v3504 = vpack.c.bf16 %v3475, %v3474
    %v3529 = vunpack.c.l.b16 %v3477
    %v3530 = vunpack.c.h.b16 %v3477
    %v3531 = vunpack.c.l.b16 %v3478
    %v3532 = vunpack.c.h.b16 %v3478
    %v3533 = vunpack.c.l.b16 %v3479
    %v3534 = vunpack.c.l.b16 %v3480
    %v3535 = vunpack.c.h.b16 %v3480
    %v3536 = vunpack.c.l.b16 %v3481
    %v3537 = vunpack.c.h.b16 %v3481
    %v3538 = vunpack.c.l.b16 %v3482
    %v3539 = vunpack.c.l.b16 %v3483
    %v3540 = vunpack.c.h.b16 %v3483
    %v3541 = vunpack.c.l.b16 %v3484
    %v3542 = vunpack.c.h.b16 %v3484
    %v3543 = vunpack.c.l.b16 %v3485
    %v3544 = vunpack.c.l.b16 %v3486
    %v3545 = vunpack.c.h.b16 %v3486
    %v3546 = vunpack.c.l.b16 %v3487
    %v3547 = vunpack.c.h.b16 %v3487
    %v3548 = vunpack.c.l.b16 %v3488
    %v3549 = vunpack.c.l.b16 %v3489
    %v3550 = vunpack.c.h.b16 %v3489
    %v3551 = vunpack.c.l.b16 %v3490
    %v3552 = vunpack.c.h.b16 %v3490
    %v3553 = vunpack.c.l.b16 %v3491
    %v3554 = vunpack.c.l.b16 %v3492
    %v3555 = vunpack.c.h.b16 %v3492
    %v3556 = vunpack.c.l.b16 %v3493
    %v3557 = vunpack.c.h.b16 %v3493
    %v3558 = vunpack.c.l.b16 %v3494
    %v3559 = vunpack.c.l.b16 %v3495
    %v3560 = vunpack.c.h.b16 %v3495
    %v3561 = vunpack.c.l.b16 %v3496
    %v3562 = vunpack.c.h.b16 %v3496
    %v3563 = vunpack.c.l.b16 %v3497
    %v3564 = vunpack.c.l.b16 %v3498
    %v3565 = vunpack.c.h.b16 %v3498
    %v3566 = vunpack.c.l.b16 %v3499
    %v3567 = vunpack.c.h.b16 %v3499
    %v3568 = vunpack.c.l.b16 %v3500
    %v3569 = vpack.c.b16 %v3534, %v3529
    %v3570 = vpack.c.b16 %v3535, %v3530
    %v3571 = vpack.c.b16 %v3536, %v3531
    %v3572 = vpack.c.b16 %v3537, %v3532
    %v3573 = vpack.c.b16 %v3538, %v3533
    %v3574 = vpack.c.b16 %v3544, %v3539
    %v3575 = vpack.c.b16 %v3545, %v3540
    %v3576 = vpack.c.b16 %v3546, %v3541
    %v3577 = vpack.c.b16 %v3547, %v3542
    %v3578 = vpack.c.b16 %v3548, %v3543
    %v3579 = vpack.c.b16 %v3554, %v3549
    %v3580 = vpack.c.b16 %v3555, %v3550
    %v3581 = vpack.c.b16 %v3556, %v3551
    %v3582 = vpack.c.b16 %v3557, %v3552
    %v3583 = vpack.c.b16 %v3558, %v3553
    %v3584 = vpack.c.b16 %v3564, %v3559
    %v3585 = vpack.c.b16 %v3565, %v3560
    %v3586 = vpack.c.b16 %v3566, %v3561
    %v3587 = vpack.c.b16 %v3567, %v3562
    %v3588 = vpack.c.b16 %v3568, %v3563
    %v3610 = vsel %vm1096, %v3503, 0
    %v3613 = vsel %vm1096, %v3504, 0
    %3615 = vmatprep.subr.bf16.mxu0 %v3570
    %3616 = vmatpush1.bf16.msra.mxu0 %v3569
    %3617 = vmatprep.subr.bf16.mxu0 %v3575
    %3618 = vmatpush1.bf16.msra.mxu0 %v3574
    %3619 = vmatprep.subr.bf16.mxu0 %v3580
    %3620 = vmatpush1.bf16.msra.mxu0 %v3579
    %3621 = vmatprep.subr.bf16.mxu0 %v3585
    %3622 = vmatpush1.bf16.msra.mxu0 %v3584
    %3623 = vmatprep.subr.bf16.mxu0 0
    %3624 = vmatpush1.bf16.msra.mxu0 0
    %3625 = vmatprep.subr.bf16.mxu0 0
    %3626 = vmatpush1.bf16.msra.mxu0 0
    %3627 = vmatprep.subr.bf16.mxu0 0
    %3628 = vmatpush1.bf16.msra.mxu0 0
    %3629 = vmatprep.subr.bf16.mxu0 0
    %3630 = vmatpush1.bf16.msra.mxu0 0
    %3631 = vmatprep.subr.bf16.mxu0 0
    %3632 = vmatpush1.bf16.msra.mxu0 0
    %3633 = vmatprep.subr.bf16.mxu0 0
    %3634 = vmatpush1.bf16.msra.mxu0 0
    %3635 = vmatprep.subr.bf16.mxu0 0
    %3636 = vmatpush1.bf16.msra.mxu0 0
    %3637 = vmatprep.subr.bf16.mxu0 0
    %3638 = vmatpush1.bf16.msra.mxu0 0
    %3639 = vmatprep.subr.bf16.mxu0 0
    %3640 = vmatpush1.bf16.msra.mxu0 0
    %3641 = vmatprep.subr.bf16.mxu0 0
    %3642 = vmatpush1.bf16.msra.mxu0 0
    %3643 = vmatprep.subr.bf16.mxu0 0
    %3644 = vmatpush1.bf16.msra.mxu0 0
    %3645 = vmatprep.subr.bf16.mxu0 0
    %3646 = vmatpush1.bf16.msra.mxu0 0
    %3647 = vmatprep.mubr.bf16.mxu0 0
    %3648 = vmatmul.mubr.bf16.gmra.mrb[0].mxu0 %v3610
    %v3649 = vpop.f32.mrb[0].mxu0
    %v3650 = vadd.f32 0.0, %v3649
    %v3651 = vpop.f32.mrb[0].mxu0
    %v3652 = vadd.f32 0.0, %v3651
    %v3653 = vpop.f32.mrb[0].mxu0
    %v3654 = vadd.f32 0.0, %v3653
    %v3655 = vpop.f32.mrb[0].mxu0
    %v3656 = vadd.f32 0.0, %v3655
    %3657 = vmatprep.mubr.bf16.mxu0 0
    %3658 = vmatmul.mubr.bf16.gmra.mrb[0].mxu0 %v3613
    %v3659 = vpop.f32.mrb[0].mxu0
    %v3660 = vadd.f32 0.0, %v3659
    %v3661 = vpop.f32.mrb[0].mxu0
    %v3662 = vadd.f32 0.0, %v3661
    %v3663 = vpop.f32.mrb[0].mxu0
    %v3664 = vadd.f32 0.0, %v3663
    %v3665 = vpop.f32.mrb[0].mxu0
    %v3666 = vadd.f32 0.0, %v3665
    %3667 = vdwg.mxu0
    %3668 = vmatprep.subr.bf16.mxu0 %v3572
    %3669 = vmatpush1.bf16.msra.mxu0 %v3571
    %3670 = vmatprep.subr.bf16.mxu0 %v3577
    %3671 = vmatpush1.bf16.msra.mxu0 %v3576
    %3672 = vmatprep.subr.bf16.mxu0 %v3582
    %3673 = vmatpush1.bf16.msra.mxu0 %v3581
    %3674 = vmatprep.subr.bf16.mxu0 %v3587
    %3675 = vmatpush1.bf16.msra.mxu0 %v3586
    %3676 = vmatprep.subr.bf16.mxu0 0
    %3677 = vmatpush1.bf16.msra.mxu0 0
    %3678 = vmatprep.subr.bf16.mxu0 0
    %3679 = vmatpush1.bf16.msra.mxu0 0
    %3680 = vmatprep.subr.bf16.mxu0 0
    %3681 = vmatpush1.bf16.msra.mxu0 0
    %3682 = vmatprep.subr.bf16.mxu0 0
    %3683 = vmatpush1.bf16.msra.mxu0 0
    %3684 = vmatprep.subr.bf16.mxu0 0
    %3685 = vmatpush1.bf16.msra.mxu0 0
    %3686 = vmatprep.subr.bf16.mxu0 0
    %3687 = vmatpush1.bf16.msra.mxu0 0
    %3688 = vmatprep.subr.bf16.mxu0 0
    %3689 = vmatpush1.bf16.msra.mxu0 0
    %3690 = vmatprep.subr.bf16.mxu0 0
    %3691 = vmatpush1.bf16.msra.mxu0 0
    %3692 = vmatprep.subr.bf16.mxu0 0
    %3693 = vmatpush1.bf16.msra.mxu0 0
    %3694 = vmatprep.subr.bf16.mxu0 0
    %3695 = vmatpush1.bf16.msra.mxu0 0
    %3696 = vmatprep.subr.bf16.mxu0 0
    %3697 = vmatpush1.bf16.msra.mxu0 0
    %3698 = vmatprep.subr.bf16.mxu0 0
    %3699 = vmatpush1.bf16.msra.mxu0 0
    %3700 = vmatprep.mubr.bf16.mxu0 0
    %3701 = vmatmul.mubr.bf16.gmra.mrb[0].mxu0 %v3610
    %v3702 = vpop.f32.mrb[0].mxu0
    %v3703 = vadd.f32 0.0, %v3702
    %v3704 = vpop.f32.mrb[0].mxu0
    %v3705 = vadd.f32 0.0, %v3704
    %v3706 = vpop.f32.mrb[0].mxu0
    %v3707 = vadd.f32 0.0, %v3706
    %v3708 = vpop.f32.mrb[0].mxu0
    %v3709 = vadd.f32 0.0, %v3708
    %3710 = vmatprep.mubr.bf16.mxu0 0
    %3711 = vmatmul.mubr.bf16.gmra.mrb[0].mxu0 %v3613
    %v3712 = vpop.f32.mrb[0].mxu0
    %v3713 = vadd.f32 0.0, %v3712
    %v3714 = vpop.f32.mrb[0].mxu0
    %v3715 = vadd.f32 0.0, %v3714
    %v3716 = vpop.f32.mrb[0].mxu0
    %v3717 = vadd.f32 0.0, %v3716
    %v3718 = vpop.f32.mrb[0].mxu0
    %v3719 = vadd.f32 0.0, %v3718
    %3720 = vdwg.mxu0
    %3721 = vmatprep.subr.bf16.mxu0 0
    %3722 = vmatpush1.bf16.msra.mxu0 %v3573
    %3723 = vmatprep.subr.bf16.mxu0 0
    %3724 = vmatpush1.bf16.msra.mxu0 %v3578
    %3725 = vmatprep.subr.bf16.mxu0 0
    %3726 = vmatpush1.bf16.msra.mxu0 %v3583
    %3727 = vmatprep.subr.bf16.mxu0 0
    %3728 = vmatpush1.bf16.msra.mxu0 %v3588
    %3729 = vmatprep.subr.bf16.mxu0 0
    %3730 = vmatpush1.bf16.msra.mxu0 0
    %3731 = vmatprep.subr.bf16.mxu0 0
    %3732 = vmatpush1.bf16.msra.mxu0 0
    %3733 = vmatprep.subr.bf16.mxu0 0
    %3734 = vmatpush1.bf16.msra.mxu0 0
    %3735 = vmatprep.subr.bf16.mxu0 0
    %3736 = vmatpush1.bf16.msra.mxu0 0
    %3737 = vmatprep.subr.bf16.mxu0 0
    %3738 = vmatpush1.bf16.msra.mxu0 0
    %3739 = vmatprep.subr.bf16.mxu0 0
    %3740 = vmatpush1.bf16.msra.mxu0 0
    %3741 = vmatprep.subr.bf16.mxu0 0
    %3742 = vmatpush1.bf16.msra.mxu0 0
    %3743 = vmatprep.subr.bf16.mxu0 0
    %3744 = vmatpush1.bf16.msra.mxu0 0
    %3745 = vmatprep.subr.bf16.mxu0 0
    %3746 = vmatpush1.bf16.msra.mxu0 0
    %3747 = vmatprep.subr.bf16.mxu0 0
    %3748 = vmatpush1.bf16.msra.mxu0 0
    %3749 = vmatprep.subr.bf16.mxu0 0
    %3750 = vmatpush1.bf16.msra.mxu0 0
    %3751 = vmatprep.subr.bf16.mxu0 0
    %3752 = vmatpush1.bf16.msra.mxu0 0
    %3753 = vmatprep.mubr.bf16.mxu0 0
    %3754 = vmatmul.mubr.bf16.gmra.mrb[0].mxu0 %v3610
    %v3755 = vpop.f32.mrb[0].mxu0
    %v3756 = vadd.f32 0.0, %v3755
    %v3757 = vpop.f32.mrb[0].mxu0
    %v3758 = vpop.f32.mrb[0].mxu0
    %v3759 = vadd.f32 0.0, %v3758
    %v3760 = vpop.f32.mrb[0].mxu0
    %3761 = vmatprep.mubr.bf16.mxu0 0
    %3762 = vmatmul.mubr.bf16.gmra.mrb[0].mxu0 %v3613
    %v3763 = vpop.f32.mrb[0].mxu0
    %v3764 = vadd.f32 0.0, %v3763
    %v3765 = vpop.f32.mrb[0].mxu0
    %v3766 = vpop.f32.mrb[0].mxu0
    %v3767 = vadd.f32 0.0, %v3766
    %v3768 = vpop.f32.mrb[0].mxu0
    %3769 = vdwg.mxu0
    %v3770 = vrot.slane %v3650, 3
    %v3771 = vrot.slane %v3654, 3
    %v3772 = vrot.slane %v3660, 3
    %v3773 = vrot.slane %v3664, 3
    %v3774 = vsel %vm555, %v3772, %v3773
    %v3775 = vsel %vm555, %v3771, %v3772
    %v3776 = vsel %vm555, %v3770, %v3771
    %v3777 = vsel %vm555, %v3773, %v3770
    %v3778 = vmul.f32 %v3777, %v567
    %v3779 = vmul.f32 %v3776, %v572
    %v3780 = vmul.f32 %v3775, %v577
    %v3781 = vmul.f32 %v3774, %v582
    %v3782 = vadd.f32 %v3703, %v3778
    %v3783 = vadd.f32 %v3707, %v3779
    %v3784 = vadd.f32 %v3713, %v3780
    %v3785 = vadd.f32 %v3717, %v3781
    %3790 = vrot.lane.b32.xlu0 %v3650, 64
    %v3791 = vpop.permute.xlu0 %3790
    %3792 = vrot.lane.b32.xlu0 %v3654, 64
    %v3793 = vpop.permute.xlu0 %3792
    %3794 = vrot.lane.b32.xlu0 %v3660, 64
    %v3795 = vpop.permute.xlu0 %3794
    %3796 = vrot.lane.b32.xlu0 %v3664, 64
    %v3797 = vpop.permute.xlu0 %3796
    %v3802 = vrot.slane %v3791, 4
    %v3803 = vrot.slane %v3793, 4
    %v3804 = vrot.slane %v3795, 4
    %v3805 = vrot.slane %v3797, 4
    %v3806 = vsel %vm612, %v3804, %v3805
    %v3807 = vsel %vm612, %v3803, %v3804
    %v3808 = vsel %vm612, %v3802, %v3803
    %v3809 = vsel %vm612, %v3805, %v3802
    %v3810 = vmul.f32 %v3809, %v625
    %v3811 = vmul.f32 %v3808, %v630
    %v3812 = vmul.f32 %v3807, %v635
    %v3813 = vmul.f32 %v3806, %v640
    %v3814 = vadd.f32 %v3782, %v3810
    %v3815 = vadd.f32 %v3783, %v3811
    %v3816 = vadd.f32 %v3784, %v3812
    %v3817 = vadd.f32 %v3785, %v3813
    %v3818 = vrot.slane %v3652, 5
    %v3819 = vrot.slane %v3656, 5
    %v3820 = vrot.slane %v3662, 5
    %v3821 = vrot.slane %v3666, 5
    %v3822 = vsel %vm654, %v3820, %v3821
    %v3823 = vsel %vm654, %v3819, %v3820
    %v3824 = vsel %vm654, %v3818, %v3819
    %v3825 = vsel %vm654, %v3821, %v3818
    %v3826 = vmul.f32 %v3825, %v667
    %v3827 = vmul.f32 %v3824, %v672
    %v3828 = vmul.f32 %v3823, %v677
    %v3829 = vmul.f32 %v3822, %v682
    %v3830 = vadd.f32 %v3814, %v3826
    %v3831 = vadd.f32 %v3815, %v3827
    %v3832 = vadd.f32 %v3816, %v3828
    %v3833 = vadd.f32 %v3817, %v3829
    %3838 = vrot.lane.b32.xlu0 %v3652, 64
    %v3839 = vpop.permute.xlu0 %3838
    %3840 = vrot.lane.b32.xlu0 %v3656, 64
    %v3841 = vpop.permute.xlu0 %3840
    %3842 = vrot.lane.b32.xlu0 %v3662, 64
    %v3843 = vpop.permute.xlu0 %3842
    %3844 = vrot.lane.b32.xlu0 %v3666, 64
    %v3845 = vpop.permute.xlu0 %3844
    %v3850 = vrot.slane %v3839, 7
    %v3851 = vrot.slane %v3841, 7
    %v3852 = vrot.slane %v3843, 7
    %v3853 = vrot.slane %v3845, 7
    %v3854 = vsel %vm712, %v3852, %v3853
    %v3855 = vsel %vm712, %v3851, %v3852
    %v3856 = vsel %vm712, %v3850, %v3851
    %v3857 = vsel %vm712, %v3853, %v3850
    %v3858 = vmul.f32 %v3857, %v725
    %v3859 = vmul.f32 %v3856, %v730
    %v3860 = vmul.f32 %v3855, %v735
    %v3861 = vmul.f32 %v3854, %v740
    %v3862 = vadd.f32 %v3830, %v3858
    %v3863 = vadd.f32 %v3831, %v3859
    %v3864 = vadd.f32 %v3832, %v3860
    %v3865 = vadd.f32 %v3833, %v3861
    %3870 = vrot.lane.b32.xlu0 %v3703, 64
    %v3871 = vpop.permute.xlu0 %3870
    %3872 = vrot.lane.b32.xlu0 %v3707, 64
    %v3873 = vpop.permute.xlu0 %3872
    %3874 = vrot.lane.b32.xlu0 %v3713, 64
    %v3875 = vpop.permute.xlu0 %3874
    %3876 = vrot.lane.b32.xlu0 %v3717, 64
    %v3877 = vpop.permute.xlu0 %3876
    %v3882 = vrot.slane %v3871, 1
    %v3883 = vrot.slane %v3873, 1
    %v3884 = vrot.slane %v3875, 1
    %v3885 = vrot.slane %v3877, 1
    %v3886 = vsel %vm770, %v3884, %v3885
    %v3887 = vsel %vm770, %v3883, %v3884
    %v3888 = vsel %vm770, %v3882, %v3883
    %v3889 = vsel %vm770, %v3885, %v3882
    %v3890 = vmul.f32 %v3888, %v783
    %v3891 = vmul.f32 %v3887, %v788
    %v3892 = vmul.f32 %v3886, %v793
    %v3893 = vmul.f32 %v3889, %v798
    %v3894 = vadd.f32 %v3862, %v3890
    %v3895 = vadd.f32 %v3863, %v3891
    %v3896 = vadd.f32 %v3864, %v3892
    %v3897 = vadd.f32 %v3865, %v3893
    %v3898 = vrot.slane %v3705, 3
    %v3899 = vrot.slane %v3709, 3
    %v3900 = vrot.slane %v3715, 3
    %v3901 = vrot.slane %v3719, 3
    %v3902 = vsel %vm555, %v3900, %v3901
    %v3903 = vsel %vm555, %v3899, %v3900
    %v3904 = vsel %vm555, %v3898, %v3899
    %v3905 = vsel %vm555, %v3901, %v3898
    %v3906 = vmul.f32 %v3904, %v824
    %v3907 = vmul.f32 %v3903, %v829
    %v3908 = vmul.f32 %v3902, %v834
    %v3909 = vmul.f32 %v3905, %v839
    %v3910 = vadd.f32 %v3894, %v3906
    %v3911 = vadd.f32 %v3895, %v3907
    %v3912 = vadd.f32 %v3896, %v3908
    %v3913 = vadd.f32 %v3897, %v3909
    %3918 = vrot.lane.b32.xlu0 %v3705, 64
    %v3919 = vpop.permute.xlu0 %3918
    %3920 = vrot.lane.b32.xlu0 %v3709, 64
    %v3921 = vpop.permute.xlu0 %3920
    %3922 = vrot.lane.b32.xlu0 %v3715, 64
    %v3923 = vpop.permute.xlu0 %3922
    %3924 = vrot.lane.b32.xlu0 %v3719, 64
    %v3925 = vpop.permute.xlu0 %3924
    %v3930 = vrot.slane %v3919, 4
    %v3931 = vrot.slane %v3921, 4
    %v3932 = vrot.slane %v3923, 4
    %v3933 = vrot.slane %v3925, 4
    %v3934 = vsel %vm612, %v3932, %v3933
    %v3935 = vsel %vm612, %v3931, %v3932
    %v3936 = vsel %vm612, %v3930, %v3931
    %v3937 = vsel %vm612, %v3933, %v3930
    %v3938 = vmul.f32 %v3936, %v881
    %v3939 = vmul.f32 %v3935, %v886
    %v3940 = vmul.f32 %v3934, %v891
    %v3941 = vmul.f32 %v3937, %v896
    %v3942 = vadd.f32 %v3910, %v3938
    %v3943 = vadd.f32 %v3911, %v3939
    %v3944 = vadd.f32 %v3912, %v3940
    %v3945 = vadd.f32 %v3913, %v3941
    %v3946 = vrot.slane %v3756, 5
    %v3947 = vrot.slane %v3759, 5
    %v3948 = vrot.slane %v3764, 5
    %v3949 = vrot.slane %v3767, 5
    %v3950 = vsel %vm654, %v3948, %v3949
    %v3951 = vsel %vm654, %v3947, %v3948
    %v3952 = vsel %vm654, %v3946, %v3947
    %v3953 = vsel %vm654, %v3949, %v3946
    %v3954 = vmul.f32 %v3952, %v922
    %v3955 = vmul.f32 %v3951, %v927
    %v3956 = vmul.f32 %v3950, %v932
    %v3957 = vmul.f32 %v3953, %v937
    %v3958 = vadd.f32 %v3942, %v3954
    %v3959 = vadd.f32 %v3943, %v3955
    %v3960 = vadd.f32 %v3944, %v3956
    %v3961 = vadd.f32 %v3945, %v3957
    %v3963 = vlaneseq
    %v3964 = vshrl.u32 %v3963, 7
    %v3965 = vsub.s32 0, %v3964
    %v3966 = vrot.slane %v3502, %v3965
    %v3968 = vadd.f32 %v3958, %v3966
    %v3969 = vadd.f32 %v3959, %v3966
    %v3970 = vadd.f32 %v3960, %v3966
    %v3971 = vadd.f32 %v3961, %v3966
    %v3972 = vadd.f32 %v3968, %v2968
    %v3973 = vadd.f32 %v3969, %v2969
    %v3974 = vadd.f32 %v3970, %v2970
    %v3975 = vadd.f32 %v3971, %v2971
    %s3976 = scalar_lea.vmem %s4, 960
    %v3977 = vld [vmem:[%s3976] sm:$0xff]
    %v3978 = vld [vmem:[%s3976 + $0x8] sm:$0xff]
    %v3979 = vld [vmem:[%s3976 + $0x10] sm:$0xf]
    %v3980 = vld [vmem:[%s3976 + $0x14] sm:$0xff]
    %v3981 = vld [vmem:[%s3976 + $0x1c] sm:$0xff]
    %v3982 = vld [vmem:[%s3976 + $0x24] sm:$0xf]
    %v3983 = vld [vmem:[%s3976 + $0x28] sm:$0xff]
    %v3984 = vld [vmem:[%s3976 + $0x30] sm:$0xff]
    %v3985 = vld [vmem:[%s3976 + $0x38] sm:$0xf]
    %v3986 = vld [vmem:[%s3976 + $0x3c] sm:$0xff]
    %v3987 = vld [vmem:[%s3976 + $0x44] sm:$0xff]
    %v3988 = vld [vmem:[%s3976 + $0x4c] sm:$0xf]
    %v3989 = vld [vmem:[%s3976 + $0x50] sm:$0xff]
    %v3990 = vld [vmem:[%s3976 + $0x58] sm:$0xff]
    %v3991 = vld [vmem:[%s3976 + $0x60] sm:$0xf]
    %v3992 = vld [vmem:[%s3976 + $0x64] sm:$0xff]
    %v3993 = vld [vmem:[%s3976 + $0x6c] sm:$0xff]
    %v3994 = vld [vmem:[%s3976 + $0x74] sm:$0xf]
    %v3995 = vld [vmem:[%s3976 + $0x78] sm:$0xff]
    %v3996 = vld [vmem:[%s3976 + $0x80] sm:$0xff]
    %v3997 = vld [vmem:[%s3976 + $0x88] sm:$0xf]
    %v3998 = vld [vmem:[%s3976 + $0x8c] sm:$0xff]
    %v3999 = vld [vmem:[%s3976 + $0x94] sm:$0xff]
    %v4000 = vld [vmem:[%s3976 + $0x9c] sm:$0xf]
    %s4001 = scalar_lea.vmem %s5, 6
    %v4002 = vld [vmem:[%s4001] sm:$0x1]
    %v4003 = vpack.c.bf16 %v3973, %v3972
    %v4004 = vpack.c.bf16 %v3975, %v3974
    %v4029 = vunpack.c.l.b16 %v3977
    %v4030 = vunpack.c.h.b16 %v3977
    %v4031 = vunpack.c.l.b16 %v3978
    %v4032 = vunpack.c.h.b16 %v3978
    %v4033 = vunpack.c.l.b16 %v3979
    %v4034 = vunpack.c.l.b16 %v3980
    %v4035 = vunpack.c.h.b16 %v3980
    %v4036 = vunpack.c.l.b16 %v3981
    %v4037 = vunpack.c.h.b16 %v3981
    %v4038 = vunpack.c.l.b16 %v3982
    %v4039 = vunpack.c.l.b16 %v3983
    %v4040 = vunpack.c.h.b16 %v3983
    %v4041 = vunpack.c.l.b16 %v3984
    %v4042 = vunpack.c.h.b16 %v3984
    %v4043 = vunpack.c.l.b16 %v3985
    %v4044 = vunpack.c.l.b16 %v3986
    %v4045 = vunpack.c.h.b16 %v3986
    %v4046 = vunpack.c.l.b16 %v3987
    %v4047 = vunpack.c.h.b16 %v3987
    %v4048 = vunpack.c.l.b16 %v3988
    %v4049 = vunpack.c.l.b16 %v3989
    %v4050 = vunpack.c.h.b16 %v3989
    %v4051 = vunpack.c.l.b16 %v3990
    %v4052 = vunpack.c.h.b16 %v3990
    %v4053 = vunpack.c.l.b16 %v3991
    %v4054 = vunpack.c.l.b16 %v3992
    %v4055 = vunpack.c.h.b16 %v3992
    %v4056 = vunpack.c.l.b16 %v3993
    %v4057 = vunpack.c.h.b16 %v3993
    %v4058 = vunpack.c.l.b16 %v3994
    %v4059 = vunpack.c.l.b16 %v3995
    %v4060 = vunpack.c.h.b16 %v3995
    %v4061 = vunpack.c.l.b16 %v3996
    %v4062 = vunpack.c.h.b16 %v3996
    %v4063 = vunpack.c.l.b16 %v3997
    %v4064 = vunpack.c.l.b16 %v3998
    %v4065 = vunpack.c.h.b16 %v3998
    %v4066 = vunpack.c.l.b16 %v3999
    %v4067 = vunpack.c.h.b16 %v3999
    %v4068 = vunpack.c.l.b16 %v4000
    %v4069 = vpack.c.b16 %v4034, %v4029
    %v4070 = vpack.c.b16 %v4035, %v4030
    %v4071 = vpack.c.b16 %v4036, %v4031
    %v4072 = vpack.c.b16 %v4037, %v4032
    %v4073 = vpack.c.b16 %v4038, %v4033
    %v4074 = vpack.c.b16 %v4044, %v4039
    %v4075 = vpack.c.b16 %v4045, %v4040
    %v4076 = vpack.c.b16 %v4046, %v4041
    %v4077 = vpack.c.b16 %v4047, %v4042
    %v4078 = vpack.c.b16 %v4048, %v4043
    %v4079 = vpack.c.b16 %v4054, %v4049
    %v4080 = vpack.c.b16 %v4055, %v4050
    %v4081 = vpack.c.b16 %v4056, %v4051
    %v4082 = vpack.c.b16 %v4057, %v4052
    %v4083 = vpack.c.b16 %v4058, %v4053
    %v4084 = vpack.c.b16 %v4064, %v4059
    %v4085 = vpack.c.b16 %v4065, %v4060
    %v4086 = vpack.c.b16 %v4066, %v4061
    %v4087 = vpack.c.b16 %v4067, %v4062
    %v4088 = vpack.c.b16 %v4068, %v4063
    %v4110 = vsel %vm1096, %v4003, 0
    %v4113 = vsel %vm1096, %v4004, 0
    %4115 = vmatprep.subr.bf16.mxu0 %v4070
    %4116 = vmatpush1.bf16.msra.mxu0 %v4069
    %4117 = vmatprep.subr.bf16.mxu0 %v4075
    %4118 = vmatpush1.bf16.msra.mxu0 %v4074
    %4119 = vmatprep.subr.bf16.mxu0 %v4080
    %4120 = vmatpush1.bf16.msra.mxu0 %v4079
    %4121 = vmatprep.subr.bf16.mxu0 %v4085
    %4122 = vmatpush1.bf16.msra.mxu0 %v4084
    %4123 = vmatprep.subr.bf16.mxu0 0
    %4124 = vmatpush1.bf16.msra.mxu0 0
    %4125 = vmatprep.subr.bf16.mxu0 0
    %4126 = vmatpush1.bf16.msra.mxu0 0
    %4127 = vmatprep.subr.bf16.mxu0 0
    %4128 = vmatpush1.bf16.msra.mxu0 0
    %4129 = vmatprep.subr.bf16.mxu0 0
    %4130 = vmatpush1.bf16.msra.mxu0 0
    %4131 = vmatprep.subr.bf16.mxu0 0
    %4132 = vmatpush1.bf16.msra.mxu0 0
    %4133 = vmatprep.subr.bf16.mxu0 0
    %4134 = vmatpush1.bf16.msra.mxu0 0
    %4135 = vmatprep.subr.bf16.mxu0 0
    %4136 = vmatpush1.bf16.msra.mxu0 0
    %4137 = vmatprep.subr.bf16.mxu0 0
    %4138 = vmatpush1.bf16.msra.mxu0 0
    %4139 = vmatprep.subr.bf16.mxu0 0
    %4140 = vmatpush1.bf16.msra.mxu0 0
    %4141 = vmatprep.subr.bf16.mxu0 0
    %4142 = vmatpush1.bf16.msra.mxu0 0
    %4143 = vmatprep.subr.bf16.mxu0 0
    %4144 = vmatpush1.bf16.msra.mxu0 0
    %4145 = vmatprep.subr.bf16.mxu0 0
    %4146 = vmatpush1.bf16.msra.mxu0 0
    %4147 = vmatprep.mubr.bf16.mxu0 0
    %4148 = vmatmul.mubr.bf16.gmra.mrb[0].mxu0 %v4110
    %v4149 = vpop.f32.mrb[0].mxu0
    %v4150 = vadd.f32 0.0, %v4149
    %v4151 = vpop.f32.mrb[0].mxu0
    %v4152 = vadd.f32 0.0, %v4151
    %v4153 = vpop.f32.mrb[0].mxu0
    %v4154 = vadd.f32 0.0, %v4153
    %v4155 = vpop.f32.mrb[0].mxu0
    %v4156 = vadd.f32 0.0, %v4155
    %4157 = vmatprep.mubr.bf16.mxu0 0
    %4158 = vmatmul.mubr.bf16.gmra.mrb[0].mxu0 %v4113
    %v4159 = vpop.f32.mrb[0].mxu0
    %v4160 = vadd.f32 0.0, %v4159
    %v4161 = vpop.f32.mrb[0].mxu0
    %v4162 = vadd.f32 0.0, %v4161
    %v4163 = vpop.f32.mrb[0].mxu0
    %v4164 = vadd.f32 0.0, %v4163
    %v4165 = vpop.f32.mrb[0].mxu0
    %v4166 = vadd.f32 0.0, %v4165
    %4167 = vdwg.mxu0
    %4168 = vmatprep.subr.bf16.mxu0 %v4072
    %4169 = vmatpush1.bf16.msra.mxu0 %v4071
    %4170 = vmatprep.subr.bf16.mxu0 %v4077
    %4171 = vmatpush1.bf16.msra.mxu0 %v4076
    %4172 = vmatprep.subr.bf16.mxu0 %v4082
    %4173 = vmatpush1.bf16.msra.mxu0 %v4081
    %4174 = vmatprep.subr.bf16.mxu0 %v4087
    %4175 = vmatpush1.bf16.msra.mxu0 %v4086
    %4176 = vmatprep.subr.bf16.mxu0 0
    %4177 = vmatpush1.bf16.msra.mxu0 0
    %4178 = vmatprep.subr.bf16.mxu0 0
    %4179 = vmatpush1.bf16.msra.mxu0 0
    %4180 = vmatprep.subr.bf16.mxu0 0
    %4181 = vmatpush1.bf16.msra.mxu0 0
    %4182 = vmatprep.subr.bf16.mxu0 0
    %4183 = vmatpush1.bf16.msra.mxu0 0
    %4184 = vmatprep.subr.bf16.mxu0 0
    %4185 = vmatpush1.bf16.msra.mxu0 0
    %4186 = vmatprep.subr.bf16.mxu0 0
    %4187 = vmatpush1.bf16.msra.mxu0 0
    %4188 = vmatprep.subr.bf16.mxu0 0
    %4189 = vmatpush1.bf16.msra.mxu0 0
    %4190 = vmatprep.subr.bf16.mxu0 0
    %4191 = vmatpush1.bf16.msra.mxu0 0
    %4192 = vmatprep.subr.bf16.mxu0 0
    %4193 = vmatpush1.bf16.msra.mxu0 0
    %4194 = vmatprep.subr.bf16.mxu0 0
    %4195 = vmatpush1.bf16.msra.mxu0 0
    %4196 = vmatprep.subr.bf16.mxu0 0
    %4197 = vmatpush1.bf16.msra.mxu0 0
    %4198 = vmatprep.subr.bf16.mxu0 0
    %4199 = vmatpush1.bf16.msra.mxu0 0
    %4200 = vmatprep.mubr.bf16.mxu0 0
    %4201 = vmatmul.mubr.bf16.gmra.mrb[0].mxu0 %v4110
    %v4202 = vpop.f32.mrb[0].mxu0
    %v4203 = vadd.f32 0.0, %v4202
    %v4204 = vpop.f32.mrb[0].mxu0
    %v4205 = vadd.f32 0.0, %v4204
    %v4206 = vpop.f32.mrb[0].mxu0
    %v4207 = vadd.f32 0.0, %v4206
    %v4208 = vpop.f32.mrb[0].mxu0
    %v4209 = vadd.f32 0.0, %v4208
    %4210 = vmatprep.mubr.bf16.mxu0 0
    %4211 = vmatmul.mubr.bf16.gmra.mrb[0].mxu0 %v4113
    %v4212 = vpop.f32.mrb[0].mxu0
    %v4213 = vadd.f32 0.0, %v4212
    %v4214 = vpop.f32.mrb[0].mxu0
    %v4215 = vadd.f32 0.0, %v4214
    %v4216 = vpop.f32.mrb[0].mxu0
    %v4217 = vadd.f32 0.0, %v4216
    %v4218 = vpop.f32.mrb[0].mxu0
    %v4219 = vadd.f32 0.0, %v4218
    %4220 = vdwg.mxu0
    %4221 = vmatprep.subr.bf16.mxu0 0
    %4222 = vmatpush1.bf16.msra.mxu0 %v4073
    %4223 = vmatprep.subr.bf16.mxu0 0
    %4224 = vmatpush1.bf16.msra.mxu0 %v4078
    %4225 = vmatprep.subr.bf16.mxu0 0
    %4226 = vmatpush1.bf16.msra.mxu0 %v4083
    %4227 = vmatprep.subr.bf16.mxu0 0
    %4228 = vmatpush1.bf16.msra.mxu0 %v4088
    %4229 = vmatprep.subr.bf16.mxu0 0
    %4230 = vmatpush1.bf16.msra.mxu0 0
    %4231 = vmatprep.subr.bf16.mxu0 0
    %4232 = vmatpush1.bf16.msra.mxu0 0
    %4233 = vmatprep.subr.bf16.mxu0 0
    %4234 = vmatpush1.bf16.msra.mxu0 0
    %4235 = vmatprep.subr.bf16.mxu0 0
    %4236 = vmatpush1.bf16.msra.mxu0 0
    %4237 = vmatprep.subr.bf16.mxu0 0
    %4238 = vmatpush1.bf16.msra.mxu0 0
    %4239 = vmatprep.subr.bf16.mxu0 0
    %4240 = vmatpush1.bf16.msra.mxu0 0
    %4241 = vmatprep.subr.bf16.mxu0 0
    %4242 = vmatpush1.bf16.msra.mxu0 0
    %4243 = vmatprep.subr.bf16.mxu0 0
    %4244 = vmatpush1.bf16.msra.mxu0 0
    %4245 = vmatprep.subr.bf16.mxu0 0
    %4246 = vmatpush1.bf16.msra.mxu0 0
    %4247 = vmatprep.subr.bf16.mxu0 0
    %4248 = vmatpush1.bf16.msra.mxu0 0
    %4249 = vmatprep.subr.bf16.mxu0 0
    %4250 = vmatpush1.bf16.msra.mxu0 0
    %4251 = vmatprep.subr.bf16.mxu0 0
    %4252 = vmatpush1.bf16.msra.mxu0 0
    %4253 = vmatprep.mubr.bf16.mxu0 0
    %4254 = vmatmul.mubr.bf16.gmra.mrb[0].mxu0 %v4110
    %v4255 = vpop.f32.mrb[0].mxu0
    %v4256 = vadd.f32 0.0, %v4255
    %v4257 = vpop.f32.mrb[0].mxu0
    %v4258 = vpop.f32.mrb[0].mxu0
    %v4259 = vadd.f32 0.0, %v4258
    %v4260 = vpop.f32.mrb[0].mxu0
    %4261 = vmatprep.mubr.bf16.mxu0 0
    %4262 = vmatmul.mubr.bf16.gmra.mrb[0].mxu0 %v4113
    %v4263 = vpop.f32.mrb[0].mxu0
    %v4264 = vadd.f32 0.0, %v4263
    %v4265 = vpop.f32.mrb[0].mxu0
    %v4266 = vpop.f32.mrb[0].mxu0
    %v4267 = vadd.f32 0.0, %v4266
    %v4268 = vpop.f32.mrb[0].mxu0
    %4269 = vdwg.mxu0
    %v4270 = vrot.slane %v4150, 3
    %v4271 = vrot.slane %v4154, 3
    %v4272 = vrot.slane %v4160, 3
    %v4273 = vrot.slane %v4164, 3
    %v4274 = vsel %vm555, %v4272, %v4273
    %v4275 = vsel %vm555, %v4271, %v4272
    %v4276 = vsel %vm555, %v4270, %v4271
    %v4277 = vsel %vm555, %v4273, %v4270
    %v4278 = vmul.f32 %v4277, %v567
    %v4279 = vmul.f32 %v4276, %v572
    %v4280 = vmul.f32 %v4275, %v577
    %v4281 = vmul.f32 %v4274, %v582
    %v4282 = vadd.f32 %v4203, %v4278
    %v4283 = vadd.f32 %v4207, %v4279
    %v4284 = vadd.f32 %v4213, %v4280
    %v4285 = vadd.f32 %v4217, %v4281
    %4290 = vrot.lane.b32.xlu0 %v4150, 64
    %v4291 = vpop.permute.xlu0 %4290
    %4292 = vrot.lane.b32.xlu0 %v4154, 64
    %v4293 = vpop.permute.xlu0 %4292
    %4294 = vrot.lane.b32.xlu0 %v4160, 64
    %v4295 = vpop.permute.xlu0 %4294
    %4296 = vrot.lane.b32.xlu0 %v4164, 64
    %v4297 = vpop.permute.xlu0 %4296
    %v4302 = vrot.slane %v4291, 4
    %v4303 = vrot.slane %v4293, 4
    %v4304 = vrot.slane %v4295, 4
    %v4305 = vrot.slane %v4297, 4
    %v4306 = vsel %vm612, %v4304, %v4305
    %v4307 = vsel %vm612, %v4303, %v4304
    %v4308 = vsel %vm612, %v4302, %v4303
    %v4309 = vsel %vm612, %v4305, %v4302
    %v4310 = vmul.f32 %v4309, %v625
    %v4311 = vmul.f32 %v4308, %v630
    %v4312 = vmul.f32 %v4307, %v635
    %v4313 = vmul.f32 %v4306, %v640
    %v4314 = vadd.f32 %v4282, %v4310
    %v4315 = vadd.f32 %v4283, %v4311
    %v4316 = vadd.f32 %v4284, %v4312
    %v4317 = vadd.f32 %v4285, %v4313
    %v4318 = vrot.slane %v4152, 5
    %v4319 = vrot.slane %v4156, 5
    %v4320 = vrot.slane %v4162, 5
    %v4321 = vrot.slane %v4166, 5
    %v4322 = vsel %vm654, %v4320, %v4321
    %v4323 = vsel %vm654, %v4319, %v4320
    %v4324 = vsel %vm654, %v4318, %v4319
    %v4325 = vsel %vm654, %v4321, %v4318
    %v4326 = vmul.f32 %v4325, %v667
    %v4327 = vmul.f32 %v4324, %v672
    %v4328 = vmul.f32 %v4323, %v677
    %v4329 = vmul.f32 %v4322, %v682
    %v4330 = vadd.f32 %v4314, %v4326
    %v4331 = vadd.f32 %v4315, %v4327
    %v4332 = vadd.f32 %v4316, %v4328
    %v4333 = vadd.f32 %v4317, %v4329
    %4338 = vrot.lane.b32.xlu0 %v4152, 64
    %v4339 = vpop.permute.xlu0 %4338
    %4340 = vrot.lane.b32.xlu0 %v4156, 64
    %v4341 = vpop.permute.xlu0 %4340
    %4342 = vrot.lane.b32.xlu0 %v4162, 64
    %v4343 = vpop.permute.xlu0 %4342
    %4344 = vrot.lane.b32.xlu0 %v4166, 64
    %v4345 = vpop.permute.xlu0 %4344
    %v4350 = vrot.slane %v4339, 7
    %v4351 = vrot.slane %v4341, 7
    %v4352 = vrot.slane %v4343, 7
    %v4353 = vrot.slane %v4345, 7
    %v4354 = vsel %vm712, %v4352, %v4353
    %v4355 = vsel %vm712, %v4351, %v4352
    %v4356 = vsel %vm712, %v4350, %v4351
    %v4357 = vsel %vm712, %v4353, %v4350
    %v4358 = vmul.f32 %v4357, %v725
    %v4359 = vmul.f32 %v4356, %v730
    %v4360 = vmul.f32 %v4355, %v735
    %v4361 = vmul.f32 %v4354, %v740
    %v4362 = vadd.f32 %v4330, %v4358
    %v4363 = vadd.f32 %v4331, %v4359
    %v4364 = vadd.f32 %v4332, %v4360
    %v4365 = vadd.f32 %v4333, %v4361
    %4370 = vrot.lane.b32.xlu0 %v4203, 64
    %v4371 = vpop.permute.xlu0 %4370
    %4372 = vrot.lane.b32.xlu0 %v4207, 64
    %v4373 = vpop.permute.xlu0 %4372
    %4374 = vrot.lane.b32.xlu0 %v4213, 64
    %v4375 = vpop.permute.xlu0 %4374
    %4376 = vrot.lane.b32.xlu0 %v4217, 64
    %v4377 = vpop.permute.xlu0 %4376
    %v4382 = vrot.slane %v4371, 1
    %v4383 = vrot.slane %v4373, 1
    %v4384 = vrot.slane %v4375, 1
    %v4385 = vrot.slane %v4377, 1
    %v4386 = vsel %vm770, %v4384, %v4385
    %v4387 = vsel %vm770, %v4383, %v4384
    %v4388 = vsel %vm770, %v4382, %v4383
    %v4389 = vsel %vm770, %v4385, %v4382
    %v4390 = vmul.f32 %v4388, %v783
    %v4391 = vmul.f32 %v4387, %v788
    %v4392 = vmul.f32 %v4386, %v793
    %v4393 = vmul.f32 %v4389, %v798
    %v4394 = vadd.f32 %v4362, %v4390
    %v4395 = vadd.f32 %v4363, %v4391
    %v4396 = vadd.f32 %v4364, %v4392
    %v4397 = vadd.f32 %v4365, %v4393
    %v4398 = vrot.slane %v4205, 3
    %v4399 = vrot.slane %v4209, 3
    %v4400 = vrot.slane %v4215, 3
    %v4401 = vrot.slane %v4219, 3
    %v4402 = vsel %vm555, %v4400, %v4401
    %v4403 = vsel %vm555, %v4399, %v4400
    %v4404 = vsel %vm555, %v4398, %v4399
    %v4405 = vsel %vm555, %v4401, %v4398
    %v4406 = vmul.f32 %v4404, %v824
    %v4407 = vmul.f32 %v4403, %v829
    %v4408 = vmul.f32 %v4402, %v834
    %v4409 = vmul.f32 %v4405, %v839
    %v4410 = vadd.f32 %v4394, %v4406
    %v4411 = vadd.f32 %v4395, %v4407
    %v4412 = vadd.f32 %v4396, %v4408
    %v4413 = vadd.f32 %v4397, %v4409
    %4418 = vrot.lane.b32.xlu0 %v4205, 64
    %v4419 = vpop.permute.xlu0 %4418
    %4420 = vrot.lane.b32.xlu0 %v4209, 64
    %v4421 = vpop.permute.xlu0 %4420
    %4422 = vrot.lane.b32.xlu0 %v4215, 64
    %v4423 = vpop.permute.xlu0 %4422
    %4424 = vrot.lane.b32.xlu0 %v4219, 64
    %v4425 = vpop.permute.xlu0 %4424
    %v4430 = vrot.slane %v4419, 4
    %v4431 = vrot.slane %v4421, 4
    %v4432 = vrot.slane %v4423, 4
    %v4433 = vrot.slane %v4425, 4
    %v4434 = vsel %vm612, %v4432, %v4433
    %v4435 = vsel %vm612, %v4431, %v4432
    %v4436 = vsel %vm612, %v4430, %v4431
    %v4437 = vsel %vm612, %v4433, %v4430
    %v4438 = vmul.f32 %v4436, %v881
    %v4439 = vmul.f32 %v4435, %v886
    %v4440 = vmul.f32 %v4434, %v891
    %v4441 = vmul.f32 %v4437, %v896
    %v4442 = vadd.f32 %v4410, %v4438
    %v4443 = vadd.f32 %v4411, %v4439
    %v4444 = vadd.f32 %v4412, %v4440
    %v4445 = vadd.f32 %v4413, %v4441
    %v4446 = vrot.slane %v4256, 5
    %v4447 = vrot.slane %v4259, 5
    %v4448 = vrot.slane %v4264, 5
    %v4449 = vrot.slane %v4267, 5
    %v4450 = vsel %vm654, %v4448, %v4449
    %v4451 = vsel %vm654, %v4447, %v4448
    %v4452 = vsel %vm654, %v4446, %v4447
    %v4453 = vsel %vm654, %v4449, %v4446
    %v4454 = vmul.f32 %v4452, %v922
    %v4455 = vmul.f32 %v4451, %v927
    %v4456 = vmul.f32 %v4450, %v932
    %v4457 = vmul.f32 %v4453, %v937
    %v4458 = vadd.f32 %v4442, %v4454
    %v4459 = vadd.f32 %v4443, %v4455
    %v4460 = vadd.f32 %v4444, %v4456
    %v4461 = vadd.f32 %v4445, %v4457
    %v4463 = vlaneseq
    %v4464 = vshrl.u32 %v4463, 7
    %v4465 = vsub.s32 0, %v4464
    %v4466 = vrot.slane %v4002, %v4465
    %v4468 = vadd.f32 %v4458, %v4466
    %v4469 = vadd.f32 %v4459, %v4466
    %v4470 = vadd.f32 %v4460, %v4466
    %v4471 = vadd.f32 %v4461, %v4466
    %v4472 = vmul.f32 %v4468, 0.1
    %v4473 = vmul.f32 %v4469, 0.1
    %v4474 = vmul.f32 %v4470, 0.1
    %v4475 = vmul.f32 %v4471, 0.1
    %v4476 = vmax.f32 %v4468, %v4472
    %v4477 = vmax.f32 %v4469, %v4473
    %v4478 = vmax.f32 %v4470, %v4474
    %v4479 = vmax.f32 %v4471, %v4475
    %s4480 = scalar_lea.vmem %s4, 1120
    %v4481 = vld [vmem:[%s4480] sm:$0xff]
    %v4482 = vld [vmem:[%s4480 + $0x8] sm:$0xff]
    %v4483 = vld [vmem:[%s4480 + $0x10] sm:$0xf]
    %v4484 = vld [vmem:[%s4480 + $0x14] sm:$0xff]
    %v4485 = vld [vmem:[%s4480 + $0x1c] sm:$0xff]
    %v4486 = vld [vmem:[%s4480 + $0x24] sm:$0xf]
    %v4487 = vld [vmem:[%s4480 + $0x28] sm:$0xff]
    %v4488 = vld [vmem:[%s4480 + $0x30] sm:$0xff]
    %v4489 = vld [vmem:[%s4480 + $0x38] sm:$0xf]
    %v4490 = vld [vmem:[%s4480 + $0x3c] sm:$0xff]
    %v4491 = vld [vmem:[%s4480 + $0x44] sm:$0xff]
    %v4492 = vld [vmem:[%s4480 + $0x4c] sm:$0xf]
    %v4493 = vld [vmem:[%s4480 + $0x50] sm:$0xff]
    %v4494 = vld [vmem:[%s4480 + $0x58] sm:$0xff]
    %v4495 = vld [vmem:[%s4480 + $0x60] sm:$0xf]
    %v4496 = vld [vmem:[%s4480 + $0x64] sm:$0xff]
    %v4497 = vld [vmem:[%s4480 + $0x6c] sm:$0xff]
    %v4498 = vld [vmem:[%s4480 + $0x74] sm:$0xf]
    %v4499 = vld [vmem:[%s4480 + $0x78] sm:$0xff]
    %v4500 = vld [vmem:[%s4480 + $0x80] sm:$0xff]
    %v4501 = vld [vmem:[%s4480 + $0x88] sm:$0xf]
    %v4502 = vld [vmem:[%s4480 + $0x8c] sm:$0xff]
    %v4503 = vld [vmem:[%s4480 + $0x94] sm:$0xff]
    %v4504 = vld [vmem:[%s4480 + $0x9c] sm:$0xf]
    %s4505 = scalar_lea.vmem %s5, 7
    %v4506 = vld [vmem:[%s4505] sm:$0x1]
    %v4507 = vpack.c.bf16 %v4477, %v4476
    %v4508 = vpack.c.bf16 %v4479, %v4478
    %v4533 = vunpack.c.l.b16 %v4481
    %v4534 = vunpack.c.h.b16 %v4481
    %v4535 = vunpack.c.l.b16 %v4482
    %v4536 = vunpack.c.h.b16 %v4482
    %v4537 = vunpack.c.l.b16 %v4483
    %v4538 = vunpack.c.l.b16 %v4484
    %v4539 = vunpack.c.h.b16 %v4484
    %v4540 = vunpack.c.l.b16 %v4485
    %v4541 = vunpack.c.h.b16 %v4485
    %v4542 = vunpack.c.l.b16 %v4486
    %v4543 = vunpack.c.l.b16 %v4487
    %v4544 = vunpack.c.h.b16 %v4487
    %v4545 = vunpack.c.l.b16 %v4488
    %v4546 = vunpack.c.h.b16 %v4488
    %v4547 = vunpack.c.l.b16 %v4489
    %v4548 = vunpack.c.l.b16 %v4490
    %v4549 = vunpack.c.h.b16 %v4490
    %v4550 = vunpack.c.l.b16 %v4491
    %v4551 = vunpack.c.h.b16 %v4491
    %v4552 = vunpack.c.l.b16 %v4492
    %v4553 = vunpack.c.l.b16 %v4493
    %v4554 = vunpack.c.h.b16 %v4493
    %v4555 = vunpack.c.l.b16 %v4494
    %v4556 = vunpack.c.h.b16 %v4494
    %v4557 = vunpack.c.l.b16 %v4495
    %v4558 = vunpack.c.l.b16 %v4496
    %v4559 = vunpack.c.h.b16 %v4496
    %v4560 = vunpack.c.l.b16 %v4497
    %v4561 = vunpack.c.h.b16 %v4497
    %v4562 = vunpack.c.l.b16 %v4498
    %v4563 = vunpack.c.l.b16 %v4499
    %v4564 = vunpack.c.h.b16 %v4499
    %v4565 = vunpack.c.l.b16 %v4500
    %v4566 = vunpack.c.h.b16 %v4500
    %v4567 = vunpack.c.l.b16 %v4501
    %v4568 = vunpack.c.l.b16 %v4502
    %v4569 = vunpack.c.h.b16 %v4502
    %v4570 = vunpack.c.l.b16 %v4503
    %v4571 = vunpack.c.h.b16 %v4503
    %v4572 = vunpack.c.l.b16 %v4504
    %v4573 = vpack.c.b16 %v4538, %v4533
    %v4574 = vpack.c.b16 %v4539, %v4534
    %v4575 = vpack.c.b16 %v4540, %v4535
    %v4576 = vpack.c.b16 %v4541, %v4536
    %v4577 = vpack.c.b16 %v4542, %v4537
    %v4578 = vpack.c.b16 %v4548, %v4543
    %v4579 = vpack.c.b16 %v4549, %v4544
    %v4580 = vpack.c.b16 %v4550, %v4545
    %v4581 = vpack.c.b16 %v4551, %v4546
    %v4582 = vpack.c.b16 %v4552, %v4547
    %v4583 = vpack.c.b16 %v4558, %v4553
    %v4584 = vpack.c.b16 %v4559, %v4554
    %v4585 = vpack.c.b16 %v4560, %v4555
    %v4586 = vpack.c.b16 %v4561, %v4556
    %v4587 = vpack.c.b16 %v4562, %v4557
    %v4588 = vpack.c.b16 %v4568, %v4563
    %v4589 = vpack.c.b16 %v4569, %v4564
    %v4590 = vpack.c.b16 %v4570, %v4565
    %v4591 = vpack.c.b16 %v4571, %v4566
    %v4592 = vpack.c.b16 %v4572, %v4567
    %v4614 = vsel %vm1096, %v4507, 0
    %v4617 = vsel %vm1096, %v4508, 0
    %4619 = vmatprep.subr.bf16.mxu0 %v4574
    %4620 = vmatpush1.bf16.msra.mxu0 %v4573
    %4621 = vmatprep.subr.bf16.mxu0 %v4579
    %4622 = vmatpush1.bf16.msra.mxu0 %v4578
    %4623 = vmatprep.subr.bf16.mxu0 %v4584
    %4624 = vmatpush1.bf16.msra.mxu0 %v4583
    %4625 = vmatprep.subr.bf16.mxu0 %v4589
    %4626 = vmatpush1.bf16.msra.mxu0 %v4588
    %4627 = vmatprep.subr.bf16.mxu0 0
    %4628 = vmatpush1.bf16.msra.mxu0 0
    %4629 = vmatprep.subr.bf16.mxu0 0
    %4630 = vmatpush1.bf16.msra.mxu0 0
    %4631 = vmatprep.subr.bf16.mxu0 0
    %4632 = vmatpush1.bf16.msra.mxu0 0
    %4633 = vmatprep.subr.bf16.mxu0 0
    %4634 = vmatpush1.bf16.msra.mxu0 0
    %4635 = vmatprep.subr.bf16.mxu0 0
    %4636 = vmatpush1.bf16.msra.mxu0 0
    %4637 = vmatprep.subr.bf16.mxu0 0
    %4638 = vmatpush1.bf16.msra.mxu0 0
    %4639 = vmatprep.subr.bf16.mxu0 0
    %4640 = vmatpush1.bf16.msra.mxu0 0
    %4641 = vmatprep.subr.bf16.mxu0 0
    %4642 = vmatpush1.bf16.msra.mxu0 0
    %4643 = vmatprep.subr.bf16.mxu0 0
    %4644 = vmatpush1.bf16.msra.mxu0 0
    %4645 = vmatprep.subr.bf16.mxu0 0
    %4646 = vmatpush1.bf16.msra.mxu0 0
    %4647 = vmatprep.subr.bf16.mxu0 0
    %4648 = vmatpush1.bf16.msra.mxu0 0
    %4649 = vmatprep.subr.bf16.mxu0 0
    %4650 = vmatpush1.bf16.msra.mxu0 0
    %4651 = vmatprep.mubr.bf16.mxu0 0
    %4652 = vmatmul.mubr.bf16.gmra.mrb[0].mxu0 %v4614
    %v4653 = vpop.f32.mrb[0].mxu0
    %v4654 = vadd.f32 0.0, %v4653
    %v4655 = vpop.f32.mrb[0].mxu0
    %v4656 = vadd.f32 0.0, %v4655
    %v4657 = vpop.f32.mrb[0].mxu0
    %v4658 = vadd.f32 0.0, %v4657
    %v4659 = vpop.f32.mrb[0].mxu0
    %v4660 = vadd.f32 0.0, %v4659
    %4661 = vmatprep.mubr.bf16.mxu0 0
    %4662 = vmatmul.mubr.bf16.gmra.mrb[0].mxu0 %v4617
    %v4663 = vpop.f32.mrb[0].mxu0
    %v4664 = vadd.f32 0.0, %v4663
    %v4665 = vpop.f32.mrb[0].mxu0
    %v4666 = vadd.f32 0.0, %v4665
    %v4667 = vpop.f32.mrb[0].mxu0
    %v4668 = vadd.f32 0.0, %v4667
    %v4669 = vpop.f32.mrb[0].mxu0
    %v4670 = vadd.f32 0.0, %v4669
    %4671 = vdwg.mxu0
    %4672 = vmatprep.subr.bf16.mxu0 %v4576
    %4673 = vmatpush1.bf16.msra.mxu0 %v4575
    %4674 = vmatprep.subr.bf16.mxu0 %v4581
    %4675 = vmatpush1.bf16.msra.mxu0 %v4580
    %4676 = vmatprep.subr.bf16.mxu0 %v4586
    %4677 = vmatpush1.bf16.msra.mxu0 %v4585
    %4678 = vmatprep.subr.bf16.mxu0 %v4591
    %4679 = vmatpush1.bf16.msra.mxu0 %v4590
    %4680 = vmatprep.subr.bf16.mxu0 0
    %4681 = vmatpush1.bf16.msra.mxu0 0
    %4682 = vmatprep.subr.bf16.mxu0 0
    %4683 = vmatpush1.bf16.msra.mxu0 0
    %4684 = vmatprep.subr.bf16.mxu0 0
    %4685 = vmatpush1.bf16.msra.mxu0 0
    %4686 = vmatprep.subr.bf16.mxu0 0
    %4687 = vmatpush1.bf16.msra.mxu0 0
    %4688 = vmatprep.subr.bf16.mxu0 0
    %4689 = vmatpush1.bf16.msra.mxu0 0
    %4690 = vmatprep.subr.bf16.mxu0 0
    %4691 = vmatpush1.bf16.msra.mxu0 0
    %4692 = vmatprep.subr.bf16.mxu0 0
    %4693 = vmatpush1.bf16.msra.mxu0 0
    %4694 = vmatprep.subr.bf16.mxu0 0
    %4695 = vmatpush1.bf16.msra.mxu0 0
    %4696 = vmatprep.subr.bf16.mxu0 0
    %4697 = vmatpush1.bf16.msra.mxu0 0
    %4698 = vmatprep.subr.bf16.mxu0 0
    %4699 = vmatpush1.bf16.msra.mxu0 0
    %4700 = vmatprep.subr.bf16.mxu0 0
    %4701 = vmatpush1.bf16.msra.mxu0 0
    %4702 = vmatprep.subr.bf16.mxu0 0
    %4703 = vmatpush1.bf16.msra.mxu0 0
    %4704 = vmatprep.mubr.bf16.mxu0 0
    %4705 = vmatmul.mubr.bf16.gmra.mrb[0].mxu0 %v4614
    %v4706 = vpop.f32.mrb[0].mxu0
    %v4707 = vadd.f32 0.0, %v4706
    %v4708 = vpop.f32.mrb[0].mxu0
    %v4709 = vadd.f32 0.0, %v4708
    %v4710 = vpop.f32.mrb[0].mxu0
    %v4711 = vadd.f32 0.0, %v4710
    %v4712 = vpop.f32.mrb[0].mxu0
    %v4713 = vadd.f32 0.0, %v4712
    %4714 = vmatprep.mubr.bf16.mxu0 0
    %4715 = vmatmul.mubr.bf16.gmra.mrb[0].mxu0 %v4617
    %v4716 = vpop.f32.mrb[0].mxu0
    %v4717 = vadd.f32 0.0, %v4716
    %v4718 = vpop.f32.mrb[0].mxu0
    %v4719 = vadd.f32 0.0, %v4718
    %v4720 = vpop.f32.mrb[0].mxu0
    %v4721 = vadd.f32 0.0, %v4720
    %v4722 = vpop.f32.mrb[0].mxu0
    %v4723 = vadd.f32 0.0, %v4722
    %4724 = vdwg.mxu0
    %4725 = vmatprep.subr.bf16.mxu0 0
    %4726 = vmatpush1.bf16.msra.mxu0 %v4577
    %4727 = vmatprep.subr.bf16.mxu0 0
    %4728 = vmatpush1.bf16.msra.mxu0 %v4582
    %4729 = vmatprep.subr.bf16.mxu0 0
    %4730 = vmatpush1.bf16.msra.mxu0 %v4587
    %4731 = vmatprep.subr.bf16.mxu0 0
    %4732 = vmatpush1.bf16.msra.mxu0 %v4592
    %4733 = vmatprep.subr.bf16.mxu0 0
    %4734 = vmatpush1.bf16.msra.mxu0 0
    %4735 = vmatprep.subr.bf16.mxu0 0
    %4736 = vmatpush1.bf16.msra.mxu0 0
    %4737 = vmatprep.subr.bf16.mxu0 0
    %4738 = vmatpush1.bf16.msra.mxu0 0
    %4739 = vmatprep.subr.bf16.mxu0 0
    %4740 = vmatpush1.bf16.msra.mxu0 0
    %4741 = vmatprep.subr.bf16.mxu0 0
    %4742 = vmatpush1.bf16.msra.mxu0 0
    %4743 = vmatprep.subr.bf16.mxu0 0
    %4744 = vmatpush1.bf16.msra.mxu0 0
    %4745 = vmatprep.subr.bf16.mxu0 0
    %4746 = vmatpush1.bf16.msra.mxu0 0
    %4747 = vmatprep.subr.bf16.mxu0 0
    %4748 = vmatpush1.bf16.msra.mxu0 0
    %4749 = vmatprep.subr.bf16.mxu0 0
    %4750 = vmatpush1.bf16.msra.mxu0 0
    %4751 = vmatprep.subr.bf16.mxu0 0
    %4752 = vmatpush1.bf16.msra.mxu0 0
    %4753 = vmatprep.subr.bf16.mxu0 0
    %4754 = vmatpush1.bf16.msra.mxu0 0
    %4755 = vmatprep.subr.bf16.mxu0 0
    %4756 = vmatpush1.bf16.msra.mxu0 0
    %4757 = vmatprep.mubr.bf16.mxu0 0
    %4758 = vmatmul.mubr.bf16.gmra.mrb[0].mxu0 %v4614
    %v4759 = vpop.f32.mrb[0].mxu0
    %v4760 = vadd.f32 0.0, %v4759
    %v4761 = vpop.f32.mrb[0].mxu0
    %v4762 = vpop.f32.mrb[0].mxu0
    %v4763 = vadd.f32 0.0, %v4762
    %v4764 = vpop.f32.mrb[0].mxu0
    %4765 = vmatprep.mubr.bf16.mxu0 0
    %4766 = vmatmul.mubr.bf16.gmra.mrb[0].mxu0 %v4617
    %v4767 = vpop.f32.mrb[0].mxu0
    %v4768 = vadd.f32 0.0, %v4767
    %v4769 = vpop.f32.mrb[0].mxu0
    %v4770 = vpop.f32.mrb[0].mxu0
    %v4771 = vadd.f32 0.0, %v4770
    %v4772 = vpop.f32.mrb[0].mxu0
    %4773 = vdwg.mxu0
    %v4774 = vrot.slane %v4654, 3
    %v4775 = vrot.slane %v4658, 3
    %v4776 = vrot.slane %v4664, 3
    %v4777 = vrot.slane %v4668, 3
    %v4778 = vsel %vm555, %v4776, %v4777
    %v4779 = vsel %vm555, %v4775, %v4776
    %v4780 = vsel %vm555, %v4774, %v4775
    %v4781 = vsel %vm555, %v4777, %v4774
    %v4782 = vmul.f32 %v4781, %v567
    %v4783 = vmul.f32 %v4780, %v572
    %v4784 = vmul.f32 %v4779, %v577
    %v4785 = vmul.f32 %v4778, %v582
    %v4786 = vadd.f32 %v4707, %v4782
    %v4787 = vadd.f32 %v4711, %v4783
    %v4788 = vadd.f32 %v4717, %v4784
    %v4789 = vadd.f32 %v4721, %v4785
    %4794 = vrot.lane.b32.xlu0 %v4654, 64
    %v4795 = vpop.permute.xlu0 %4794
    %4796 = vrot.lane.b32.xlu0 %v4658, 64
    %v4797 = vpop.permute.xlu0 %4796
    %4798 = vrot.lane.b32.xlu0 %v4664, 64
    %v4799 = vpop.permute.xlu0 %4798
    %4800 = vrot.lane.b32.xlu0 %v4668, 64
    %v4801 = vpop.permute.xlu0 %4800
    %v4806 = vrot.slane %v4795, 4
    %v4807 = vrot.slane %v4797, 4
    %v4808 = vrot.slane %v4799, 4
    %v4809 = vrot.slane %v4801, 4
    %v4810 = vsel %vm612, %v4808, %v4809
    %v4811 = vsel %vm612, %v4807, %v4808
    %v4812 = vsel %vm612, %v4806, %v4807
    %v4813 = vsel %vm612, %v4809, %v4806
    %v4814 = vmul.f32 %v4813, %v625
    %v4815 = vmul.f32 %v4812, %v630
    %v4816 = vmul.f32 %v4811, %v635
    %v4817 = vmul.f32 %v4810, %v640
    %v4818 = vadd.f32 %v4786, %v4814
    %v4819 = vadd.f32 %v4787, %v4815
    %v4820 = vadd.f32 %v4788, %v4816
    %v4821 = vadd.f32 %v4789, %v4817
    %v4822 = vrot.slane %v4656, 5
    %v4823 = vrot.slane %v4660, 5
    %v4824 = vrot.slane %v4666, 5
    %v4825 = vrot.slane %v4670, 5
    %v4826 = vsel %vm654, %v4824, %v4825
    %v4827 = vsel %vm654, %v4823, %v4824
    %v4828 = vsel %vm654, %v4822, %v4823
    %v4829 = vsel %vm654, %v4825, %v4822
    %v4830 = vmul.f32 %v4829, %v667
    %v4831 = vmul.f32 %v4828, %v672
    %v4832 = vmul.f32 %v4827, %v677
    %v4833 = vmul.f32 %v4826, %v682
    %v4834 = vadd.f32 %v4818, %v4830
    %v4835 = vadd.f32 %v4819, %v4831
    %v4836 = vadd.f32 %v4820, %v4832
    %v4837 = vadd.f32 %v4821, %v4833
    %4842 = vrot.lane.b32.xlu0 %v4656, 64
    %v4843 = vpop.permute.xlu0 %4842
    %4844 = vrot.lane.b32.xlu0 %v4660, 64
    %v4845 = vpop.permute.xlu0 %4844
    %4846 = vrot.lane.b32.xlu0 %v4666, 64
    %v4847 = vpop.permute.xlu0 %4846
    %4848 = vrot.lane.b32.xlu0 %v4670, 64
    %v4849 = vpop.permute.xlu0 %4848
    %v4854 = vrot.slane %v4843, 7
    %v4855 = vrot.slane %v4845, 7
    %v4856 = vrot.slane %v4847, 7
    %v4857 = vrot.slane %v4849, 7
    %v4858 = vsel %vm712, %v4856, %v4857
    %v4859 = vsel %vm712, %v4855, %v4856
    %v4860 = vsel %vm712, %v4854, %v4855
    %v4861 = vsel %vm712, %v4857, %v4854
    %v4862 = vmul.f32 %v4861, %v725
    %v4863 = vmul.f32 %v4860, %v730
    %v4864 = vmul.f32 %v4859, %v735
    %v4865 = vmul.f32 %v4858, %v740
    %v4866 = vadd.f32 %v4834, %v4862
    %v4867 = vadd.f32 %v4835, %v4863
    %v4868 = vadd.f32 %v4836, %v4864
    %v4869 = vadd.f32 %v4837, %v4865
    %4874 = vrot.lane.b32.xlu0 %v4707, 64
    %v4875 = vpop.permute.xlu0 %4874
    %4876 = vrot.lane.b32.xlu0 %v4711, 64
    %v4877 = vpop.permute.xlu0 %4876
    %4878 = vrot.lane.b32.xlu0 %v4717, 64
    %v4879 = vpop.permute.xlu0 %4878
    %4880 = vrot.lane.b32.xlu0 %v4721, 64
    %v4881 = vpop.permute.xlu0 %4880
    %v4886 = vrot.slane %v4875, 1
    %v4887 = vrot.slane %v4877, 1
    %v4888 = vrot.slane %v4879, 1
    %v4889 = vrot.slane %v4881, 1
    %v4890 = vsel %vm770, %v4888, %v4889
    %v4891 = vsel %vm770, %v4887, %v4888
    %v4892 = vsel %vm770, %v4886, %v4887
    %v4893 = vsel %vm770, %v4889, %v4886
    %v4894 = vmul.f32 %v4892, %v783
    %v4895 = vmul.f32 %v4891, %v788
    %v4896 = vmul.f32 %v4890, %v793
    %v4897 = vmul.f32 %v4893, %v798
    %v4898 = vadd.f32 %v4866, %v4894
    %v4899 = vadd.f32 %v4867, %v4895
    %v4900 = vadd.f32 %v4868, %v4896
    %v4901 = vadd.f32 %v4869, %v4897
    %v4902 = vrot.slane %v4709, 3
    %v4903 = vrot.slane %v4713, 3
    %v4904 = vrot.slane %v4719, 3
    %v4905 = vrot.slane %v4723, 3
    %v4906 = vsel %vm555, %v4904, %v4905
    %v4907 = vsel %vm555, %v4903, %v4904
    %v4908 = vsel %vm555, %v4902, %v4903
    %v4909 = vsel %vm555, %v4905, %v4902
    %v4910 = vmul.f32 %v4908, %v824
    %v4911 = vmul.f32 %v4907, %v829
    %v4912 = vmul.f32 %v4906, %v834
    %v4913 = vmul.f32 %v4909, %v839
    %v4914 = vadd.f32 %v4898, %v4910
    %v4915 = vadd.f32 %v4899, %v4911
    %v4916 = vadd.f32 %v4900, %v4912
    %v4917 = vadd.f32 %v4901, %v4913
    %4922 = vrot.lane.b32.xlu0 %v4709, 64
    %v4923 = vpop.permute.xlu0 %4922
    %4924 = vrot.lane.b32.xlu0 %v4713, 64
    %v4925 = vpop.permute.xlu0 %4924
    %4926 = vrot.lane.b32.xlu0 %v4719, 64
    %v4927 = vpop.permute.xlu0 %4926
    %4928 = vrot.lane.b32.xlu0 %v4723, 64
    %v4929 = vpop.permute.xlu0 %4928
    %v4934 = vrot.slane %v4923, 4
    %v4935 = vrot.slane %v4925, 4
    %v4936 = vrot.slane %v4927, 4
    %v4937 = vrot.slane %v4929, 4
    %v4938 = vsel %vm612, %v4936, %v4937
    %v4939 = vsel %vm612, %v4935, %v4936
    %v4940 = vsel %vm612, %v4934, %v4935
    %v4941 = vsel %vm612, %v4937, %v4934
    %v4942 = vmul.f32 %v4940, %v881
    %v4943 = vmul.f32 %v4939, %v886
    %v4944 = vmul.f32 %v4938, %v891
    %v4945 = vmul.f32 %v4941, %v896
    %v4946 = vadd.f32 %v4914, %v4942
    %v4947 = vadd.f32 %v4915, %v4943
    %v4948 = vadd.f32 %v4916, %v4944
    %v4949 = vadd.f32 %v4917, %v4945
    %v4950 = vrot.slane %v4760, 5
    %v4951 = vrot.slane %v4763, 5
    %v4952 = vrot.slane %v4768, 5
    %v4953 = vrot.slane %v4771, 5
    %v4954 = vsel %vm654, %v4952, %v4953
    %v4955 = vsel %vm654, %v4951, %v4952
    %v4956 = vsel %vm654, %v4950, %v4951
    %v4957 = vsel %vm654, %v4953, %v4950
    %v4958 = vmul.f32 %v4956, %v922
    %v4959 = vmul.f32 %v4955, %v927
    %v4960 = vmul.f32 %v4954, %v932
    %v4961 = vmul.f32 %v4957, %v937
    %v4962 = vadd.f32 %v4946, %v4958
    %v4963 = vadd.f32 %v4947, %v4959
    %v4964 = vadd.f32 %v4948, %v4960
    %v4965 = vadd.f32 %v4949, %v4961
    %v4967 = vlaneseq
    %v4968 = vshrl.u32 %v4967, 7
    %v4969 = vsub.s32 0, %v4968
    %v4970 = vrot.slane %v4506, %v4969
    %v4972 = vadd.f32 %v4962, %v4970
    %v4973 = vadd.f32 %v4963, %v4970
    %v4974 = vadd.f32 %v4964, %v4970
    %v4975 = vadd.f32 %v4965, %v4970
    %v4976 = vadd.f32 %v4972, %v3972
    %v4977 = vadd.f32 %v4973, %v3973
    %v4978 = vadd.f32 %v4974, %v3974
    %v4979 = vadd.f32 %v4975, %v3975
    %v4980 = vld [vmem:[%s6] sm:$0xff]
    %v4981 = vld [vmem:[%s6 + $0x8] sm:$0xff]
    %v4982 = vld [vmem:[%s6 + $0x10] sm:$0xff]
    %v4983 = vld [vmem:[%s6 + $0x18] sm:$0xff]
    %v4984 = vld [vmem:[%s6 + $0x20] sm:$0xf]
    %v4985 = vld [vmem:[%s6 + $0x24] sm:$0xff]
    %v4986 = vld [vmem:[%s6 + $0x2c] sm:$0xff]
    %v4987 = vld [vmem:[%s6 + $0x34] sm:$0xff]
    %v4988 = vld [vmem:[%s6 + $0x3c] sm:$0xff]
    %v4989 = vld [vmem:[%s6 + $0x44] sm:$0xf]
    %v4990 = vld [vmem:[%s6 + $0x48] sm:$0xff]
    %v4991 = vld [vmem:[%s6 + $0x50] sm:$0xff]
    %v4992 = vld [vmem:[%s6 + $0x58] sm:$0xff]
    %v4993 = vld [vmem:[%s6 + $0x60] sm:$0xff]
    %v4994 = vld [vmem:[%s6 + $0x68] sm:$0xf]
    %v4995 = vld [vmem:[%s6 + $0x6c] sm:$0xff]
    %v4996 = vld [vmem:[%s6 + $0x74] sm:$0xff]
    %v4997 = vld [vmem:[%s6 + $0x7c] sm:$0xff]
    %v4998 = vld [vmem:[%s6 + $0x84] sm:$0xff]
    %v4999 = vld [vmem:[%s6 + $0x8c] sm:$0xf]
    %v5000 = vld [vmem:[%s6 + $0x90] sm:$0xff]
    %v5001 = vld [vmem:[%s6 + $0x98] sm:$0xff]
    %v5002 = vld [vmem:[%s6 + $0xa0] sm:$0xff]
    %v5003 = vld [vmem:[%s6 + $0xa8] sm:$0xff]
    %v5004 = vld [vmem:[%s6 + $0xb0] sm:$0xf]
    %v5005 = vld [vmem:[%s6 + $0xb4] sm:$0xff]
    %v5006 = vld [vmem:[%s6 + $0xbc] sm:$0xff]
    %v5007 = vld [vmem:[%s6 + $0xc4] sm:$0xff]
    %v5008 = vld [vmem:[%s6 + $0xcc] sm:$0xff]
    %v5009 = vld [vmem:[%s6 + $0xd4] sm:$0xf]
    %v5010 = vld [vmem:[%s6 + $0xd8] sm:$0xff]
    %v5011 = vld [vmem:[%s6 + $0xe0] sm:$0xff]
    %v5012 = vld [vmem:[%s6 + $0xe8] sm:$0xff]
    %v5013 = vld [vmem:[%s6 + $0xf0] sm:$0xff]
    %v5014 = vld [vmem:[%s6 + $0xf8] sm:$0xf]
    %v5015 = vld [vmem:[%s6 + $0xfc] sm:$0xff]
    %v5016 = vld [vmem:[%s6 + $0x104] sm:$0xff]
    %v5017 = vld [vmem:[%s6 + $0x10c] sm:$0xff]
    %v5018 = vld [vmem:[%s6 + $0x114] sm:$0xff]
    %v5019 = vld [vmem:[%s6 + $0x11c] sm:$0xf]
    %v5020 = vld [vmem:[%s7] sm:$0x1]
    %v5021 = vpack.c.bf16 %v4977, %v4976
    %v5022 = vpack.c.bf16 %v4979, %v4978
    %v5063 = vunpack.c.l.b16 %v4980
    %v5064 = vunpack.c.h.b16 %v4980
    %v5065 = vunpack.c.l.b16 %v4981
    %v5066 = vunpack.c.h.b16 %v4981
    %v5067 = vunpack.c.l.b16 %v4982
    %v5068 = vunpack.c.h.b16 %v4982
    %v5069 = vunpack.c.l.b16 %v4983
    %v5070 = vunpack.c.h.b16 %v4983
    %v5071 = vunpack.c.l.b16 %v4984
    %v5072 = vunpack.c.l.b16 %v4985
    %v5073 = vunpack.c.h.b16 %v4985
    %v5074 = vunpack.c.l.b16 %v4986
    %v5075 = vunpack.c.h.b16 %v4986
    %v5076 = vunpack.c.l.b16 %v4987
    %v5077 = vunpack.c.h.b16 %v4987
    %v5078 = vunpack.c.l.b16 %v4988
    %v5079 = vunpack.c.h.b16 %v4988
    %v5080 = vunpack.c.l.b16 %v4989
    %v5081 = vunpack.c.l.b16 %v4990
    %v5082 = vunpack.c.h.b16 %v4990
    %v5083 = vunpack.c.l.b16 %v4991
    %v5084 = vunpack.c.h.b16 %v4991
    %v5085 = vunpack.c.l.b16 %v4992
    %v5086 = vunpack.c.h.b16 %v4992
    %v5087 = vunpack.c.l.b16 %v4993
    %v5088 = vunpack.c.h.b16 %v4993
    %v5089 = vunpack.c.l.b16 %v4994
    %v5090 = vunpack.c.l.b16 %v4995
    %v5091 = vunpack.c.h.b16 %v4995
    %v5092 = vunpack.c.l.b16 %v4996
    %v5093 = vunpack.c.h.b16 %v4996
    %v5094 = vunpack.c.l.b16 %v4997
    %v5095 = vunpack.c.h.b16 %v4997
    %v5096 = vunpack.c.l.b16 %v4998
    %v5097 = vunpack.c.h.b16 %v4998
    %v5098 = vunpack.c.l.b16 %v4999
    %v5099 = vunpack.c.l.b16 %v5000
    %v5100 = vunpack.c.h.b16 %v5000
    %v5101 = vunpack.c.l.b16 %v5001
    %v5102 = vunpack.c.h.b16 %v5001
    %v5103 = vunpack.c.l.b16 %v5002
    %v5104 = vunpack.c.h.b16 %v5002
    %v5105 = vunpack.c.l.b16 %v5003
    %v5106 = vunpack.c.h.b16 %v5003
    %v5107 = vunpack.c.l.b16 %v5004
    %v5108 = vunpack.c.l.b16 %v5005
    %v5109 = vunpack.c.h.b16 %v5005
    %v5110 = vunpack.c.l.b16 %v5006
    %v5111 = vunpack.c.h.b16 %v5006
    %v5112 = vunpack.c.l.b16 %v5007
    %v5113 = vunpack.c.h.b16 %v5007
    %v5114 = vunpack.c.l.b16 %v5008
    %v5115 = vunpack.c.h.b16 %v5008
    %v5116 = vunpack.c.l.b16 %v5009
    %v5117 = vunpack.c.l.b16 %v5010
    %v5118 = vunpack.c.h.b16 %v5010
    %v5119 = vunpack.c.l.b16 %v5011
    %v5120 = vunpack.c.h.b16 %v5011
    %v5121 = vunpack.c.l.b16 %v5012
    %v5122 = vunpack.c.h.b16 %v5012
    %v5123 = vunpack.c.l.b16 %v5013
    %v5124 = vunpack.c.h.b16 %v5013
    %v5125 = vunpack.c.l.b16 %v5014
    %v5126 = vunpack.c.l.b16 %v5015
    %v5127 = vunpack.c.h.b16 %v5015
    %v5128 = vunpack.c.l.b16 %v5016
    %v5129 = vunpack.c.h.b16 %v5016
    %v5130 = vunpack.c.l.b16 %v5017
    %v5131 = vunpack.c.h.b16 %v5017
    %v5132 = vunpack.c.l.b16 %v5018
    %v5133 = vunpack.c.h.b16 %v5018
    %v5134 = vunpack.c.l.b16 %v5019
    %v5135 = vpack.c.b16 %v5072, %v5063
    %v5136 = vpack.c.b16 %v5073, %v5064
    %v5137 = vpack.c.b16 %v5074, %v5065
    %v5138 = vpack.c.b16 %v5075, %v5066
    %v5139 = vpack.c.b16 %v5076, %v5067
    %v5140 = vpack.c.b16 %v5077, %v5068
    %v5141 = vpack.c.b16 %v5078, %v5069
    %v5142 = vpack.c.b16 %v5079, %v5070
    %v5143 = vpack.c.b16 %v5080, %v5071
    %v5144 = vpack.c.b16 %v5090, %v5081
    %v5145 = vpack.c.b16 %v5091, %v5082
    %v5146 = vpack.c.b16 %v5092, %v5083
    %v5147 = vpack.c.b16 %v5093, %v5084
    %v5148 = vpack.c.b16 %v5094, %v5085
    %v5149 = vpack.c.b16 %v5095, %v5086
    %v5150 = vpack.c.b16 %v5096, %v5087
    %v5151 = vpack.c.b16 %v5097, %v5088
    %v5152 = vpack.c.b16 %v5098, %v5089
    %v5153 = vpack.c.b16 %v5108, %v5099
    %v5154 = vpack.c.b16 %v5109, %v5100
    %v5155 = vpack.c.b16 %v5110, %v5101
    %v5156 = vpack.c.b16 %v5111, %v5102
    %v5157 = vpack.c.b16 %v5112, %v5103
    %v5158 = vpack.c.b16 %v5113, %v5104
    %v5159 = vpack.c.b16 %v5114, %v5105
    %v5160 = vpack.c.b16 %v5115, %v5106
    %v5161 = vpack.c.b16 %v5116, %v5107
    %v5162 = vpack.c.b16 %v5126, %v5117
    %v5163 = vpack.c.b16 %v5127, %v5118
    %v5164 = vpack.c.b16 %v5128, %v5119
    %v5165 = vpack.c.b16 %v5129, %v5120
    %v5166 = vpack.c.b16 %v5130, %v5121
    %v5167 = vpack.c.b16 %v5131, %v5122
    %v5168 = vpack.c.b16 %v5132, %v5123
    %v5169 = vpack.c.b16 %v5133, %v5124
    %v5170 = vpack.c.b16 %v5134, %v5125
    %v5208 = vsel %vm1096, %v5021, 0
    %v5211 = vsel %vm1096, %v5022, 0
    %5213 = vmatprep.subr.bf16.mxu0 %v5136
    %5214 = vmatpush1.bf16.msra.mxu0 %v5135
    %5215 = vmatprep.subr.bf16.mxu0 %v5145
    %5216 = vmatpush1.bf16.msra.mxu0 %v5144
    %5217 = vmatprep.subr.bf16.mxu0 %v5154
    %5218 = vmatpush1.bf16.msra.mxu0 %v5153
    %5219 = vmatprep.subr.bf16.mxu0 %v5163
    %5220 = vmatpush1.bf16.msra.mxu0 %v5162
    %5221 = vmatprep.subr.bf16.mxu0 0
    %5222 = vmatpush1.bf16.msra.mxu0 0
    %5223 = vmatprep.subr.bf16.mxu0 0
    %5224 = vmatpush1.bf16.msra.mxu0 0
    %5225 = vmatprep.subr.bf16.mxu0 0
    %5226 = vmatpush1.bf16.msra.mxu0 0
    %5227 = vmatprep.subr.bf16.mxu0 0
    %5228 = vmatpush1.bf16.msra.mxu0 0
    %5229 = vmatprep.subr.bf16.mxu0 0
    %5230 = vmatpush1.bf16.msra.mxu0 0
    %5231 = vmatprep.subr.bf16.mxu0 0
    %5232 = vmatpush1.bf16.msra.mxu0 0
    %5233 = vmatprep.subr.bf16.mxu0 0
    %5234 = vmatpush1.bf16.msra.mxu0 0
    %5235 = vmatprep.subr.bf16.mxu0 0
    %5236 = vmatpush1.bf16.msra.mxu0 0
    %5237 = vmatprep.subr.bf16.mxu0 0
    %5238 = vmatpush1.bf16.msra.mxu0 0
    %5239 = vmatprep.subr.bf16.mxu0 0
    %5240 = vmatpush1.bf16.msra.mxu0 0
    %5241 = vmatprep.subr.bf16.mxu0 0
    %5242 = vmatpush1.bf16.msra.mxu0 0
    %5243 = vmatprep.subr.bf16.mxu0 0
    %5244 = vmatpush1.bf16.msra.mxu0 0
    %5245 = vmatprep.mubr.bf16.mxu0 0
    %5246 = vmatmul.mubr.bf16.gmra.mrb[0].mxu0 %v5208
    %v5247 = vpop.f32.mrb[0].mxu0
    %v5248 = vadd.f32 0.0, %v5247
    %v5249 = vpop.f32.mrb[0].mxu0
    %v5250 = vadd.f32 0.0, %v5249
    %v5251 = vpop.f32.mrb[0].mxu0
    %v5252 = vadd.f32 0.0, %v5251
    %v5253 = vpop.f32.mrb[0].mxu0
    %v5254 = vadd.f32 0.0, %v5253
    %5255 = vmatprep.mubr.bf16.mxu0 0
    %5256 = vmatmul.mubr.bf16.gmra.mrb[0].mxu0 %v5211
    %v5257 = vpop.f32.mrb[0].mxu0
    %v5258 = vadd.f32 0.0, %v5257
    %v5259 = vpop.f32.mrb[0].mxu0
    %v5260 = vadd.f32 0.0, %v5259
    %v5261 = vpop.f32.mrb[0].mxu0
    %v5262 = vadd.f32 0.0, %v5261
    %v5263 = vpop.f32.mrb[0].mxu0
    %v5264 = vadd.f32 0.0, %v5263
    %5265 = vdwg.mxu0
    %5266 = vmatprep.subr.bf16.mxu0 %v5138
    %5267 = vmatpush1.bf16.msra.mxu0 %v5137
    %5268 = vmatprep.subr.bf16.mxu0 %v5147
    %5269 = vmatpush1.bf16.msra.mxu0 %v5146
    %5270 = vmatprep.subr.bf16.mxu0 %v5156
    %5271 = vmatpush1.bf16.msra.mxu0 %v5155
    %5272 = vmatprep.subr.bf16.mxu0 %v5165
    %5273 = vmatpush1.bf16.msra.mxu0 %v5164
    %5274 = vmatprep.subr.bf16.mxu0 0
    %5275 = vmatpush1.bf16.msra.mxu0 0
    %5276 = vmatprep.subr.bf16.mxu0 0
    %5277 = vmatpush1.bf16.msra.mxu0 0
    %5278 = vmatprep.subr.bf16.mxu0 0
    %5279 = vmatpush1.bf16.msra.mxu0 0
    %5280 = vmatprep.subr.bf16.mxu0 0
    %5281 = vmatpush1.bf16.msra.mxu0 0
    %5282 = vmatprep.subr.bf16.mxu0 0
    %5283 = vmatpush1.bf16.msra.mxu0 0
    %5284 = vmatprep.subr.bf16.mxu0 0
    %5285 = vmatpush1.bf16.msra.mxu0 0
    %5286 = vmatprep.subr.bf16.mxu0 0
    %5287 = vmatpush1.bf16.msra.mxu0 0
    %5288 = vmatprep.subr.bf16.mxu0 0
    %5289 = vmatpush1.bf16.msra.mxu0 0
    %5290 = vmatprep.subr.bf16.mxu0 0
    %5291 = vmatpush1.bf16.msra.mxu0 0
    %5292 = vmatprep.subr.bf16.mxu0 0
    %5293 = vmatpush1.bf16.msra.mxu0 0
    %5294 = vmatprep.subr.bf16.mxu0 0
    %5295 = vmatpush1.bf16.msra.mxu0 0
    %5296 = vmatprep.subr.bf16.mxu0 0
    %5297 = vmatpush1.bf16.msra.mxu0 0
    %5298 = vmatprep.mubr.bf16.mxu0 0
    %5299 = vmatmul.mubr.bf16.gmra.mrb[0].mxu0 %v5208
    %v5300 = vpop.f32.mrb[0].mxu0
    %v5301 = vadd.f32 0.0, %v5300
    %v5302 = vpop.f32.mrb[0].mxu0
    %v5303 = vadd.f32 0.0, %v5302
    %v5304 = vpop.f32.mrb[0].mxu0
    %v5305 = vadd.f32 0.0, %v5304
    %v5306 = vpop.f32.mrb[0].mxu0
    %v5307 = vadd.f32 0.0, %v5306
    %5308 = vmatprep.mubr.bf16.mxu0 0
    %5309 = vmatmul.mubr.bf16.gmra.mrb[0].mxu0 %v5211
    %v5310 = vpop.f32.mrb[0].mxu0
    %v5311 = vadd.f32 0.0, %v5310
    %v5312 = vpop.f32.mrb[0].mxu0
    %v5313 = vadd.f32 0.0, %v5312
    %v5314 = vpop.f32.mrb[0].mxu0
    %v5315 = vadd.f32 0.0, %v5314
    %v5316 = vpop.f32.mrb[0].mxu0
    %v5317 = vadd.f32 0.0, %v5316
    %5318 = vdwg.mxu0
    %5319 = vmatprep.subr.bf16.mxu0 %v5140
    %5320 = vmatpush1.bf16.msra.mxu0 %v5139
    %5321 = vmatprep.subr.bf16.mxu0 %v5149
    %5322 = vmatpush1.bf16.msra.mxu0 %v5148
    %5323 = vmatprep.subr.bf16.mxu0 %v5158
    %5324 = vmatpush1.bf16.msra.mxu0 %v5157
    %5325 = vmatprep.subr.bf16.mxu0 %v5167
    %5326 = vmatpush1.bf16.msra.mxu0 %v5166
    %5327 = vmatprep.subr.bf16.mxu0 0
    %5328 = vmatpush1.bf16.msra.mxu0 0
    %5329 = vmatprep.subr.bf16.mxu0 0
    %5330 = vmatpush1.bf16.msra.mxu0 0
    %5331 = vmatprep.subr.bf16.mxu0 0
    %5332 = vmatpush1.bf16.msra.mxu0 0
    %5333 = vmatprep.subr.bf16.mxu0 0
    %5334 = vmatpush1.bf16.msra.mxu0 0
    %5335 = vmatprep.subr.bf16.mxu0 0
    %5336 = vmatpush1.bf16.msra.mxu0 0
    %5337 = vmatprep.subr.bf16.mxu0 0
    %5338 = vmatpush1.bf16.msra.mxu0 0
    %5339 = vmatprep.subr.bf16.mxu0 0
    %5340 = vmatpush1.bf16.msra.mxu0 0
    %5341 = vmatprep.subr.bf16.mxu0 0
    %5342 = vmatpush1.bf16.msra.mxu0 0
    %5343 = vmatprep.subr.bf16.mxu0 0
    %5344 = vmatpush1.bf16.msra.mxu0 0
    %5345 = vmatprep.subr.bf16.mxu0 0
    %5346 = vmatpush1.bf16.msra.mxu0 0
    %5347 = vmatprep.subr.bf16.mxu0 0
    %5348 = vmatpush1.bf16.msra.mxu0 0
    %5349 = vmatprep.subr.bf16.mxu0 0
    %5350 = vmatpush1.bf16.msra.mxu0 0
    %5351 = vmatprep.mubr.bf16.mxu0 0
    %5352 = vmatmul.mubr.bf16.gmra.mrb[0].mxu0 %v5208
    %v5353 = vpop.f32.mrb[0].mxu0
    %v5354 = vadd.f32 0.0, %v5353
    %v5355 = vpop.f32.mrb[0].mxu0
    %v5356 = vadd.f32 0.0, %v5355
    %v5357 = vpop.f32.mrb[0].mxu0
    %v5358 = vadd.f32 0.0, %v5357
    %v5359 = vpop.f32.mrb[0].mxu0
    %v5360 = vadd.f32 0.0, %v5359
    %5361 = vmatprep.mubr.bf16.mxu0 0
    %5362 = vmatmul.mubr.bf16.gmra.mrb[0].mxu0 %v5211
    %v5363 = vpop.f32.mrb[0].mxu0
    %v5364 = vadd.f32 0.0, %v5363
    %v5365 = vpop.f32.mrb[0].mxu0
    %v5366 = vadd.f32 0.0, %v5365
    %v5367 = vpop.f32.mrb[0].mxu0
    %v5368 = vadd.f32 0.0, %v5367
    %v5369 = vpop.f32.mrb[0].mxu0
    %v5370 = vadd.f32 0.0, %v5369
    %5371 = vdwg.mxu0
    %5372 = vmatprep.subr.bf16.mxu0 %v5142
    %5373 = vmatpush1.bf16.msra.mxu0 %v5141
    %5374 = vmatprep.subr.bf16.mxu0 %v5151
    %5375 = vmatpush1.bf16.msra.mxu0 %v5150
    %5376 = vmatprep.subr.bf16.mxu0 %v5160
    %5377 = vmatpush1.bf16.msra.mxu0 %v5159
    %5378 = vmatprep.subr.bf16.mxu0 %v5169
    %5379 = vmatpush1.bf16.msra.mxu0 %v5168
    %5380 = vmatprep.subr.bf16.mxu0 0
    %5381 = vmatpush1.bf16.msra.mxu0 0
    %5382 = vmatprep.subr.bf16.mxu0 0
    %5383 = vmatpush1.bf16.msra.mxu0 0
    %5384 = vmatprep.subr.bf16.mxu0 0
    %5385 = vmatpush1.bf16.msra.mxu0 0
    %5386 = vmatprep.subr.bf16.mxu0 0
    %5387 = vmatpush1.bf16.msra.mxu0 0
    %5388 = vmatprep.subr.bf16.mxu0 0
    %5389 = vmatpush1.bf16.msra.mxu0 0
    %5390 = vmatprep.subr.bf16.mxu0 0
    %5391 = vmatpush1.bf16.msra.mxu0 0
    %5392 = vmatprep.subr.bf16.mxu0 0
    %5393 = vmatpush1.bf16.msra.mxu0 0
    %5394 = vmatprep.subr.bf16.mxu0 0
    %5395 = vmatpush1.bf16.msra.mxu0 0
    %5396 = vmatprep.subr.bf16.mxu0 0
    %5397 = vmatpush1.bf16.msra.mxu0 0
    %5398 = vmatprep.subr.bf16.mxu0 0
    %5399 = vmatpush1.bf16.msra.mxu0 0
    %5400 = vmatprep.subr.bf16.mxu0 0
    %5401 = vmatpush1.bf16.msra.mxu0 0
    %5402 = vmatprep.subr.bf16.mxu0 0
    %5403 = vmatpush1.bf16.msra.mxu0 0
    %5404 = vmatprep.mubr.bf16.mxu0 0
    %5405 = vmatmul.mubr.bf16.gmra.mrb[0].mxu0 %v5208
    %v5406 = vpop.f32.mrb[0].mxu0
    %v5407 = vadd.f32 0.0, %v5406
    %v5408 = vpop.f32.mrb[0].mxu0
    %v5409 = vadd.f32 0.0, %v5408
    %v5410 = vpop.f32.mrb[0].mxu0
    %v5411 = vadd.f32 0.0, %v5410
    %v5412 = vpop.f32.mrb[0].mxu0
    %v5413 = vadd.f32 0.0, %v5412
    %5414 = vmatprep.mubr.bf16.mxu0 0
    %5415 = vmatmul.mubr.bf16.gmra.mrb[0].mxu0 %v5211
    %v5416 = vpop.f32.mrb[0].mxu0
    %v5417 = vadd.f32 0.0, %v5416
    %v5418 = vpop.f32.mrb[0].mxu0
    %v5419 = vadd.f32 0.0, %v5418
    %v5420 = vpop.f32.mrb[0].mxu0
    %v5421 = vadd.f32 0.0, %v5420
    %v5422 = vpop.f32.mrb[0].mxu0
    %v5423 = vadd.f32 0.0, %v5422
    %5424 = vdwg.mxu0
    %5425 = vmatprep.subr.bf16.mxu0 0
    %5426 = vmatpush1.bf16.msra.mxu0 %v5143
    %5427 = vmatprep.subr.bf16.mxu0 0
    %5428 = vmatpush1.bf16.msra.mxu0 %v5152
    %5429 = vmatprep.subr.bf16.mxu0 0
    %5430 = vmatpush1.bf16.msra.mxu0 %v5161
    %5431 = vmatprep.subr.bf16.mxu0 0
    %5432 = vmatpush1.bf16.msra.mxu0 %v5170
    %5433 = vmatprep.subr.bf16.mxu0 0
    %5434 = vmatpush1.bf16.msra.mxu0 0
    %5435 = vmatprep.subr.bf16.mxu0 0
    %5436 = vmatpush1.bf16.msra.mxu0 0
    %5437 = vmatprep.subr.bf16.mxu0 0
    %5438 = vmatpush1.bf16.msra.mxu0 0
    %5439 = vmatprep.subr.bf16.mxu0 0
    %5440 = vmatpush1.bf16.msra.mxu0 0
    %5441 = vmatprep.subr.bf16.mxu0 0
    %5442 = vmatpush1.bf16.msra.mxu0 0
    %5443 = vmatprep.subr.bf16.mxu0 0
    %5444 = vmatpush1.bf16.msra.mxu0 0
    %5445 = vmatprep.subr.bf16.mxu0 0
    %5446 = vmatpush1.bf16.msra.mxu0 0
    %5447 = vmatprep.subr.bf16.mxu0 0
    %5448 = vmatpush1.bf16.msra.mxu0 0
    %5449 = vmatprep.subr.bf16.mxu0 0
    %5450 = vmatpush1.bf16.msra.mxu0 0
    %5451 = vmatprep.subr.bf16.mxu0 0
    %5452 = vmatpush1.bf16.msra.mxu0 0
    %5453 = vmatprep.subr.bf16.mxu0 0
    %5454 = vmatpush1.bf16.msra.mxu0 0
    %5455 = vmatprep.subr.bf16.mxu0 0
    %5456 = vmatpush1.bf16.msra.mxu0 0
    %5457 = vmatprep.mubr.bf16.mxu0 0
    %5458 = vmatmul.mubr.bf16.gmra.mrb[0].mxu0 %v5208
    %v5459 = vpop.f32.mrb[0].mxu0
    %v5460 = vadd.f32 0.0, %v5459
    %v5461 = vpop.f32.mrb[0].mxu0
    %v5462 = vpop.f32.mrb[0].mxu0
    %v5463 = vadd.f32 0.0, %v5462
    %v5464 = vpop.f32.mrb[0].mxu0
    %5465 = vmatprep.mubr.bf16.mxu0 0
    %5466 = vmatmul.mubr.bf16.gmra.mrb[0].mxu0 %v5211
    %v5467 = vpop.f32.mrb[0].mxu0
    %v5468 = vadd.f32 0.0, %v5467
    %v5469 = vpop.f32.mrb[0].mxu0
    %v5470 = vpop.f32.mrb[0].mxu0
    %v5471 = vadd.f32 0.0, %v5470
    %v5472 = vpop.f32.mrb[0].mxu0
    %5473 = vdwg.mxu0
    %v5474 = vrot.slane %v5248, 3
    %v5475 = vrot.slane %v5252, 3
    %v5476 = vrot.slane %v5258, 3
    %v5477 = vrot.slane %v5262, 3
    %v5478 = vsel %vm555, %v5476, %v5477
    %v5479 = vsel %vm555, %v5475, %v5476
    %v5480 = vsel %vm555, %v5474, %v5475
    %v5481 = vsel %vm555, %v5477, %v5474
    %v5482 = vmul.f32 %v5481, %v567
    %v5483 = vmul.f32 %v5480, %v572
    %v5484 = vmul.f32 %v5479, %v577
    %v5485 = vmul.f32 %v5478, %v582
    %v5486 = vadd.f32 %v5354, %v5482
    %v5487 = vadd.f32 %v5358, %v5483
    %v5488 = vadd.f32 %v5364, %v5484
    %v5489 = vadd.f32 %v5368, %v5485
    %v5490 = vrot.slane %v5250, 4
    %v5491 = vrot.slane %v5254, 4
    %v5492 = vrot.slane %v5260, 4
    %v5493 = vrot.slane %v5264, 4
    %v5494 = vsel %vm612, %v5492, %v5493
    %v5495 = vsel %vm612, %v5491, %v5492
    %v5496 = vsel %vm612, %v5490, %v5491
    %v5497 = vsel %vm612, %v5493, %v5490
    %v5498 = vmul.f32 %v5497, %v625
    %v5499 = vmul.f32 %v5496, %v630
    %v5500 = vmul.f32 %v5495, %v635
    %v5501 = vmul.f32 %v5494, %v640
    %v5502 = vadd.f32 %v5486, %v5498
    %v5503 = vadd.f32 %v5487, %v5499
    %v5504 = vadd.f32 %v5488, %v5500
    %v5505 = vadd.f32 %v5489, %v5501
    %v5506 = vrot.slane %v5301, 5
    %v5507 = vrot.slane %v5305, 5
    %v5508 = vrot.slane %v5311, 5
    %v5509 = vrot.slane %v5315, 5
    %v5510 = vsel %vm654, %v5508, %v5509
    %v5511 = vsel %vm654, %v5507, %v5508
    %v5512 = vsel %vm654, %v5506, %v5507
    %v5513 = vsel %vm654, %v5509, %v5506
    %v5514 = vmul.f32 %v5513, %v667
    %v5515 = vmul.f32 %v5512, %v672
    %v5516 = vmul.f32 %v5511, %v677
    %v5517 = vmul.f32 %v5510, %v682
    %v5518 = vadd.f32 %v5502, %v5514
    %v5519 = vadd.f32 %v5503, %v5515
    %v5520 = vadd.f32 %v5504, %v5516
    %v5521 = vadd.f32 %v5505, %v5517
    %v5522 = vrot.slane %v5303, 7
    %v5523 = vrot.slane %v5307, 7
    %v5524 = vrot.slane %v5313, 7
    %v5525 = vrot.slane %v5317, 7
    %v5526 = vsel %vm712, %v5524, %v5525
    %v5527 = vsel %vm712, %v5523, %v5524
    %v5528 = vsel %vm712, %v5522, %v5523
    %v5529 = vsel %vm712, %v5525, %v5522
    %v5530 = vmul.f32 %v5529, %v725
    %v5531 = vmul.f32 %v5528, %v730
    %v5532 = vmul.f32 %v5527, %v735
    %v5533 = vmul.f32 %v5526, %v740
    %v5534 = vadd.f32 %v5518, %v5530
    %v5535 = vadd.f32 %v5519, %v5531
    %v5536 = vadd.f32 %v5520, %v5532
    %v5537 = vadd.f32 %v5521, %v5533
    %v5538 = vrot.slane %v5356, 1
    %v5539 = vrot.slane %v5360, 1
    %v5540 = vrot.slane %v5366, 1
    %v5541 = vrot.slane %v5370, 1
    %v5542 = vsel %vm770, %v5540, %v5541
    %v5543 = vsel %vm770, %v5539, %v5540
    %v5544 = vsel %vm770, %v5538, %v5539
    %v5545 = vsel %vm770, %v5541, %v5538
    %v5546 = vmul.f32 %v5544, %v783
    %v5547 = vmul.f32 %v5543, %v788
    %v5548 = vmul.f32 %v5542, %v793
    %v5549 = vmul.f32 %v5545, %v798
    %v5550 = vadd.f32 %v5534, %v5546
    %v5551 = vadd.f32 %v5535, %v5547
    %v5552 = vadd.f32 %v5536, %v5548
    %v5553 = vadd.f32 %v5537, %v5549
    %v5554 = vrot.slane %v5407, 3
    %v5555 = vrot.slane %v5411, 3
    %v5556 = vrot.slane %v5417, 3
    %v5557 = vrot.slane %v5421, 3
    %v5558 = vsel %vm555, %v5556, %v5557
    %v5559 = vsel %vm555, %v5555, %v5556
    %v5560 = vsel %vm555, %v5554, %v5555
    %v5561 = vsel %vm555, %v5557, %v5554
    %v5562 = vmul.f32 %v5560, %v824
    %v5563 = vmul.f32 %v5559, %v829
    %v5564 = vmul.f32 %v5558, %v834
    %v5565 = vmul.f32 %v5561, %v839
    %v5566 = vadd.f32 %v5550, %v5562
    %v5567 = vadd.f32 %v5551, %v5563
    %v5568 = vadd.f32 %v5552, %v5564
    %v5569 = vadd.f32 %v5553, %v5565
    %v5570 = vrot.slane %v5409, 4
    %v5571 = vrot.slane %v5413, 4
    %v5572 = vrot.slane %v5419, 4
    %v5573 = vrot.slane %v5423, 4
    %v5574 = vsel %vm612, %v5572, %v5573
    %v5575 = vsel %vm612, %v5571, %v5572
    %v5576 = vsel %vm612, %v5570, %v5571
    %v5577 = vsel %vm612, %v5573, %v5570
    %v5578 = vmul.f32 %v5576, %v881
    %v5579 = vmul.f32 %v5575, %v886
    %v5580 = vmul.f32 %v5574, %v891
    %v5581 = vmul.f32 %v5577, %v896
    %v5582 = vadd.f32 %v5566, %v5578
    %v5583 = vadd.f32 %v5567, %v5579
    %v5584 = vadd.f32 %v5568, %v5580
    %v5585 = vadd.f32 %v5569, %v5581
    %v5586 = vrot.slane %v5460, 5
    %v5587 = vrot.slane %v5463, 5
    %v5588 = vrot.slane %v5468, 5
    %v5589 = vrot.slane %v5471, 5
    %v5590 = vsel %vm654, %v5588, %v5589
    %v5591 = vsel %vm654, %v5587, %v5588
    %v5592 = vsel %vm654, %v5586, %v5587
    %v5593 = vsel %vm654, %v5589, %v5586
    %v5594 = vmul.f32 %v5592, %v922
    %v5595 = vmul.f32 %v5591, %v927
    %v5596 = vmul.f32 %v5590, %v932
    %v5597 = vmul.f32 %v5593, %v937
    %v5598 = vadd.f32 %v5582, %v5594
    %v5599 = vadd.f32 %v5583, %v5595
    %v5600 = vadd.f32 %v5584, %v5596
    %v5601 = vadd.f32 %v5585, %v5597
    %v5603 = vlaneseq
    %v5604 = vshrl.u32 %v5603, 7
    %v5605 = vsub.s32 0, %v5604
    %v5606 = vrot.slane %v5020, %v5605
    %v5608 = vadd.f32 %v5598, %v5606
    %v5609 = vadd.f32 %v5599, %v5606
    %v5610 = vadd.f32 %v5600, %v5606
    %v5611 = vadd.f32 %v5601, %v5606
    %v5612 = vmul.f32 %v5608, 0.1
    %v5613 = vmul.f32 %v5609, 0.1
    %v5614 = vmul.f32 %v5610, 0.1
    %v5615 = vmul.f32 %v5611, 0.1
    %v5616 = vmax.f32 %v5608, %v5612
    %v5617 = vmax.f32 %v5609, %v5613
    %v5618 = vmax.f32 %v5610, %v5614
    %v5619 = vmax.f32 %v5611, %v5615
    %v5620 = vld [vmem:[%s8] sm:$0xff]
    %v5621 = vld [vmem:[%s8 + $0x8] sm:$0xff]
    %v5622 = vld [vmem:[%s8 + $0x10] sm:$0xff]
    %v5623 = vld [vmem:[%s8 + $0x18] sm:$0xff]
    %v5624 = vld [vmem:[%s8 + $0x20] sm:$0xf]
    %v5625 = vld [vmem:[%s8 + $0x24] sm:$0xff]
    %v5626 = vld [vmem:[%s8 + $0x2c] sm:$0xff]
    %v5627 = vld [vmem:[%s8 + $0x34] sm:$0xff]
    %v5628 = vld [vmem:[%s8 + $0x3c] sm:$0xff]
    %v5629 = vld [vmem:[%s8 + $0x44] sm:$0xf]
    %v5630 = vld [vmem:[%s8 + $0x48] sm:$0xff]
    %v5631 = vld [vmem:[%s8 + $0x50] sm:$0xff]
    %v5632 = vld [vmem:[%s8 + $0x58] sm:$0xff]
    %v5633 = vld [vmem:[%s8 + $0x60] sm:$0xff]
    %v5634 = vld [vmem:[%s8 + $0x68] sm:$0xf]
    %v5635 = vld [vmem:[%s8 + $0x6c] sm:$0xff]
    %v5636 = vld [vmem:[%s8 + $0x74] sm:$0xff]
    %v5637 = vld [vmem:[%s8 + $0x7c] sm:$0xff]
    %v5638 = vld [vmem:[%s8 + $0x84] sm:$0xff]
    %v5639 = vld [vmem:[%s8 + $0x8c] sm:$0xf]
    %v5640 = vld [vmem:[%s8 + $0x90] sm:$0xff]
    %v5641 = vld [vmem:[%s8 + $0x98] sm:$0xff]
    %v5642 = vld [vmem:[%s8 + $0xa0] sm:$0xff]
    %v5643 = vld [vmem:[%s8 + $0xa8] sm:$0xff]
    %v5644 = vld [vmem:[%s8 + $0xb0] sm:$0xf]
    %v5645 = vld [vmem:[%s8 + $0xb4] sm:$0xff]
    %v5646 = vld [vmem:[%s8 + $0xbc] sm:$0xff]
    %v5647 = vld [vmem:[%s8 + $0xc4] sm:$0xff]
    %v5648 = vld [vmem:[%s8 + $0xcc] sm:$0xff]
    %v5649 = vld [vmem:[%s8 + $0xd4] sm:$0xf]
    %v5650 = vld [vmem:[%s8 + $0xd8] sm:$0xff]
    %v5651 = vld [vmem:[%s8 + $0xe0] sm:$0xff]
    %v5652 = vld [vmem:[%s8 + $0xe8] sm:$0xff]
    %v5653 = vld [vmem:[%s8 + $0xf0] sm:$0xff]
    %v5654 = vld [vmem:[%s8 + $0xf8] sm:$0xf]
    %v5655 = vld [vmem:[%s8 + $0xfc] sm:$0xff]
    %v5656 = vld [vmem:[%s8 + $0x104] sm:$0xff]
    %v5657 = vld [vmem:[%s8 + $0x10c] sm:$0xff]
    %v5658 = vld [vmem:[%s8 + $0x114] sm:$0xff]
    %v5659 = vld [vmem:[%s8 + $0x11c] sm:$0xf]
    %v5660 = vld [vmem:[%s8 + $0x120] sm:$0xff]
    %v5661 = vld [vmem:[%s8 + $0x128] sm:$0xff]
    %v5662 = vld [vmem:[%s8 + $0x130] sm:$0xff]
    %v5663 = vld [vmem:[%s8 + $0x138] sm:$0xff]
    %v5664 = vld [vmem:[%s8 + $0x140] sm:$0xf]
    %v5665 = vld [vmem:[%s8 + $0x144] sm:$0xff]
    %v5666 = vld [vmem:[%s8 + $0x14c] sm:$0xff]
    %v5667 = vld [vmem:[%s8 + $0x154] sm:$0xff]
    %v5668 = vld [vmem:[%s8 + $0x15c] sm:$0xff]
    %v5669 = vld [vmem:[%s8 + $0x164] sm:$0xf]
    %v5670 = vld [vmem:[%s8 + $0x168] sm:$0xff]
    %v5671 = vld [vmem:[%s8 + $0x170] sm:$0xff]
    %v5672 = vld [vmem:[%s8 + $0x178] sm:$0xff]
    %v5673 = vld [vmem:[%s8 + $0x180] sm:$0xff]
    %v5674 = vld [vmem:[%s8 + $0x188] sm:$0xf]
    %v5675 = vld [vmem:[%s8 + $0x18c] sm:$0xff]
    %v5676 = vld [vmem:[%s8 + $0x194] sm:$0xff]
    %v5677 = vld [vmem:[%s8 + $0x19c] sm:$0xff]
    %v5678 = vld [vmem:[%s8 + $0x1a4] sm:$0xff]
    %v5679 = vld [vmem:[%s8 + $0x1ac] sm:$0xf]
    %v5680 = vld [vmem:[%s8 + $0x1b0] sm:$0xff]
    %v5681 = vld [vmem:[%s8 + $0x1b8] sm:$0xff]
    %v5682 = vld [vmem:[%s8 + $0x1c0] sm:$0xff]
    %v5683 = vld [vmem:[%s8 + $0x1c8] sm:$0xff]
    %v5684 = vld [vmem:[%s8 + $0x1d0] sm:$0xf]
    %v5685 = vld [vmem:[%s8 + $0x1d4] sm:$0xff]
    %v5686 = vld [vmem:[%s8 + $0x1dc] sm:$0xff]
    %v5687 = vld [vmem:[%s8 + $0x1e4] sm:$0xff]
    %v5688 = vld [vmem:[%s8 + $0x1ec] sm:$0xff]
    %v5689 = vld [vmem:[%s8 + $0x1f4] sm:$0xf]
    %v5690 = vld [vmem:[%s8 + $0x1f8] sm:$0xff]
    %v5691 = vld [vmem:[%s8 + $0x200] sm:$0xff]
    %v5692 = vld [vmem:[%s8 + $0x208] sm:$0xff]
    %v5693 = vld [vmem:[%s8 + $0x210] sm:$0xff]
    %v5694 = vld [vmem:[%s8 + $0x218] sm:$0xf]
    %v5695 = vld [vmem:[%s8 + $0x21c] sm:$0xff]
    %v5696 = vld [vmem:[%s8 + $0x224] sm:$0xff]
    %v5697 = vld [vmem:[%s8 + $0x22c] sm:$0xff]
    %v5698 = vld [vmem:[%s8 + $0x234] sm:$0xff]
    %v5699 = vld [vmem:[%s8 + $0x23c] sm:$0xf]
    %v5700 = vld [vmem:[%s9] sm:$0x1]
    %v5701 = vpack.c.bf16 %v5617, %v5616
    %v5702 = vpack.c.bf16 %v5619, %v5618
    %v5783 = vunpack.c.l.b16 %v5620
    %v5784 = vunpack.c.h.b16 %v5620
    %v5785 = vunpack.c.l.b16 %v5621
    %v5786 = vunpack.c.h.b16 %v5621
    %v5787 = vunpack.c.l.b16 %v5622
    %v5788 = vunpack.c.h.b16 %v5622
    %v5789 = vunpack.c.l.b16 %v5623
    %v5790 = vunpack.c.h.b16 %v5623
    %v5791 = vunpack.c.l.b16 %v5624
    %v5792 = vunpack.c.l.b16 %v5625
    %v5793 = vunpack.c.h.b16 %v5625
    %v5794 = vunpack.c.l.b16 %v5626
    %v5795 = vunpack.c.h.b16 %v5626
    %v5796 = vunpack.c.l.b16 %v5627
    %v5797 = vunpack.c.h.b16 %v5627
    %v5798 = vunpack.c.l.b16 %v5628
    %v5799 = vunpack.c.h.b16 %v5628
    %v5800 = vunpack.c.l.b16 %v5629
    %v5801 = vunpack.c.l.b16 %v5630
    %v5802 = vunpack.c.h.b16 %v5630
    %v5803 = vunpack.c.l.b16 %v5631
    %v5804 = vunpack.c.h.b16 %v5631
    %v5805 = vunpack.c.l.b16 %v5632
    %v5806 = vunpack.c.h.b16 %v5632
    %v5807 = vunpack.c.l.b16 %v5633
    %v5808 = vunpack.c.h.b16 %v5633
    %v5809 = vunpack.c.l.b16 %v5634
    %v5810 = vunpack.c.l.b16 %v5635
    %v5811 = vunpack.c.h.b16 %v5635
    %v5812 = vunpack.c.l.b16 %v5636
    %v5813 = vunpack.c.h.b16 %v5636
    %v5814 = vunpack.c.l.b16 %v5637
    %v5815 = vunpack.c.h.b16 %v5637
    %v5816 = vunpack.c.l.b16 %v5638
    %v5817 = vunpack.c.h.b16 %v5638
    %v5818 = vunpack.c.l.b16 %v5639
    %v5819 = vunpack.c.l.b16 %v5640
    %v5820 = vunpack.c.h.b16 %v5640
    %v5821 = vunpack.c.l.b16 %v5641
    %v5822 = vunpack.c.h.b16 %v5641
    %v5823 = vunpack.c.l.b16 %v5642
    %v5824 = vunpack.c.h.b16 %v5642
    %v5825 = vunpack.c.l.b16 %v5643
    %v5826 = vunpack.c.h.b16 %v5643
    %v5827 = vunpack.c.l.b16 %v5644
    %v5828 = vunpack.c.l.b16 %v5645
    %v5829 = vunpack.c.h.b16 %v5645
    %v5830 = vunpack.c.l.b16 %v5646
    %v5831 = vunpack.c.h.b16 %v5646
    %v5832 = vunpack.c.l.b16 %v5647
    %v5833 = vunpack.c.h.b16 %v5647
    %v5834 = vunpack.c.l.b16 %v5648
    %v5835 = vunpack.c.h.b16 %v5648
    %v5836 = vunpack.c.l.b16 %v5649
    %v5837 = vunpack.c.l.b16 %v5650
    %v5838 = vunpack.c.h.b16 %v5650
    %v5839 = vunpack.c.l.b16 %v5651
    %v5840 = vunpack.c.h.b16 %v5651
    %v5841 = vunpack.c.l.b16 %v5652
    %v5842 = vunpack.c.h.b16 %v5652
    %v5843 = vunpack.c.l.b16 %v5653
    %v5844 = vunpack.c.h.b16 %v5653
    %v5845 = vunpack.c.l.b16 %v5654
    %v5846 = vunpack.c.l.b16 %v5655
    %v5847 = vunpack.c.h.b16 %v5655
    %v5848 = vunpack.c.l.b16 %v5656
    %v5849 = vunpack.c.h.b16 %v5656
    %v5850 = vunpack.c.l.b16 %v5657
    %v5851 = vunpack.c.h.b16 %v5657
    %v5852 = vunpack.c.l.b16 %v5658
    %v5853 = vunpack.c.h.b16 %v5658
    %v5854 = vunpack.c.l.b16 %v5659
    %v5855 = vunpack.c.l.b16 %v5660
    %v5856 = vunpack.c.h.b16 %v5660
    %v5857 = vunpack.c.l.b16 %v5661
    %v5858 = vunpack.c.h.b16 %v5661
    %v5859 = vunpack.c.l.b16 %v5662
    %v5860 = vunpack.c.h.b16 %v5662
    %v5861 = vunpack.c.l.b16 %v5663
    %v5862 = vunpack.c.h.b16 %v5663
    %v5863 = vunpack.c.l.b16 %v5664
    %v5864 = vunpack.c.l.b16 %v5665
    %v5865 = vunpack.c.h.b16 %v5665
    %v5866 = vunpack.c.l.b16 %v5666
    %v5867 = vunpack.c.h.b16 %v5666
    %v5868 = vunpack.c.l.b16 %v5667
    %v5869 = vunpack.c.h.b16 %v5667
    %v5870 = vunpack.c.l.b16 %v5668
    %v5871 = vunpack.c.h.b16 %v5668
    %v5872 = vunpack.c.l.b16 %v5669
    %v5873 = vunpack.c.l.b16 %v5670
    %v5874 = vunpack.c.h.b16 %v5670
    %v5875 = vunpack.c.l.b16 %v5671
    %v5876 = vunpack.c.h.b16 %v5671
    %v5877 = vunpack.c.l.b16 %v5672
    %v5878 = vunpack.c.h.b16 %v5672
    %v5879 = vunpack.c.l.b16 %v5673
    %v5880 = vunpack.c.h.b16 %v5673
    %v5881 = vunpack.c.l.b16 %v5674
    %v5882 = vunpack.c.l.b16 %v5675
    %v5883 = vunpack.c.h.b16 %v5675
    %v5884 = vunpack.c.l.b16 %v5676
    %v5885 = vunpack.c.h.b16 %v5676
    %v5886 = vunpack.c.l.b16 %v5677
    %v5887 = vunpack.c.h.b16 %v5677
    %v5888 = vunpack.c.l.b16 %v5678
    %v5889 = vunpack.c.h.b16 %v5678
    %v5890 = vunpack.c.l.b16 %v5679
    %v5891 = vunpack.c.l.b16 %v5680
    %v5892 = vunpack.c.h.b16 %v5680
    %v5893 = vunpack.c.l.b16 %v5681
    %v5894 = vunpack.c.h.b16 %v5681
    %v5895 = vunpack.c.l.b16 %v5682
    %v5896 = vunpack.c.h.b16 %v5682
    %v5897 = vunpack.c.l.b16 %v5683
    %v5898 = vunpack.c.h.b16 %v5683
    %v5899 = vunpack.c.l.b16 %v5684
    %v5900 = vunpack.c.l.b16 %v5685
    %v5901 = vunpack.c.h.b16 %v5685
    %v5902 = vunpack.c.l.b16 %v5686
    %v5903 = vunpack.c.h.b16 %v5686
    %v5904 = vunpack.c.l.b16 %v5687
    %v5905 = vunpack.c.h.b16 %v5687
    %v5906 = vunpack.c.l.b16 %v5688
    %v5907 = vunpack.c.h.b16 %v5688
    %v5908 = vunpack.c.l.b16 %v5689
    %v5909 = vunpack.c.l.b16 %v5690
    %v5910 = vunpack.c.h.b16 %v5690
    %v5911 = vunpack.c.l.b16 %v5691
    %v5912 = vunpack.c.h.b16 %v5691
    %v5913 = vunpack.c.l.b16 %v5692
    %v5914 = vunpack.c.h.b16 %v5692
    %v5915 = vunpack.c.l.b16 %v5693
    %v5916 = vunpack.c.h.b16 %v5693
    %v5917 = vunpack.c.l.b16 %v5694
    %v5918 = vunpack.c.l.b16 %v5695
    %v5919 = vunpack.c.h.b16 %v5695
    %v5920 = vunpack.c.l.b16 %v5696
    %v5921 = vunpack.c.h.b16 %v5696
    %v5922 = vunpack.c.l.b16 %v5697
    %v5923 = vunpack.c.h.b16 %v5697
    %v5924 = vunpack.c.l.b16 %v5698
    %v5925 = vunpack.c.h.b16 %v5698
    %v5926 = vunpack.c.l.b16 %v5699
    %v5927 = vpack.c.b16 %v5792, %v5783
    %v5928 = vpack.c.b16 %v5793, %v5784
    %v5929 = vpack.c.b16 %v5794, %v5785
    %v5930 = vpack.c.b16 %v5795, %v5786
    %v5931 = vpack.c.b16 %v5796, %v5787
    %v5932 = vpack.c.b16 %v5797, %v5788
    %v5933 = vpack.c.b16 %v5798, %v5789
    %v5934 = vpack.c.b16 %v5799, %v5790
    %v5935 = vpack.c.b16 %v5800, %v5791
    %v5936 = vpack.c.b16 %v5810, %v5801
    %v5937 = vpack.c.b16 %v5811, %v5802
    %v5938 = vpack.c.b16 %v5812, %v5803
    %v5939 = vpack.c.b16 %v5813, %v5804
    %v5940 = vpack.c.b16 %v5814, %v5805
    %v5941 = vpack.c.b16 %v5815, %v5806
    %v5942 = vpack.c.b16 %v5816, %v5807
    %v5943 = vpack.c.b16 %v5817, %v5808
    %v5944 = vpack.c.b16 %v5818, %v5809
    %v5945 = vpack.c.b16 %v5828, %v5819
    %v5946 = vpack.c.b16 %v5829, %v5820
    %v5947 = vpack.c.b16 %v5830, %v5821
    %v5948 = vpack.c.b16 %v5831, %v5822
    %v5949 = vpack.c.b16 %v5832, %v5823
    %v5950 = vpack.c.b16 %v5833, %v5824
    %v5951 = vpack.c.b16 %v5834, %v5825
    %v5952 = vpack.c.b16 %v5835, %v5826
    %v5953 = vpack.c.b16 %v5836, %v5827
    %v5954 = vpack.c.b16 %v5846, %v5837
    %v5955 = vpack.c.b16 %v5847, %v5838
    %v5956 = vpack.c.b16 %v5848, %v5839
    %v5957 = vpack.c.b16 %v5849, %v5840
    %v5958 = vpack.c.b16 %v5850, %v5841
    %v5959 = vpack.c.b16 %v5851, %v5842
    %v5960 = vpack.c.b16 %v5852, %v5843
    %v5961 = vpack.c.b16 %v5853, %v5844
    %v5962 = vpack.c.b16 %v5854, %v5845
    %v5963 = vpack.c.b16 %v5864, %v5855
    %v5964 = vpack.c.b16 %v5865, %v5856
    %v5965 = vpack.c.b16 %v5866, %v5857
    %v5966 = vpack.c.b16 %v5867, %v5858
    %v5967 = vpack.c.b16 %v5868, %v5859
    %v5968 = vpack.c.b16 %v5869, %v5860
    %v5969 = vpack.c.b16 %v5870, %v5861
    %v5970 = vpack.c.b16 %v5871, %v5862
    %v5971 = vpack.c.b16 %v5872, %v5863
    %v5972 = vpack.c.b16 %v5882, %v5873
    %v5973 = vpack.c.b16 %v5883, %v5874
    %v5974 = vpack.c.b16 %v5884, %v5875
    %v5975 = vpack.c.b16 %v5885, %v5876
    %v5976 = vpack.c.b16 %v5886, %v5877
    %v5977 = vpack.c.b16 %v5887, %v5878
    %v5978 = vpack.c.b16 %v5888, %v5879
    %v5979 = vpack.c.b16 %v5889, %v5880
    %v5980 = vpack.c.b16 %v5890, %v5881
    %v5981 = vpack.c.b16 %v5900, %v5891
    %v5982 = vpack.c.b16 %v5901, %v5892
    %v5983 = vpack.c.b16 %v5902, %v5893
    %v5984 = vpack.c.b16 %v5903, %v5894
    %v5985 = vpack.c.b16 %v5904, %v5895
    %v5986 = vpack.c.b16 %v5905, %v5896
    %v5987 = vpack.c.b16 %v5906, %v5897
    %v5988 = vpack.c.b16 %v5907, %v5898
    %v5989 = vpack.c.b16 %v5908, %v5899
    %v5990 = vpack.c.b16 %v5918, %v5909
    %v5991 = vpack.c.b16 %v5919, %v5910
    %v5992 = vpack.c.b16 %v5920, %v5911
    %v5993 = vpack.c.b16 %v5921, %v5912
    %v5994 = vpack.c.b16 %v5922, %v5913
    %v5995 = vpack.c.b16 %v5923, %v5914
    %v5996 = vpack.c.b16 %v5924, %v5915
    %v5997 = vpack.c.b16 %v5925, %v5916
    %v5998 = vpack.c.b16 %v5926, %v5917
    %6071 = vmatprep.subr.bf16.mxu0 %v5928
    %6072 = vmatpush1.bf16.msra.mxu0 %v5927
    %6073 = vmatprep.subr.bf16.mxu0 %v5937
    %6074 = vmatpush1.bf16.msra.mxu0 %v5936
    %6075 = vmatprep.subr.bf16.mxu0 %v5946
    %6076 = vmatpush1.bf16.msra.mxu0 %v5945
    %6077 = vmatprep.subr.bf16.mxu0 %v5955
    %6078 = vmatpush1.bf16.msra.mxu0 %v5954
    %6079 = vmatprep.subr.bf16.mxu0 %v5964
    %6080 = vmatpush1.bf16.msra.mxu0 %v5963
    %6081 = vmatprep.subr.bf16.mxu0 %v5973
    %6082 = vmatpush1.bf16.msra.mxu0 %v5972
    %6083 = vmatprep.subr.bf16.mxu0 %v5982
    %6084 = vmatpush1.bf16.msra.mxu0 %v5981
    %6085 = vmatprep.subr.bf16.mxu0 %v5991
    %6086 = vmatpush1.bf16.msra.mxu0 %v5990
    %6087 = vmatprep.subr.bf16.mxu0 0
    %6088 = vmatpush1.bf16.msra.mxu0 0
    %6089 = vmatprep.subr.bf16.mxu0 0
    %6090 = vmatpush1.bf16.msra.mxu0 0
    %6091 = vmatprep.subr.bf16.mxu0 0
    %6092 = vmatpush1.bf16.msra.mxu0 0
    %6093 = vmatprep.subr.bf16.mxu0 0
    %6094 = vmatpush1.bf16.msra.mxu0 0
    %6095 = vmatprep.subr.bf16.mxu0 0
    %6096 = vmatpush1.bf16.msra.mxu0 0
    %6097 = vmatprep.subr.bf16.mxu0 0
    %6098 = vmatpush1.bf16.msra.mxu0 0
    %6099 = vmatprep.subr.bf16.mxu0 0
    %6100 = vmatpush1.bf16.msra.mxu0 0
    %6101 = vmatprep.subr.bf16.mxu0 0
    %6102 = vmatpush1.bf16.msra.mxu0 0
    %6103 = vmatprep.mubr.bf16.mxu0 0
    %6104 = vmatmul.mubr.bf16.gmra.mrb[0].mxu0 %v5701
    %v6105 = vpop.f32.mrb[0].mxu0
    %v6106 = vadd.f32 0.0, %v6105
    %v6107 = vpop.f32.mrb[0].mxu0
    %v6108 = vadd.f32 0.0, %v6107
    %v6109 = vpop.f32.mrb[0].mxu0
    %v6110 = vadd.f32 0.0, %v6109
    %v6111 = vpop.f32.mrb[0].mxu0
    %v6112 = vadd.f32 0.0, %v6111
    %6113 = vmatprep.mubr.bf16.mxu0 0
    %6114 = vmatmul.mubr.bf16.gmra.mrb[0].mxu0 %v5702
    %v6115 = vpop.f32.mrb[0].mxu0
    %v6116 = vadd.f32 0.0, %v6115
    %v6117 = vpop.f32.mrb[0].mxu0
    %v6118 = vadd.f32 0.0, %v6117
    %v6119 = vpop.f32.mrb[0].mxu0
    %v6120 = vadd.f32 0.0, %v6119
    %v6121 = vpop.f32.mrb[0].mxu0
    %v6122 = vadd.f32 0.0, %v6121
    %6123 = vdwg.mxu0
    %6124 = vmatprep.subr.bf16.mxu0 %v5930
    %6125 = vmatpush1.bf16.msra.mxu0 %v5929
    %6126 = vmatprep.subr.bf16.mxu0 %v5939
    %6127 = vmatpush1.bf16.msra.mxu0 %v5938
    %6128 = vmatprep.subr.bf16.mxu0 %v5948
    %6129 = vmatpush1.bf16.msra.mxu0 %v5947
    %6130 = vmatprep.subr.bf16.mxu0 %v5957
    %6131 = vmatpush1.bf16.msra.mxu0 %v5956
    %6132 = vmatprep.subr.bf16.mxu0 %v5966
    %6133 = vmatpush1.bf16.msra.mxu0 %v5965
    %6134 = vmatprep.subr.bf16.mxu0 %v5975
    %6135 = vmatpush1.bf16.msra.mxu0 %v5974
    %6136 = vmatprep.subr.bf16.mxu0 %v5984
    %6137 = vmatpush1.bf16.msra.mxu0 %v5983
    %6138 = vmatprep.subr.bf16.mxu0 %v5993
    %6139 = vmatpush1.bf16.msra.mxu0 %v5992
    %6140 = vmatprep.subr.bf16.mxu0 0
    %6141 = vmatpush1.bf16.msra.mxu0 0
    %6142 = vmatprep.subr.bf16.mxu0 0
    %6143 = vmatpush1.bf16.msra.mxu0 0
    %6144 = vmatprep.subr.bf16.mxu0 0
    %6145 = vmatpush1.bf16.msra.mxu0 0
    %6146 = vmatprep.subr.bf16.mxu0 0
    %6147 = vmatpush1.bf16.msra.mxu0 0
    %6148 = vmatprep.subr.bf16.mxu0 0
    %6149 = vmatpush1.bf16.msra.mxu0 0
    %6150 = vmatprep.subr.bf16.mxu0 0
    %6151 = vmatpush1.bf16.msra.mxu0 0
    %6152 = vmatprep.subr.bf16.mxu0 0
    %6153 = vmatpush1.bf16.msra.mxu0 0
    %6154 = vmatprep.subr.bf16.mxu0 0
    %6155 = vmatpush1.bf16.msra.mxu0 0
    %6156 = vmatprep.mubr.bf16.mxu0 0
    %6157 = vmatmul.mubr.bf16.gmra.mrb[0].mxu0 %v5701
    %v6158 = vpop.f32.mrb[0].mxu0
    %v6159 = vadd.f32 0.0, %v6158
    %v6160 = vpop.f32.mrb[0].mxu0
    %v6161 = vadd.f32 0.0, %v6160
    %v6162 = vpop.f32.mrb[0].mxu0
    %v6163 = vadd.f32 0.0, %v6162
    %v6164 = vpop.f32.mrb[0].mxu0
    %v6165 = vadd.f32 0.0, %v6164
    %6166 = vmatprep.mubr.bf16.mxu0 0
    %6167 = vmatmul.mubr.bf16.gmra.mrb[0].mxu0 %v5702
    %v6168 = vpop.f32.mrb[0].mxu0
    %v6169 = vadd.f32 0.0, %v6168
    %v6170 = vpop.f32.mrb[0].mxu0
    %v6171 = vadd.f32 0.0, %v6170
    %v6172 = vpop.f32.mrb[0].mxu0
    %v6173 = vadd.f32 0.0, %v6172
    %v6174 = vpop.f32.mrb[0].mxu0
    %v6175 = vadd.f32 0.0, %v6174
    %6176 = vdwg.mxu0
    %6177 = vmatprep.subr.bf16.mxu0 %v5932
    %6178 = vmatpush1.bf16.msra.mxu0 %v5931
    %6179 = vmatprep.subr.bf16.mxu0 %v5941
    %6180 = vmatpush1.bf16.msra.mxu0 %v5940
    %6181 = vmatprep.subr.bf16.mxu0 %v5950
    %6182 = vmatpush1.bf16.msra.mxu0 %v5949
    %6183 = vmatprep.subr.bf16.mxu0 %v5959
    %6184 = vmatpush1.bf16.msra.mxu0 %v5958
    %6185 = vmatprep.subr.bf16.mxu0 %v5968
    %6186 = vmatpush1.bf16.msra.mxu0 %v5967
    %6187 = vmatprep.subr.bf16.mxu0 %v5977
    %6188 = vmatpush1.bf16.msra.mxu0 %v5976
    %6189 = vmatprep.subr.bf16.mxu0 %v5986
    %6190 = vmatpush1.bf16.msra.mxu0 %v5985
    %6191 = vmatprep.subr.bf16.mxu0 %v5995
    %6192 = vmatpush1.bf16.msra.mxu0 %v5994
    %6193 = vmatprep.subr.bf16.mxu0 0
    %6194 = vmatpush1.bf16.msra.mxu0 0
    %6195 = vmatprep.subr.bf16.mxu0 0
    %6196 = vmatpush1.bf16.msra.mxu0 0
    %6197 = vmatprep.subr.bf16.mxu0 0
    %6198 = vmatpush1.bf16.msra.mxu0 0
    %6199 = vmatprep.subr.bf16.mxu0 0
    %6200 = vmatpush1.bf16.msra.mxu0 0
    %6201 = vmatprep.subr.bf16.mxu0 0
    %6202 = vmatpush1.bf16.msra.mxu0 0
    %6203 = vmatprep.subr.bf16.mxu0 0
    %6204 = vmatpush1.bf16.msra.mxu0 0
    %6205 = vmatprep.subr.bf16.mxu0 0
    %6206 = vmatpush1.bf16.msra.mxu0 0
    %6207 = vmatprep.subr.bf16.mxu0 0
    %6208 = vmatpush1.bf16.msra.mxu0 0
    %6209 = vmatprep.mubr.bf16.mxu0 0
    %6210 = vmatmul.mubr.bf16.gmra.mrb[0].mxu0 %v5701
    %v6211 = vpop.f32.mrb[0].mxu0
    %v6212 = vadd.f32 0.0, %v6211
    %v6213 = vpop.f32.mrb[0].mxu0
    %v6214 = vadd.f32 0.0, %v6213
    %v6215 = vpop.f32.mrb[0].mxu0
    %v6216 = vadd.f32 0.0, %v6215
    %v6217 = vpop.f32.mrb[0].mxu0
    %v6218 = vadd.f32 0.0, %v6217
    %6219 = vmatprep.mubr.bf16.mxu0 0
    %6220 = vmatmul.mubr.bf16.gmra.mrb[0].mxu0 %v5702
    %v6221 = vpop.f32.mrb[0].mxu0
    %v6222 = vadd.f32 0.0, %v6221
    %v6223 = vpop.f32.mrb[0].mxu0
    %v6224 = vadd.f32 0.0, %v6223
    %v6225 = vpop.f32.mrb[0].mxu0
    %v6226 = vadd.f32 0.0, %v6225
    %v6227 = vpop.f32.mrb[0].mxu0
    %v6228 = vadd.f32 0.0, %v6227
    %6229 = vdwg.mxu0
    %6230 = vmatprep.subr.bf16.mxu0 %v5934
    %6231 = vmatpush1.bf16.msra.mxu0 %v5933
    %6232 = vmatprep.subr.bf16.mxu0 %v5943
    %6233 = vmatpush1.bf16.msra.mxu0 %v5942
    %6234 = vmatprep.subr.bf16.mxu0 %v5952
    %6235 = vmatpush1.bf16.msra.mxu0 %v5951
    %6236 = vmatprep.subr.bf16.mxu0 %v5961
    %6237 = vmatpush1.bf16.msra.mxu0 %v5960
    %6238 = vmatprep.subr.bf16.mxu0 %v5970
    %6239 = vmatpush1.bf16.msra.mxu0 %v5969
    %6240 = vmatprep.subr.bf16.mxu0 %v5979
    %6241 = vmatpush1.bf16.msra.mxu0 %v5978
    %6242 = vmatprep.subr.bf16.mxu0 %v5988
    %6243 = vmatpush1.bf16.msra.mxu0 %v5987
    %6244 = vmatprep.subr.bf16.mxu0 %v5997
    %6245 = vmatpush1.bf16.msra.mxu0 %v5996
    %6246 = vmatprep.subr.bf16.mxu0 0
    %6247 = vmatpush1.bf16.msra.mxu0 0
    %6248 = vmatprep.subr.bf16.mxu0 0
    %6249 = vmatpush1.bf16.msra.mxu0 0
    %6250 = vmatprep.subr.bf16.mxu0 0
    %6251 = vmatpush1.bf16.msra.mxu0 0
    %6252 = vmatprep.subr.bf16.mxu0 0
    %6253 = vmatpush1.bf16.msra.mxu0 0
    %6254 = vmatprep.subr.bf16.mxu0 0
    %6255 = vmatpush1.bf16.msra.mxu0 0
    %6256 = vmatprep.subr.bf16.mxu0 0
    %6257 = vmatpush1.bf16.msra.mxu0 0
    %6258 = vmatprep.subr.bf16.mxu0 0
    %6259 = vmatpush1.bf16.msra.mxu0 0
    %6260 = vmatprep.subr.bf16.mxu0 0
    %6261 = vmatpush1.bf16.msra.mxu0 0
    %6262 = vmatprep.mubr.bf16.mxu0 0
    %6263 = vmatmul.mubr.bf16.gmra.mrb[0].mxu0 %v5701
    %v6264 = vpop.f32.mrb[0].mxu0
    %v6265 = vadd.f32 0.0, %v6264
    %v6266 = vpop.f32.mrb[0].mxu0
    %v6267 = vadd.f32 0.0, %v6266
    %v6268 = vpop.f32.mrb[0].mxu0
    %v6269 = vadd.f32 0.0, %v6268
    %v6270 = vpop.f32.mrb[0].mxu0
    %v6271 = vadd.f32 0.0, %v6270
    %6272 = vmatprep.mubr.bf16.mxu0 0
    %6273 = vmatmul.mubr.bf16.gmra.mrb[0].mxu0 %v5702
    %v6274 = vpop.f32.mrb[0].mxu0
    %v6275 = vadd.f32 0.0, %v6274
    %v6276 = vpop.f32.mrb[0].mxu0
    %v6277 = vadd.f32 0.0, %v6276
    %v6278 = vpop.f32.mrb[0].mxu0
    %v6279 = vadd.f32 0.0, %v6278
    %v6280 = vpop.f32.mrb[0].mxu0
    %v6281 = vadd.f32 0.0, %v6280
    %6282 = vdwg.mxu0
    %6283 = vmatprep.subr.bf16.mxu0 0
    %6284 = vmatpush1.bf16.msra.mxu0 %v5935
    %6285 = vmatprep.subr.bf16.mxu0 0
    %6286 = vmatpush1.bf16.msra.mxu0 %v5944
    %6287 = vmatprep.subr.bf16.mxu0 0
    %6288 = vmatpush1.bf16.msra.mxu0 %v5953
    %6289 = vmatprep.subr.bf16.mxu0 0
    %6290 = vmatpush1.bf16.msra.mxu0 %v5962
    %6291 = vmatprep.subr.bf16.mxu0 0
    %6292 = vmatpush1.bf16.msra.mxu0 %v5971
    %6293 = vmatprep.subr.bf16.mxu0 0
    %6294 = vmatpush1.bf16.msra.mxu0 %v5980
    %6295 = vmatprep.subr.bf16.mxu0 0
    %6296 = vmatpush1.bf16.msra.mxu0 %v5989
    %6297 = vmatprep.subr.bf16.mxu0 0
    %6298 = vmatpush1.bf16.msra.mxu0 %v5998
    %6299 = vmatprep.subr.bf16.mxu0 0
    %6300 = vmatpush1.bf16.msra.mxu0 0
    %6301 = vmatprep.subr.bf16.mxu0 0
    %6302 = vmatpush1.bf16.msra.mxu0 0
    %6303 = vmatprep.subr.bf16.mxu0 0
    %6304 = vmatpush1.bf16.msra.mxu0 0
    %6305 = vmatprep.subr.bf16.mxu0 0
    %6306 = vmatpush1.bf16.msra.mxu0 0
    %6307 = vmatprep.subr.bf16.mxu0 0
    %6308 = vmatpush1.bf16.msra.mxu0 0
    %6309 = vmatprep.subr.bf16.mxu0 0
    %6310 = vmatpush1.bf16.msra.mxu0 0
    %6311 = vmatprep.subr.bf16.mxu0 0
    %6312 = vmatpush1.bf16.msra.mxu0 0
    %6313 = vmatprep.subr.bf16.mxu0 0
    %6314 = vmatpush1.bf16.msra.mxu0 0
    %6315 = vmatprep.mubr.bf16.mxu0 0
    %6316 = vmatmul.mubr.bf16.gmra.mrb[0].mxu0 %v5701
    %v6317 = vpop.f32.mrb[0].mxu0
    %v6318 = vadd.f32 0.0, %v6317
    %v6319 = vpop.f32.mrb[0].mxu0
    %v6320 = vpop.f32.mrb[0].mxu0
    %v6321 = vadd.f32 0.0, %v6320
    %v6322 = vpop.f32.mrb[0].mxu0
    %6323 = vmatprep.mubr.bf16.mxu0 0
    %6324 = vmatmul.mubr.bf16.gmra.mrb[0].mxu0 %v5702
    %v6325 = vpop.f32.mrb[0].mxu0
    %v6326 = vadd.f32 0.0, %v6325
    %v6327 = vpop.f32.mrb[0].mxu0
    %v6328 = vpop.f32.mrb[0].mxu0
    %v6329 = vadd.f32 0.0, %v6328
    %v6330 = vpop.f32.mrb[0].mxu0
    %6331 = vdwg.mxu0
    %v6332 = vrot.slane %v6106, 3
    %v6333 = vrot.slane %v6110, 3
    %v6334 = vrot.slane %v6116, 3
    %v6335 = vrot.slane %v6120, 3
    %v6336 = vsel %vm555, %v6334, %v6335
    %v6337 = vsel %vm555, %v6333, %v6334
    %v6338 = vsel %vm555, %v6332, %v6333
    %v6339 = vsel %vm555, %v6335, %v6332
    %v6340 = vmul.f32 %v6339, %v567
    %v6341 = vmul.f32 %v6338, %v572
    %v6342 = vmul.f32 %v6337, %v577
    %v6343 = vmul.f32 %v6336, %v582
    %v6344 = vadd.f32 %v6212, %v6340
    %v6345 = vadd.f32 %v6216, %v6341
    %v6346 = vadd.f32 %v6222, %v6342
    %v6347 = vadd.f32 %v6226, %v6343
    %v6348 = vrot.slane %v6108, 4
    %v6349 = vrot.slane %v6112, 4
    %v6350 = vrot.slane %v6118, 4
    %v6351 = vrot.slane %v6122, 4
    %v6352 = vsel %vm612, %v6350, %v6351
    %v6353 = vsel %vm612, %v6349, %v6350
    %v6354 = vsel %vm612, %v6348, %v6349
    %v6355 = vsel %vm612, %v6351, %v6348
    %v6356 = vmul.f32 %v6355, %v625
    %v6357 = vmul.f32 %v6354, %v630
    %v6358 = vmul.f32 %v6353, %v635
    %v6359 = vmul.f32 %v6352, %v640
    %v6360 = vadd.f32 %v6344, %v6356
    %v6361 = vadd.f32 %v6345, %v6357
    %v6362 = vadd.f32 %v6346, %v6358
    %v6363 = vadd.f32 %v6347, %v6359
    %v6364 = vrot.slane %v6159, 5
    %v6365 = vrot.slane %v6163, 5
    %v6366 = vrot.slane %v6169, 5
    %v6367 = vrot.slane %v6173, 5
    %v6368 = vsel %vm654, %v6366, %v6367
    %v6369 = vsel %vm654, %v6365, %v6366
    %v6370 = vsel %vm654, %v6364, %v6365
    %v6371 = vsel %vm654, %v6367, %v6364
    %v6372 = vmul.f32 %v6371, %v667
    %v6373 = vmul.f32 %v6370, %v672
    %v6374 = vmul.f32 %v6369, %v677
    %v6375 = vmul.f32 %v6368, %v682
    %v6376 = vadd.f32 %v6360, %v6372
    %v6377 = vadd.f32 %v6361, %v6373
    %v6378 = vadd.f32 %v6362, %v6374
    %v6379 = vadd.f32 %v6363, %v6375
    %v6380 = vrot.slane %v6161, 7
    %v6381 = vrot.slane %v6165, 7
    %v6382 = vrot.slane %v6171, 7
    %v6383 = vrot.slane %v6175, 7
    %v6384 = vsel %vm712, %v6382, %v6383
    %v6385 = vsel %vm712, %v6381, %v6382
    %v6386 = vsel %vm712, %v6380, %v6381
    %v6387 = vsel %vm712, %v6383, %v6380
    %v6388 = vmul.f32 %v6387, %v725
    %v6389 = vmul.f32 %v6386, %v730
    %v6390 = vmul.f32 %v6385, %v735
    %v6391 = vmul.f32 %v6384, %v740
    %v6392 = vadd.f32 %v6376, %v6388
    %v6393 = vadd.f32 %v6377, %v6389
    %v6394 = vadd.f32 %v6378, %v6390
    %v6395 = vadd.f32 %v6379, %v6391
    %v6396 = vrot.slane %v6214, 1
    %v6397 = vrot.slane %v6218, 1
    %v6398 = vrot.slane %v6224, 1
    %v6399 = vrot.slane %v6228, 1
    %v6400 = vsel %vm770, %v6398, %v6399
    %v6401 = vsel %vm770, %v6397, %v6398
    %v6402 = vsel %vm770, %v6396, %v6397
    %v6403 = vsel %vm770, %v6399, %v6396
    %v6404 = vmul.f32 %v6402, %v783
    %v6405 = vmul.f32 %v6401, %v788
    %v6406 = vmul.f32 %v6400, %v793
    %v6407 = vmul.f32 %v6403, %v798
    %v6408 = vadd.f32 %v6392, %v6404
    %v6409 = vadd.f32 %v6393, %v6405
    %v6410 = vadd.f32 %v6394, %v6406
    %v6411 = vadd.f32 %v6395, %v6407
    %v6412 = vrot.slane %v6265, 3
    %v6413 = vrot.slane %v6269, 3
    %v6414 = vrot.slane %v6275, 3
    %v6415 = vrot.slane %v6279, 3
    %v6416 = vsel %vm555, %v6414, %v6415
    %v6417 = vsel %vm555, %v6413, %v6414
    %v6418 = vsel %vm555, %v6412, %v6413
    %v6419 = vsel %vm555, %v6415, %v6412
    %v6420 = vmul.f32 %v6418, %v824
    %v6421 = vmul.f32 %v6417, %v829
    %v6422 = vmul.f32 %v6416, %v834
    %v6423 = vmul.f32 %v6419, %v839
    %v6424 = vadd.f32 %v6408, %v6420
    %v6425 = vadd.f32 %v6409, %v6421
    %v6426 = vadd.f32 %v6410, %v6422
    %v6427 = vadd.f32 %v6411, %v6423
    %v6428 = vrot.slane %v6267, 4
    %v6429 = vrot.slane %v6271, 4
    %v6430 = vrot.slane %v6277, 4
    %v6431 = vrot.slane %v6281, 4
    %v6432 = vsel %vm612, %v6430, %v6431
    %v6433 = vsel %vm612, %v6429, %v6430
    %v6434 = vsel %vm612, %v6428, %v6429
    %v6435 = vsel %vm612, %v6431, %v6428
    %v6436 = vmul.f32 %v6434, %v881
    %v6437 = vmul.f32 %v6433, %v886
    %v6438 = vmul.f32 %v6432, %v891
    %v6439 = vmul.f32 %v6435, %v896
    %v6440 = vadd.f32 %v6424, %v6436
    %v6441 = vadd.f32 %v6425, %v6437
    %v6442 = vadd.f32 %v6426, %v6438
    %v6443 = vadd.f32 %v6427, %v6439
    %v6444 = vrot.slane %v6318, 5
    %v6445 = vrot.slane %v6321, 5
    %v6446 = vrot.slane %v6326, 5
    %v6447 = vrot.slane %v6329, 5
    %v6448 = vsel %vm654, %v6446, %v6447
    %v6449 = vsel %vm654, %v6445, %v6446
    %v6450 = vsel %vm654, %v6444, %v6445
    %v6451 = vsel %vm654, %v6447, %v6444
    %v6452 = vmul.f32 %v6450, %v922
    %v6453 = vmul.f32 %v6449, %v927
    %v6454 = vmul.f32 %v6448, %v932
    %v6455 = vmul.f32 %v6451, %v937
    %v6456 = vadd.f32 %v6440, %v6452
    %v6457 = vadd.f32 %v6441, %v6453
    %v6458 = vadd.f32 %v6442, %v6454
    %v6459 = vadd.f32 %v6443, %v6455
    %v6461 = vlaneseq
    %v6462 = vshrl.u32 %v6461, 7
    %v6463 = vsub.s32 0, %v6462
    %v6464 = vrot.slane %v5700, %v6463
    %v6466 = vadd.f32 %v6456, %v6464
    %v6467 = vadd.f32 %v6457, %v6464
    %v6468 = vadd.f32 %v6458, %v6464
    %v6469 = vadd.f32 %v6459, %v6464
    %v6470 = vmul.f32 %v6466, 0.1
    %v6471 = vmul.f32 %v6467, 0.1
    %v6472 = vmul.f32 %v6468, 0.1
    %v6473 = vmul.f32 %v6469, 0.1
    %v6474 = vmax.f32 %v6466, %v6470
    %v6475 = vmax.f32 %v6467, %v6471
    %v6476 = vmax.f32 %v6468, %v6472
    %v6477 = vmax.f32 %v6469, %v6473
    %v6478 = vld [vmem:[%s10] sm:$0xff]
    %v6479 = vld [vmem:[%s10 + $0x8] sm:$0xff]
    %v6480 = vld [vmem:[%s10 + $0x10] sm:$0xff]
    %v6481 = vld [vmem:[%s10 + $0x18] sm:$0xff]
    %v6482 = vld [vmem:[%s10 + $0x20] sm:$0xff]
    %v6483 = vld [vmem:[%s10 + $0x28] sm:$0xff]
    %v6484 = vld [vmem:[%s10 + $0x30] sm:$0xff]
    %v6485 = vld [vmem:[%s10 + $0x38] sm:$0xff]
    %v6486 = vld [vmem:[%s10 + $0x40] sm:$0xff]
    %v6487 = vld [vmem:[%s10 + $0x48] sm:$0xff]
    %v6488 = vld [vmem:[%s10 + $0x50] sm:$0xff]
    %v6489 = vld [vmem:[%s10 + $0x58] sm:$0xff]
    %v6490 = vld [vmem:[%s10 + $0x60] sm:$0xff]
    %v6491 = vld [vmem:[%s10 + $0x68] sm:$0xff]
    %v6492 = vld [vmem:[%s10 + $0x70] sm:$0xff]
    %v6493 = vld [vmem:[%s10 + $0x78] sm:$0xff]
    %v6494 = vld [vmem:[%s10 + $0x80] sm:$0xff]
    %v6495 = vld [vmem:[%s10 + $0x88] sm:$0xff]
    %v6496 = vld [vmem:[%s10 + $0x90] sm:$0xff]
    %v6497 = vld [vmem:[%s10 + $0x98] sm:$0xff]
    %v6498 = vld [vmem:[%s10 + $0xa0] sm:$0xff]
    %v6499 = vld [vmem:[%s10 + $0xa8] sm:$0xff]
    %v6500 = vld [vmem:[%s10 + $0xb0] sm:$0xff]
    %v6501 = vld [vmem:[%s10 + $0xb8] sm:$0xff]
    %v6502 = vld [vmem:[%s10 + $0xc0] sm:$0xff]
    %v6503 = vld [vmem:[%s10 + $0xc8] sm:$0xff]
    %v6504 = vld [vmem:[%s10 + $0xd0] sm:$0xff]
    %v6505 = vld [vmem:[%s10 + $0xd8] sm:$0xff]
    %v6506 = vld [vmem:[%s10 + $0xe0] sm:$0xff]
    %v6507 = vld [vmem:[%s10 + $0xe8] sm:$0xff]
    %v6508 = vld [vmem:[%s10 + $0xf0] sm:$0xff]
    %v6509 = vld [vmem:[%s10 + $0xf8] sm:$0xff]
    %v6510 = vld [vmem:[%s10 + $0x100] sm:$0xff]
    %v6511 = vld [vmem:[%s10 + $0x108] sm:$0xff]
    %v6512 = vld [vmem:[%s10 + $0x110] sm:$0xff]
    %v6513 = vld [vmem:[%s10 + $0x118] sm:$0xff]
    %v6514 = vld [vmem:[%s10 + $0x120] sm:$0xff]
    %v6515 = vld [vmem:[%s10 + $0x128] sm:$0xff]
    %v6516 = vld [vmem:[%s10 + $0x130] sm:$0xff]
    %v6517 = vld [vmem:[%s10 + $0x138] sm:$0xff]
    %v6518 = vld [vmem:[%s10 + $0x140] sm:$0xff]
    %v6519 = vld [vmem:[%s10 + $0x148] sm:$0xff]
    %v6520 = vld [vmem:[%s10 + $0x150] sm:$0xff]
    %v6521 = vld [vmem:[%s10 + $0x158] sm:$0xff]
    %v6522 = vld [vmem:[%s10 + $0x160] sm:$0xff]
    %v6523 = vld [vmem:[%s10 + $0x168] sm:$0xff]
    %v6524 = vld [vmem:[%s10 + $0x170] sm:$0xff]
    %v6525 = vld [vmem:[%s10 + $0x178] sm:$0xff]
    %v6526 = vld [vmem:[%s10 + $0x180] sm:$0xff]
    %v6527 = vld [vmem:[%s10 + $0x188] sm:$0xff]
    %v6528 = vld [vmem:[%s10 + $0x190] sm:$0xff]
    %v6529 = vld [vmem:[%s10 + $0x198] sm:$0xff]
    %v6530 = vld [vmem:[%s10 + $0x1a0] sm:$0xff]
    %v6531 = vld [vmem:[%s10 + $0x1a8] sm:$0xff]
    %v6532 = vld [vmem:[%s10 + $0x1b0] sm:$0xff]
    %v6533 = vld [vmem:[%s10 + $0x1b8] sm:$0xff]
    %v6534 = vld [vmem:[%s10 + $0x1c0] sm:$0xff]
    %v6535 = vld [vmem:[%s10 + $0x1c8] sm:$0xff]
    %v6536 = vld [vmem:[%s10 + $0x1d0] sm:$0xff]
    %v6537 = vld [vmem:[%s10 + $0x1d8] sm:$0xff]
    %v6538 = vld [vmem:[%s10 + $0x1e0] sm:$0xff]
    %v6539 = vld [vmem:[%s10 + $0x1e8] sm:$0xff]
    %v6540 = vld [vmem:[%s10 + $0x1f0] sm:$0xff]
    %v6541 = vld [vmem:[%s10 + $0x1f8] sm:$0xff]
    %v6542 = vld [vmem:[%s10 + $0x200] sm:$0xff]
    %v6543 = vld [vmem:[%s10 + $0x208] sm:$0xff]
    %v6544 = vld [vmem:[%s10 + $0x210] sm:$0xff]
    %v6545 = vld [vmem:[%s10 + $0x218] sm:$0xff]
    %v6546 = vld [vmem:[%s10 + $0x220] sm:$0xff]
    %v6547 = vld [vmem:[%s10 + $0x228] sm:$0xff]
    %v6548 = vld [vmem:[%s10 + $0x230] sm:$0xff]
    %v6549 = vld [vmem:[%s10 + $0x238] sm:$0xff]
    %v6550 = vld [vmem:[%s10 + $0x240] sm:$0xff]
    %v6551 = vld [vmem:[%s10 + $0x248] sm:$0xff]
    %v6552 = vld [vmem:[%s10 + $0x250] sm:$0xff]
    %v6553 = vld [vmem:[%s10 + $0x258] sm:$0xff]
    %v6554 = vld [vmem:[%s10 + $0x260] sm:$0xff]
    %v6555 = vld [vmem:[%s10 + $0x268] sm:$0xff]
    %v6556 = vld [vmem:[%s10 + $0x270] sm:$0xff]
    %v6557 = vld [vmem:[%s10 + $0x278] sm:$0xff]
    %v6558 = vld [vmem:[%s10 + $0x280] sm:$0xff]
    %v6559 = vld [vmem:[%s10 + $0x288] sm:$0xff]
    %v6560 = vld [vmem:[%s10 + $0x290] sm:$0xff]
    %v6561 = vld [vmem:[%s10 + $0x298] sm:$0xff]
    %v6562 = vld [vmem:[%s10 + $0x2a0] sm:$0xff]
    %v6563 = vld [vmem:[%s10 + $0x2a8] sm:$0xff]
    %v6564 = vld [vmem:[%s10 + $0x2b0] sm:$0xff]
    %v6565 = vld [vmem:[%s10 + $0x2b8] sm:$0xff]
    %v6566 = vld [vmem:[%s10 + $0x2c0] sm:$0xff]
    %v6567 = vld [vmem:[%s10 + $0x2c8] sm:$0xff]
    %v6568 = vld [vmem:[%s10 + $0x2d0] sm:$0xff]
    %v6569 = vld [vmem:[%s10 + $0x2d8] sm:$0xff]
    %v6570 = vld [vmem:[%s10 + $0x2e0] sm:$0xff]
    %v6571 = vld [vmem:[%s10 + $0x2e8] sm:$0xff]
    %v6572 = vld [vmem:[%s10 + $0x2f0] sm:$0xff]
    %v6573 = vld [vmem:[%s10 + $0x2f8] sm:$0xff]
    %v6574 = vld [vmem:[%s10 + $0x300] sm:$0xff]
    %v6575 = vld [vmem:[%s10 + $0x308] sm:$0xff]
    %v6576 = vld [vmem:[%s10 + $0x310] sm:$0xff]
    %v6577 = vld [vmem:[%s10 + $0x318] sm:$0xff]
    %v6578 = vld [vmem:[%s10 + $0x320] sm:$0xff]
    %v6579 = vld [vmem:[%s10 + $0x328] sm:$0xff]
    %v6580 = vld [vmem:[%s10 + $0x330] sm:$0xff]
    %v6581 = vld [vmem:[%s10 + $0x338] sm:$0xff]
    %v6582 = vld [vmem:[%s10 + $0x340] sm:$0xff]
    %v6583 = vld [vmem:[%s10 + $0x348] sm:$0xff]
    %v6584 = vld [vmem:[%s10 + $0x350] sm:$0xff]
    %v6585 = vld [vmem:[%s10 + $0x358] sm:$0xff]
    %v6586 = vld [vmem:[%s10 + $0x360] sm:$0xff]
    %v6587 = vld [vmem:[%s10 + $0x368] sm:$0xff]
    %v6588 = vld [vmem:[%s10 + $0x370] sm:$0xff]
    %v6589 = vld [vmem:[%s10 + $0x378] sm:$0xff]
    %v6590 = vld [vmem:[%s10 + $0x380] sm:$0xff]
    %v6591 = vld [vmem:[%s10 + $0x388] sm:$0xff]
    %v6592 = vld [vmem:[%s10 + $0x390] sm:$0xff]
    %v6593 = vld [vmem:[%s10 + $0x398] sm:$0xff]
    %v6594 = vld [vmem:[%s10 + $0x3a0] sm:$0xff]
    %v6595 = vld [vmem:[%s10 + $0x3a8] sm:$0xff]
    %v6596 = vld [vmem:[%s10 + $0x3b0] sm:$0xff]
    %v6597 = vld [vmem:[%s10 + $0x3b8] sm:$0xff]
    %v6598 = vld [vmem:[%s10 + $0x3c0] sm:$0xff]
    %v6599 = vld [vmem:[%s10 + $0x3c8] sm:$0xff]
    %v6600 = vld [vmem:[%s10 + $0x3d0] sm:$0xff]
    %v6601 = vld [vmem:[%s10 + $0x3d8] sm:$0xff]
    %v6602 = vld [vmem:[%s10 + $0x3e0] sm:$0xff]
    %v6603 = vld [vmem:[%s10 + $0x3e8] sm:$0xff]
    %v6604 = vld [vmem:[%s10 + $0x3f0] sm:$0xff]
    %v6605 = vld [vmem:[%s10 + $0x3f8] sm:$0xff]
    %v6606 = vld [vmem:[%s10 + $0x400] sm:$0xff]
    %v6607 = vld [vmem:[%s10 + $0x408] sm:$0xff]
    %v6608 = vld [vmem:[%s10 + $0x410] sm:$0xff]
    %v6609 = vld [vmem:[%s10 + $0x418] sm:$0xff]
    %v6610 = vld [vmem:[%s10 + $0x420] sm:$0xff]
    %v6611 = vld [vmem:[%s10 + $0x428] sm:$0xff]
    %v6612 = vld [vmem:[%s10 + $0x430] sm:$0xff]
    %v6613 = vld [vmem:[%s10 + $0x438] sm:$0xff]
    %v6614 = vld [vmem:[%s10 + $0x440] sm:$0xff]
    %v6615 = vld [vmem:[%s10 + $0x448] sm:$0xff]
    %v6616 = vld [vmem:[%s10 + $0x450] sm:$0xff]
    %v6617 = vld [vmem:[%s10 + $0x458] sm:$0xff]
    %v6618 = vld [vmem:[%s10 + $0x460] sm:$0xff]
    %v6619 = vld [vmem:[%s10 + $0x468] sm:$0xff]
    %v6620 = vld [vmem:[%s10 + $0x470] sm:$0xff]
    %v6621 = vld [vmem:[%s10 + $0x478] sm:$0xff]
    %v6622 = vld [vmem:[%s11] sm:$0x3]
    %v6623 = vpack.c.bf16 %v6475, %v6474
    %v6624 = vpack.c.bf16 %v6477, %v6476
    %v6769 = vunpack.c.l.b16 %v6478
    %v6770 = vunpack.c.h.b16 %v6478
    %v6771 = vunpack.c.l.b16 %v6479
    %v6772 = vunpack.c.h.b16 %v6479
    %v6773 = vunpack.c.l.b16 %v6480
    %v6774 = vunpack.c.h.b16 %v6480
    %v6775 = vunpack.c.l.b16 %v6481
    %v6776 = vunpack.c.h.b16 %v6481
    %v6777 = vunpack.c.l.b16 %v6482
    %v6778 = vunpack.c.h.b16 %v6482
    %v6779 = vunpack.c.l.b16 %v6483
    %v6780 = vunpack.c.h.b16 %v6483
    %v6781 = vunpack.c.l.b16 %v6484
    %v6782 = vunpack.c.h.b16 %v6484
    %v6783 = vunpack.c.l.b16 %v6485
    %v6784 = vunpack.c.h.b16 %v6485
    %v6785 = vunpack.c.l.b16 %v6486
    %v6786 = vunpack.c.h.b16 %v6486
    %v6787 = vunpack.c.l.b16 %v6487
    %v6788 = vunpack.c.h.b16 %v6487
    %v6789 = vunpack.c.l.b16 %v6488
    %v6790 = vunpack.c.h.b16 %v6488
    %v6791 = vunpack.c.l.b16 %v6489
    %v6792 = vunpack.c.h.b16 %v6489
    %v6793 = vunpack.c.l.b16 %v6490
    %v6794 = vunpack.c.h.b16 %v6490
    %v6795 = vunpack.c.l.b16 %v6491
    %v6796 = vunpack.c.h.b16 %v6491
    %v6797 = vunpack.c.l.b16 %v6492
    %v6798 = vunpack.c.h.b16 %v6492
    %v6799 = vunpack.c.l.b16 %v6493
    %v6800 = vunpack.c.h.b16 %v6493
    %v6801 = vunpack.c.l.b16 %v6494
    %v6802 = vunpack.c.h.b16 %v6494
    %v6803 = vunpack.c.l.b16 %v6495
    %v6804 = vunpack.c.h.b16 %v6495
    %v6805 = vunpack.c.l.b16 %v6496
    %v6806 = vunpack.c.h.b16 %v6496
    %v6807 = vunpack.c.l.b16 %v6497
    %v6808 = vunpack.c.h.b16 %v6497
    %v6809 = vunpack.c.l.b16 %v6498
    %v6810 = vunpack.c.h.b16 %v6498
    %v6811 = vunpack.c.l.b16 %v6499
    %v6812 = vunpack.c.h.b16 %v6499
    %v6813 = vunpack.c.l.b16 %v6500
    %v6814 = vunpack.c.h.b16 %v6500
    %v6815 = vunpack.c.l.b16 %v6501
    %v6816 = vunpack.c.h.b16 %v6501
    %v6817 = vunpack.c.l.b16 %v6502
    %v6818 = vunpack.c.h.b16 %v6502
    %v6819 = vunpack.c.l.b16 %v6503
    %v6820 = vunpack.c.h.b16 %v6503
    %v6821 = vunpack.c.l.b16 %v6504
    %v6822 = vunpack.c.h.b16 %v6504
    %v6823 = vunpack.c.l.b16 %v6505
    %v6824 = vunpack.c.h.b16 %v6505
    %v6825 = vunpack.c.l.b16 %v6506
    %v6826 = vunpack.c.h.b16 %v6506
    %v6827 = vunpack.c.l.b16 %v6507
    %v6828 = vunpack.c.h.b16 %v6507
    %v6829 = vunpack.c.l.b16 %v6508
    %v6830 = vunpack.c.h.b16 %v6508
    %v6831 = vunpack.c.l.b16 %v6509
    %v6832 = vunpack.c.h.b16 %v6509
    %v6833 = vunpack.c.l.b16 %v6510
    %v6834 = vunpack.c.h.b16 %v6510
    %v6835 = vunpack.c.l.b16 %v6511
    %v6836 = vunpack.c.h.b16 %v6511
    %v6837 = vunpack.c.l.b16 %v6512
    %v6838 = vunpack.c.h.b16 %v6512
    %v6839 = vunpack.c.l.b16 %v6513
    %v6840 = vunpack.c.h.b16 %v6513
    %v6841 = vunpack.c.l.b16 %v6514
    %v6842 = vunpack.c.h.b16 %v6514
    %v6843 = vunpack.c.l.b16 %v6515
    %v6844 = vunpack.c.h.b16 %v6515
    %v6845 = vunpack.c.l.b16 %v6516
    %v6846 = vunpack.c.h.b16 %v6516
    %v6847 = vunpack.c.l.b16 %v6517
    %v6848 = vunpack.c.h.b16 %v6517
    %v6849 = vunpack.c.l.b16 %v6518
    %v6850 = vunpack.c.h.b16 %v6518
    %v6851 = vunpack.c.l.b16 %v6519
    %v6852 = vunpack.c.h.b16 %v6519
    %v6853 = vunpack.c.l.b16 %v6520
    %v6854 = vunpack.c.h.b16 %v6520
    %v6855 = vunpack.c.l.b16 %v6521
    %v6856 = vunpack.c.h.b16 %v6521
    %v6857 = vunpack.c.l.b16 %v6522
    %v6858 = vunpack.c.h.b16 %v6522
    %v6859 = vunpack.c.l.b16 %v6523
    %v6860 = vunpack.c.h.b16 %v6523
    %v6861 = vunpack.c.l.b16 %v6524
    %v6862 = vunpack.c.h.b16 %v6524
    %v6863 = vunpack.c.l.b16 %v6525
    %v6864 = vunpack.c.h.b16 %v6525
    %v6865 = vunpack.c.l.b16 %v6526
    %v6866 = vunpack.c.h.b16 %v6526
    %v6867 = vunpack.c.l.b16 %v6527
    %v6868 = vunpack.c.h.b16 %v6527
    %v6869 = vunpack.c.l.b16 %v6528
    %v6870 = vunpack.c.h.b16 %v6528
    %v6871 = vunpack.c.l.b16 %v6529
    %v6872 = vunpack.c.h.b16 %v6529
    %v6873 = vunpack.c.l.b16 %v6530
    %v6874 = vunpack.c.h.b16 %v6530
    %v6875 = vunpack.c.l.b16 %v6531
    %v6876 = vunpack.c.h.b16 %v6531
    %v6877 = vunpack.c.l.b16 %v6532
    %v6878 = vunpack.c.h.b16 %v6532
    %v6879 = vunpack.c.l.b16 %v6533
    %v6880 = vunpack.c.h.b16 %v6533
    %v6881 = vunpack.c.l.b16 %v6534
    %v6882 = vunpack.c.h.b16 %v6534
    %v6883 = vunpack.c.l.b16 %v6535
    %v6884 = vunpack.c.h.b16 %v6535
    %v6885 = vunpack.c.l.b16 %v6536
    %v6886 = vunpack.c.h.b16 %v6536
    %v6887 = vunpack.c.l.b16 %v6537
    %v6888 = vunpack.c.h.b16 %v6537
    %v6889 = vunpack.c.l.b16 %v6538
    %v6890 = vunpack.c.h.b16 %v6538
    %v6891 = vunpack.c.l.b16 %v6539
    %v6892 = vunpack.c.h.b16 %v6539
    %v6893 = vunpack.c.l.b16 %v6540
    %v6894 = vunpack.c.h.b16 %v6540
    %v6895 = vunpack.c.l.b16 %v6541
    %v6896 = vunpack.c.h.b16 %v6541
    %v6897 = vunpack.c.l.b16 %v6542
    %v6898 = vunpack.c.h.b16 %v6542
    %v6899 = vunpack.c.l.b16 %v6543
    %v6900 = vunpack.c.h.b16 %v6543
    %v6901 = vunpack.c.l.b16 %v6544
    %v6902 = vunpack.c.h.b16 %v6544
    %v6903 = vunpack.c.l.b16 %v6545
    %v6904 = vunpack.c.h.b16 %v6545
    %v6905 = vunpack.c.l.b16 %v6546
    %v6906 = vunpack.c.h.b16 %v6546
    %v6907 = vunpack.c.l.b16 %v6547
    %v6908 = vunpack.c.h.b16 %v6547
    %v6909 = vunpack.c.l.b16 %v6548
    %v6910 = vunpack.c.h.b16 %v6548
    %v6911 = vunpack.c.l.b16 %v6549
    %v6912 = vunpack.c.h.b16 %v6549
    %v6913 = vunpack.c.l.b16 %v6550
    %v6914 = vunpack.c.h.b16 %v6550
    %v6915 = vunpack.c.l.b16 %v6551
    %v6916 = vunpack.c.h.b16 %v6551
    %v6917 = vunpack.c.l.b16 %v6552
    %v6918 = vunpack.c.h.b16 %v6552
    %v6919 = vunpack.c.l.b16 %v6553
    %v6920 = vunpack.c.h.b16 %v6553
    %v6921 = vunpack.c.l.b16 %v6554
    %v6922 = vunpack.c.h.b16 %v6554
    %v6923 = vunpack.c.l.b16 %v6555
    %v6924 = vunpack.c.h.b16 %v6555
    %v6925 = vunpack.c.l.b16 %v6556
    %v6926 = vunpack.c.h.b16 %v6556
    %v6927 = vunpack.c.l.b16 %v6557
    %v6928 = vunpack.c.h.b16 %v6557
    %v6929 = vunpack.c.l.b16 %v6558
    %v6930 = vunpack.c.h.b16 %v6558
    %v6931 = vunpack.c.l.b16 %v6559
    %v6932 = vunpack.c.h.b16 %v6559
    %v6933 = vunpack.c.l.b16 %v6560
    %v6934 = vunpack.c.h.b16 %v6560
    %v6935 = vunpack.c.l.b16 %v6561
    %v6936 = vunpack.c.h.b16 %v6561
    %v6937 = vunpack.c.l.b16 %v6562
    %v6938 = vunpack.c.h.b16 %v6562
    %v6939 = vunpack.c.l.b16 %v6563
    %v6940 = vunpack.c.h.b16 %v6563
    %v6941 = vunpack.c.l.b16 %v6564
    %v6942 = vunpack.c.h.b16 %v6564
    %v6943 = vunpack.c.l.b16 %v6565
    %v6944 = vunpack.c.h.b16 %v6565
    %v6945 = vunpack.c.l.b16 %v6566
    %v6946 = vunpack.c.h.b16 %v6566
    %v6947 = vunpack.c.l.b16 %v6567
    %v6948 = vunpack.c.h.b16 %v6567
    %v6949 = vunpack.c.l.b16 %v6568
    %v6950 = vunpack.c.h.b16 %v6568
    %v6951 = vunpack.c.l.b16 %v6569
    %v6952 = vunpack.c.h.b16 %v6569
    %v6953 = vunpack.c.l.b16 %v6570
    %v6954 = vunpack.c.h.b16 %v6570
    %v6955 = vunpack.c.l.b16 %v6571
    %v6956 = vunpack.c.h.b16 %v6571
    %v6957 = vunpack.c.l.b16 %v6572
    %v6958 = vunpack.c.h.b16 %v6572
    %v6959 = vunpack.c.l.b16 %v6573
    %v6960 = vunpack.c.h.b16 %v6573
    %v6961 = vunpack.c.l.b16 %v6574
    %v6962 = vunpack.c.h.b16 %v6574
    %v6963 = vunpack.c.l.b16 %v6575
    %v6964 = vunpack.c.h.b16 %v6575
    %v6965 = vunpack.c.l.b16 %v6576
    %v6966 = vunpack.c.h.b16 %v6576
    %v6967 = vunpack.c.l.b16 %v6577
    %v6968 = vunpack.c.h.b16 %v6577
    %v6969 = vunpack.c.l.b16 %v6578
    %v6970 = vunpack.c.h.b16 %v6578
    %v6971 = vunpack.c.l.b16 %v6579
    %v6972 = vunpack.c.h.b16 %v6579
    %v6973 = vunpack.c.l.b16 %v6580
    %v6974 = vunpack.c.h.b16 %v6580
    %v6975 = vunpack.c.l.b16 %v6581
    %v6976 = vunpack.c.h.b16 %v6581
    %v6977 = vunpack.c.l.b16 %v6582
    %v6978 = vunpack.c.h.b16 %v6582
    %v6979 = vunpack.c.l.b16 %v6583
    %v6980 = vunpack.c.h.b16 %v6583
    %v6981 = vunpack.c.l.b16 %v6584
    %v6982 = vunpack.c.h.b16 %v6584
    %v6983 = vunpack.c.l.b16 %v6585
    %v6984 = vunpack.c.h.b16 %v6585
    %v6985 = vunpack.c.l.b16 %v6586
    %v6986 = vunpack.c.h.b16 %v6586
    %v6987 = vunpack.c.l.b16 %v6587
    %v6988 = vunpack.c.h.b16 %v6587
    %v6989 = vunpack.c.l.b16 %v6588
    %v6990 = vunpack.c.h.b16 %v6588
    %v6991 = vunpack.c.l.b16 %v6589
    %v6992 = vunpack.c.h.b16 %v6589
    %v6993 = vunpack.c.l.b16 %v6590
    %v6994 = vunpack.c.h.b16 %v6590
    %v6995 = vunpack.c.l.b16 %v6591
    %v6996 = vunpack.c.h.b16 %v6591
    %v6997 = vunpack.c.l.b16 %v6592
    %v6998 = vunpack.c.h.b16 %v6592
    %v6999 = vunpack.c.l.b16 %v6593
    %v7000 = vunpack.c.h.b16 %v6593
    %v7001 = vunpack.c.l.b16 %v6594
    %v7002 = vunpack.c.h.b16 %v6594
    %v7003 = vunpack.c.l.b16 %v6595
    %v7004 = vunpack.c.h.b16 %v6595
    %v7005 = vunpack.c.l.b16 %v6596
    %v7006 = vunpack.c.h.b16 %v6596
    %v7007 = vunpack.c.l.b16 %v6597
    %v7008 = vunpack.c.h.b16 %v6597
    %v7009 = vunpack.c.l.b16 %v6598
    %v7010 = vunpack.c.h.b16 %v6598
    %v7011 = vunpack.c.l.b16 %v6599
    %v7012 = vunpack.c.h.b16 %v6599
    %v7013 = vunpack.c.l.b16 %v6600
    %v7014 = vunpack.c.h.b16 %v6600
    %v7015 = vunpack.c.l.b16 %v6601
    %v7016 = vunpack.c.h.b16 %v6601
    %v7017 = vunpack.c.l.b16 %v6602
    %v7018 = vunpack.c.h.b16 %v6602
    %v7019 = vunpack.c.l.b16 %v6603
    %v7020 = vunpack.c.h.b16 %v6603
    %v7021 = vunpack.c.l.b16 %v6604
    %v7022 = vunpack.c.h.b16 %v6604
    %v7023 = vunpack.c.l.b16 %v6605
    %v7024 = vunpack.c.h.b16 %v6605
    %v7025 = vunpack.c.l.b16 %v6606
    %v7026 = vunpack.c.h.b16 %v6606
    %v7027 = vunpack.c.l.b16 %v6607
    %v7028 = vunpack.c.h.b16 %v6607
    %v7029 = vunpack.c.l.b16 %v6608
    %v7030 = vunpack.c.h.b16 %v6608
    %v7031 = vunpack.c.l.b16 %v6609
    %v7032 = vunpack.c.h.b16 %v6609
    %v7033 = vunpack.c.l.b16 %v6610
    %v7034 = vunpack.c.h.b16 %v6610
    %v7035 = vunpack.c.l.b16 %v6611
    %v7036 = vunpack.c.h.b16 %v6611
    %v7037 = vunpack.c.l.b16 %v6612
    %v7038 = vunpack.c.h.b16 %v6612
    %v7039 = vunpack.c.l.b16 %v6613
    %v7040 = vunpack.c.h.b16 %v6613
    %v7041 = vunpack.c.l.b16 %v6614
    %v7042 = vunpack.c.h.b16 %v6614
    %v7043 = vunpack.c.l.b16 %v6615
    %v7044 = vunpack.c.h.b16 %v6615
    %v7045 = vunpack.c.l.b16 %v6616
    %v7046 = vunpack.c.h.b16 %v6616
    %v7047 = vunpack.c.l.b16 %v6617
    %v7048 = vunpack.c.h.b16 %v6617
    %v7049 = vunpack.c.l.b16 %v6618
    %v7050 = vunpack.c.h.b16 %v6618
    %v7051 = vunpack.c.l.b16 %v6619
    %v7052 = vunpack.c.h.b16 %v6619
    %v7053 = vunpack.c.l.b16 %v6620
    %v7054 = vunpack.c.h.b16 %v6620
    %v7055 = vunpack.c.l.b16 %v6621
    %v7056 = vunpack.c.h.b16 %v6621
    %v7057 = vpack.c.b16 %v6787, %v6769
    %v7058 = vpack.c.b16 %v6788, %v6770
    %v7059 = vpack.c.b16 %v6789, %v6771
    %v7060 = vpack.c.b16 %v6790, %v6772
    %v7061 = vpack.c.b16 %v6791, %v6773
    %v7062 = vpack.c.b16 %v6792, %v6774
    %v7063 = vpack.c.b16 %v6793, %v6775
    %v7064 = vpack.c.b16 %v6794, %v6776
    %v7065 = vpack.c.b16 %v6795, %v6777
    %v7066 = vpack.c.b16 %v6796, %v6778
    %v7067 = vpack.c.b16 %v6797, %v6779
    %v7068 = vpack.c.b16 %v6798, %v6780
    %v7069 = vpack.c.b16 %v6799, %v6781
    %v7070 = vpack.c.b16 %v6800, %v6782
    %v7071 = vpack.c.b16 %v6801, %v6783
    %v7072 = vpack.c.b16 %v6802, %v6784
    %v7073 = vpack.c.b16 %v6803, %v6785
    %v7074 = vpack.c.b16 %v6804, %v6786
    %v7075 = vpack.c.b16 %v6823, %v6805
    %v7076 = vpack.c.b16 %v6824, %v6806
    %v7077 = vpack.c.b16 %v6825, %v6807
    %v7078 = vpack.c.b16 %v6826, %v6808
    %v7079 = vpack.c.b16 %v6827, %v6809
    %v7080 = vpack.c.b16 %v6828, %v6810
    %v7081 = vpack.c.b16 %v6829, %v6811
    %v7082 = vpack.c.b16 %v6830, %v6812
    %v7083 = vpack.c.b16 %v6831, %v6813
    %v7084 = vpack.c.b16 %v6832, %v6814
    %v7085 = vpack.c.b16 %v6833, %v6815
    %v7086 = vpack.c.b16 %v6834, %v6816
    %v7087 = vpack.c.b16 %v6835, %v6817
    %v7088 = vpack.c.b16 %v6836, %v6818
    %v7089 = vpack.c.b16 %v6837, %v6819
    %v7090 = vpack.c.b16 %v6838, %v6820
    %v7091 = vpack.c.b16 %v6839, %v6821
    %v7092 = vpack.c.b16 %v6840, %v6822
    %v7093 = vpack.c.b16 %v6859, %v6841
    %v7094 = vpack.c.b16 %v6860, %v6842
    %v7095 = vpack.c.b16 %v6861, %v6843
    %v7096 = vpack.c.b16 %v6862, %v6844
    %v7097 = vpack.c.b16 %v6863, %v6845
    %v7098 = vpack.c.b16 %v6864, %v6846
    %v7099 = vpack.c.b16 %v6865, %v6847
    %v7100 = vpack.c.b16 %v6866, %v6848
    %v7101 = vpack.c.b16 %v6867, %v6849
    %v7102 = vpack.c.b16 %v6868, %v6850
    %v7103 = vpack.c.b16 %v6869, %v6851
    %v7104 = vpack.c.b16 %v6870, %v6852
    %v7105 = vpack.c.b16 %v6871, %v6853
    %v7106 = vpack.c.b16 %v6872, %v6854
    %v7107 = vpack.c.b16 %v6873, %v6855
    %v7108 = vpack.c.b16 %v6874, %v6856
    %v7109 = vpack.c.b16 %v6875, %v6857
    %v7110 = vpack.c.b16 %v6876, %v6858
    %v7111 = vpack.c.b16 %v6895, %v6877
    %v7112 = vpack.c.b16 %v6896, %v6878
    %v7113 = vpack.c.b16 %v6897, %v6879
    %v7114 = vpack.c.b16 %v6898, %v6880
    %v7115 = vpack.c.b16 %v6899, %v6881
    %v7116 = vpack.c.b16 %v6900, %v6882
    %v7117 = vpack.c.b16 %v6901, %v6883
    %v7118 = vpack.c.b16 %v6902, %v6884
    %v7119 = vpack.c.b16 %v6903, %v6885
    %v7120 = vpack.c.b16 %v6904, %v6886
    %v7121 = vpack.c.b16 %v6905, %v6887
    %v7122 = vpack.c.b16 %v6906, %v6888
    %v7123 = vpack.c.b16 %v6907, %v6889
    %v7124 = vpack.c.b16 %v6908, %v6890
    %v7125 = vpack.c.b16 %v6909, %v6891
    %v7126 = vpack.c.b16 %v6910, %v6892
    %v7127 = vpack.c.b16 %v6911, %v6893
    %v7128 = vpack.c.b16 %v6912, %v6894
    %v7129 = vpack.c.b16 %v6931, %v6913
    %v7130 = vpack.c.b16 %v6932, %v6914
    %v7131 = vpack.c.b16 %v6933, %v6915
    %v7132 = vpack.c.b16 %v6934, %v6916
    %v7133 = vpack.c.b16 %v6935, %v6917
    %v7134 = vpack.c.b16 %v6936, %v6918
    %v7135 = vpack.c.b16 %v6937, %v6919
    %v7136 = vpack.c.b16 %v6938, %v6920
    %v7137 = vpack.c.b16 %v6939, %v6921
    %v7138 = vpack.c.b16 %v6940, %v6922
    %v7139 = vpack.c.b16 %v6941, %v6923
    %v7140 = vpack.c.b16 %v6942, %v6924
    %v7141 = vpack.c.b16 %v6943, %v6925
    %v7142 = vpack.c.b16 %v6944, %v6926
    %v7143 = vpack.c.b16 %v6945, %v6927
    %v7144 = vpack.c.b16 %v6946, %v6928
    %v7145 = vpack.c.b16 %v6947, %v6929
    %v7146 = vpack.c.b16 %v6948, %v6930
    %v7147 = vpack.c.b16 %v6967, %v6949
    %v7148 = vpack.c.b16 %v6968, %v6950
    %v7149 = vpack.c.b16 %v6969, %v6951
    %v7150 = vpack.c.b16 %v6970, %v6952
    %v7151 = vpack.c.b16 %v6971, %v6953
    %v7152 = vpack.c.b16 %v6972, %v6954
    %v7153 = vpack.c.b16 %v6973, %v6955
    %v7154 = vpack.c.b16 %v6974, %v6956
    %v7155 = vpack.c.b16 %v6975, %v6957
    %v7156 = vpack.c.b16 %v6976, %v6958
    %v7157 = vpack.c.b16 %v6977, %v6959
    %v7158 = vpack.c.b16 %v6978, %v6960
    %v7159 = vpack.c.b16 %v6979, %v6961
    %v7160 = vpack.c.b16 %v6980, %v6962
    %v7161 = vpack.c.b16 %v6981, %v6963
    %v7162 = vpack.c.b16 %v6982, %v6964
    %v7163 = vpack.c.b16 %v6983, %v6965
    %v7164 = vpack.c.b16 %v6984, %v6966
    %v7165 = vpack.c.b16 %v7003, %v6985
    %v7166 = vpack.c.b16 %v7004, %v6986
    %v7167 = vpack.c.b16 %v7005, %v6987
    %v7168 = vpack.c.b16 %v7006, %v6988
    %v7169 = vpack.c.b16 %v7007, %v6989
    %v7170 = vpack.c.b16 %v7008, %v6990
    %v7171 = vpack.c.b16 %v7009, %v6991
    %v7172 = vpack.c.b16 %v7010, %v6992
    %v7173 = vpack.c.b16 %v7011, %v6993
    %v7174 = vpack.c.b16 %v7012, %v6994
    %v7175 = vpack.c.b16 %v7013, %v6995
    %v7176 = vpack.c.b16 %v7014, %v6996
    %v7177 = vpack.c.b16 %v7015, %v6997
    %v7178 = vpack.c.b16 %v7016, %v6998
    %v7179 = vpack.c.b16 %v7017, %v6999
    %v7180 = vpack.c.b16 %v7018, %v7000
    %v7181 = vpack.c.b16 %v7019, %v7001
    %v7182 = vpack.c.b16 %v7020, %v7002
    %v7183 = vpack.c.b16 %v7039, %v7021
    %v7184 = vpack.c.b16 %v7040, %v7022
    %v7185 = vpack.c.b16 %v7041, %v7023
    %v7186 = vpack.c.b16 %v7042, %v7024
    %v7187 = vpack.c.b16 %v7043, %v7025
    %v7188 = vpack.c.b16 %v7044, %v7026
    %v7189 = vpack.c.b16 %v7045, %v7027
    %v7190 = vpack.c.b16 %v7046, %v7028
    %v7191 = vpack.c.b16 %v7047, %v7029
    %v7192 = vpack.c.b16 %v7048, %v7030
    %v7193 = vpack.c.b16 %v7049, %v7031
    %v7194 = vpack.c.b16 %v7050, %v7032
    %v7195 = vpack.c.b16 %v7051, %v7033
    %v7196 = vpack.c.b16 %v7052, %v7034
    %v7197 = vpack.c.b16 %v7053, %v7035
    %v7198 = vpack.c.b16 %v7054, %v7036
    %v7199 = vpack.c.b16 %v7055, %v7037
    %v7200 = vpack.c.b16 %v7056, %v7038
    %7345 = vmatprep.subr.bf16.mxu0 %v7058
    %7346 = vmatpush1.bf16.msra.mxu0 %v7057
    %7347 = vmatprep.subr.bf16.mxu0 %v7076
    %7348 = vmatpush1.bf16.msra.mxu0 %v7075
    %7349 = vmatprep.subr.bf16.mxu0 %v7094
    %7350 = vmatpush1.bf16.msra.mxu0 %v7093
    %7351 = vmatprep.subr.bf16.mxu0 %v7112
    %7352 = vmatpush1.bf16.msra.mxu0 %v7111
    %7353 = vmatprep.subr.bf16.mxu0 %v7130
    %7354 = vmatpush1.bf16.msra.mxu0 %v7129
    %7355 = vmatprep.subr.bf16.mxu0 %v7148
    %7356 = vmatpush1.bf16.msra.mxu0 %v7147
    %7357 = vmatprep.subr.bf16.mxu0 %v7166
    %7358 = vmatpush1.bf16.msra.mxu0 %v7165
    %7359 = vmatprep.subr.bf16.mxu0 %v7184
    %7360 = vmatpush1.bf16.msra.mxu0 %v7183
    %7361 = vmatprep.subr.bf16.mxu0 0
    %7362 = vmatpush1.bf16.msra.mxu0 0
    %7363 = vmatprep.subr.bf16.mxu0 0
    %7364 = vmatpush1.bf16.msra.mxu0 0
    %7365 = vmatprep.subr.bf16.mxu0 0
    %7366 = vmatpush1.bf16.msra.mxu0 0
    %7367 = vmatprep.subr.bf16.mxu0 0
    %7368 = vmatpush1.bf16.msra.mxu0 0
    %7369 = vmatprep.subr.bf16.mxu0 0
    %7370 = vmatpush1.bf16.msra.mxu0 0
    %7371 = vmatprep.subr.bf16.mxu0 0
    %7372 = vmatpush1.bf16.msra.mxu0 0
    %7373 = vmatprep.subr.bf16.mxu0 0
    %7374 = vmatpush1.bf16.msra.mxu0 0
    %7375 = vmatprep.subr.bf16.mxu0 0
    %7376 = vmatpush1.bf16.msra.mxu0 0
    %7377 = vmatprep.mubr.bf16.mxu0 0
    %7378 = vmatmul.mubr.bf16.gmra.mrb[0].mxu0 %v6623
    %v7379 = vpop.f32.mrb[0].mxu0
    %v7380 = vadd.f32 0.0, %v7379
    %v7381 = vpop.f32.mrb[0].mxu0
    %v7382 = vadd.f32 0.0, %v7381
    %v7383 = vpop.f32.mrb[0].mxu0
    %v7384 = vadd.f32 0.0, %v7383
    %v7385 = vpop.f32.mrb[0].mxu0
    %v7386 = vadd.f32 0.0, %v7385
    %7387 = vmatprep.mubr.bf16.mxu0 0
    %7388 = vmatmul.mubr.bf16.gmra.mrb[0].mxu0 %v6624
    %v7389 = vpop.f32.mrb[0].mxu0
    %v7390 = vadd.f32 0.0, %v7389
    %v7391 = vpop.f32.mrb[0].mxu0
    %v7392 = vadd.f32 0.0, %v7391
    %v7393 = vpop.f32.mrb[0].mxu0
    %v7394 = vadd.f32 0.0, %v7393
    %v7395 = vpop.f32.mrb[0].mxu0
    %v7396 = vadd.f32 0.0, %v7395
    %7397 = vdwg.mxu0
    %7398 = vmatprep.subr.bf16.mxu0 %v7060
    %7399 = vmatpush1.bf16.msra.mxu0 %v7059
    %7400 = vmatprep.subr.bf16.mxu0 %v7078
    %7401 = vmatpush1.bf16.msra.mxu0 %v7077
    %7402 = vmatprep.subr.bf16.mxu0 %v7096
    %7403 = vmatpush1.bf16.msra.mxu0 %v7095
    %7404 = vmatprep.subr.bf16.mxu0 %v7114
    %7405 = vmatpush1.bf16.msra.mxu0 %v7113
    %7406 = vmatprep.subr.bf16.mxu0 %v7132
    %7407 = vmatpush1.bf16.msra.mxu0 %v7131
    %7408 = vmatprep.subr.bf16.mxu0 %v7150
    %7409 = vmatpush1.bf16.msra.mxu0 %v7149
    %7410 = vmatprep.subr.bf16.mxu0 %v7168
    %7411 = vmatpush1.bf16.msra.mxu0 %v7167
    %7412 = vmatprep.subr.bf16.mxu0 %v7186
    %7413 = vmatpush1.bf16.msra.mxu0 %v7185
    %7414 = vmatprep.subr.bf16.mxu0 0
    %7415 = vmatpush1.bf16.msra.mxu0 0
    %7416 = vmatprep.subr.bf16.mxu0 0
    %7417 = vmatpush1.bf16.msra.mxu0 0
    %7418 = vmatprep.subr.bf16.mxu0 0
    %7419 = vmatpush1.bf16.msra.mxu0 0
    %7420 = vmatprep.subr.bf16.mxu0 0
    %7421 = vmatpush1.bf16.msra.mxu0 0
    %7422 = vmatprep.subr.bf16.mxu0 0
    %7423 = vmatpush1.bf16.msra.mxu0 0
    %7424 = vmatprep.subr.bf16.mxu0 0
    %7425 = vmatpush1.bf16.msra.mxu0 0
    %7426 = vmatprep.subr.bf16.mxu0 0
    %7427 = vmatpush1.bf16.msra.mxu0 0
    %7428 = vmatprep.subr.bf16.mxu0 0
    %7429 = vmatpush1.bf16.msra.mxu0 0
    %7430 = vmatprep.mubr.bf16.mxu0 0
    %7431 = vmatmul.mubr.bf16.gmra.mrb[0].mxu0 %v6623
    %v7432 = vpop.f32.mrb[0].mxu0
    %v7433 = vadd.f32 0.0, %v7432
    %v7434 = vpop.f32.mrb[0].mxu0
    %v7435 = vadd.f32 0.0, %v7434
    %v7436 = vpop.f32.mrb[0].mxu0
    %v7437 = vadd.f32 0.0, %v7436
    %v7438 = vpop.f32.mrb[0].mxu0
    %v7439 = vadd.f32 0.0, %v7438
    %7440 = vmatprep.mubr.bf16.mxu0 0
    %7441 = vmatmul.mubr.bf16.gmra.mrb[0].mxu0 %v6624
    %v7442 = vpop.f32.mrb[0].mxu0
    %v7443 = vadd.f32 0.0, %v7442
    %v7444 = vpop.f32.mrb[0].mxu0
    %v7445 = vadd.f32 0.0, %v7444
    %v7446 = vpop.f32.mrb[0].mxu0
    %v7447 = vadd.f32 0.0, %v7446
    %v7448 = vpop.f32.mrb[0].mxu0
    %v7449 = vadd.f32 0.0, %v7448
    %7450 = vdwg.mxu0
    %7451 = vmatprep.subr.bf16.mxu0 %v7062
    %7452 = vmatpush1.bf16.msra.mxu0 %v7061
    %7453 = vmatprep.subr.bf16.mxu0 %v7080
    %7454 = vmatpush1.bf16.msra.mxu0 %v7079
    %7455 = vmatprep.subr.bf16.mxu0 %v7098
    %7456 = vmatpush1.bf16.msra.mxu0 %v7097
    %7457 = vmatprep.subr.bf16.mxu0 %v7116
    %7458 = vmatpush1.bf16.msra.mxu0 %v7115
    %7459 = vmatprep.subr.bf16.mxu0 %v7134
    %7460 = vmatpush1.bf16.msra.mxu0 %v7133
    %7461 = vmatprep.subr.bf16.mxu0 %v7152
    %7462 = vmatpush1.bf16.msra.mxu0 %v7151
    %7463 = vmatprep.subr.bf16.mxu0 %v7170
    %7464 = vmatpush1.bf16.msra.mxu0 %v7169
    %7465 = vmatprep.subr.bf16.mxu0 %v7188
    %7466 = vmatpush1.bf16.msra.mxu0 %v7187
    %7467 = vmatprep.subr.bf16.mxu0 0
    %7468 = vmatpush1.bf16.msra.mxu0 0
    %7469 = vmatprep.subr.bf16.mxu0 0
    %7470 = vmatpush1.bf16.msra.mxu0 0
    %7471 = vmatprep.subr.bf16.mxu0 0
    %7472 = vmatpush1.bf16.msra.mxu0 0
    %7473 = vmatprep.subr.bf16.mxu0 0
    %7474 = vmatpush1.bf16.msra.mxu0 0
    %7475 = vmatprep.subr.bf16.mxu0 0
    %7476 = vmatpush1.bf16.msra.mxu0 0
    %7477 = vmatprep.subr.bf16.mxu0 0
    %7478 = vmatpush1.bf16.msra.mxu0 0
    %7479 = vmatprep.subr.bf16.mxu0 0
    %7480 = vmatpush1.bf16.msra.mxu0 0
    %7481 = vmatprep.subr.bf16.mxu0 0
    %7482 = vmatpush1.bf16.msra.mxu0 0
    %7483 = vmatprep.mubr.bf16.mxu0 0
    %7484 = vmatmul.mubr.bf16.gmra.mrb[0].mxu0 %v6623
    %v7485 = vpop.f32.mrb[0].mxu0
    %v7486 = vadd.f32 0.0, %v7485
    %v7487 = vpop.f32.mrb[0].mxu0
    %v7488 = vadd.f32 0.0, %v7487
    %v7489 = vpop.f32.mrb[0].mxu0
    %v7490 = vadd.f32 0.0, %v7489
    %v7491 = vpop.f32.mrb[0].mxu0
    %v7492 = vadd.f32 0.0, %v7491
    %7493 = vmatprep.mubr.bf16.mxu0 0
    %7494 = vmatmul.mubr.bf16.gmra.mrb[0].mxu0 %v6624
    %v7495 = vpop.f32.mrb[0].mxu0
    %v7496 = vadd.f32 0.0, %v7495
    %v7497 = vpop.f32.mrb[0].mxu0
    %v7498 = vadd.f32 0.0, %v7497
    %v7499 = vpop.f32.mrb[0].mxu0
    %v7500 = vadd.f32 0.0, %v7499
    %v7501 = vpop.f32.mrb[0].mxu0
    %v7502 = vadd.f32 0.0, %v7501
    %7503 = vdwg.mxu0
    %7504 = vmatprep.subr.bf16.mxu0 %v7064
    %7505 = vmatpush1.bf16.msra.mxu0 %v7063
    %7506 = vmatprep.subr.bf16.mxu0 %v7082
    %7507 = vmatpush1.bf16.msra.mxu0 %v7081
    %7508 = vmatprep.subr.bf16.mxu0 %v7100
    %7509 = vmatpush1.bf16.msra.mxu0 %v7099
    %7510 = vmatprep.subr.bf16.mxu0 %v7118
    %7511 = vmatpush1.bf16.msra.mxu0 %v7117
    %7512 = vmatprep.subr.bf16.mxu0 %v7136
    %7513 = vmatpush1.bf16.msra.mxu0 %v7135
    %7514 = vmatprep.subr.bf16.mxu0 %v7154
    %7515 = vmatpush1.bf16.msra.mxu0 %v7153
    %7516 = vmatprep.subr.bf16.mxu0 %v7172
    %7517 = vmatpush1.bf16.msra.mxu0 %v7171
    %7518 = vmatprep.subr.bf16.mxu0 %v7190
    %7519 = vmatpush1.bf16.msra.mxu0 %v7189
    %7520 = vmatprep.subr.bf16.mxu0 0
    %7521 = vmatpush1.bf16.msra.mxu0 0
    %7522 = vmatprep.subr.bf16.mxu0 0
    %7523 = vmatpush1.bf16.msra.mxu0 0
    %7524 = vmatprep.subr.bf16.mxu0 0
    %7525 = vmatpush1.bf16.msra.mxu0 0
    %7526 = vmatprep.subr.bf16.mxu0 0
    %7527 = vmatpush1.bf16.msra.mxu0 0
    %7528 = vmatprep.subr.bf16.mxu0 0
    %7529 = vmatpush1.bf16.msra.mxu0 0
    %7530 = vmatprep.subr.bf16.mxu0 0
    %7531 = vmatpush1.bf16.msra.mxu0 0
    %7532 = vmatprep.subr.bf16.mxu0 0
    %7533 = vmatpush1.bf16.msra.mxu0 0
    %7534 = vmatprep.subr.bf16.mxu0 0
    %7535 = vmatpush1.bf16.msra.mxu0 0
    %7536 = vmatprep.mubr.bf16.mxu0 0
    %7537 = vmatmul.mubr.bf16.gmra.mrb[0].mxu0 %v6623
    %v7538 = vpop.f32.mrb[0].mxu0
    %v7539 = vadd.f32 0.0, %v7538
    %v7540 = vpop.f32.mrb[0].mxu0
    %v7541 = vadd.f32 0.0, %v7540
    %v7542 = vpop.f32.mrb[0].mxu0
    %v7543 = vadd.f32 0.0, %v7542
    %v7544 = vpop.f32.mrb[0].mxu0
    %v7545 = vadd.f32 0.0, %v7544
    %7546 = vmatprep.mubr.bf16.mxu0 0
    %7547 = vmatmul.mubr.bf16.gmra.mrb[0].mxu0 %v6624
    %v7548 = vpop.f32.mrb[0].mxu0
    %v7549 = vadd.f32 0.0, %v7548
    %v7550 = vpop.f32.mrb[0].mxu0
    %v7551 = vadd.f32 0.0, %v7550
    %v7552 = vpop.f32.mrb[0].mxu0
    %v7553 = vadd.f32 0.0, %v7552
    %v7554 = vpop.f32.mrb[0].mxu0
    %v7555 = vadd.f32 0.0, %v7554
    %7556 = vdwg.mxu0
    %7557 = vmatprep.subr.bf16.mxu0 %v7066
    %7558 = vmatpush1.bf16.msra.mxu0 %v7065
    %7559 = vmatprep.subr.bf16.mxu0 %v7084
    %7560 = vmatpush1.bf16.msra.mxu0 %v7083
    %7561 = vmatprep.subr.bf16.mxu0 %v7102
    %7562 = vmatpush1.bf16.msra.mxu0 %v7101
    %7563 = vmatprep.subr.bf16.mxu0 %v7120
    %7564 = vmatpush1.bf16.msra.mxu0 %v7119
    %7565 = vmatprep.subr.bf16.mxu0 %v7138
    %7566 = vmatpush1.bf16.msra.mxu0 %v7137
    %7567 = vmatprep.subr.bf16.mxu0 %v7156
    %7568 = vmatpush1.bf16.msra.mxu0 %v7155
    %7569 = vmatprep.subr.bf16.mxu0 %v7174
    %7570 = vmatpush1.bf16.msra.mxu0 %v7173
    %7571 = vmatprep.subr.bf16.mxu0 %v7192
    %7572 = vmatpush1.bf16.msra.mxu0 %v7191
    %7573 = vmatprep.subr.bf16.mxu0 0
    %7574 = vmatpush1.bf16.msra.mxu0 0
    %7575 = vmatprep.subr.bf16.mxu0 0
    %7576 = vmatpush1.bf16.msra.mxu0 0
    %7577 = vmatprep.subr.bf16.mxu0 0
    %7578 = vmatpush1.bf16.msra.mxu0 0
    %7579 = vmatprep.subr.bf16.mxu0 0
    %7580 = vmatpush1.bf16.msra.mxu0 0
    %7581 = vmatprep.subr.bf16.mxu0 0
    %7582 = vmatpush1.bf16.msra.mxu0 0
    %7583 = vmatprep.subr.bf16.mxu0 0
    %7584 = vmatpush1.bf16.msra.mxu0 0
    %7585 = vmatprep.subr.bf16.mxu0 0
    %7586 = vmatpush1.bf16.msra.mxu0 0
    %7587 = vmatprep.subr.bf16.mxu0 0
    %7588 = vmatpush1.bf16.msra.mxu0 0
    %7589 = vmatprep.mubr.bf16.mxu0 0
    %7590 = vmatmul.mubr.bf16.gmra.mrb[0].mxu0 %v6623
    %v7591 = vpop.f32.mrb[0].mxu0
    %v7592 = vadd.f32 0.0, %v7591
    %v7593 = vpop.f32.mrb[0].mxu0
    %v7594 = vadd.f32 0.0, %v7593
    %v7595 = vpop.f32.mrb[0].mxu0
    %v7596 = vadd.f32 0.0, %v7595
    %v7597 = vpop.f32.mrb[0].mxu0
    %v7598 = vadd.f32 0.0, %v7597
    %7599 = vmatprep.mubr.bf16.mxu0 0
    %7600 = vmatmul.mubr.bf16.gmra.mrb[0].mxu0 %v6624
    %v7601 = vpop.f32.mrb[0].mxu0
    %v7602 = vadd.f32 0.0, %v7601
    %v7603 = vpop.f32.mrb[0].mxu0
    %v7604 = vadd.f32 0.0, %v7603
    %v7605 = vpop.f32.mrb[0].mxu0
    %v7606 = vadd.f32 0.0, %v7605
    %v7607 = vpop.f32.mrb[0].mxu0
    %v7608 = vadd.f32 0.0, %v7607
    %7609 = vdwg.mxu0
    %7610 = vmatprep.subr.bf16.mxu0 %v7068
    %7611 = vmatpush1.bf16.msra.mxu0 %v7067
    %7612 = vmatprep.subr.bf16.mxu0 %v7086
    %7613 = vmatpush1.bf16.msra.mxu0 %v7085
    %7614 = vmatprep.subr.bf16.mxu0 %v7104
    %7615 = vmatpush1.bf16.msra.mxu0 %v7103
    %7616 = vmatprep.subr.bf16.mxu0 %v7122
    %7617 = vmatpush1.bf16.msra.mxu0 %v7121
    %7618 = vmatprep.subr.bf16.mxu0 %v7140
    %7619 = vmatpush1.bf16.msra.mxu0 %v7139
    %7620 = vmatprep.subr.bf16.mxu0 %v7158
    %7621 = vmatpush1.bf16.msra.mxu0 %v7157
    %7622 = vmatprep.subr.bf16.mxu0 %v7176
    %7623 = vmatpush1.bf16.msra.mxu0 %v7175
    %7624 = vmatprep.subr.bf16.mxu0 %v7194
    %7625 = vmatpush1.bf16.msra.mxu0 %v7193
    %7626 = vmatprep.subr.bf16.mxu0 0
    %7627 = vmatpush1.bf16.msra.mxu0 0
    %7628 = vmatprep.subr.bf16.mxu0 0
    %7629 = vmatpush1.bf16.msra.mxu0 0
    %7630 = vmatprep.subr.bf16.mxu0 0
    %7631 = vmatpush1.bf16.msra.mxu0 0
    %7632 = vmatprep.subr.bf16.mxu0 0
    %7633 = vmatpush1.bf16.msra.mxu0 0
    %7634 = vmatprep.subr.bf16.mxu0 0
    %7635 = vmatpush1.bf16.msra.mxu0 0
    %7636 = vmatprep.subr.bf16.mxu0 0
    %7637 = vmatpush1.bf16.msra.mxu0 0
    %7638 = vmatprep.subr.bf16.mxu0 0
    %7639 = vmatpush1.bf16.msra.mxu0 0
    %7640 = vmatprep.subr.bf16.mxu0 0
    %7641 = vmatpush1.bf16.msra.mxu0 0
    %7642 = vmatprep.mubr.bf16.mxu0 0
    %7643 = vmatmul.mubr.bf16.gmra.mrb[0].mxu0 %v6623
    %v7644 = vpop.f32.mrb[0].mxu0
    %v7645 = vadd.f32 0.0, %v7644
    %v7646 = vpop.f32.mrb[0].mxu0
    %v7647 = vadd.f32 0.0, %v7646
    %v7648 = vpop.f32.mrb[0].mxu0
    %v7649 = vadd.f32 0.0, %v7648
    %v7650 = vpop.f32.mrb[0].mxu0
    %v7651 = vadd.f32 0.0, %v7650
    %7652 = vmatprep.mubr.bf16.mxu0 0
    %7653 = vmatmul.mubr.bf16.gmra.mrb[0].mxu0 %v6624
    %v7654 = vpop.f32.mrb[0].mxu0
    %v7655 = vadd.f32 0.0, %v7654
    %v7656 = vpop.f32.mrb[0].mxu0
    %v7657 = vadd.f32 0.0, %v7656
    %v7658 = vpop.f32.mrb[0].mxu0
    %v7659 = vadd.f32 0.0, %v7658
    %v7660 = vpop.f32.mrb[0].mxu0
    %v7661 = vadd.f32 0.0, %v7660
    %7662 = vdwg.mxu0
    %7663 = vmatprep.subr.bf16.mxu0 %v7070
    %7664 = vmatpush1.bf16.msra.mxu0 %v7069
    %7665 = vmatprep.subr.bf16.mxu0 %v7088
    %7666 = vmatpush1.bf16.msra.mxu0 %v7087
    %7667 = vmatprep.subr.bf16.mxu0 %v7106
    %7668 = vmatpush1.bf16.msra.mxu0 %v7105
    %7669 = vmatprep.subr.bf16.mxu0 %v7124
    %7670 = vmatpush1.bf16.msra.mxu0 %v7123
    %7671 = vmatprep.subr.bf16.mxu0 %v7142
    %7672 = vmatpush1.bf16.msra.mxu0 %v7141
    %7673 = vmatprep.subr.bf16.mxu0 %v7160
    %7674 = vmatpush1.bf16.msra.mxu0 %v7159
    %7675 = vmatprep.subr.bf16.mxu0 %v7178
    %7676 = vmatpush1.bf16.msra.mxu0 %v7177
    %7677 = vmatprep.subr.bf16.mxu0 %v7196
    %7678 = vmatpush1.bf16.msra.mxu0 %v7195
    %7679 = vmatprep.subr.bf16.mxu0 0
    %7680 = vmatpush1.bf16.msra.mxu0 0
    %7681 = vmatprep.subr.bf16.mxu0 0
    %7682 = vmatpush1.bf16.msra.mxu0 0
    %7683 = vmatprep.subr.bf16.mxu0 0
    %7684 = vmatpush1.bf16.msra.mxu0 0
    %7685 = vmatprep.subr.bf16.mxu0 0
    %7686 = vmatpush1.bf16.msra.mxu0 0
    %7687 = vmatprep.subr.bf16.mxu0 0
    %7688 = vmatpush1.bf16.msra.mxu0 0
    %7689 = vmatprep.subr.bf16.mxu0 0
    %7690 = vmatpush1.bf16.msra.mxu0 0
    %7691 = vmatprep.subr.bf16.mxu0 0
    %7692 = vmatpush1.bf16.msra.mxu0 0
    %7693 = vmatprep.subr.bf16.mxu0 0
    %7694 = vmatpush1.bf16.msra.mxu0 0
    %7695 = vmatprep.mubr.bf16.mxu0 0
    %7696 = vmatmul.mubr.bf16.gmra.mrb[0].mxu0 %v6623
    %v7697 = vpop.f32.mrb[0].mxu0
    %v7698 = vadd.f32 0.0, %v7697
    %v7699 = vpop.f32.mrb[0].mxu0
    %v7700 = vadd.f32 0.0, %v7699
    %v7701 = vpop.f32.mrb[0].mxu0
    %v7702 = vadd.f32 0.0, %v7701
    %v7703 = vpop.f32.mrb[0].mxu0
    %v7704 = vadd.f32 0.0, %v7703
    %7705 = vmatprep.mubr.bf16.mxu0 0
    %7706 = vmatmul.mubr.bf16.gmra.mrb[0].mxu0 %v6624
    %v7707 = vpop.f32.mrb[0].mxu0
    %v7708 = vadd.f32 0.0, %v7707
    %v7709 = vpop.f32.mrb[0].mxu0
    %v7710 = vadd.f32 0.0, %v7709
    %v7711 = vpop.f32.mrb[0].mxu0
    %v7712 = vadd.f32 0.0, %v7711
    %v7713 = vpop.f32.mrb[0].mxu0
    %v7714 = vadd.f32 0.0, %v7713
    %7715 = vdwg.mxu0
    %7716 = vmatprep.subr.bf16.mxu0 %v7072
    %7717 = vmatpush1.bf16.msra.mxu0 %v7071
    %7718 = vmatprep.subr.bf16.mxu0 %v7090
    %7719 = vmatpush1.bf16.msra.mxu0 %v7089
    %7720 = vmatprep.subr.bf16.mxu0 %v7108
    %7721 = vmatpush1.bf16.msra.mxu0 %v7107
    %7722 = vmatprep.subr.bf16.mxu0 %v7126
    %7723 = vmatpush1.bf16.msra.mxu0 %v7125
    %7724 = vmatprep.subr.bf16.mxu0 %v7144
    %7725 = vmatpush1.bf16.msra.mxu0 %v7143
    %7726 = vmatprep.subr.bf16.mxu0 %v7162
    %7727 = vmatpush1.bf16.msra.mxu0 %v7161
    %7728 = vmatprep.subr.bf16.mxu0 %v7180
    %7729 = vmatpush1.bf16.msra.mxu0 %v7179
    %7730 = vmatprep.subr.bf16.mxu0 %v7198
    %7731 = vmatpush1.bf16.msra.mxu0 %v7197
    %7732 = vmatprep.subr.bf16.mxu0 0
    %7733 = vmatpush1.bf16.msra.mxu0 0
    %7734 = vmatprep.subr.bf16.mxu0 0
    %7735 = vmatpush1.bf16.msra.mxu0 0
    %7736 = vmatprep.subr.bf16.mxu0 0
    %7737 = vmatpush1.bf16.msra.mxu0 0
    %7738 = vmatprep.subr.bf16.mxu0 0
    %7739 = vmatpush1.bf16.msra.mxu0 0
    %7740 = vmatprep.subr.bf16.mxu0 0
    %7741 = vmatpush1.bf16.msra.mxu0 0
    %7742 = vmatprep.subr.bf16.mxu0 0
    %7743 = vmatpush1.bf16.msra.mxu0 0
    %7744 = vmatprep.subr.bf16.mxu0 0
    %7745 = vmatpush1.bf16.msra.mxu0 0
    %7746 = vmatprep.subr.bf16.mxu0 0
    %7747 = vmatpush1.bf16.msra.mxu0 0
    %7748 = vmatprep.mubr.bf16.mxu0 0
    %7749 = vmatmul.mubr.bf16.gmra.mrb[0].mxu0 %v6623
    %v7750 = vpop.f32.mrb[0].mxu0
    %v7751 = vadd.f32 0.0, %v7750
    %v7752 = vpop.f32.mrb[0].mxu0
    %v7753 = vadd.f32 0.0, %v7752
    %v7754 = vpop.f32.mrb[0].mxu0
    %v7755 = vadd.f32 0.0, %v7754
    %v7756 = vpop.f32.mrb[0].mxu0
    %v7757 = vadd.f32 0.0, %v7756
    %7758 = vmatprep.mubr.bf16.mxu0 0
    %7759 = vmatmul.mubr.bf16.gmra.mrb[0].mxu0 %v6624
    %v7760 = vpop.f32.mrb[0].mxu0
    %v7761 = vadd.f32 0.0, %v7760
    %v7762 = vpop.f32.mrb[0].mxu0
    %v7763 = vadd.f32 0.0, %v7762
    %v7764 = vpop.f32.mrb[0].mxu0
    %v7765 = vadd.f32 0.0, %v7764
    %v7766 = vpop.f32.mrb[0].mxu0
    %v7767 = vadd.f32 0.0, %v7766
    %7768 = vdwg.mxu0
    %7769 = vmatprep.subr.bf16.mxu0 %v7074
    %7770 = vmatpush1.bf16.msra.mxu0 %v7073
    %7771 = vmatprep.subr.bf16.mxu0 %v7092
    %7772 = vmatpush1.bf16.msra.mxu0 %v7091
    %7773 = vmatprep.subr.bf16.mxu0 %v7110
    %7774 = vmatpush1.bf16.msra.mxu0 %v7109
    %7775 = vmatprep.subr.bf16.mxu0 %v7128
    %7776 = vmatpush1.bf16.msra.mxu0 %v7127
    %7777 = vmatprep.subr.bf16.mxu0 %v7146
    %7778 = vmatpush1.bf16.msra.mxu0 %v7145
    %7779 = vmatprep.subr.bf16.mxu0 %v7164
    %7780 = vmatpush1.bf16.msra.mxu0 %v7163
    %7781 = vmatprep.subr.bf16.mxu0 %v7182
    %7782 = vmatpush1.bf16.msra.mxu0 %v7181
    %7783 = vmatprep.subr.bf16.mxu0 %v7200
    %7784 = vmatpush1.bf16.msra.mxu0 %v7199
    %7785 = vmatprep.subr.bf16.mxu0 0
    %7786 = vmatpush1.bf16.msra.mxu0 0
    %7787 = vmatprep.subr.bf16.mxu0 0
    %7788 = vmatpush1.bf16.msra.mxu0 0
    %7789 = vmatprep.subr.bf16.mxu0 0
    %7790 = vmatpush1.bf16.msra.mxu0 0
    %7791 = vmatprep.subr.bf16.mxu0 0
    %7792 = vmatpush1.bf16.msra.mxu0 0
    %7793 = vmatprep.subr.bf16.mxu0 0
    %7794 = vmatpush1.bf16.msra.mxu0 0
    %7795 = vmatprep.subr.bf16.mxu0 0
    %7796 = vmatpush1.bf16.msra.mxu0 0
    %7797 = vmatprep.subr.bf16.mxu0 0
    %7798 = vmatpush1.bf16.msra.mxu0 0
    %7799 = vmatprep.subr.bf16.mxu0 0
    %7800 = vmatpush1.bf16.msra.mxu0 0
    %7801 = vmatprep.mubr.bf16.mxu0 0
    %7802 = vmatmul.mubr.bf16.gmra.mrb[0].mxu0 %v6623
    %v7803 = vpop.f32.mrb[0].mxu0
    %v7804 = vadd.f32 0.0, %v7803
    %v7805 = vpop.f32.mrb[0].mxu0
    %v7806 = vadd.f32 0.0, %v7805
    %v7807 = vpop.f32.mrb[0].mxu0
    %v7808 = vadd.f32 0.0, %v7807
    %v7809 = vpop.f32.mrb[0].mxu0
    %v7810 = vadd.f32 0.0, %v7809
    %7811 = vmatprep.mubr.bf16.mxu0 0
    %7812 = vmatmul.mubr.bf16.gmra.mrb[0].mxu0 %v6624
    %v7813 = vpop.f32.mrb[0].mxu0
    %v7814 = vadd.f32 0.0, %v7813
    %v7815 = vpop.f32.mrb[0].mxu0
    %v7816 = vadd.f32 0.0, %v7815
    %v7817 = vpop.f32.mrb[0].mxu0
    %v7818 = vadd.f32 0.0, %v7817
    %v7819 = vpop.f32.mrb[0].mxu0
    %v7820 = vadd.f32 0.0, %v7819
    %7821 = vdwg.mxu0
    %v7822 = vrot.slane %v7380, 3
    %v7823 = vrot.slane %v7382, 3
    %v7824 = vrot.slane %v7384, 3
    %v7825 = vrot.slane %v7386, 3
    %v7826 = vrot.slane %v7390, 3
    %v7827 = vrot.slane %v7392, 3
    %v7828 = vrot.slane %v7394, 3
    %v7829 = vrot.slane %v7396, 3
    %v7830 = vsel %vm555, %v7826, %v7828
    %v7831 = vsel %vm555, %v7827, %v7829
    %v7832 = vsel %vm555, %v7824, %v7826
    %v7833 = vsel %vm555, %v7825, %v7827
    %v7834 = vsel %vm555, %v7822, %v7824
    %v7835 = vsel %vm555, %v7823, %v7825
    %v7836 = vsel %vm555, %v7828, %v7822
    %v7837 = vsel %vm555, %v7829, %v7823
    %v7838 = vmul.f32 %v7836, %v567
    %v7839 = vmul.f32 %v7837, %v567
    %v7840 = vmul.f32 %v7834, %v572
    %v7841 = vmul.f32 %v7835, %v572
    %v7842 = vmul.f32 %v7832, %v577
    %v7843 = vmul.f32 %v7833, %v577
    %v7844 = vmul.f32 %v7830, %v582
    %v7845 = vmul.f32 %v7831, %v582
    %v7846 = vadd.f32 %v7592, %v7838
    %v7847 = vadd.f32 %v7594, %v7839
    %v7848 = vadd.f32 %v7596, %v7840
    %v7849 = vadd.f32 %v7598, %v7841
    %v7850 = vadd.f32 %v7602, %v7842
    %v7851 = vadd.f32 %v7604, %v7843
    %v7852 = vadd.f32 %v7606, %v7844
    %v7853 = vadd.f32 %v7608, %v7845
    %v7854 = vrot.slane %v7433, 4
    %v7855 = vrot.slane %v7435, 4
    %v7856 = vrot.slane %v7437, 4
    %v7857 = vrot.slane %v7439, 4
    %v7858 = vrot.slane %v7443, 4
    %v7859 = vrot.slane %v7445, 4
    %v7860 = vrot.slane %v7447, 4
    %v7861 = vrot.slane %v7449, 4
    %v7862 = vsel %vm612, %v7858, %v7860
    %v7863 = vsel %vm612, %v7859, %v7861
    %v7864 = vsel %vm612, %v7856, %v7858
    %v7865 = vsel %vm612, %v7857, %v7859
    %v7866 = vsel %vm612, %v7854, %v7856
    %v7867 = vsel %vm612, %v7855, %v7857
    %v7868 = vsel %vm612, %v7860, %v7854
    %v7869 = vsel %vm612, %v7861, %v7855
    %v7870 = vmul.f32 %v7868, %v625
    %v7871 = vmul.f32 %v7869, %v625
    %v7872 = vmul.f32 %v7866, %v630
    %v7873 = vmul.f32 %v7867, %v630
    %v7874 = vmul.f32 %v7864, %v635
    %v7875 = vmul.f32 %v7865, %v635
    %v7876 = vmul.f32 %v7862, %v640
    %v7877 = vmul.f32 %v7863, %v640
    %v7878 = vadd.f32 %v7846, %v7870
    %v7879 = vadd.f32 %v7847, %v7871
    %v7880 = vadd.f32 %v7848, %v7872
    %v7881 = vadd.f32 %v7849, %v7873
    %v7882 = vadd.f32 %v7850, %v7874
    %v7883 = vadd.f32 %v7851, %v7875
    %v7884 = vadd.f32 %v7852, %v7876
    %v7885 = vadd.f32 %v7853, %v7877
    %v7886 = vrot.slane %v7486, 5
    %v7887 = vrot.slane %v7488, 5
    %v7888 = vrot.slane %v7490, 5
    %v7889 = vrot.slane %v7492, 5
    %v7890 = vrot.slane %v7496, 5
    %v7891 = vrot.slane %v7498, 5
    %v7892 = vrot.slane %v7500, 5
    %v7893 = vrot.slane %v7502, 5
    %v7894 = vsel %vm654, %v7890, %v7892
    %v7895 = vsel %vm654, %v7891, %v7893
    %v7896 = vsel %vm654, %v7888, %v7890
    %v7897 = vsel %vm654, %v7889, %v7891
    %v7898 = vsel %vm654, %v7886, %v7888
    %v7899 = vsel %vm654, %v7887, %v7889
    %v7900 = vsel %vm654, %v7892, %v7886
    %v7901 = vsel %vm654, %v7893, %v7887
    %v7902 = vmul.f32 %v7900, %v667
    %v7903 = vmul.f32 %v7901, %v667
    %v7904 = vmul.f32 %v7898, %v672
    %v7905 = vmul.f32 %v7899, %v672
    %v7906 = vmul.f32 %v7896, %v677
    %v7907 = vmul.f32 %v7897, %v677
    %v7908 = vmul.f32 %v7894, %v682
    %v7909 = vmul.f32 %v7895, %v682
    %v7910 = vadd.f32 %v7878, %v7902
    %v7911 = vadd.f32 %v7879, %v7903
    %v7912 = vadd.f32 %v7880, %v7904
    %v7913 = vadd.f32 %v7881, %v7905
    %v7914 = vadd.f32 %v7882, %v7906
    %v7915 = vadd.f32 %v7883, %v7907
    %v7916 = vadd.f32 %v7884, %v7908
    %v7917 = vadd.f32 %v7885, %v7909
    %v7918 = vrot.slane %v7539, 7
    %v7919 = vrot.slane %v7541, 7
    %v7920 = vrot.slane %v7543, 7
    %v7921 = vrot.slane %v7545, 7
    %v7922 = vrot.slane %v7549, 7
    %v7923 = vrot.slane %v7551, 7
    %v7924 = vrot.slane %v7553, 7
    %v7925 = vrot.slane %v7555, 7
    %v7926 = vsel %vm712, %v7922, %v7924
    %v7927 = vsel %vm712, %v7923, %v7925
    %v7928 = vsel %vm712, %v7920, %v7922
    %v7929 = vsel %vm712, %v7921, %v7923
    %v7930 = vsel %vm712, %v7918, %v7920
    %v7931 = vsel %vm712, %v7919, %v7921
    %v7932 = vsel %vm712, %v7924, %v7918
    %v7933 = vsel %vm712, %v7925, %v7919
    %v7934 = vmul.f32 %v7932, %v725
    %v7935 = vmul.f32 %v7933, %v725
    %v7936 = vmul.f32 %v7930, %v730
    %v7937 = vmul.f32 %v7931, %v730
    %v7938 = vmul.f32 %v7928, %v735
    %v7939 = vmul.f32 %v7929, %v735
    %v7940 = vmul.f32 %v7926, %v740
    %v7941 = vmul.f32 %v7927, %v740
    %v7942 = vadd.f32 %v7910, %v7934
    %v7943 = vadd.f32 %v7911, %v7935
    %v7944 = vadd.f32 %v7912, %v7936
    %v7945 = vadd.f32 %v7913, %v7937
    %v7946 = vadd.f32 %v7914, %v7938
    %v7947 = vadd.f32 %v7915, %v7939
    %v7948 = vadd.f32 %v7916, %v7940
    %v7949 = vadd.f32 %v7917, %v7941
    %v7950 = vrot.slane %v7645, 1
    %v7951 = vrot.slane %v7647, 1
    %v7952 = vrot.slane %v7649, 1
    %v7953 = vrot.slane %v7651, 1
    %v7954 = vrot.slane %v7655, 1
    %v7955 = vrot.slane %v7657, 1
    %v7956 = vrot.slane %v7659, 1
    %v7957 = vrot.slane %v7661, 1
    %v7958 = vsel %vm770, %v7954, %v7956
    %v7959 = vsel %vm770, %v7955, %v7957
    %v7960 = vsel %vm770, %v7952, %v7954
    %v7961 = vsel %vm770, %v7953, %v7955
    %v7962 = vsel %vm770, %v7950, %v7952
    %v7963 = vsel %vm770, %v7951, %v7953
    %v7964 = vsel %vm770, %v7956, %v7950
    %v7965 = vsel %vm770, %v7957, %v7951
    %v7966 = vmul.f32 %v7962, %v783
    %v7967 = vmul.f32 %v7963, %v783
    %v7968 = vmul.f32 %v7960, %v788
    %v7969 = vmul.f32 %v7961, %v788
    %v7970 = vmul.f32 %v7958, %v793
    %v7971 = vmul.f32 %v7959, %v793
    %v7972 = vmul.f32 %v7964, %v798
    %v7973 = vmul.f32 %v7965, %v798
    %v7974 = vadd.f32 %v7942, %v7966
    %v7975 = vadd.f32 %v7943, %v7967
    %v7976 = vadd.f32 %v7944, %v7968
    %v7977 = vadd.f32 %v7945, %v7969
    %v7978 = vadd.f32 %v7946, %v7970
    %v7979 = vadd.f32 %v7947, %v7971
    %v7980 = vadd.f32 %v7948, %v7972
    %v7981 = vadd.f32 %v7949, %v7973
    %v7982 = vrot.slane %v7698, 3
    %v7983 = vrot.slane %v7700, 3
    %v7984 = vrot.slane %v7702, 3
    %v7985 = vrot.slane %v7704, 3
    %v7986 = vrot.slane %v7708, 3
    %v7987 = vrot.slane %v7710, 3
    %v7988 = vrot.slane %v7712, 3
    %v7989 = vrot.slane %v7714, 3
    %v7990 = vsel %vm555, %v7986, %v7988
    %v7991 = vsel %vm555, %v7987, %v7989
    %v7992 = vsel %vm555, %v7984, %v7986
    %v7993 = vsel %vm555, %v7985, %v7987
    %v7994 = vsel %vm555, %v7982, %v7984
    %v7995 = vsel %vm555, %v7983, %v7985
    %v7996 = vsel %vm555, %v7988, %v7982
    %v7997 = vsel %vm555, %v7989, %v7983
    %v7998 = vmul.f32 %v7994, %v824
    %v7999 = vmul.f32 %v7995, %v824
    %v8000 = vmul.f32 %v7992, %v829
    %v8001 = vmul.f32 %v7993, %v829
    %v8002 = vmul.f32 %v7990, %v834
    %v8003 = vmul.f32 %v7991, %v834
    %v8004 = vmul.f32 %v7996, %v839
    %v8005 = vmul.f32 %v7997, %v839
    %v8006 = vadd.f32 %v7974, %v7998
    %v8007 = vadd.f32 %v7975, %v7999
    %v8008 = vadd.f32 %v7976, %v8000
    %v8009 = vadd.f32 %v7977, %v8001
    %v8010 = vadd.f32 %v7978, %v8002
    %v8011 = vadd.f32 %v7979, %v8003
    %v8012 = vadd.f32 %v7980, %v8004
    %v8013 = vadd.f32 %v7981, %v8005
    %v8014 = vrot.slane %v7751, 4
    %v8015 = vrot.slane %v7753, 4
    %v8016 = vrot.slane %v7755, 4
    %v8017 = vrot.slane %v7757, 4
    %v8018 = vrot.slane %v7761, 4
    %v8019 = vrot.slane %v7763, 4
    %v8020 = vrot.slane %v7765, 4
    %v8021 = vrot.slane %v7767, 4
    %v8022 = vsel %vm612, %v8018, %v8020
    %v8023 = vsel %vm612, %v8019, %v8021
    %v8024 = vsel %vm612, %v8016, %v8018
    %v8025 = vsel %vm612, %v8017, %v8019
    %v8026 = vsel %vm612, %v8014, %v8016
    %v8027 = vsel %vm612, %v8015, %v8017
    %v8028 = vsel %vm612, %v8020, %v8014
    %v8029 = vsel %vm612, %v8021, %v8015
    %v8030 = vmul.f32 %v8026, %v881
    %v8031 = vmul.f32 %v8027, %v881
    %v8032 = vmul.f32 %v8024, %v886
    %v8033 = vmul.f32 %v8025, %v886
    %v8034 = vmul.f32 %v8022, %v891
    %v8035 = vmul.f32 %v8023, %v891
    %v8036 = vmul.f32 %v8028, %v896
    %v8037 = vmul.f32 %v8029, %v896
    %v8038 = vadd.f32 %v8006, %v8030
    %v8039 = vadd.f32 %v8007, %v8031
    %v8040 = vadd.f32 %v8008, %v8032
    %v8041 = vadd.f32 %v8009, %v8033
    %v8042 = vadd.f32 %v8010, %v8034
    %v8043 = vadd.f32 %v8011, %v8035
    %v8044 = vadd.f32 %v8012, %v8036
    %v8045 = vadd.f32 %v8013, %v8037
    %v8046 = vrot.slane %v7804, 5
    %v8047 = vrot.slane %v7806, 5
    %v8048 = vrot.slane %v7808, 5
    %v8049 = vrot.slane %v7810, 5
    %v8050 = vrot.slane %v7814, 5
    %v8051 = vrot.slane %v7816, 5
    %v8052 = vrot.slane %v7818, 5
    %v8053 = vrot.slane %v7820, 5
    %v8054 = vsel %vm654, %v8050, %v8052
    %v8055 = vsel %vm654, %v8051, %v8053
    %v8056 = vsel %vm654, %v8048, %v8050
    %v8057 = vsel %vm654, %v8049, %v8051
    %v8058 = vsel %vm654, %v8046, %v8048
    %v8059 = vsel %vm654, %v8047, %v8049
    %v8060 = vsel %vm654, %v8052, %v8046
    %v8061 = vsel %vm654, %v8053, %v8047
    %v8062 = vmul.f32 %v8058, %v922
    %v8063 = vmul.f32 %v8059, %v922
    %v8064 = vmul.f32 %v8056, %v927
    %v8065 = vmul.f32 %v8057, %v927
    %v8066 = vmul.f32 %v8054, %v932
    %v8067 = vmul.f32 %v8055, %v932
    %v8068 = vmul.f32 %v8060, %v937
    %v8069 = vmul.f32 %v8061, %v937
    %v8070 = vadd.f32 %v8038, %v8062
    %v8071 = vadd.f32 %v8039, %v8063
    %v8072 = vadd.f32 %v8040, %v8064
    %v8073 = vadd.f32 %v8041, %v8065
    %v8074 = vadd.f32 %v8042, %v8066
    %v8075 = vadd.f32 %v8043, %v8067
    %v8076 = vadd.f32 %v8044, %v8068
    %v8077 = vadd.f32 %v8045, %v8069
    %v8079 = vlaneseq
    %v8080 = vshrl.u32 %v8079, 7
    %v8081 = vsub.s32 0, %v8080
    %v8082 = vrot.slane %v6622, %v8081
    %v8083 = vlaneseq
    %v8084 = vshrl.u32 %v8083, 7
    %v8085 = vsub.s32 1, %v8084
    %v8086 = vrot.slane %v6622, %v8085
    %v8089 = vadd.f32 %v8070, %v8082
    %v8090 = vadd.f32 %v8071, %v8086
    %v8091 = vadd.f32 %v8072, %v8082
    %v8092 = vadd.f32 %v8073, %v8086
    %v8093 = vadd.f32 %v8074, %v8082
    %v8094 = vadd.f32 %v8075, %v8086
    %v8095 = vadd.f32 %v8076, %v8082
    %v8096 = vadd.f32 %v8077, %v8086
    %v8097 = vmul.f32 %v8089, 0.1
    %v8098 = vmul.f32 %v8090, 0.1
    %v8099 = vmul.f32 %v8091, 0.1
    %v8100 = vmul.f32 %v8092, 0.1
    %v8101 = vmul.f32 %v8093, 0.1
    %v8102 = vmul.f32 %v8094, 0.1
    %v8103 = vmul.f32 %v8095, 0.1
    %v8104 = vmul.f32 %v8096, 0.1
    %v8105 = vmax.f32 %v8089, %v8097
    %v8106 = vmax.f32 %v8090, %v8098
    %v8107 = vmax.f32 %v8091, %v8099
    %v8108 = vmax.f32 %v8092, %v8100
    %v8109 = vmax.f32 %v8093, %v8101
    %v8110 = vmax.f32 %v8094, %v8102
    %v8111 = vmax.f32 %v8095, %v8103
    %v8112 = vmax.f32 %v8096, %v8104
    %v8113 = vadd.f32 %v8105, %v8107
    %v8114 = vrot.slane %v8113, 4
    %v8115 = vadd.f32 %v8113, %v8114
    %v8116 = vrot.slane %v8115, 2
    %v8117 = vadd.f32 %v8115, %v8116
    %v8118 = vrot.slane %v8117, 1
    %v8119 = vadd.f32 %v8117, %v8118
    %v8120 = vadd.f32 %v8106, %v8108
    %v8121 = vrot.slane %v8120, 4
    %v8122 = vadd.f32 %v8120, %v8121
    %v8123 = vrot.slane %v8122, 2
    %v8124 = vadd.f32 %v8122, %v8123
    %v8125 = vrot.slane %v8124, 1
    %v8126 = vadd.f32 %v8124, %v8125
    %v8127 = vadd.f32 %v8109, %v8111
    %v8128 = vrot.slane %v8127, 4
    %v8129 = vadd.f32 %v8127, %v8128
    %v8130 = vrot.slane %v8129, 2
    %v8131 = vadd.f32 %v8129, %v8130
    %v8132 = vrot.slane %v8131, 1
    %v8133 = vadd.f32 %v8131, %v8132
    %v8134 = vadd.f32 %v8110, %v8112
    %v8135 = vrot.slane %v8134, 4
    %v8136 = vadd.f32 %v8134, %v8135
    %v8137 = vrot.slane %v8136, 2
    %v8138 = vadd.f32 %v8136, %v8137
    %v8139 = vrot.slane %v8138, 1
    %v8140 = vadd.f32 %v8138, %v8139
    %v8141 = vmul.f32 %v8119, 0.0625
    %v8142 = vmul.f32 %v8126, 0.0625
    %v8143 = vmul.f32 %v8133, 0.0625
    %v8144 = vmul.f32 %v8140, 0.0625
    %v8145 = vpack.c.bf16 %v8141, %v8141
    %v8146 = vpack.c.bf16 %v8142, %v8142
    %v8147 = vpack.c.bf16 %v8143, %v8143
    %v8148 = vpack.c.bf16 %v8144, %v8144
    %v8149 = vld [vmem:[%s12] sm:$0xff]
    %v8150 = vld [vmem:[%s12 + $0x8] sm:$0xff]
    %v8151 = vld [vmem:[%s12 + $0x10] sm:$0xff]
    %v8152 = vld [vmem:[%s12 + $0x18] sm:$0xff]
    %v8153 = vld [vmem:[%s12 + $0x20] sm:$0xff]
    %v8154 = vld [vmem:[%s12 + $0x28] sm:$0xff]
    %v8155 = vld [vmem:[%s12 + $0x30] sm:$0xff]
    %v8156 = vld [vmem:[%s12 + $0x38] sm:$0xff]
    %v8157 = vld [vmem:[%s12 + $0x40] sm:$0xff]
    %v8158 = vld [vmem:[%s12 + $0x48] sm:$0xff]
    %v8159 = vld [vmem:[%s12 + $0x50] sm:$0xff]
    %v8160 = vld [vmem:[%s12 + $0x58] sm:$0xff]
    %v8161 = vld [vmem:[%s12 + $0x60] sm:$0xff]
    %v8162 = vld [vmem:[%s12 + $0x68] sm:$0xff]
    %v8163 = vld [vmem:[%s12 + $0x70] sm:$0xff]
    %v8164 = vld [vmem:[%s12 + $0x78] sm:$0xff]
    %v8165 = vld [vmem:[%s12 + $0x80] sm:$0xff]
    %v8166 = vld [vmem:[%s12 + $0x88] sm:$0xff]
    %v8167 = vld [vmem:[%s12 + $0x90] sm:$0xff]
    %v8168 = vld [vmem:[%s12 + $0x98] sm:$0xff]
    %v8169 = vld [vmem:[%s12 + $0xa0] sm:$0xff]
    %v8170 = vld [vmem:[%s12 + $0xa8] sm:$0xff]
    %v8171 = vld [vmem:[%s12 + $0xb0] sm:$0xff]
    %v8172 = vld [vmem:[%s12 + $0xb8] sm:$0xff]
    %v8173 = vld [vmem:[%s12 + $0xc0] sm:$0xff]
    %v8174 = vld [vmem:[%s12 + $0xc8] sm:$0xff]
    %v8175 = vld [vmem:[%s12 + $0xd0] sm:$0xff]
    %v8176 = vld [vmem:[%s12 + $0xd8] sm:$0xff]
    %v8177 = vld [vmem:[%s12 + $0xe0] sm:$0xff]
    %v8178 = vld [vmem:[%s12 + $0xe8] sm:$0xff]
    %v8179 = vld [vmem:[%s12 + $0xf0] sm:$0xff]
    %v8180 = vld [vmem:[%s12 + $0xf8] sm:$0xff]
    %v8181 = vld [vmem:[%s13] sm:$0x3]
    %v8183 = vlaneseq
    %v8184 = vshrl.u32 %v8183, 7
    %v8185 = vsub.s32 0, %v8184
    %v8186 = vrot.slane %v8181, %v8185
    %v8187 = vlaneseq
    %v8188 = vshrl.u32 %v8187, 7
    %v8189 = vsub.s32 1, %v8188
    %v8190 = vrot.slane %v8181, %v8189
    %v8197 = vunpack.c.l.b16 %v8145
    %v8198 = vunpack.c.l.b16 %v8146
    %v8199 = vunpack.c.l.b16 %v8147
    %v8200 = vunpack.c.l.b16 %v8148
    %vm8201 = vcmask 1041409
    %v8202 = vsel %vm8201, %v8199, %v8197
    %v8203 = vsel %vm8201, %v8200, %v8198
    %v8204 = vpack.c.b16 %v8202, %v8202
    %v8205 = vpack.c.b16 %v8203, %v8203
    %v8240 = vunpack.c.l.b16 %v8149
    %v8241 = vunpack.c.h.b16 %v8149
    %v8242 = vunpack.c.l.b16 %v8150
    %v8243 = vunpack.c.h.b16 %v8150
    %v8244 = vunpack.c.l.b16 %v8151
    %v8245 = vunpack.c.h.b16 %v8151
    %v8246 = vunpack.c.l.b16 %v8152
    %v8247 = vunpack.c.h.b16 %v8152
    %v8248 = vunpack.c.l.b16 %v8153
    %v8249 = vunpack.c.h.b16 %v8153
    %v8250 = vunpack.c.l.b16 %v8154
    %v8251 = vunpack.c.h.b16 %v8154
    %v8252 = vunpack.c.l.b16 %v8155
    %v8253 = vunpack.c.h.b16 %v8155
    %v8254 = vunpack.c.l.b16 %v8156
    %v8255 = vunpack.c.h.b16 %v8156
    %v8256 = vunpack.c.l.b16 %v8157
    %v8257 = vunpack.c.h.b16 %v8157
    %v8258 = vunpack.c.l.b16 %v8158
    %v8259 = vunpack.c.h.b16 %v8158
    %v8260 = vunpack.c.l.b16 %v8159
    %v8261 = vunpack.c.h.b16 %v8159
    %v8262 = vunpack.c.l.b16 %v8160
    %v8263 = vunpack.c.h.b16 %v8160
    %v8264 = vunpack.c.l.b16 %v8161
    %v8265 = vunpack.c.h.b16 %v8161
    %v8266 = vunpack.c.l.b16 %v8162
    %v8267 = vunpack.c.h.b16 %v8162
    %v8268 = vunpack.c.l.b16 %v8163
    %v8269 = vunpack.c.h.b16 %v8163
    %v8270 = vunpack.c.l.b16 %v8164
    %v8271 = vunpack.c.h.b16 %v8164
    %v8272 = vunpack.c.l.b16 %v8165
    %v8273 = vunpack.c.h.b16 %v8165
    %v8274 = vunpack.c.l.b16 %v8166
    %v8275 = vunpack.c.h.b16 %v8166
    %v8276 = vunpack.c.l.b16 %v8167
    %v8277 = vunpack.c.h.b16 %v8167
    %v8278 = vunpack.c.l.b16 %v8168
    %v8279 = vunpack.c.h.b16 %v8168
    %v8280 = vunpack.c.l.b16 %v8169
    %v8281 = vunpack.c.h.b16 %v8169
    %v8282 = vunpack.c.l.b16 %v8170
    %v8283 = vunpack.c.h.b16 %v8170
    %v8284 = vunpack.c.l.b16 %v8171
    %v8285 = vunpack.c.h.b16 %v8171
    %v8286 = vunpack.c.l.b16 %v8172
    %v8287 = vunpack.c.h.b16 %v8172
    %v8288 = vunpack.c.l.b16 %v8173
    %v8289 = vunpack.c.h.b16 %v8173
    %v8290 = vunpack.c.l.b16 %v8174
    %v8291 = vunpack.c.h.b16 %v8174
    %v8292 = vunpack.c.l.b16 %v8175
    %v8293 = vunpack.c.h.b16 %v8175
    %v8294 = vunpack.c.l.b16 %v8176
    %v8295 = vunpack.c.h.b16 %v8176
    %v8296 = vunpack.c.l.b16 %v8177
    %v8297 = vunpack.c.h.b16 %v8177
    %v8298 = vunpack.c.l.b16 %v8178
    %v8299 = vunpack.c.h.b16 %v8178
    %v8300 = vunpack.c.l.b16 %v8179
    %v8301 = vunpack.c.h.b16 %v8179
    %v8302 = vunpack.c.l.b16 %v8180
    %v8303 = vunpack.c.h.b16 %v8180
    %v8304 = vpack.c.b16 %v8242, %v8240
    %v8305 = vpack.c.b16 %v8243, %v8241
    %v8306 = vpack.c.b16 %v8246, %v8244
    %v8307 = vpack.c.b16 %v8247, %v8245
    %v8308 = vpack.c.b16 %v8250, %v8248
    %v8309 = vpack.c.b16 %v8251, %v8249
    %v8310 = vpack.c.b16 %v8254, %v8252
    %v8311 = vpack.c.b16 %v8255, %v8253
    %v8312 = vpack.c.b16 %v8258, %v8256
    %v8313 = vpack.c.b16 %v8259, %v8257
    %v8314 = vpack.c.b16 %v8262, %v8260
    %v8315 = vpack.c.b16 %v8263, %v8261
    %v8316 = vpack.c.b16 %v8266, %v8264
    %v8317 = vpack.c.b16 %v8267, %v8265
    %v8318 = vpack.c.b16 %v8270, %v8268
    %v8319 = vpack.c.b16 %v8271, %v8269
    %v8320 = vpack.c.b16 %v8274, %v8272
    %v8321 = vpack.c.b16 %v8275, %v8273
    %v8322 = vpack.c.b16 %v8278, %v8276
    %v8323 = vpack.c.b16 %v8279, %v8277
    %v8324 = vpack.c.b16 %v8282, %v8280
    %v8325 = vpack.c.b16 %v8283, %v8281
    %v8326 = vpack.c.b16 %v8286, %v8284
    %v8327 = vpack.c.b16 %v8287, %v8285
    %v8328 = vpack.c.b16 %v8290, %v8288
    %v8329 = vpack.c.b16 %v8291, %v8289
    %v8330 = vpack.c.b16 %v8294, %v8292
    %v8331 = vpack.c.b16 %v8295, %v8293
    %v8332 = vpack.c.b16 %v8298, %v8296
    %v8333 = vpack.c.b16 %v8299, %v8297
    %v8334 = vpack.c.b16 %v8302, %v8300
    %v8335 = vpack.c.b16 %v8303, %v8301
    %8368 = vmatprep.subr.bf16.mxu0 %v8305
    %8369 = vmatpush1.bf16.msra.mxu0 %v8304
    %8370 = vmatprep.subr.bf16.mxu0 %v8307
    %8371 = vmatpush1.bf16.msra.mxu0 %v8306
    %8372 = vmatprep.subr.bf16.mxu0 %v8309
    %8373 = vmatpush1.bf16.msra.mxu0 %v8308
    %8374 = vmatprep.subr.bf16.mxu0 %v8311
    %8375 = vmatpush1.bf16.msra.mxu0 %v8310
    %8376 = vmatprep.subr.bf16.mxu0 %v8313
    %8377 = vmatpush1.bf16.msra.mxu0 %v8312
    %8378 = vmatprep.subr.bf16.mxu0 %v8315
    %8379 = vmatpush1.bf16.msra.mxu0 %v8314
    %8380 = vmatprep.subr.bf16.mxu0 %v8317
    %8381 = vmatpush1.bf16.msra.mxu0 %v8316
    %8382 = vmatprep.subr.bf16.mxu0 %v8319
    %8383 = vmatpush1.bf16.msra.mxu0 %v8318
    %8384 = vmatprep.subr.bf16.mxu0 %v8321
    %8385 = vmatpush1.bf16.msra.mxu0 %v8320
    %8386 = vmatprep.subr.bf16.mxu0 %v8323
    %8387 = vmatpush1.bf16.msra.mxu0 %v8322
    %8388 = vmatprep.subr.bf16.mxu0 %v8325
    %8389 = vmatpush1.bf16.msra.mxu0 %v8324
    %8390 = vmatprep.subr.bf16.mxu0 %v8327
    %8391 = vmatpush1.bf16.msra.mxu0 %v8326
    %8392 = vmatprep.subr.bf16.mxu0 %v8329
    %8393 = vmatpush1.bf16.msra.mxu0 %v8328
    %8394 = vmatprep.subr.bf16.mxu0 %v8331
    %8395 = vmatpush1.bf16.msra.mxu0 %v8330
    %8396 = vmatprep.subr.bf16.mxu0 %v8333
    %8397 = vmatpush1.bf16.msra.mxu0 %v8332
    %8398 = vmatprep.subr.bf16.mxu0 %v8335
    %8399 = vmatpush1.bf16.msra.mxu0 %v8334
    %8400 = vmatprep.mubr.bf16.mxu0 %v8205
    %8401 = vmatmul.mubr.bf16.gmra.mrb[0].mxu0 %v8204
    %v8402 = vpop.f32.mrb[0].mxu0
    %v8403 = vadd.f32 %v8186, %v8402
    %v8404 = vpop.f32.mrb[0].mxu0
    %v8405 = vadd.f32 %v8190, %v8404
    %v8406 = vpop.f32.mrb[0].mxu0
    %v8407 = vpop.f32.mrb[0].mxu0
    %8408 = vdwg.mxu0
    %v8409 = vmul.f32 %v8403, 0.1
    %v8410 = vmul.f32 %v8405, 0.1
    %v8411 = vmax.f32 %v8403, %v8409
    %v8412 = vmax.f32 %v8405, %v8410
    %v8413 = vpack.c.bf16 %v8411, %v8411
    %v8414 = vpack.c.bf16 %v8412, %v8412
    %v8415 = vld [vmem:[%s14] sm:$0xff]
    %v8416 = vld [vmem:[%s14 + $0x8] sm:$0xff]
    %v8417 = vld [vmem:[%s14 + $0x10] sm:$0xff]
    %v8418 = vld [vmem:[%s14 + $0x18] sm:$0xff]
    %v8419 = vld [vmem:[%s14 + $0x20] sm:$0xff]
    %v8420 = vld [vmem:[%s14 + $0x28] sm:$0xff]
    %v8421 = vld [vmem:[%s14 + $0x30] sm:$0xff]
    %v8422 = vld [vmem:[%s14 + $0x38] sm:$0xff]
    %v8423 = vld [vmem:[%s14 + $0x40] sm:$0xff]
    %v8424 = vld [vmem:[%s14 + $0x48] sm:$0xff]
    %v8425 = vld [vmem:[%s14 + $0x50] sm:$0xff]
    %v8426 = vld [vmem:[%s14 + $0x58] sm:$0xff]
    %v8427 = vld [vmem:[%s14 + $0x60] sm:$0xff]
    %v8428 = vld [vmem:[%s14 + $0x68] sm:$0xff]
    %v8429 = vld [vmem:[%s14 + $0x70] sm:$0xff]
    %v8430 = vld [vmem:[%s14 + $0x78] sm:$0xff]
    %v8431 = vld [vmem:[%s14 + $0x80] sm:$0xff]
    %v8432 = vld [vmem:[%s14 + $0x88] sm:$0xff]
    %v8433 = vld [vmem:[%s14 + $0x90] sm:$0xff]
    %v8434 = vld [vmem:[%s14 + $0x98] sm:$0xff]
    %v8435 = vld [vmem:[%s14 + $0xa0] sm:$0xff]
    %v8436 = vld [vmem:[%s14 + $0xa8] sm:$0xff]
    %v8437 = vld [vmem:[%s14 + $0xb0] sm:$0xff]
    %v8438 = vld [vmem:[%s14 + $0xb8] sm:$0xff]
    %v8439 = vld [vmem:[%s14 + $0xc0] sm:$0xff]
    %v8440 = vld [vmem:[%s14 + $0xc8] sm:$0xff]
    %v8441 = vld [vmem:[%s14 + $0xd0] sm:$0xff]
    %v8442 = vld [vmem:[%s14 + $0xd8] sm:$0xff]
    %v8443 = vld [vmem:[%s14 + $0xe0] sm:$0xff]
    %v8444 = vld [vmem:[%s14 + $0xe8] sm:$0xff]
    %v8445 = vld [vmem:[%s14 + $0xf0] sm:$0xff]
    %v8446 = vld [vmem:[%s14 + $0xf8] sm:$0xff]
    %v8447 = vld [vmem:[%s15] sm:$0x3]
    %v8449 = vlaneseq
    %v8450 = vshrl.u32 %v8449, 7
    %v8451 = vsub.s32 0, %v8450
    %v8452 = vrot.slane %v8447, %v8451
    %v8453 = vlaneseq
    %v8454 = vshrl.u32 %v8453, 7
    %v8455 = vsub.s32 1, %v8454
    %v8456 = vrot.slane %v8447, %v8455
    %v8491 = vunpack.c.l.b16 %v8415
    %v8492 = vunpack.c.h.b16 %v8415
    %v8493 = vunpack.c.l.b16 %v8416
    %v8494 = vunpack.c.h.b16 %v8416
    %v8495 = vunpack.c.l.b16 %v8417
    %v8496 = vunpack.c.h.b16 %v8417
    %v8497 = vunpack.c.l.b16 %v8418
    %v8498 = vunpack.c.h.b16 %v8418
    %v8499 = vunpack.c.l.b16 %v8419
    %v8500 = vunpack.c.h.b16 %v8419
    %v8501 = vunpack.c.l.b16 %v8420
    %v8502 = vunpack.c.h.b16 %v8420
    %v8503 = vunpack.c.l.b16 %v8421
    %v8504 = vunpack.c.h.b16 %v8421
    %v8505 = vunpack.c.l.b16 %v8422
    %v8506 = vunpack.c.h.b16 %v8422
    %v8507 = vunpack.c.l.b16 %v8423
    %v8508 = vunpack.c.h.b16 %v8423
    %v8509 = vunpack.c.l.b16 %v8424
    %v8510 = vunpack.c.h.b16 %v8424
    %v8511 = vunpack.c.l.b16 %v8425
    %v8512 = vunpack.c.h.b16 %v8425
    %v8513 = vunpack.c.l.b16 %v8426
    %v8514 = vunpack.c.h.b16 %v8426
    %v8515 = vunpack.c.l.b16 %v8427
    %v8516 = vunpack.c.h.b16 %v8427
    %v8517 = vunpack.c.l.b16 %v8428
    %v8518 = vunpack.c.h.b16 %v8428
    %v8519 = vunpack.c.l.b16 %v8429
    %v8520 = vunpack.c.h.b16 %v8429
    %v8521 = vunpack.c.l.b16 %v8430
    %v8522 = vunpack.c.h.b16 %v8430
    %v8523 = vunpack.c.l.b16 %v8431
    %v8524 = vunpack.c.h.b16 %v8431
    %v8525 = vunpack.c.l.b16 %v8432
    %v8526 = vunpack.c.h.b16 %v8432
    %v8527 = vunpack.c.l.b16 %v8433
    %v8528 = vunpack.c.h.b16 %v8433
    %v8529 = vunpack.c.l.b16 %v8434
    %v8530 = vunpack.c.h.b16 %v8434
    %v8531 = vunpack.c.l.b16 %v8435
    %v8532 = vunpack.c.h.b16 %v8435
    %v8533 = vunpack.c.l.b16 %v8436
    %v8534 = vunpack.c.h.b16 %v8436
    %v8535 = vunpack.c.l.b16 %v8437
    %v8536 = vunpack.c.h.b16 %v8437
    %v8537 = vunpack.c.l.b16 %v8438
    %v8538 = vunpack.c.h.b16 %v8438
    %v8539 = vunpack.c.l.b16 %v8439
    %v8540 = vunpack.c.h.b16 %v8439
    %v8541 = vunpack.c.l.b16 %v8440
    %v8542 = vunpack.c.h.b16 %v8440
    %v8543 = vunpack.c.l.b16 %v8441
    %v8544 = vunpack.c.h.b16 %v8441
    %v8545 = vunpack.c.l.b16 %v8442
    %v8546 = vunpack.c.h.b16 %v8442
    %v8547 = vunpack.c.l.b16 %v8443
    %v8548 = vunpack.c.h.b16 %v8443
    %v8549 = vunpack.c.l.b16 %v8444
    %v8550 = vunpack.c.h.b16 %v8444
    %v8551 = vunpack.c.l.b16 %v8445
    %v8552 = vunpack.c.h.b16 %v8445
    %v8553 = vunpack.c.l.b16 %v8446
    %v8554 = vunpack.c.h.b16 %v8446
    %v8555 = vpack.c.b16 %v8493, %v8491
    %v8556 = vpack.c.b16 %v8494, %v8492
    %v8557 = vpack.c.b16 %v8497, %v8495
    %v8558 = vpack.c.b16 %v8498, %v8496
    %v8559 = vpack.c.b16 %v8501, %v8499
    %v8560 = vpack.c.b16 %v8502, %v8500
    %v8561 = vpack.c.b16 %v8505, %v8503
    %v8562 = vpack.c.b16 %v8506, %v8504
    %v8563 = vpack.c.b16 %v8509, %v8507
    %v8564 = vpack.c.b16 %v8510, %v8508
    %v8565 = vpack.c.b16 %v8513, %v8511
    %v8566 = vpack.c.b16 %v8514, %v8512
    %v8567 = vpack.c.b16 %v8517, %v8515
    %v8568 = vpack.c.b16 %v8518, %v8516
    %v8569 = vpack.c.b16 %v8521, %v8519
    %v8570 = vpack.c.b16 %v8522, %v8520
    %v8571 = vpack.c.b16 %v8525, %v8523
    %v8572 = vpack.c.b16 %v8526, %v8524
    %v8573 = vpack.c.b16 %v8529, %v8527
    %v8574 = vpack.c.b16 %v8530, %v8528
    %v8575 = vpack.c.b16 %v8533, %v8531
    %v8576 = vpack.c.b16 %v8534, %v8532
    %v8577 = vpack.c.b16 %v8537, %v8535
    %v8578 = vpack.c.b16 %v8538, %v8536
    %v8579 = vpack.c.b16 %v8541, %v8539
    %v8580 = vpack.c.b16 %v8542, %v8540
    %v8581 = vpack.c.b16 %v8545, %v8543
    %v8582 = vpack.c.b16 %v8546, %v8544
    %v8583 = vpack.c.b16 %v8549, %v8547
    %v8584 = vpack.c.b16 %v8550, %v8548
    %v8585 = vpack.c.b16 %v8553, %v8551
    %v8586 = vpack.c.b16 %v8554, %v8552
    %8619 = vmatprep.subr.bf16.mxu0 %v8556
    %8620 = vmatpush1.bf16.msra.mxu0 %v8555
    %8621 = vmatprep.subr.bf16.mxu0 %v8558
    %8622 = vmatpush1.bf16.msra.mxu0 %v8557
    %8623 = vmatprep.subr.bf16.mxu0 %v8560
    %8624 = vmatpush1.bf16.msra.mxu0 %v8559
    %8625 = vmatprep.subr.bf16.mxu0 %v8562
    %8626 = vmatpush1.bf16.msra.mxu0 %v8561
    %8627 = vmatprep.subr.bf16.mxu0 %v8564
    %8628 = vmatpush1.bf16.msra.mxu0 %v8563
    %8629 = vmatprep.subr.bf16.mxu0 %v8566
    %8630 = vmatpush1.bf16.msra.mxu0 %v8565
    %8631 = vmatprep.subr.bf16.mxu0 %v8568
    %8632 = vmatpush1.bf16.msra.mxu0 %v8567
    %8633 = vmatprep.subr.bf16.mxu0 %v8570
    %8634 = vmatpush1.bf16.msra.mxu0 %v8569
    %8635 = vmatprep.subr.bf16.mxu0 %v8572
    %8636 = vmatpush1.bf16.msra.mxu0 %v8571
    %8637 = vmatprep.subr.bf16.mxu0 %v8574
    %8638 = vmatpush1.bf16.msra.mxu0 %v8573
    %8639 = vmatprep.subr.bf16.mxu0 %v8576
    %8640 = vmatpush1.bf16.msra.mxu0 %v8575
    %8641 = vmatprep.subr.bf16.mxu0 %v8578
    %8642 = vmatpush1.bf16.msra.mxu0 %v8577
    %8643 = vmatprep.subr.bf16.mxu0 %v8580
    %8644 = vmatpush1.bf16.msra.mxu0 %v8579
    %8645 = vmatprep.subr.bf16.mxu0 %v8582
    %8646 = vmatpush1.bf16.msra.mxu0 %v8581
    %8647 = vmatprep.subr.bf16.mxu0 %v8584
    %8648 = vmatpush1.bf16.msra.mxu0 %v8583
    %8649 = vmatprep.subr.bf16.mxu0 %v8586
    %8650 = vmatpush1.bf16.msra.mxu0 %v8585
    %8651 = vmatprep.mubr.bf16.mxu0 %v8414
    %8652 = vmatmul.mubr.bf16.gmra.mrb[0].mxu0 %v8413
    %v8653 = vpop.f32.mrb[0].mxu0
    %v8654 = vadd.f32 %v8452, %v8653
    %v8655 = vpop.f32.mrb[0].mxu0
    %v8656 = vadd.f32 %v8456, %v8655
    %v8657 = vpop.f32.mrb[0].mxu0
    %v8658 = vpop.f32.mrb[0].mxu0
    %8659 = vdwg.mxu0
    %v8660 = vsub.f32 0.0, %v8654
    %v8661 = vsub.f32 0.0, %v8656
    %v8662 = vmul.f32 %v8660, 1.442695
    %v8663 = vpow.pop %v8662
    %v8664 = vmul.f32 %v8661, 1.442695
    %v8665 = vpow.pop %v8664
    %v8666 = vadd.f32 %v8663, 1.0
    %v8667 = vadd.f32 %v8665, 1.0
    %v8668 = vrcp.pop %v8666
    %v8669 = vmul.f32 1.0, %v8668
    %v8670 = vrcp.pop %v8667
    %v8671 = vmul.f32 1.0, %v8670
    %v8672 = vpack.c.bf16 %v8669, %v8669
    %v8673 = vpack.c.bf16 %v8671, %v8671
    %v8674 = vld [vmem:[%s16] sm:$0xff]
    %v8675 = vld [vmem:[%s16 + $0x8] sm:$0xff]
    %v8676 = vld [vmem:[%s16 + $0x10] sm:$0xff]
    %v8677 = vld [vmem:[%s16 + $0x18] sm:$0xff]
    %v8678 = vld [vmem:[%s16 + $0x20] sm:$0xff]
    %v8679 = vld [vmem:[%s16 + $0x28] sm:$0xff]
    %v8680 = vld [vmem:[%s16 + $0x30] sm:$0xff]
    %v8681 = vld [vmem:[%s16 + $0x38] sm:$0xff]
    %v8682 = vld [vmem:[%s16 + $0x40] sm:$0xff]
    %v8683 = vld [vmem:[%s16 + $0x48] sm:$0xff]
    %v8684 = vld [vmem:[%s16 + $0x50] sm:$0xff]
    %v8685 = vld [vmem:[%s16 + $0x58] sm:$0xff]
    %v8686 = vld [vmem:[%s16 + $0x60] sm:$0xff]
    %v8687 = vld [vmem:[%s16 + $0x68] sm:$0xff]
    %v8688 = vld [vmem:[%s16 + $0x70] sm:$0xff]
    %v8689 = vld [vmem:[%s16 + $0x78] sm:$0xff]
    %v8690 = vld [vmem:[%s16 + $0x80] sm:$0xff]
    %v8691 = vld [vmem:[%s16 + $0x88] sm:$0xff]
    %v8692 = vld [vmem:[%s16 + $0x90] sm:$0xff]
    %v8693 = vld [vmem:[%s16 + $0x98] sm:$0xff]
    %v8694 = vld [vmem:[%s16 + $0xa0] sm:$0xff]
    %v8695 = vld [vmem:[%s16 + $0xa8] sm:$0xff]
    %v8696 = vld [vmem:[%s16 + $0xb0] sm:$0xff]
    %v8697 = vld [vmem:[%s16 + $0xb8] sm:$0xff]
    %v8698 = vld [vmem:[%s16 + $0xc0] sm:$0xff]
    %v8699 = vld [vmem:[%s16 + $0xc8] sm:$0xff]
    %v8700 = vld [vmem:[%s16 + $0xd0] sm:$0xff]
    %v8701 = vld [vmem:[%s16 + $0xd8] sm:$0xff]
    %v8702 = vld [vmem:[%s16 + $0xe0] sm:$0xff]
    %v8703 = vld [vmem:[%s16 + $0xe8] sm:$0xff]
    %v8704 = vld [vmem:[%s16 + $0xf0] sm:$0xff]
    %v8705 = vld [vmem:[%s16 + $0xf8] sm:$0xff]
    %v8706 = vld [vmem:[%s19] sm:$0x3]
    %v8708 = vlaneseq
    %v8709 = vshrl.u32 %v8708, 7
    %v8710 = vsub.s32 0, %v8709
    %v8711 = vrot.slane %v8706, %v8710
    %v8712 = vlaneseq
    %v8713 = vshrl.u32 %v8712, 7
    %v8714 = vsub.s32 1, %v8713
    %v8715 = vrot.slane %v8706, %v8714
    %v8750 = vunpack.c.l.b16 %v8674
    %v8751 = vunpack.c.h.b16 %v8674
    %v8752 = vunpack.c.l.b16 %v8675
    %v8753 = vunpack.c.h.b16 %v8675
    %v8754 = vunpack.c.l.b16 %v8676
    %v8755 = vunpack.c.h.b16 %v8676
    %v8756 = vunpack.c.l.b16 %v8677
    %v8757 = vunpack.c.h.b16 %v8677
    %v8758 = vunpack.c.l.b16 %v8678
    %v8759 = vunpack.c.h.b16 %v8678
    %v8760 = vunpack.c.l.b16 %v8679
    %v8761 = vunpack.c.h.b16 %v8679
    %v8762 = vunpack.c.l.b16 %v8680
    %v8763 = vunpack.c.h.b16 %v8680
    %v8764 = vunpack.c.l.b16 %v8681
    %v8765 = vunpack.c.h.b16 %v8681
    %v8766 = vunpack.c.l.b16 %v8682
    %v8767 = vunpack.c.h.b16 %v8682
    %v8768 = vunpack.c.l.b16 %v8683
    %v8769 = vunpack.c.h.b16 %v8683
    %v8770 = vunpack.c.l.b16 %v8684
    %v8771 = vunpack.c.h.b16 %v8684
    %v8772 = vunpack.c.l.b16 %v8685
    %v8773 = vunpack.c.h.b16 %v8685
    %v8774 = vunpack.c.l.b16 %v8686
    %v8775 = vunpack.c.h.b16 %v8686
    %v8776 = vunpack.c.l.b16 %v8687
    %v8777 = vunpack.c.h.b16 %v8687
    %v8778 = vunpack.c.l.b16 %v8688
    %v8779 = vunpack.c.h.b16 %v8688
    %v8780 = vunpack.c.l.b16 %v8689
    %v8781 = vunpack.c.h.b16 %v8689
    %v8782 = vunpack.c.l.b16 %v8690
    %v8783 = vunpack.c.h.b16 %v8690
    %v8784 = vunpack.c.l.b16 %v8691
    %v8785 = vunpack.c.h.b16 %v8691
    %v8786 = vunpack.c.l.b16 %v8692
    %v8787 = vunpack.c.h.b16 %v8692
    %v8788 = vunpack.c.l.b16 %v8693
    %v8789 = vunpack.c.h.b16 %v8693
    %v8790 = vunpack.c.l.b16 %v8694
    %v8791 = vunpack.c.h.b16 %v8694
    %v8792 = vunpack.c.l.b16 %v8695
    %v8793 = vunpack.c.h.b16 %v8695
    %v8794 = vunpack.c.l.b16 %v8696
    %v8795 = vunpack.c.h.b16 %v8696
    %v8796 = vunpack.c.l.b16 %v8697
    %v8797 = vunpack.c.h.b16 %v8697
    %v8798 = vunpack.c.l.b16 %v8698
    %v8799 = vunpack.c.h.b16 %v8698
    %v8800 = vunpack.c.l.b16 %v8699
    %v8801 = vunpack.c.h.b16 %v8699
    %v8802 = vunpack.c.l.b16 %v8700
    %v8803 = vunpack.c.h.b16 %v8700
    %v8804 = vunpack.c.l.b16 %v8701
    %v8805 = vunpack.c.h.b16 %v8701
    %v8806 = vunpack.c.l.b16 %v8702
    %v8807 = vunpack.c.h.b16 %v8702
    %v8808 = vunpack.c.l.b16 %v8703
    %v8809 = vunpack.c.h.b16 %v8703
    %v8810 = vunpack.c.l.b16 %v8704
    %v8811 = vunpack.c.h.b16 %v8704
    %v8812 = vunpack.c.l.b16 %v8705
    %v8813 = vunpack.c.h.b16 %v8705
    %v8814 = vpack.c.b16 %v8752, %v8750
    %v8815 = vpack.c.b16 %v8753, %v8751
    %v8816 = vpack.c.b16 %v8756, %v8754
    %v8817 = vpack.c.b16 %v8757, %v8755
    %v8818 = vpack.c.b16 %v8760, %v8758
    %v8819 = vpack.c.b16 %v8761, %v8759
    %v8820 = vpack.c.b16 %v8764, %v8762
    %v8821 = vpack.c.b16 %v8765, %v8763
    %v8822 = vpack.c.b16 %v8768, %v8766
    %v8823 = vpack.c.b16 %v8769, %v8767
    %v8824 = vpack.c.b16 %v8772, %v8770
    %v8825 = vpack.c.b16 %v8773, %v8771
    %v8826 = vpack.c.b16 %v8776, %v8774
    %v8827 = vpack.c.b16 %v8777, %v8775
    %v8828 = vpack.c.b16 %v8780, %v8778
    %v8829 = vpack.c.b16 %v8781, %v8779
    %v8830 = vpack.c.b16 %v8784, %v8782
    %v8831 = vpack.c.b16 %v8785, %v8783
    %v8832 = vpack.c.b16 %v8788, %v8786
    %v8833 = vpack.c.b16 %v8789, %v8787
    %v8834 = vpack.c.b16 %v8792, %v8790
    %v8835 = vpack.c.b16 %v8793, %v8791
    %v8836 = vpack.c.b16 %v8796, %v8794
    %v8837 = vpack.c.b16 %v8797, %v8795
    %v8838 = vpack.c.b16 %v8800, %v8798
    %v8839 = vpack.c.b16 %v8801, %v8799
    %v8840 = vpack.c.b16 %v8804, %v8802
    %v8841 = vpack.c.b16 %v8805, %v8803
    %v8842 = vpack.c.b16 %v8808, %v8806
    %v8843 = vpack.c.b16 %v8809, %v8807
    %v8844 = vpack.c.b16 %v8812, %v8810
    %v8845 = vpack.c.b16 %v8813, %v8811
    %8878 = vmatprep.subr.bf16.mxu0 %v8815
    %8879 = vmatpush1.bf16.msra.mxu0 %v8814
    %8880 = vmatprep.subr.bf16.mxu0 %v8817
    %8881 = vmatpush1.bf16.msra.mxu0 %v8816
    %8882 = vmatprep.subr.bf16.mxu0 %v8819
    %8883 = vmatpush1.bf16.msra.mxu0 %v8818
    %8884 = vmatprep.subr.bf16.mxu0 %v8821
    %8885 = vmatpush1.bf16.msra.mxu0 %v8820
    %8886 = vmatprep.subr.bf16.mxu0 %v8823
    %8887 = vmatpush1.bf16.msra.mxu0 %v8822
    %8888 = vmatprep.subr.bf16.mxu0 %v8825
    %8889 = vmatpush1.bf16.msra.mxu0 %v8824
    %8890 = vmatprep.subr.bf16.mxu0 %v8827
    %8891 = vmatpush1.bf16.msra.mxu0 %v8826
    %8892 = vmatprep.subr.bf16.mxu0 %v8829
    %8893 = vmatpush1.bf16.msra.mxu0 %v8828
    %8894 = vmatprep.subr.bf16.mxu0 %v8831
    %8895 = vmatpush1.bf16.msra.mxu0 %v8830
    %8896 = vmatprep.subr.bf16.mxu0 %v8833
    %8897 = vmatpush1.bf16.msra.mxu0 %v8832
    %8898 = vmatprep.subr.bf16.mxu0 %v8835
    %8899 = vmatpush1.bf16.msra.mxu0 %v8834
    %8900 = vmatprep.subr.bf16.mxu0 %v8837
    %8901 = vmatpush1.bf16.msra.mxu0 %v8836
    %8902 = vmatprep.subr.bf16.mxu0 %v8839
    %8903 = vmatpush1.bf16.msra.mxu0 %v8838
    %8904 = vmatprep.subr.bf16.mxu0 %v8841
    %8905 = vmatpush1.bf16.msra.mxu0 %v8840
    %8906 = vmatprep.subr.bf16.mxu0 %v8843
    %8907 = vmatpush1.bf16.msra.mxu0 %v8842
    %8908 = vmatprep.subr.bf16.mxu0 %v8845
    %8909 = vmatpush1.bf16.msra.mxu0 %v8844
    %8910 = vmatprep.mubr.bf16.mxu0 %v8673
    %8911 = vmatmul.mubr.bf16.gmra.mrb[0].mxu0 %v8672
    %v8912 = vpop.f32.mrb[0].mxu0
    %v8913 = vadd.f32 %v8711, %v8912
    %v8914 = vpop.f32.mrb[0].mxu0
    %v8915 = vadd.f32 %v8715, %v8914
    %v8916 = vpop.f32.mrb[0].mxu0
    %v8917 = vpop.f32.mrb[0].mxu0
    %8918 = vdwg.mxu0
    %v8919 = vld [vmem:[%s17] sm:$0x3]
    %v8920 = vld [vmem:[%s18] sm:$0xff]
    %v8921 = vld [vmem:[%s18 + $0x8] sm:$0xff]
    %v8922 = vld [vmem:[%s18 + $0x10] sm:$0xff]
    %v8923 = vld [vmem:[%s18 + $0x18] sm:$0xff]
    %v8924 = vld [vmem:[%s18 + $0x20] sm:$0xff]
    %v8925 = vld [vmem:[%s18 + $0x28] sm:$0xff]
    %v8926 = vld [vmem:[%s18 + $0x30] sm:$0xff]
    %v8927 = vld [vmem:[%s18 + $0x38] sm:$0xff]
    %v8928 = vld [vmem:[%s18 + $0x40] sm:$0xff]
    %v8929 = vld [vmem:[%s18 + $0x48] sm:$0xff]
    %v8930 = vld [vmem:[%s18 + $0x50] sm:$0xff]
    %v8931 = vld [vmem:[%s18 + $0x58] sm:$0xff]
    %v8932 = vld [vmem:[%s18 + $0x60] sm:$0xff]
    %v8933 = vld [vmem:[%s18 + $0x68] sm:$0xff]
    %v8934 = vld [vmem:[%s18 + $0x70] sm:$0xff]
    %v8935 = vld [vmem:[%s18 + $0x78] sm:$0xff]
    %v8936 = vld [vmem:[%s18 + $0x80] sm:$0xff]
    %v8937 = vld [vmem:[%s18 + $0x88] sm:$0xff]
    %v8938 = vld [vmem:[%s18 + $0x90] sm:$0xff]
    %v8939 = vld [vmem:[%s18 + $0x98] sm:$0xff]
    %v8940 = vld [vmem:[%s18 + $0xa0] sm:$0xff]
    %v8941 = vld [vmem:[%s18 + $0xa8] sm:$0xff]
    %v8942 = vld [vmem:[%s18 + $0xb0] sm:$0xff]
    %v8943 = vld [vmem:[%s18 + $0xb8] sm:$0xff]
    %v8944 = vld [vmem:[%s18 + $0xc0] sm:$0xff]
    %v8945 = vld [vmem:[%s18 + $0xc8] sm:$0xff]
    %v8946 = vld [vmem:[%s18 + $0xd0] sm:$0xff]
    %v8947 = vld [vmem:[%s18 + $0xd8] sm:$0xff]
    %v8948 = vld [vmem:[%s18 + $0xe0] sm:$0xff]
    %v8949 = vld [vmem:[%s18 + $0xe8] sm:$0xff]
    %v8950 = vld [vmem:[%s18 + $0xf0] sm:$0xff]
    %v8951 = vld [vmem:[%s18 + $0xf8] sm:$0xff]
    %v8952 = vld [vmem:[%s20] sm:$0xff]
    %v8953 = vld [vmem:[%s20 + $0x8] sm:$0xff]
    %v8954 = vld [vmem:[%s20 + $0x10] sm:$0xff]
    %v8955 = vld [vmem:[%s20 + $0x18] sm:$0xff]
    %v8956 = vld [vmem:[%s20 + $0x20] sm:$0xff]
    %v8957 = vld [vmem:[%s20 + $0x28] sm:$0xff]
    %v8958 = vld [vmem:[%s20 + $0x30] sm:$0xff]
    %v8959 = vld [vmem:[%s20 + $0x38] sm:$0xff]
    %v8960 = vld [vmem:[%s20 + $0x40] sm:$0xff]
    %v8961 = vld [vmem:[%s20 + $0x48] sm:$0xff]
    %v8962 = vld [vmem:[%s20 + $0x50] sm:$0xff]
    %v8963 = vld [vmem:[%s20 + $0x58] sm:$0xff]
    %v8964 = vld [vmem:[%s20 + $0x60] sm:$0xff]
    %v8965 = vld [vmem:[%s20 + $0x68] sm:$0xff]
    %v8966 = vld [vmem:[%s20 + $0x70] sm:$0xff]
    %v8967 = vld [vmem:[%s20 + $0x78] sm:$0xff]
    %v8968 = vld [vmem:[%s20 + $0x80] sm:$0xff]
    %v8969 = vld [vmem:[%s20 + $0x88] sm:$0xff]
    %v8970 = vld [vmem:[%s20 + $0x90] sm:$0xff]
    %v8971 = vld [vmem:[%s20 + $0x98] sm:$0xff]
    %v8972 = vld [vmem:[%s20 + $0xa0] sm:$0xff]
    %v8973 = vld [vmem:[%s20 + $0xa8] sm:$0xff]
    %v8974 = vld [vmem:[%s20 + $0xb0] sm:$0xff]
    %v8975 = vld [vmem:[%s20 + $0xb8] sm:$0xff]
    %v8976 = vld [vmem:[%s20 + $0xc0] sm:$0xff]
    %v8977 = vld [vmem:[%s20 + $0xc8] sm:$0xff]
    %v8978 = vld [vmem:[%s20 + $0xd0] sm:$0xff]
    %v8979 = vld [vmem:[%s20 + $0xd8] sm:$0xff]
    %v8980 = vld [vmem:[%s20 + $0xe0] sm:$0xff]
    %v8981 = vld [vmem:[%s20 + $0xe8] sm:$0xff]
    %v8982 = vld [vmem:[%s20 + $0xf0] sm:$0xff]
    %v8983 = vld [vmem:[%s20 + $0xf8] sm:$0xff]
    %v8984 = vld [vmem:[%s21] sm:$0x3]
    %v8985 = vld [vmem:[%s22] sm:$0xf]
    %v8986 = vmul.f32 %v8919, 0.09
    %v8988 = vlaneseq
    %v8989 = vshrl.u32 %v8988, 7
    %v8990 = vsub.s32 0, %v8989
    %v8991 = vrot.slane %v8986, %v8990
    %v8992 = vlaneseq
    %v8993 = vshrl.u32 %v8992, 7
    %v8994 = vsub.s32 1, %v8993
    %v8995 = vrot.slane %v8986, %v8994
    %v8998 = vadd.f32 %v8913, %v8991
    %v8999 = vadd.f32 %v8915, %v8995
    %v9002 = vunpack.c.l.s4 1983009808
    %v9003 = vunpack.c.0.s8 %v9002
    %v9004 = vlaneseq
    %v9005 = vshrl.u32 %v9004, 7
    %v9006 = vsub.s32 %v9003, %v9005
    %v9007 = vrot.slane %v8985, %v9006
    %v9008 = vcombine.high %v9007, %v9007
    %v9011 = vpack.c.bf16 %v9007, %v9007
    %v9012 = vpack.c.bf16 %v9008, %v9008
    %v9045 = vunpack.c.l.b16 %v8920
    %v9046 = vunpack.c.h.b16 %v8920
    %v9047 = vunpack.c.l.b16 %v8921
    %v9048 = vunpack.c.h.b16 %v8921
    %v9049 = vunpack.c.l.b16 %v8922
    %v9050 = vunpack.c.h.b16 %v8922
    %v9051 = vunpack.c.l.b16 %v8923
    %v9052 = vunpack.c.h.b16 %v8923
    %v9053 = vunpack.c.l.b16 %v8924
    %v9054 = vunpack.c.h.b16 %v8924
    %v9055 = vunpack.c.l.b16 %v8925
    %v9056 = vunpack.c.h.b16 %v8925
    %v9057 = vunpack.c.l.b16 %v8926
    %v9058 = vunpack.c.h.b16 %v8926
    %v9059 = vunpack.c.l.b16 %v8927
    %v9060 = vunpack.c.h.b16 %v8927
    %v9061 = vunpack.c.l.b16 %v8928
    %v9062 = vunpack.c.h.b16 %v8928
    %v9063 = vunpack.c.l.b16 %v8929
    %v9064 = vunpack.c.h.b16 %v8929
    %v9065 = vunpack.c.l.b16 %v8930
    %v9066 = vunpack.c.h.b16 %v8930
    %v9067 = vunpack.c.l.b16 %v8931
    %v9068 = vunpack.c.h.b16 %v8931
    %v9069 = vunpack.c.l.b16 %v8932
    %v9070 = vunpack.c.h.b16 %v8932
    %v9071 = vunpack.c.l.b16 %v8933
    %v9072 = vunpack.c.h.b16 %v8933
    %v9073 = vunpack.c.l.b16 %v8934
    %v9074 = vunpack.c.h.b16 %v8934
    %v9075 = vunpack.c.l.b16 %v8935
    %v9076 = vunpack.c.h.b16 %v8935
    %v9077 = vunpack.c.l.b16 %v8936
    %v9078 = vunpack.c.h.b16 %v8936
    %v9079 = vunpack.c.l.b16 %v8937
    %v9080 = vunpack.c.h.b16 %v8937
    %v9081 = vunpack.c.l.b16 %v8938
    %v9082 = vunpack.c.h.b16 %v8938
    %v9083 = vunpack.c.l.b16 %v8939
    %v9084 = vunpack.c.h.b16 %v8939
    %v9085 = vunpack.c.l.b16 %v8940
    %v9086 = vunpack.c.h.b16 %v8940
    %v9087 = vunpack.c.l.b16 %v8941
    %v9088 = vunpack.c.h.b16 %v8941
    %v9089 = vunpack.c.l.b16 %v8942
    %v9090 = vunpack.c.h.b16 %v8942
    %v9091 = vunpack.c.l.b16 %v8943
    %v9092 = vunpack.c.h.b16 %v8943
    %v9093 = vunpack.c.l.b16 %v8944
    %v9094 = vunpack.c.h.b16 %v8944
    %v9095 = vunpack.c.l.b16 %v8945
    %v9096 = vunpack.c.h.b16 %v8945
    %v9097 = vunpack.c.l.b16 %v8946
    %v9098 = vunpack.c.h.b16 %v8946
    %v9099 = vunpack.c.l.b16 %v8947
    %v9100 = vunpack.c.h.b16 %v8947
    %v9101 = vunpack.c.l.b16 %v8948
    %v9102 = vunpack.c.h.b16 %v8948
    %v9103 = vunpack.c.l.b16 %v8949
    %v9104 = vunpack.c.h.b16 %v8949
    %v9105 = vunpack.c.l.b16 %v8950
    %v9106 = vunpack.c.h.b16 %v8950
    %v9107 = vunpack.c.l.b16 %v8951
    %v9108 = vunpack.c.h.b16 %v8951
    %v9109 = vpack.c.b16 %v9047, %v9045
    %v9110 = vpack.c.b16 %v9048, %v9046
    %v9111 = vpack.c.b16 %v9051, %v9049
    %v9112 = vpack.c.b16 %v9052, %v9050
    %v9113 = vpack.c.b16 %v9055, %v9053
    %v9114 = vpack.c.b16 %v9056, %v9054
    %v9115 = vpack.c.b16 %v9059, %v9057
    %v9116 = vpack.c.b16 %v9060, %v9058
    %v9117 = vpack.c.b16 %v9063, %v9061
    %v9118 = vpack.c.b16 %v9064, %v9062
    %v9119 = vpack.c.b16 %v9067, %v9065
    %v9120 = vpack.c.b16 %v9068, %v9066
    %v9121 = vpack.c.b16 %v9071, %v9069
    %v9122 = vpack.c.b16 %v9072, %v9070
    %v9123 = vpack.c.b16 %v9075, %v9073
    %v9124 = vpack.c.b16 %v9076, %v9074
    %v9125 = vpack.c.b16 %v9079, %v9077
    %v9126 = vpack.c.b16 %v9080, %v9078
    %v9127 = vpack.c.b16 %v9083, %v9081
    %v9128 = vpack.c.b16 %v9084, %v9082
    %v9129 = vpack.c.b16 %v9087, %v9085
    %v9130 = vpack.c.b16 %v9088, %v9086
    %v9131 = vpack.c.b16 %v9091, %v9089
    %v9132 = vpack.c.b16 %v9092, %v9090
    %v9133 = vpack.c.b16 %v9095, %v9093
    %v9134 = vpack.c.b16 %v9096, %v9094
    %v9135 = vpack.c.b16 %v9099, %v9097
    %v9136 = vpack.c.b16 %v9100, %v9098
    %v9137 = vpack.c.b16 %v9103, %v9101
    %v9138 = vpack.c.b16 %v9104, %v9102
    %v9139 = vpack.c.b16 %v9107, %v9105
    %v9140 = vpack.c.b16 %v9108, %v9106
    %9173 = vmatprep.subr.bf16.mxu0 %v9110
    %9174 = vmatpush1.bf16.msra.mxu0 %v9109
    %9175 = vmatprep.subr.bf16.mxu0 %v9112
    %9176 = vmatpush1.bf16.msra.mxu0 %v9111
    %9177 = vmatprep.subr.bf16.mxu0 %v9114
    %9178 = vmatpush1.bf16.msra.mxu0 %v9113
    %9179 = vmatprep.subr.bf16.mxu0 %v9116
    %9180 = vmatpush1.bf16.msra.mxu0 %v9115
    %9181 = vmatprep.subr.bf16.mxu0 %v9118
    %9182 = vmatpush1.bf16.msra.mxu0 %v9117
    %9183 = vmatprep.subr.bf16.mxu0 %v9120
    %9184 = vmatpush1.bf16.msra.mxu0 %v9119
    %9185 = vmatprep.subr.bf16.mxu0 %v9122
    %9186 = vmatpush1.bf16.msra.mxu0 %v9121
    %9187 = vmatprep.subr.bf16.mxu0 %v9124
    %9188 = vmatpush1.bf16.msra.mxu0 %v9123
    %9189 = vmatprep.subr.bf16.mxu0 %v9126
    %9190 = vmatpush1.bf16.msra.mxu0 %v9125
    %9191 = vmatprep.subr.bf16.mxu0 %v9128
    %9192 = vmatpush1.bf16.msra.mxu0 %v9127
    %9193 = vmatprep.subr.bf16.mxu0 %v9130
    %9194 = vmatpush1.bf16.msra.mxu0 %v9129
    %9195 = vmatprep.subr.bf16.mxu0 %v9132
    %9196 = vmatpush1.bf16.msra.mxu0 %v9131
    %9197 = vmatprep.subr.bf16.mxu0 %v9134
    %9198 = vmatpush1.bf16.msra.mxu0 %v9133
    %9199 = vmatprep.subr.bf16.mxu0 %v9136
    %9200 = vmatpush1.bf16.msra.mxu0 %v9135
    %9201 = vmatprep.subr.bf16.mxu0 %v9138
    %9202 = vmatpush1.bf16.msra.mxu0 %v9137
    %9203 = vmatprep.subr.bf16.mxu0 %v9140
    %9204 = vmatpush1.bf16.msra.mxu0 %v9139
    %9205 = vmatprep.mubr.bf16.mxu0 %v9012
    %9206 = vmatmul.mubr.bf16.gmra.mrb[0].mxu0 %v9011
    %v9207 = vpop.f32.mrb[0].mxu0
    %v9208 = vadd.f32 0.0, %v9207
    %v9209 = vpop.f32.mrb[0].mxu0
    %v9210 = vadd.f32 0.0, %v9209
    %v9211 = vpop.f32.mrb[0].mxu0
    %v9212 = vpop.f32.mrb[0].mxu0
    %9213 = vdwg.mxu0
    %v9214 = vadd.f32 %v8998, %v9208
    %v9215 = vadd.f32 %v8999, %v9210
    %v9216 = vmul.f32 %v9214, 0.1
    %v9217 = vmul.f32 %v9215, 0.1
    %v9218 = vmax.f32 %v9214, %v9216
    %v9219 = vmax.f32 %v9215, %v9217
    %v9220 = vpack.c.bf16 %v9218, %v9218
    %v9221 = vpack.c.bf16 %v9219, %v9219
    %v9223 = vlaneseq
    %v9224 = vshrl.u32 %v9223, 7
    %v9225 = vsub.s32 0, %v9224
    %v9226 = vrot.slane %v8984, %v9225
    %v9227 = vlaneseq
    %v9228 = vshrl.u32 %v9227, 7
    %v9229 = vsub.s32 1, %v9228
    %v9230 = vrot.slane %v8984, %v9229
    %v9265 = vunpack.c.l.b16 %v8952
    %v9266 = vunpack.c.h.b16 %v8952
    %v9267 = vunpack.c.l.b16 %v8953
    %v9268 = vunpack.c.h.b16 %v8953
    %v9269 = vunpack.c.l.b16 %v8954
    %v9270 = vunpack.c.h.b16 %v8954
    %v9271 = vunpack.c.l.b16 %v8955
    %v9272 = vunpack.c.h.b16 %v8955
    %v9273 = vunpack.c.l.b16 %v8956
    %v9274 = vunpack.c.h.b16 %v8956
    %v9275 = vunpack.c.l.b16 %v8957
    %v9276 = vunpack.c.h.b16 %v8957
    %v9277 = vunpack.c.l.b16 %v8958
    %v9278 = vunpack.c.h.b16 %v8958
    %v9279 = vunpack.c.l.b16 %v8959
    %v9280 = vunpack.c.h.b16 %v8959
    %v9281 = vunpack.c.l.b16 %v8960
    %v9282 = vunpack.c.h.b16 %v8960
    %v9283 = vunpack.c.l.b16 %v8961
    %v9284 = vunpack.c.h.b16 %v8961
    %v9285 = vunpack.c.l.b16 %v8962
    %v9286 = vunpack.c.h.b16 %v8962
    %v9287 = vunpack.c.l.b16 %v8963
    %v9288 = vunpack.c.h.b16 %v8963
    %v9289 = vunpack.c.l.b16 %v8964
    %v9290 = vunpack.c.h.b16 %v8964
    %v9291 = vunpack.c.l.b16 %v8965
    %v9292 = vunpack.c.h.b16 %v8965
    %v9293 = vunpack.c.l.b16 %v8966
    %v9294 = vunpack.c.h.b16 %v8966
    %v9295 = vunpack.c.l.b16 %v8967
    %v9296 = vunpack.c.h.b16 %v8967
    %v9297 = vunpack.c.l.b16 %v8968
    %v9298 = vunpack.c.h.b16 %v8968
    %v9299 = vunpack.c.l.b16 %v8969
    %v9300 = vunpack.c.h.b16 %v8969
    %v9301 = vunpack.c.l.b16 %v8970
    %v9302 = vunpack.c.h.b16 %v8970
    %v9303 = vunpack.c.l.b16 %v8971
    %v9304 = vunpack.c.h.b16 %v8971
    %v9305 = vunpack.c.l.b16 %v8972
    %v9306 = vunpack.c.h.b16 %v8972
    %v9307 = vunpack.c.l.b16 %v8973
    %v9308 = vunpack.c.h.b16 %v8973
    %v9309 = vunpack.c.l.b16 %v8974
    %v9310 = vunpack.c.h.b16 %v8974
    %v9311 = vunpack.c.l.b16 %v8975
    %v9312 = vunpack.c.h.b16 %v8975
    %v9313 = vunpack.c.l.b16 %v8976
    %v9314 = vunpack.c.h.b16 %v8976
    %v9315 = vunpack.c.l.b16 %v8977
    %v9316 = vunpack.c.h.b16 %v8977
    %v9317 = vunpack.c.l.b16 %v8978
    %v9318 = vunpack.c.h.b16 %v8978
    %v9319 = vunpack.c.l.b16 %v8979
    %v9320 = vunpack.c.h.b16 %v8979
    %v9321 = vunpack.c.l.b16 %v8980
    %v9322 = vunpack.c.h.b16 %v8980
    %v9323 = vunpack.c.l.b16 %v8981
    %v9324 = vunpack.c.h.b16 %v8981
    %v9325 = vunpack.c.l.b16 %v8982
    %v9326 = vunpack.c.h.b16 %v8982
    %v9327 = vunpack.c.l.b16 %v8983
    %v9328 = vunpack.c.h.b16 %v8983
    %v9329 = vpack.c.b16 %v9267, %v9265
    %v9330 = vpack.c.b16 %v9268, %v9266
    %v9331 = vpack.c.b16 %v9271, %v9269
    %v9332 = vpack.c.b16 %v9272, %v9270
    %v9333 = vpack.c.b16 %v9275, %v9273
    %v9334 = vpack.c.b16 %v9276, %v9274
    %v9335 = vpack.c.b16 %v9279, %v9277
    %v9336 = vpack.c.b16 %v9280, %v9278
    %v9337 = vpack.c.b16 %v9283, %v9281
    %v9338 = vpack.c.b16 %v9284, %v9282
    %v9339 = vpack.c.b16 %v9287, %v9285
    %v9340 = vpack.c.b16 %v9288, %v9286
    %v9341 = vpack.c.b16 %v9291, %v9289
    %v9342 = vpack.c.b16 %v9292, %v9290
    %v9343 = vpack.c.b16 %v9295, %v9293
    %v9344 = vpack.c.b16 %v9296, %v9294
    %v9345 = vpack.c.b16 %v9299, %v9297
    %v9346 = vpack.c.b16 %v9300, %v9298
    %v9347 = vpack.c.b16 %v9303, %v9301
    %v9348 = vpack.c.b16 %v9304, %v9302
    %v9349 = vpack.c.b16 %v9307, %v9305
    %v9350 = vpack.c.b16 %v9308, %v9306
    %v9351 = vpack.c.b16 %v9311, %v9309
    %v9352 = vpack.c.b16 %v9312, %v9310
    %v9353 = vpack.c.b16 %v9315, %v9313
    %v9354 = vpack.c.b16 %v9316, %v9314
    %v9355 = vpack.c.b16 %v9319, %v9317
    %v9356 = vpack.c.b16 %v9320, %v9318
    %v9357 = vpack.c.b16 %v9323, %v9321
    %v9358 = vpack.c.b16 %v9324, %v9322
    %v9359 = vpack.c.b16 %v9327, %v9325
    %v9360 = vpack.c.b16 %v9328, %v9326
    %9393 = vmatprep.subr.bf16.mxu0 %v9330
    %9394 = vmatpush1.bf16.msra.mxu0 %v9329
    %9395 = vmatprep.subr.bf16.mxu0 %v9332
    %9396 = vmatpush1.bf16.msra.mxu0 %v9331
    %9397 = vmatprep.subr.bf16.mxu0 %v9334
    %9398 = vmatpush1.bf16.msra.mxu0 %v9333
    %9399 = vmatprep.subr.bf16.mxu0 %v9336
    %9400 = vmatpush1.bf16.msra.mxu0 %v9335
    %9401 = vmatprep.subr.bf16.mxu0 %v9338
    %9402 = vmatpush1.bf16.msra.mxu0 %v9337
    %9403 = vmatprep.subr.bf16.mxu0 %v9340
    %9404 = vmatpush1.bf16.msra.mxu0 %v9339
    %9405 = vmatprep.subr.bf16.mxu0 %v9342
    %9406 = vmatpush1.bf16.msra.mxu0 %v9341
    %9407 = vmatprep.subr.bf16.mxu0 %v9344
    %9408 = vmatpush1.bf16.msra.mxu0 %v9343
    %9409 = vmatprep.subr.bf16.mxu0 %v9346
    %9410 = vmatpush1.bf16.msra.mxu0 %v9345
    %9411 = vmatprep.subr.bf16.mxu0 %v9348
    %9412 = vmatpush1.bf16.msra.mxu0 %v9347
    %9413 = vmatprep.subr.bf16.mxu0 %v9350
    %9414 = vmatpush1.bf16.msra.mxu0 %v9349
    %9415 = vmatprep.subr.bf16.mxu0 %v9352
    %9416 = vmatpush1.bf16.msra.mxu0 %v9351
    %9417 = vmatprep.subr.bf16.mxu0 %v9354
    %9418 = vmatpush1.bf16.msra.mxu0 %v9353
    %9419 = vmatprep.subr.bf16.mxu0 %v9356
    %9420 = vmatpush1.bf16.msra.mxu0 %v9355
    %9421 = vmatprep.subr.bf16.mxu0 %v9358
    %9422 = vmatpush1.bf16.msra.mxu0 %v9357
    %9423 = vmatprep.subr.bf16.mxu0 %v9360
    %9424 = vmatpush1.bf16.msra.mxu0 %v9359
    %9425 = vmatprep.mubr.bf16.mxu0 %v9221
    %9426 = vmatmul.mubr.bf16.gmra.mrb[0].mxu0 %v9220
    %v9427 = vpop.f32.mrb[0].mxu0
    %v9428 = vadd.f32 %v9226, %v9427
    %v9429 = vpop.f32.mrb[0].mxu0
    %v9430 = vadd.f32 %v9230, %v9429
    %v9431 = vpop.f32.mrb[0].mxu0
    %v9432 = vpop.f32.mrb[0].mxu0
    %9433 = vdwg.mxu0
    %v9434 = vmul.f32 %v9428, 0.1
    %v9435 = vmul.f32 %v9430, 0.1
    %v9436 = vmax.f32 %v9428, %v9434
    %v9437 = vmax.f32 %v9430, %v9435
    %v9438 = vmul.f32 %v9436, 0.049001966
    %v9439 = vmul.f32 %v9437, 0.049001966
    %v9440 = vmul.f32 %v8985, 0.09975746
    %v9443 = vunpack.c.l.s4 1983009808
    %v9444 = vunpack.c.0.s8 %v9443
    %v9445 = vlaneseq
    %v9446 = vshrl.u32 %v9445, 7
    %v9447 = vsub.s32 %v9444, %v9446
    %v9448 = vrot.slane %v9440, %v9447
    %v9449 = vcombine.high %v9448, %v9448
    %v9452 = vadd.f32 %v9438, %v9448
    %v9453 = vadd.f32 %v9439, %v9449
    %v9454 = vmul.f32 %v8919, 0.08
    %v9456 = vlaneseq
    %v9457 = vshrl.u32 %v9456, 7
    %v9458 = vsub.s32 0, %v9457
    %v9459 = vrot.slane %v9454, %v9458
    %v9460 = vlaneseq
    %v9461 = vshrl.u32 %v9460, 7
    %v9462 = vsub.s32 1, %v9461
    %v9463 = vrot.slane %v9454, %v9462
    %v9466 = vadd.f32 %v8913, %v9459
    %v9467 = vadd.f32 %v8915, %v9463
    %v9468 = vpack.c.bf16 %v9452, %v9452
    %v9469 = vpack.c.bf16 %v9453, %v9453
    %9470 = vmatprep.subr.bf16.mxu0 %v9110
    %9471 = vmatpush1.bf16.msra.mxu0 %v9109
    %9472 = vmatprep.subr.bf16.mxu0 %v9112
    %9473 = vmatpush1.bf16.msra.mxu0 %v9111
    %9474 = vmatprep.subr.bf16.mxu0 %v9114
    %9475 = vmatpush1.bf16.msra.mxu0 %v9113
    %9476 = vmatprep.subr.bf16.mxu0 %v9116
    %9477 = vmatpush1.bf16.msra.mxu0 %v9115
    %9478 = vmatprep.subr.bf16.mxu0 %v9118
    %9479 = vmatpush1.bf16.msra.mxu0 %v9117
    %9480 = vmatprep.subr.bf16.mxu0 %v9120
    %9481 = vmatpush1.bf16.msra.mxu0 %v9119
    %9482 = vmatprep.subr.bf16.mxu0 %v9122
    %9483 = vmatpush1.bf16.msra.mxu0 %v9121
    %9484 = vmatprep.subr.bf16.mxu0 %v9124
    %9485 = vmatpush1.bf16.msra.mxu0 %v9123
    %9486 = vmatprep.subr.bf16.mxu0 %v9126
    %9487 = vmatpush1.bf16.msra.mxu0 %v9125
    %9488 = vmatprep.subr.bf16.mxu0 %v9128
    %9489 = vmatpush1.bf16.msra.mxu0 %v9127
    %9490 = vmatprep.subr.bf16.mxu0 %v9130
    %9491 = vmatpush1.bf16.msra.mxu0 %v9129
    %9492 = vmatprep.subr.bf16.mxu0 %v9132
    %9493 = vmatpush1.bf16.msra.mxu0 %v9131
    %9494 = vmatprep.subr.bf16.mxu0 %v9134
    %9495 = vmatpush1.bf16.msra.mxu0 %v9133
    %9496 = vmatprep.subr.bf16.mxu0 %v9136
    %9497 = vmatpush1.bf16.msra.mxu0 %v9135
    %9498 = vmatprep.subr.bf16.mxu0 %v9138
    %9499 = vmatpush1.bf16.msra.mxu0 %v9137
    %9500 = vmatprep.subr.bf16.mxu0 %v9140
    %9501 = vmatpush1.bf16.msra.mxu0 %v9139
    %9502 = vmatprep.mubr.bf16.mxu0 %v9469
    %9503 = vmatmul.mubr.bf16.gmra.mrb[0].mxu0 %v9468
    %v9504 = vpop.f32.mrb[0].mxu0
    %v9505 = vadd.f32 0.0, %v9504
    %v9506 = vpop.f32.mrb[0].mxu0
    %v9507 = vadd.f32 0.0, %v9506
    %v9508 = vpop.f32.mrb[0].mxu0
    %v9509 = vpop.f32.mrb[0].mxu0
    %9510 = vdwg.mxu0
    %v9511 = vadd.f32 %v9466, %v9505
    %v9512 = vadd.f32 %v9467, %v9507
    %v9513 = vmul.f32 %v9511, 0.1
    %v9514 = vmul.f32 %v9512, 0.1
    %v9515 = vmax.f32 %v9511, %v9513
    %v9516 = vmax.f32 %v9512, %v9514
    %v9517 = vpack.c.bf16 %v9515, %v9515
    %v9518 = vpack.c.bf16 %v9516, %v9516
    %9519 = vmatprep.subr.bf16.mxu0 %v9330
    %9520 = vmatpush1.bf16.msra.mxu0 %v9329
    %9521 = vmatprep.subr.bf16.mxu0 %v9332
    %9522 = vmatpush1.bf16.msra.mxu0 %v9331
    %9523 = vmatprep.subr.bf16.mxu0 %v9334
    %9524 = vmatpush1.bf16.msra.mxu0 %v9333
    %9525 = vmatprep.subr.bf16.mxu0 %v9336
    %9526 = vmatpush1.bf16.msra.mxu0 %v9335
    %9527 = vmatprep.subr.bf16.mxu0 %v9338
    %9528 = vmatpush1.bf16.msra.mxu0 %v9337
    %9529 = vmatprep.subr.bf16.mxu0 %v9340
    %9530 = vmatpush1.bf16.msra.mxu0 %v9339
    %9531 = vmatprep.subr.bf16.mxu0 %v9342
    %9532 = vmatpush1.bf16.msra.mxu0 %v9341
    %9533 = vmatprep.subr.bf16.mxu0 %v9344
    %9534 = vmatpush1.bf16.msra.mxu0 %v9343
    %9535 = vmatprep.subr.bf16.mxu0 %v9346
    %9536 = vmatpush1.bf16.msra.mxu0 %v9345
    %9537 = vmatprep.subr.bf16.mxu0 %v9348
    %9538 = vmatpush1.bf16.msra.mxu0 %v9347
    %9539 = vmatprep.subr.bf16.mxu0 %v9350
    %9540 = vmatpush1.bf16.msra.mxu0 %v9349
    %9541 = vmatprep.subr.bf16.mxu0 %v9352
    %9542 = vmatpush1.bf16.msra.mxu0 %v9351
    %9543 = vmatprep.subr.bf16.mxu0 %v9354
    %9544 = vmatpush1.bf16.msra.mxu0 %v9353
    %9545 = vmatprep.subr.bf16.mxu0 %v9356
    %9546 = vmatpush1.bf16.msra.mxu0 %v9355
    %9547 = vmatprep.subr.bf16.mxu0 %v9358
    %9548 = vmatpush1.bf16.msra.mxu0 %v9357
    %9549 = vmatprep.subr.bf16.mxu0 %v9360
    %9550 = vmatpush1.bf16.msra.mxu0 %v9359
    %9551 = vmatprep.mubr.bf16.mxu0 %v9518
    %9552 = vmatmul.mubr.bf16.gmra.mrb[0].mxu0 %v9517
    %v9553 = vpop.f32.mrb[0].mxu0
    %v9554 = vadd.f32 %v9226, %v9553
    %v9555 = vpop.f32.mrb[0].mxu0
    %v9556 = vadd.f32 %v9230, %v9555
    %v9557 = vpop.f32.mrb[0].mxu0
    %v9558 = vpop.f32.mrb[0].mxu0
    %9559 = vdwg.mxu0
    %v9560 = vmul.f32 %v9554, 0.1
    %v9561 = vmul.f32 %v9556, 0.1
    %v9562 = vmax.f32 %v9554, %v9560
    %v9563 = vmax.f32 %v9556, %v9561
    %v9564 = vmul.f32 %v9562, 0.10678013
    %v9565 = vmul.f32 %v9563, 0.10678013
    %v9566 = vmul.f32 %v9452, 0.3876418
    %v9567 = vmul.f32 %v9453, 0.3876418
    %v9568 = vadd.f32 %v9564, %v9566
    %v9569 = vadd.f32 %v9565, %v9567
    %v9570 = vmul.f32 %v8919, 0.07
    %v9572 = vlaneseq
    %v9573 = vshrl.u32 %v9572, 7
    %v9574 = vsub.s32 0, %v9573
    %v9575 = vrot.slane %v9570, %v9574
    %v9576 = vlaneseq
    %v9577 = vshrl.u32 %v9576, 7
    %v9578 = vsub.s32 1, %v9577
    %v9579 = vrot.slane %v9570, %v9578
    %v9582 = vadd.f32 %v8913, %v9575
    %v9583 = vadd.f32 %v8915, %v9579
    %v9584 = vpack.c.bf16 %v9568, %v9568
    %v9585 = vpack.c.bf16 %v9569, %v9569
    %9586 = vmatprep.subr.bf16.mxu0 %v9110
    %9587 = vmatpush1.bf16.msra.mxu0 %v9109
    %9588 = vmatprep.subr.bf16.mxu0 %v9112
    %9589 = vmatpush1.bf16.msra.mxu0 %v9111
    %9590 = vmatprep.subr.bf16.mxu0 %v9114
    %9591 = vmatpush1.bf16.msra.mxu0 %v9113
    %9592 = vmatprep.subr.bf16.mxu0 %v9116
    %9593 = vmatpush1.bf16.msra.mxu0 %v9115
    %9594 = vmatprep.subr.bf16.mxu0 %v9118
    %9595 = vmatpush1.bf16.msra.mxu0 %v9117
    %9596 = vmatprep.subr.bf16.mxu0 %v9120
    %9597 = vmatpush1.bf16.msra.mxu0 %v9119
    %9598 = vmatprep.subr.bf16.mxu0 %v9122
    %9599 = vmatpush1.bf16.msra.mxu0 %v9121
    %9600 = vmatprep.subr.bf16.mxu0 %v9124
    %9601 = vmatpush1.bf16.msra.mxu0 %v9123
    %9602 = vmatprep.subr.bf16.mxu0 %v9126
    %9603 = vmatpush1.bf16.msra.mxu0 %v9125
    %9604 = vmatprep.subr.bf16.mxu0 %v9128
    %9605 = vmatpush1.bf16.msra.mxu0 %v9127
    %9606 = vmatprep.subr.bf16.mxu0 %v9130
    %9607 = vmatpush1.bf16.msra.mxu0 %v9129
    %9608 = vmatprep.subr.bf16.mxu0 %v9132
    %9609 = vmatpush1.bf16.msra.mxu0 %v9131
    %9610 = vmatprep.subr.bf16.mxu0 %v9134
    %9611 = vmatpush1.bf16.msra.mxu0 %v9133
    %9612 = vmatprep.subr.bf16.mxu0 %v9136
    %9613 = vmatpush1.bf16.msra.mxu0 %v9135
    %9614 = vmatprep.subr.bf16.mxu0 %v9138
    %9615 = vmatpush1.bf16.msra.mxu0 %v9137
    %9616 = vmatprep.subr.bf16.mxu0 %v9140
    %9617 = vmatpush1.bf16.msra.mxu0 %v9139
    %9618 = vmatprep.mubr.bf16.mxu0 %v9585
    %9619 = vmatmul.mubr.bf16.gmra.mrb[0].mxu0 %v9584
    %v9620 = vpop.f32.mrb[0].mxu0
    %v9621 = vadd.f32 0.0, %v9620
    %v9622 = vpop.f32.mrb[0].mxu0
    %v9623 = vadd.f32 0.0, %v9622
    %v9624 = vpop.f32.mrb[0].mxu0
    %v9625 = vpop.f32.mrb[0].mxu0
    %9626 = vdwg.mxu0
    %v9627 = vadd.f32 %v9582, %v9621
    %v9628 = vadd.f32 %v9583, %v9623
    %v9629 = vmul.f32 %v9627, 0.1
    %v9630 = vmul.f32 %v9628, 0.1
    %v9631 = vmax.f32 %v9627, %v9629
    %v9632 = vmax.f32 %v9628, %v9630
    %v9633 = vpack.c.bf16 %v9631, %v9631
    %v9634 = vpack.c.bf16 %v9632, %v9632
    %9635 = vmatprep.subr.bf16.mxu0 %v9330
    %9636 = vmatpush1.bf16.msra.mxu0 %v9329
    %9637 = vmatprep.subr.bf16.mxu0 %v9332
    %9638 = vmatpush1.bf16.msra.mxu0 %v9331
    %9639 = vmatprep.subr.bf16.mxu0 %v9334
    %9640 = vmatpush1.bf16.msra.mxu0 %v9333
    %9641 = vmatprep.subr.bf16.mxu0 %v9336
    %9642 = vmatpush1.bf16.msra.mxu0 %v9335
    %9643 = vmatprep.subr.bf16.mxu0 %v9338
    %9644 = vmatpush1.bf16.msra.mxu0 %v9337
    %9645 = vmatprep.subr.bf16.mxu0 %v9340
    %9646 = vmatpush1.bf16.msra.mxu0 %v9339
    %9647 = vmatprep.subr.bf16.mxu0 %v9342
    %9648 = vmatpush1.bf16.msra.mxu0 %v9341
    %9649 = vmatprep.subr.bf16.mxu0 %v9344
    %9650 = vmatpush1.bf16.msra.mxu0 %v9343
    %9651 = vmatprep.subr.bf16.mxu0 %v9346
    %9652 = vmatpush1.bf16.msra.mxu0 %v9345
    %9653 = vmatprep.subr.bf16.mxu0 %v9348
    %9654 = vmatpush1.bf16.msra.mxu0 %v9347
    %9655 = vmatprep.subr.bf16.mxu0 %v9350
    %9656 = vmatpush1.bf16.msra.mxu0 %v9349
    %9657 = vmatprep.subr.bf16.mxu0 %v9352
    %9658 = vmatpush1.bf16.msra.mxu0 %v9351
    %9659 = vmatprep.subr.bf16.mxu0 %v9354
    %9660 = vmatpush1.bf16.msra.mxu0 %v9353
    %9661 = vmatprep.subr.bf16.mxu0 %v9356
    %9662 = vmatpush1.bf16.msra.mxu0 %v9355
    %9663 = vmatprep.subr.bf16.mxu0 %v9358
    %9664 = vmatpush1.bf16.msra.mxu0 %v9357
    %9665 = vmatprep.subr.bf16.mxu0 %v9360
    %9666 = vmatpush1.bf16.msra.mxu0 %v9359
    %9667 = vmatprep.mubr.bf16.mxu0 %v9634
    %9668 = vmatmul.mubr.bf16.gmra.mrb[0].mxu0 %v9633
    %v9669 = vpop.f32.mrb[0].mxu0
    %v9670 = vadd.f32 %v9226, %v9669
    %v9671 = vpop.f32.mrb[0].mxu0
    %v9672 = vadd.f32 %v9230, %v9671
    %v9673 = vpop.f32.mrb[0].mxu0
    %v9674 = vpop.f32.mrb[0].mxu0
    %9675 = vdwg.mxu0
    %v9676 = vmul.f32 %v9670, 0.1
    %v9677 = vmul.f32 %v9672, 0.1
    %v9678 = vmax.f32 %v9670, %v9676
    %v9679 = vmax.f32 %v9672, %v9677
    %v9680 = vmul.f32 %v9678, 0.17013536
    %v9681 = vmul.f32 %v9679, 0.17013536
    %v9682 = vmul.f32 %v9568, 0.5146726
    %v9683 = vmul.f32 %v9569, 0.5146726
    %v9684 = vadd.f32 %v9680, %v9682
    %v9685 = vadd.f32 %v9681, %v9683
    %v9686 = vmul.f32 %v8919, 0.06
    %v9688 = vlaneseq
    %v9689 = vshrl.u32 %v9688, 7
    %v9690 = vsub.s32 0, %v9689
    %v9691 = vrot.slane %v9686, %v9690
    %v9692 = vlaneseq
    %v9693 = vshrl.u32 %v9692, 7
    %v9694 = vsub.s32 1, %v9693
    %v9695 = vrot.slane %v9686, %v9694
    %v9698 = vadd.f32 %v8913, %v9691
    %v9699 = vadd.f32 %v8915, %v9695
    %v9700 = vpack.c.bf16 %v9684, %v9684
    %v9701 = vpack.c.bf16 %v9685, %v9685
    %9702 = vmatprep.subr.bf16.mxu0 %v9110
    %9703 = vmatpush1.bf16.msra.mxu0 %v9109
    %9704 = vmatprep.subr.bf16.mxu0 %v9112
    %9705 = vmatpush1.bf16.msra.mxu0 %v9111
    %9706 = vmatprep.subr.bf16.mxu0 %v9114
    %9707 = vmatpush1.bf16.msra.mxu0 %v9113
    %9708 = vmatprep.subr.bf16.mxu0 %v9116
    %9709 = vmatpush1.bf16.msra.mxu0 %v9115
    %9710 = vmatprep.subr.bf16.mxu0 %v9118
    %9711 = vmatpush1.bf16.msra.mxu0 %v9117
    %9712 = vmatprep.subr.bf16.mxu0 %v9120
    %9713 = vmatpush1.bf16.msra.mxu0 %v9119
    %9714 = vmatprep.subr.bf16.mxu0 %v9122
    %9715 = vmatpush1.bf16.msra.mxu0 %v9121
    %9716 = vmatprep.subr.bf16.mxu0 %v9124
    %9717 = vmatpush1.bf16.msra.mxu0 %v9123
    %9718 = vmatprep.subr.bf16.mxu0 %v9126
    %9719 = vmatpush1.bf16.msra.mxu0 %v9125
    %9720 = vmatprep.subr.bf16.mxu0 %v9128
    %9721 = vmatpush1.bf16.msra.mxu0 %v9127
    %9722 = vmatprep.subr.bf16.mxu0 %v9130
    %9723 = vmatpush1.bf16.msra.mxu0 %v9129
    %9724 = vmatprep.subr.bf16.mxu0 %v9132
    %9725 = vmatpush1.bf16.msra.mxu0 %v9131
    %9726 = vmatprep.subr.bf16.mxu0 %v9134
    %9727 = vmatpush1.bf16.msra.mxu0 %v9133
    %9728 = vmatprep.subr.bf16.mxu0 %v9136
    %9729 = vmatpush1.bf16.msra.mxu0 %v9135
    %9730 = vmatprep.subr.bf16.mxu0 %v9138
    %9731 = vmatpush1.bf16.msra.mxu0 %v9137
    %9732 = vmatprep.subr.bf16.mxu0 %v9140
    %9733 = vmatpush1.bf16.msra.mxu0 %v9139
    %9734 = vmatprep.mubr.bf16.mxu0 %v9701
    %9735 = vmatmul.mubr.bf16.gmra.mrb[0].mxu0 %v9700
    %v9736 = vpop.f32.mrb[0].mxu0
    %v9737 = vadd.f32 0.0, %v9736
    %v9738 = vpop.f32.mrb[0].mxu0
    %v9739 = vadd.f32 0.0, %v9738
    %v9740 = vpop.f32.mrb[0].mxu0
    %v9741 = vpop.f32.mrb[0].mxu0
    %9742 = vdwg.mxu0
    %v9743 = vadd.f32 %v9698, %v9737
    %v9744 = vadd.f32 %v9699, %v9739
    %v9745 = vmul.f32 %v9743, 0.1
    %v9746 = vmul.f32 %v9744, 0.1
    %v9747 = vmax.f32 %v9743, %v9745
    %v9748 = vmax.f32 %v9744, %v9746
    %v9749 = vpack.c.bf16 %v9747, %v9747
    %v9750 = vpack.c.bf16 %v9748, %v9748
    %9751 = vmatprep.subr.bf16.mxu0 %v9330
    %9752 = vmatpush1.bf16.msra.mxu0 %v9329
    %9753 = vmatprep.subr.bf16.mxu0 %v9332
    %9754 = vmatpush1.bf16.msra.mxu0 %v9331
    %9755 = vmatprep.subr.bf16.mxu0 %v9334
    %9756 = vmatpush1.bf16.msra.mxu0 %v9333
    %9757 = vmatprep.subr.bf16.mxu0 %v9336
    %9758 = vmatpush1.bf16.msra.mxu0 %v9335
    %9759 = vmatprep.subr.bf16.mxu0 %v9338
    %9760 = vmatpush1.bf16.msra.mxu0 %v9337
    %9761 = vmatprep.subr.bf16.mxu0 %v9340
    %9762 = vmatpush1.bf16.msra.mxu0 %v9339
    %9763 = vmatprep.subr.bf16.mxu0 %v9342
    %9764 = vmatpush1.bf16.msra.mxu0 %v9341
    %9765 = vmatprep.subr.bf16.mxu0 %v9344
    %9766 = vmatpush1.bf16.msra.mxu0 %v9343
    %9767 = vmatprep.subr.bf16.mxu0 %v9346
    %9768 = vmatpush1.bf16.msra.mxu0 %v9345
    %9769 = vmatprep.subr.bf16.mxu0 %v9348
    %9770 = vmatpush1.bf16.msra.mxu0 %v9347
    %9771 = vmatprep.subr.bf16.mxu0 %v9350
    %9772 = vmatpush1.bf16.msra.mxu0 %v9349
    %9773 = vmatprep.subr.bf16.mxu0 %v9352
    %9774 = vmatpush1.bf16.msra.mxu0 %v9351
    %9775 = vmatprep.subr.bf16.mxu0 %v9354
    %9776 = vmatpush1.bf16.msra.mxu0 %v9353
    %9777 = vmatprep.subr.bf16.mxu0 %v9356
    %9778 = vmatpush1.bf16.msra.mxu0 %v9355
    %9779 = vmatprep.subr.bf16.mxu0 %v9358
    %9780 = vmatpush1.bf16.msra.mxu0 %v9357
    %9781 = vmatprep.subr.bf16.mxu0 %v9360
    %9782 = vmatpush1.bf16.msra.mxu0 %v9359
    %9783 = vmatprep.mubr.bf16.mxu0 %v9750
    %9784 = vmatmul.mubr.bf16.gmra.mrb[0].mxu0 %v9749
    %v9785 = vpop.f32.mrb[0].mxu0
    %v9786 = vadd.f32 %v9226, %v9785
    %v9787 = vpop.f32.mrb[0].mxu0
    %v9788 = vadd.f32 %v9230, %v9787
    %v9789 = vpop.f32.mrb[0].mxu0
    %v9790 = vpop.f32.mrb[0].mxu0
    %9791 = vdwg.mxu0
    %v9792 = vmul.f32 %v9786, 0.1
    %v9793 = vmul.f32 %v9788, 0.1
    %v9794 = vmax.f32 %v9786, %v9792
    %v9795 = vmax.f32 %v9788, %v9793
    %v9796 = vmul.f32 %v9794, 0.22979298
    %v9797 = vmul.f32 %v9795, 0.22979298
    %v9798 = vmul.f32 %v9684, 0.5855746
    %v9799 = vmul.f32 %v9685, 0.5855746
    %v9800 = vadd.f32 %v9796, %v9798
    %v9801 = vadd.f32 %v9797, %v9799
    %v9802 = vmul.f32 %v8919, 0.05
    %v9804 = vlaneseq
    %v9805 = vshrl.u32 %v9804, 7
    %v9806 = vsub.s32 0, %v9805
    %v9807 = vrot.slane %v9802, %v9806
    %v9808 = vlaneseq
    %v9809 = vshrl.u32 %v9808, 7
    %v9810 = vsub.s32 1, %v9809
    %v9811 = vrot.slane %v9802, %v9810
    %v9814 = vadd.f32 %v8913, %v9807
    %v9815 = vadd.f32 %v8915, %v9811
    %v9816 = vpack.c.bf16 %v9800, %v9800
    %v9817 = vpack.c.bf16 %v9801, %v9801
    %9818 = vmatprep.subr.bf16.mxu0 %v9110
    %9819 = vmatpush1.bf16.msra.mxu0 %v9109
    %9820 = vmatprep.subr.bf16.mxu0 %v9112
    %9821 = vmatpush1.bf16.msra.mxu0 %v9111
    %9822 = vmatprep.subr.bf16.mxu0 %v9114
    %9823 = vmatpush1.bf16.msra.mxu0 %v9113
    %9824 = vmatprep.subr.bf16.mxu0 %v9116
    %9825 = vmatpush1.bf16.msra.mxu0 %v9115
    %9826 = vmatprep.subr.bf16.mxu0 %v9118
    %9827 = vmatpush1.bf16.msra.mxu0 %v9117
    %9828 = vmatprep.subr.bf16.mxu0 %v9120
    %9829 = vmatpush1.bf16.msra.mxu0 %v9119
    %9830 = vmatprep.subr.bf16.mxu0 %v9122
    %9831 = vmatpush1.bf16.msra.mxu0 %v9121
    %9832 = vmatprep.subr.bf16.mxu0 %v9124
    %9833 = vmatpush1.bf16.msra.mxu0 %v9123
    %9834 = vmatprep.subr.bf16.mxu0 %v9126
    %9835 = vmatpush1.bf16.msra.mxu0 %v9125
    %9836 = vmatprep.subr.bf16.mxu0 %v9128
    %9837 = vmatpush1.bf16.msra.mxu0 %v9127
    %9838 = vmatprep.subr.bf16.mxu0 %v9130
    %9839 = vmatpush1.bf16.msra.mxu0 %v9129
    %9840 = vmatprep.subr.bf16.mxu0 %v9132
    %9841 = vmatpush1.bf16.msra.mxu0 %v9131
    %9842 = vmatprep.subr.bf16.mxu0 %v9134
    %9843 = vmatpush1.bf16.msra.mxu0 %v9133
    %9844 = vmatprep.subr.bf16.mxu0 %v9136
    %9845 = vmatpush1.bf16.msra.mxu0 %v9135
    %9846 = vmatprep.subr.bf16.mxu0 %v9138
    %9847 = vmatpush1.bf16.msra.mxu0 %v9137
    %9848 = vmatprep.subr.bf16.mxu0 %v9140
    %9849 = vmatpush1.bf16.msra.mxu0 %v9139
    %9850 = vmatprep.mubr.bf16.mxu0 %v9817
    %9851 = vmatmul.mubr.bf16.gmra.mrb[0].mxu0 %v9816
    %v9852 = vpop.f32.mrb[0].mxu0
    %v9853 = vadd.f32 0.0, %v9852
    %v9854 = vpop.f32.mrb[0].mxu0
    %v9855 = vadd.f32 0.0, %v9854
    %v9856 = vpop.f32.mrb[0].mxu0
    %v9857 = vpop.f32.mrb[0].mxu0
    %9858 = vdwg.mxu0
    %v9859 = vadd.f32 %v9814, %v9853
    %v9860 = vadd.f32 %v9815, %v9855
    %v9861 = vmul.f32 %v9859, 0.1
    %v9862 = vmul.f32 %v9860, 0.1
    %v9863 = vmax.f32 %v9859, %v9861
    %v9864 = vmax.f32 %v9860, %v9862
    %v9865 = vpack.c.bf16 %v9863, %v9863
    %v9866 = vpack.c.bf16 %v9864, %v9864
    %9867 = vmatprep.subr.bf16.mxu0 %v9330
    %9868 = vmatpush1.bf16.msra.mxu0 %v9329
    %9869 = vmatprep.subr.bf16.mxu0 %v9332
    %9870 = vmatpush1.bf16.msra.mxu0 %v9331
    %9871 = vmatprep.subr.bf16.mxu0 %v9334
    %9872 = vmatpush1.bf16.msra.mxu0 %v9333
    %9873 = vmatprep.subr.bf16.mxu0 %v9336
    %9874 = vmatpush1.bf16.msra.mxu0 %v9335
    %9875 = vmatprep.subr.bf16.mxu0 %v9338
    %9876 = vmatpush1.bf16.msra.mxu0 %v9337
    %9877 = vmatprep.subr.bf16.mxu0 %v9340
    %9878 = vmatpush1.bf16.msra.mxu0 %v9339
    %9879 = vmatprep.subr.bf16.mxu0 %v9342
    %9880 = vmatpush1.bf16.msra.mxu0 %v9341
    %9881 = vmatprep.subr.bf16.mxu0 %v9344
    %9882 = vmatpush1.bf16.msra.mxu0 %v9343
    %9883 = vmatprep.subr.bf16.mxu0 %v9346
    %9884 = vmatpush1.bf16.msra.mxu0 %v9345
    %9885 = vmatprep.subr.bf16.mxu0 %v9348
    %9886 = vmatpush1.bf16.msra.mxu0 %v9347
    %9887 = vmatprep.subr.bf16.mxu0 %v9350
    %9888 = vmatpush1.bf16.msra.mxu0 %v9349
    %9889 = vmatprep.subr.bf16.mxu0 %v9352
    %9890 = vmatpush1.bf16.msra.mxu0 %v9351
    %9891 = vmatprep.subr.bf16.mxu0 %v9354
    %9892 = vmatpush1.bf16.msra.mxu0 %v9353
    %9893 = vmatprep.subr.bf16.mxu0 %v9356
    %9894 = vmatpush1.bf16.msra.mxu0 %v9355
    %9895 = vmatprep.subr.bf16.mxu0 %v9358
    %9896 = vmatpush1.bf16.msra.mxu0 %v9357
    %9897 = vmatprep.subr.bf16.mxu0 %v9360
    %9898 = vmatpush1.bf16.msra.mxu0 %v9359
    %9899 = vmatprep.mubr.bf16.mxu0 %v9866
    %9900 = vmatmul.mubr.bf16.gmra.mrb[0].mxu0 %v9865
    %v9901 = vpop.f32.mrb[0].mxu0
    %v9902 = vadd.f32 %v9226, %v9901
    %v9903 = vpop.f32.mrb[0].mxu0
    %v9904 = vadd.f32 %v9230, %v9903
    %v9905 = vpop.f32.mrb[0].mxu0
    %v9906 = vpop.f32.mrb[0].mxu0
    %9907 = vdwg.mxu0
    %v9908 = vmul.f32 %v9902, 0.1
    %v9909 = vmul.f32 %v9904, 0.1
    %v9910 = vmax.f32 %v9902, %v9908
    %v9911 = vmax.f32 %v9904, %v9909
    %v9912 = vmul.f32 %v9910, 0.2832943
    %v9913 = vmul.f32 %v9911, 0.2832943
    %v9914 = vmul.f32 %v9800, 0.6165556
    %v9915 = vmul.f32 %v9801, 0.6165556
    %v9916 = vadd.f32 %v9912, %v9914
    %v9917 = vadd.f32 %v9913, %v9915
    %v9918 = vmul.f32 %v8919, 0.04
    %v9920 = vlaneseq
    %v9921 = vshrl.u32 %v9920, 7
    %v9922 = vsub.s32 0, %v9921
    %v9923 = vrot.slane %v9918, %v9922
    %v9924 = vlaneseq
    %v9925 = vshrl.u32 %v9924, 7
    %v9926 = vsub.s32 1, %v9925
    %v9927 = vrot.slane %v9918, %v9926
    %v9930 = vadd.f32 %v8913, %v9923
    %v9931 = vadd.f32 %v8915, %v9927
    %v9932 = vpack.c.bf16 %v9916, %v9916
    %v9933 = vpack.c.bf16 %v9917, %v9917
    %9934 = vmatprep.subr.bf16.mxu0 %v9110
    %9935 = vmatpush1.bf16.msra.mxu0 %v9109
    %9936 = vmatprep.subr.bf16.mxu0 %v9112
    %9937 = vmatpush1.bf16.msra.mxu0 %v9111
    %9938 = vmatprep.subr.bf16.mxu0 %v9114
    %9939 = vmatpush1.bf16.msra.mxu0 %v9113
    %9940 = vmatprep.subr.bf16.mxu0 %v9116
    %9941 = vmatpush1.bf16.msra.mxu0 %v9115
    %9942 = vmatprep.subr.bf16.mxu0 %v9118
    %9943 = vmatpush1.bf16.msra.mxu0 %v9117
    %9944 = vmatprep.subr.bf16.mxu0 %v9120
    %9945 = vmatpush1.bf16.msra.mxu0 %v9119
    %9946 = vmatprep.subr.bf16.mxu0 %v9122
    %9947 = vmatpush1.bf16.msra.mxu0 %v9121
    %9948 = vmatprep.subr.bf16.mxu0 %v9124
    %9949 = vmatpush1.bf16.msra.mxu0 %v9123
    %9950 = vmatprep.subr.bf16.mxu0 %v9126
    %9951 = vmatpush1.bf16.msra.mxu0 %v9125
    %9952 = vmatprep.subr.bf16.mxu0 %v9128
    %9953 = vmatpush1.bf16.msra.mxu0 %v9127
    %9954 = vmatprep.subr.bf16.mxu0 %v9130
    %9955 = vmatpush1.bf16.msra.mxu0 %v9129
    %9956 = vmatprep.subr.bf16.mxu0 %v9132
    %9957 = vmatpush1.bf16.msra.mxu0 %v9131
    %9958 = vmatprep.subr.bf16.mxu0 %v9134
    %9959 = vmatpush1.bf16.msra.mxu0 %v9133
    %9960 = vmatprep.subr.bf16.mxu0 %v9136
    %9961 = vmatpush1.bf16.msra.mxu0 %v9135
    %9962 = vmatprep.subr.bf16.mxu0 %v9138
    %9963 = vmatpush1.bf16.msra.mxu0 %v9137
    %9964 = vmatprep.subr.bf16.mxu0 %v9140
    %9965 = vmatpush1.bf16.msra.mxu0 %v9139
    %9966 = vmatprep.mubr.bf16.mxu0 %v9933
    %9967 = vmatmul.mubr.bf16.gmra.mrb[0].mxu0 %v9932
    %v9968 = vpop.f32.mrb[0].mxu0
    %v9969 = vadd.f32 0.0, %v9968
    %v9970 = vpop.f32.mrb[0].mxu0
    %v9971 = vadd.f32 0.0, %v9970
    %v9972 = vpop.f32.mrb[0].mxu0
    %v9973 = vpop.f32.mrb[0].mxu0
    %9974 = vdwg.mxu0
    %v9975 = vadd.f32 %v9930, %v9969
    %v9976 = vadd.f32 %v9931, %v9971
    %v9977 = vmul.f32 %v9975, 0.1
    %v9978 = vmul.f32 %v9976, 0.1
    %v9979 = vmax.f32 %v9975, %v9977
    %v9980 = vmax.f32 %v9976, %v9978
    %v9981 = vpack.c.bf16 %v9979, %v9979
    %v9982 = vpack.c.bf16 %v9980, %v9980
    %9983 = vmatprep.subr.bf16.mxu0 %v9330
    %9984 = vmatpush1.bf16.msra.mxu0 %v9329
    %9985 = vmatprep.subr.bf16.mxu0 %v9332
    %9986 = vmatpush1.bf16.msra.mxu0 %v9331
    %9987 = vmatprep.subr.bf16.mxu0 %v9334
    %9988 = vmatpush1.bf16.msra.mxu0 %v9333
    %9989 = vmatprep.subr.bf16.mxu0 %v9336
    %9990 = vmatpush1.bf16.msra.mxu0 %v9335
    %9991 = vmatprep.subr.bf16.mxu0 %v9338
    %9992 = vmatpush1.bf16.msra.mxu0 %v9337
    %9993 = vmatprep.subr.bf16.mxu0 %v9340
    %9994 = vmatpush1.bf16.msra.mxu0 %v9339
    %9995 = vmatprep.subr.bf16.mxu0 %v9342
    %9996 = vmatpush1.bf16.msra.mxu0 %v9341
    %9997 = vmatprep.subr.bf16.mxu0 %v9344
    %9998 = vmatpush1.bf16.msra.mxu0 %v9343
    %9999 = vmatprep.subr.bf16.mxu0 %v9346
    %10000 = vmatpush1.bf16.msra.mxu0 %v9345
    %10001 = vmatprep.subr.bf16.mxu0 %v9348
    %10002 = vmatpush1.bf16.msra.mxu0 %v9347
    %10003 = vmatprep.subr.bf16.mxu0 %v9350
    %10004 = vmatpush1.bf16.msra.mxu0 %v9349
    %10005 = vmatprep.subr.bf16.mxu0 %v9352
    %10006 = vmatpush1.bf16.msra.mxu0 %v9351
    %10007 = vmatprep.subr.bf16.mxu0 %v9354
    %10008 = vmatpush1.bf16.msra.mxu0 %v9353
    %10009 = vmatprep.subr.bf16.mxu0 %v9356
    %10010 = vmatpush1.bf16.msra.mxu0 %v9355
    %10011 = vmatprep.subr.bf16.mxu0 %v9358
    %10012 = vmatpush1.bf16.msra.mxu0 %v9357
    %10013 = vmatprep.subr.bf16.mxu0 %v9360
    %10014 = vmatpush1.bf16.msra.mxu0 %v9359
    %10015 = vmatprep.mubr.bf16.mxu0 %v9982
    %10016 = vmatmul.mubr.bf16.gmra.mrb[0].mxu0 %v9981
    %v10017 = vpop.f32.mrb[0].mxu0
    %v10018 = vadd.f32 %v9226, %v10017
    %v10019 = vpop.f32.mrb[0].mxu0
    %v10020 = vadd.f32 %v9230, %v10019
    %v10021 = vpop.f32.mrb[0].mxu0
    %v10022 = vpop.f32.mrb[0].mxu0
    %10023 = vdwg.mxu0
    %v10024 = vmul.f32 %v10018, 0.1
    %v10025 = vmul.f32 %v10020, 0.1
    %v10026 = vmax.f32 %v10018, %v10024
    %v10027 = vmax.f32 %v10020, %v10025
    %v10028 = vmul.f32 %v10026, 0.33449265
    %v10029 = vmul.f32 %v10027, 0.33449265
    %v10030 = vmul.f32 %v9916, 0.61573106
    %v10031 = vmul.f32 %v9917, 0.61573106
    %v10032 = vadd.f32 %v10028, %v10030
    %v10033 = vadd.f32 %v10029, %v10031
    %v10034 = vmul.f32 %v8919, 0.03
    %v10036 = vlaneseq
    %v10037 = vshrl.u32 %v10036, 7
    %v10038 = vsub.s32 0, %v10037
    %v10039 = vrot.slane %v10034, %v10038
    %v10040 = vlaneseq
    %v10041 = vshrl.u32 %v10040, 7
    %v10042 = vsub.s32 1, %v10041
    %v10043 = vrot.slane %v10034, %v10042
    %v10046 = vadd.f32 %v8913, %v10039
    %v10047 = vadd.f32 %v8915, %v10043
    %v10048 = vpack.c.bf16 %v10032, %v10032
    %v10049 = vpack.c.bf16 %v10033, %v10033
    %10050 = vmatprep.subr.bf16.mxu0 %v9110
    %10051 = vmatpush1.bf16.msra.mxu0 %v9109
    %10052 = vmatprep.subr.bf16.mxu0 %v9112
    %10053 = vmatpush1.bf16.msra.mxu0 %v9111
    %10054 = vmatprep.subr.bf16.mxu0 %v9114
    %10055 = vmatpush1.bf16.msra.mxu0 %v9113
    %10056 = vmatprep.subr.bf16.mxu0 %v9116
    %10057 = vmatpush1.bf16.msra.mxu0 %v9115
    %10058 = vmatprep.subr.bf16.mxu0 %v9118
    %10059 = vmatpush1.bf16.msra.mxu0 %v9117
    %10060 = vmatprep.subr.bf16.mxu0 %v9120
    %10061 = vmatpush1.bf16.msra.mxu0 %v9119
    %10062 = vmatprep.subr.bf16.mxu0 %v9122
    %10063 = vmatpush1.bf16.msra.mxu0 %v9121
    %10064 = vmatprep.subr.bf16.mxu0 %v9124
    %10065 = vmatpush1.bf16.msra.mxu0 %v9123
    %10066 = vmatprep.subr.bf16.mxu0 %v9126
    %10067 = vmatpush1.bf16.msra.mxu0 %v9125
    %10068 = vmatprep.subr.bf16.mxu0 %v9128
    %10069 = vmatpush1.bf16.msra.mxu0 %v9127
    %10070 = vmatprep.subr.bf16.mxu0 %v9130
    %10071 = vmatpush1.bf16.msra.mxu0 %v9129
    %10072 = vmatprep.subr.bf16.mxu0 %v9132
    %10073 = vmatpush1.bf16.msra.mxu0 %v9131
    %10074 = vmatprep.subr.bf16.mxu0 %v9134
    %10075 = vmatpush1.bf16.msra.mxu0 %v9133
    %10076 = vmatprep.subr.bf16.mxu0 %v9136
    %10077 = vmatpush1.bf16.msra.mxu0 %v9135
    %10078 = vmatprep.subr.bf16.mxu0 %v9138
    %10079 = vmatpush1.bf16.msra.mxu0 %v9137
    %10080 = vmatprep.subr.bf16.mxu0 %v9140
    %10081 = vmatpush1.bf16.msra.mxu0 %v9139
    %10082 = vmatprep.mubr.bf16.mxu0 %v10049
    %10083 = vmatmul.mubr.bf16.gmra.mrb[0].mxu0 %v10048
    %v10084 = vpop.f32.mrb[0].mxu0
    %v10085 = vadd.f32 0.0, %v10084
    %v10086 = vpop.f32.mrb[0].mxu0
    %v10087 = vadd.f32 0.0, %v10086
    %v10088 = vpop.f32.mrb[0].mxu0
    %v10089 = vpop.f32.mrb[0].mxu0
    %10090 = vdwg.mxu0
    %v10091 = vadd.f32 %v10046, %v10085
    %v10092 = vadd.f32 %v10047, %v10087
    %v10093 = vmul.f32 %v10091, 0.1
    %v10094 = vmul.f32 %v10092, 0.1
    %v10095 = vmax.f32 %v10091, %v10093
    %v10096 = vmax.f32 %v10092, %v10094
    %v10097 = vpack.c.bf16 %v10095, %v10095
    %v10098 = vpack.c.bf16 %v10096, %v10096
    %10099 = vmatprep.subr.bf16.mxu0 %v9330
    %10100 = vmatpush1.bf16.msra.mxu0 %v9329
    %10101 = vmatprep.subr.bf16.mxu0 %v9332
    %10102 = vmatpush1.bf16.msra.mxu0 %v9331
    %10103 = vmatprep.subr.bf16.mxu0 %v9334
    %10104 = vmatpush1.bf16.msra.mxu0 %v9333
    %10105 = vmatprep.subr.bf16.mxu0 %v9336
    %10106 = vmatpush1.bf16.msra.mxu0 %v9335
    %10107 = vmatprep.subr.bf16.mxu0 %v9338
    %10108 = vmatpush1.bf16.msra.mxu0 %v9337
    %10109 = vmatprep.subr.bf16.mxu0 %v9340
    %10110 = vmatpush1.bf16.msra.mxu0 %v9339
    %10111 = vmatprep.subr.bf16.mxu0 %v9342
    %10112 = vmatpush1.bf16.msra.mxu0 %v9341
    %10113 = vmatprep.subr.bf16.mxu0 %v9344
    %10114 = vmatpush1.bf16.msra.mxu0 %v9343
    %10115 = vmatprep.subr.bf16.mxu0 %v9346
    %10116 = vmatpush1.bf16.msra.mxu0 %v9345
    %10117 = vmatprep.subr.bf16.mxu0 %v9348
    %10118 = vmatpush1.bf16.msra.mxu0 %v9347
    %10119 = vmatprep.subr.bf16.mxu0 %v9350
    %10120 = vmatpush1.bf16.msra.mxu0 %v9349
    %10121 = vmatprep.subr.bf16.mxu0 %v9352
    %10122 = vmatpush1.bf16.msra.mxu0 %v9351
    %10123 = vmatprep.subr.bf16.mxu0 %v9354
    %10124 = vmatpush1.bf16.msra.mxu0 %v9353
    %10125 = vmatprep.subr.bf16.mxu0 %v9356
    %10126 = vmatpush1.bf16.msra.mxu0 %v9355
    %10127 = vmatprep.subr.bf16.mxu0 %v9358
    %10128 = vmatpush1.bf16.msra.mxu0 %v9357
    %10129 = vmatprep.subr.bf16.mxu0 %v9360
    %10130 = vmatpush1.bf16.msra.mxu0 %v9359
    %10131 = vmatprep.mubr.bf16.mxu0 %v10098
    %10132 = vmatmul.mubr.bf16.gmra.mrb[0].mxu0 %v10097
    %v10133 = vpop.f32.mrb[0].mxu0
    %v10134 = vadd.f32 %v9226, %v10133
    %v10135 = vpop.f32.mrb[0].mxu0
    %v10136 = vadd.f32 %v9230, %v10135
    %v10137 = vpop.f32.mrb[0].mxu0
    %v10138 = vpop.f32.mrb[0].mxu0
    %10139 = vdwg.mxu0
    %v10140 = vmul.f32 %v10134, 0.1
    %v10141 = vmul.f32 %v10136, 0.1
    %v10142 = vmax.f32 %v10134, %v10140
    %v10143 = vmax.f32 %v10136, %v10141
    %v10144 = vmul.f32 %v10142, 0.3919046
    %v10145 = vmul.f32 %v10143, 0.3919046
    %v10146 = vmul.f32 %v10032, 0.58595854
    %v10147 = vmul.f32 %v10033, 0.58595854
    %v10148 = vadd.f32 %v10144, %v10146
    %v10149 = vadd.f32 %v10145, %v10147
    %v10150 = vmul.f32 %v8919, 0.02
    %v10152 = vlaneseq
    %v10153 = vshrl.u32 %v10152, 7
    %v10154 = vsub.s32 0, %v10153
    %v10155 = vrot.slane %v10150, %v10154
    %v10156 = vlaneseq
    %v10157 = vshrl.u32 %v10156, 7
    %v10158 = vsub.s32 1, %v10157
    %v10159 = vrot.slane %v10150, %v10158
    %v10162 = vadd.f32 %v8913, %v10155
    %v10163 = vadd.f32 %v8915, %v10159
    %v10164 = vpack.c.bf16 %v10148, %v10148
    %v10165 = vpack.c.bf16 %v10149, %v10149
    %10166 = vmatprep.subr.bf16.mxu0 %v9110
    %10167 = vmatpush1.bf16.msra.mxu0 %v9109
    %10168 = vmatprep.subr.bf16.mxu0 %v9112
    %10169 = vmatpush1.bf16.msra.mxu0 %v9111
    %10170 = vmatprep.subr.bf16.mxu0 %v9114
    %10171 = vmatpush1.bf16.msra.mxu0 %v9113
    %10172 = vmatprep.subr.bf16.mxu0 %v9116
    %10173 = vmatpush1.bf16.msra.mxu0 %v9115
    %10174 = vmatprep.subr.bf16.mxu0 %v9118
    %10175 = vmatpush1.bf16.msra.mxu0 %v9117
    %10176 = vmatprep.subr.bf16.mxu0 %v9120
    %10177 = vmatpush1.bf16.msra.mxu0 %v9119
    %10178 = vmatprep.subr.bf16.mxu0 %v9122
    %10179 = vmatpush1.bf16.msra.mxu0 %v9121
    %10180 = vmatprep.subr.bf16.mxu0 %v9124
    %10181 = vmatpush1.bf16.msra.mxu0 %v9123
    %10182 = vmatprep.subr.bf16.mxu0 %v9126
    %10183 = vmatpush1.bf16.msra.mxu0 %v9125
    %10184 = vmatprep.subr.bf16.mxu0 %v9128
    %10185 = vmatpush1.bf16.msra.mxu0 %v9127
    %10186 = vmatprep.subr.bf16.mxu0 %v9130
    %10187 = vmatpush1.bf16.msra.mxu0 %v9129
    %10188 = vmatprep.subr.bf16.mxu0 %v9132
    %10189 = vmatpush1.bf16.msra.mxu0 %v9131
    %10190 = vmatprep.subr.bf16.mxu0 %v9134
    %10191 = vmatpush1.bf16.msra.mxu0 %v9133
    %10192 = vmatprep.subr.bf16.mxu0 %v9136
    %10193 = vmatpush1.bf16.msra.mxu0 %v9135
    %10194 = vmatprep.subr.bf16.mxu0 %v9138
    %10195 = vmatpush1.bf16.msra.mxu0 %v9137
    %10196 = vmatprep.subr.bf16.mxu0 %v9140
    %10197 = vmatpush1.bf16.msra.mxu0 %v9139
    %10198 = vmatprep.mubr.bf16.mxu0 %v10165
    %10199 = vmatmul.mubr.bf16.gmra.mrb[0].mxu0 %v10164
    %v10200 = vpop.f32.mrb[0].mxu0
    %v10201 = vadd.f32 0.0, %v10200
    %v10202 = vpop.f32.mrb[0].mxu0
    %v10203 = vadd.f32 0.0, %v10202
    %v10204 = vpop.f32.mrb[0].mxu0
    %v10205 = vpop.f32.mrb[0].mxu0
    %10206 = vdwg.mxu0
    %v10207 = vadd.f32 %v10162, %v10201
    %v10208 = vadd.f32 %v10163, %v10203
    %v10209 = vmul.f32 %v10207, 0.1
    %v10210 = vmul.f32 %v10208, 0.1
    %v10211 = vmax.f32 %v10207, %v10209
    %v10212 = vmax.f32 %v10208, %v10210
    %v10213 = vpack.c.bf16 %v10211, %v10211
    %v10214 = vpack.c.bf16 %v10212, %v10212
    %10215 = vmatprep.subr.bf16.mxu0 %v9330
    %10216 = vmatpush1.bf16.msra.mxu0 %v9329
    %10217 = vmatprep.subr.bf16.mxu0 %v9332
    %10218 = vmatpush1.bf16.msra.mxu0 %v9331
    %10219 = vmatprep.subr.bf16.mxu0 %v9334
    %10220 = vmatpush1.bf16.msra.mxu0 %v9333
    %10221 = vmatprep.subr.bf16.mxu0 %v9336
    %10222 = vmatpush1.bf16.msra.mxu0 %v9335
    %10223 = vmatprep.subr.bf16.mxu0 %v9338
    %10224 = vmatpush1.bf16.msra.mxu0 %v9337
    %10225 = vmatprep.subr.bf16.mxu0 %v9340
    %10226 = vmatpush1.bf16.msra.mxu0 %v9339
    %10227 = vmatprep.subr.bf16.mxu0 %v9342
    %10228 = vmatpush1.bf16.msra.mxu0 %v9341
    %10229 = vmatprep.subr.bf16.mxu0 %v9344
    %10230 = vmatpush1.bf16.msra.mxu0 %v9343
    %10231 = vmatprep.subr.bf16.mxu0 %v9346
    %10232 = vmatpush1.bf16.msra.mxu0 %v9345
    %10233 = vmatprep.subr.bf16.mxu0 %v9348
    %10234 = vmatpush1.bf16.msra.mxu0 %v9347
    %10235 = vmatprep.subr.bf16.mxu0 %v9350
    %10236 = vmatpush1.bf16.msra.mxu0 %v9349
    %10237 = vmatprep.subr.bf16.mxu0 %v9352
    %10238 = vmatpush1.bf16.msra.mxu0 %v9351
    %10239 = vmatprep.subr.bf16.mxu0 %v9354
    %10240 = vmatpush1.bf16.msra.mxu0 %v9353
    %10241 = vmatprep.subr.bf16.mxu0 %v9356
    %10242 = vmatpush1.bf16.msra.mxu0 %v9355
    %10243 = vmatprep.subr.bf16.mxu0 %v9358
    %10244 = vmatpush1.bf16.msra.mxu0 %v9357
    %10245 = vmatprep.subr.bf16.mxu0 %v9360
    %10246 = vmatpush1.bf16.msra.mxu0 %v9359
    %10247 = vmatprep.mubr.bf16.mxu0 %v10214
    %10248 = vmatmul.mubr.bf16.gmra.mrb[0].mxu0 %v10213
    %v10249 = vpop.f32.mrb[0].mxu0
    %v10250 = vadd.f32 %v9226, %v10249
    %v10251 = vpop.f32.mrb[0].mxu0
    %v10252 = vadd.f32 %v9230, %v10251
    %v10253 = vpop.f32.mrb[0].mxu0
    %v10254 = vpop.f32.mrb[0].mxu0
    %10255 = vdwg.mxu0
    %v10256 = vmul.f32 %v10250, 0.1
    %v10257 = vmul.f32 %v10252, 0.1
    %v10258 = vmax.f32 %v10250, %v10256
    %v10259 = vmax.f32 %v10252, %v10257
    %v10260 = vmul.f32 %v10258, 0.47102946
    %v10261 = vmul.f32 %v10259, 0.47102946
    %v10262 = vmul.f32 %v10148, 0.52066547
    %v10263 = vmul.f32 %v10149, 0.52066547
    %v10264 = vadd.f32 %v10260, %v10262
    %v10265 = vadd.f32 %v10261, %v10263
    %v10266 = vmul.f32 %v8919, 0.01
    %v10268 = vlaneseq
    %v10269 = vshrl.u32 %v10268, 7
    %v10270 = vsub.s32 0, %v10269
    %v10271 = vrot.slane %v10266, %v10270
    %v10272 = vlaneseq
    %v10273 = vshrl.u32 %v10272, 7
    %v10274 = vsub.s32 1, %v10273
    %v10275 = vrot.slane %v10266, %v10274
    %v10278 = vadd.f32 %v8913, %v10271
    %v10279 = vadd.f32 %v8915, %v10275
    %v10280 = vpack.c.bf16 %v10264, %v10264
    %v10281 = vpack.c.bf16 %v10265, %v10265
    %10282 = vmatprep.subr.bf16.mxu0 %v9110
    %10283 = vmatpush1.bf16.msra.mxu0 %v9109
    %10284 = vmatprep.subr.bf16.mxu0 %v9112
    %10285 = vmatpush1.bf16.msra.mxu0 %v9111
    %10286 = vmatprep.subr.bf16.mxu0 %v9114
    %10287 = vmatpush1.bf16.msra.mxu0 %v9113
    %10288 = vmatprep.subr.bf16.mxu0 %v9116
    %10289 = vmatpush1.bf16.msra.mxu0 %v9115
    %10290 = vmatprep.subr.bf16.mxu0 %v9118
    %10291 = vmatpush1.bf16.msra.mxu0 %v9117
    %10292 = vmatprep.subr.bf16.mxu0 %v9120
    %10293 = vmatpush1.bf16.msra.mxu0 %v9119
    %10294 = vmatprep.subr.bf16.mxu0 %v9122
    %10295 = vmatpush1.bf16.msra.mxu0 %v9121
    %10296 = vmatprep.subr.bf16.mxu0 %v9124
    %10297 = vmatpush1.bf16.msra.mxu0 %v9123
    %10298 = vmatprep.subr.bf16.mxu0 %v9126
    %10299 = vmatpush1.bf16.msra.mxu0 %v9125
    %10300 = vmatprep.subr.bf16.mxu0 %v9128
    %10301 = vmatpush1.bf16.msra.mxu0 %v9127
    %10302 = vmatprep.subr.bf16.mxu0 %v9130
    %10303 = vmatpush1.bf16.msra.mxu0 %v9129
    %10304 = vmatprep.subr.bf16.mxu0 %v9132
    %10305 = vmatpush1.bf16.msra.mxu0 %v9131
    %10306 = vmatprep.subr.bf16.mxu0 %v9134
    %10307 = vmatpush1.bf16.msra.mxu0 %v9133
    %10308 = vmatprep.subr.bf16.mxu0 %v9136
    %10309 = vmatpush1.bf16.msra.mxu0 %v9135
    %10310 = vmatprep.subr.bf16.mxu0 %v9138
    %10311 = vmatpush1.bf16.msra.mxu0 %v9137
    %10312 = vmatprep.subr.bf16.mxu0 %v9140
    %10313 = vmatpush1.bf16.msra.mxu0 %v9139
    %10314 = vmatprep.mubr.bf16.mxu0 %v10281
    %10315 = vmatmul.mubr.bf16.gmra.mrb[0].mxu0 %v10280
    %v10316 = vpop.f32.mrb[0].mxu0
    %v10317 = vadd.f32 0.0, %v10316
    %v10318 = vpop.f32.mrb[0].mxu0
    %v10319 = vadd.f32 0.0, %v10318
    %v10320 = vpop.f32.mrb[0].mxu0
    %v10321 = vpop.f32.mrb[0].mxu0
    %10322 = vdwg.mxu0
    %v10323 = vadd.f32 %v10278, %v10317
    %v10324 = vadd.f32 %v10279, %v10319
    %v10325 = vmul.f32 %v10323, 0.1
    %v10326 = vmul.f32 %v10324, 0.1
    %v10327 = vmax.f32 %v10323, %v10325
    %v10328 = vmax.f32 %v10324, %v10326
    %v10329 = vpack.c.bf16 %v10327, %v10327
    %v10330 = vpack.c.bf16 %v10328, %v10328
    %10331 = vmatprep.subr.bf16.mxu0 %v9330
    %10332 = vmatpush1.bf16.msra.mxu0 %v9329
    %10333 = vmatprep.subr.bf16.mxu0 %v9332
    %10334 = vmatpush1.bf16.msra.mxu0 %v9331
    %10335 = vmatprep.subr.bf16.mxu0 %v9334
    %10336 = vmatpush1.bf16.msra.mxu0 %v9333
    %10337 = vmatprep.subr.bf16.mxu0 %v9336
    %10338 = vmatpush1.bf16.msra.mxu0 %v9335
    %10339 = vmatprep.subr.bf16.mxu0 %v9338
    %10340 = vmatpush1.bf16.msra.mxu0 %v9337
    %10341 = vmatprep.subr.bf16.mxu0 %v9340
    %10342 = vmatpush1.bf16.msra.mxu0 %v9339
    %10343 = vmatprep.subr.bf16.mxu0 %v9342
    %10344 = vmatpush1.bf16.msra.mxu0 %v9341
    %10345 = vmatprep.subr.bf16.mxu0 %v9344
    %10346 = vmatpush1.bf16.msra.mxu0 %v9343
    %10347 = vmatprep.subr.bf16.mxu0 %v9346
    %10348 = vmatpush1.bf16.msra.mxu0 %v9345
    %10349 = vmatprep.subr.bf16.mxu0 %v9348
    %10350 = vmatpush1.bf16.msra.mxu0 %v9347
    %10351 = vmatprep.subr.bf16.mxu0 %v9350
    %10352 = vmatpush1.bf16.msra.mxu0 %v9349
    %10353 = vmatprep.subr.bf16.mxu0 %v9352
    %10354 = vmatpush1.bf16.msra.mxu0 %v9351
    %10355 = vmatprep.subr.bf16.mxu0 %v9354
    %10356 = vmatpush1.bf16.msra.mxu0 %v9353
    %10357 = vmatprep.subr.bf16.mxu0 %v9356
    %10358 = vmatpush1.bf16.msra.mxu0 %v9355
    %10359 = vmatprep.subr.bf16.mxu0 %v9358
    %10360 = vmatpush1.bf16.msra.mxu0 %v9357
    %10361 = vmatprep.subr.bf16.mxu0 %v9360
    %10362 = vmatpush1.bf16.msra.mxu0 %v9359
    %10363 = vmatprep.mubr.bf16.mxu0 %v10330
    %10364 = vmatmul.mubr.bf16.gmra.mrb[0].mxu0 %v10329
    %v10365 = vpop.f32.mrb[0].mxu0
    %v10366 = vadd.f32 %v9226, %v10365
    %v10367 = vpop.f32.mrb[0].mxu0
    %v10368 = vadd.f32 %v9230, %v10367
    %v10369 = vpop.f32.mrb[0].mxu0
    %v10370 = vpop.f32.mrb[0].mxu0
    %10371 = vdwg.mxu0
    %v10372 = vmul.f32 %v10366, 0.1
    %v10373 = vmul.f32 %v10368, 0.1
    %v10374 = vmax.f32 %v10366, %v10372
    %v10375 = vmax.f32 %v10368, %v10373
    %v10376 = vmul.f32 %v10374, 0.61128503
    %v10377 = vmul.f32 %v10375, 0.61128503
    %v10378 = vmul.f32 %v10264, 0.38652617
    %v10379 = vmul.f32 %v10265, 0.38652617
    %v10380 = vadd.f32 %v10376, %v10378
    %v10381 = vadd.f32 %v10377, %v10379
    %v10382 = vmul.f32 %v8919, 0.0
    %v10384 = vlaneseq
    %v10385 = vshrl.u32 %v10384, 7
    %v10386 = vsub.s32 0, %v10385
    %v10387 = vrot.slane %v10382, %v10386
    %v10388 = vlaneseq
    %v10389 = vshrl.u32 %v10388, 7
    %v10390 = vsub.s32 1, %v10389
    %v10391 = vrot.slane %v10382, %v10390
    %v10394 = vadd.f32 %v8913, %v10387
    %v10395 = vadd.f32 %v8915, %v10391
    %v10396 = vpack.c.bf16 %v10380, %v10380
    %v10397 = vpack.c.bf16 %v10381, %v10381
    %10398 = vmatprep.subr.bf16.mxu0 %v9110
    %10399 = vmatpush1.bf16.msra.mxu0 %v9109
    %10400 = vmatprep.subr.bf16.mxu0 %v9112
    %10401 = vmatpush1.bf16.msra.mxu0 %v9111
    %10402 = vmatprep.subr.bf16.mxu0 %v9114
    %10403 = vmatpush1.bf16.msra.mxu0 %v9113
    %10404 = vmatprep.subr.bf16.mxu0 %v9116
    %10405 = vmatpush1.bf16.msra.mxu0 %v9115
    %10406 = vmatprep.subr.bf16.mxu0 %v9118
    %10407 = vmatpush1.bf16.msra.mxu0 %v9117
    %10408 = vmatprep.subr.bf16.mxu0 %v9120
    %10409 = vmatpush1.bf16.msra.mxu0 %v9119
    %10410 = vmatprep.subr.bf16.mxu0 %v9122
    %10411 = vmatpush1.bf16.msra.mxu0 %v9121
    %10412 = vmatprep.subr.bf16.mxu0 %v9124
    %10413 = vmatpush1.bf16.msra.mxu0 %v9123
    %10414 = vmatprep.subr.bf16.mxu0 %v9126
    %10415 = vmatpush1.bf16.msra.mxu0 %v9125
    %10416 = vmatprep.subr.bf16.mxu0 %v9128
    %10417 = vmatpush1.bf16.msra.mxu0 %v9127
    %10418 = vmatprep.subr.bf16.mxu0 %v9130
    %10419 = vmatpush1.bf16.msra.mxu0 %v9129
    %10420 = vmatprep.subr.bf16.mxu0 %v9132
    %10421 = vmatpush1.bf16.msra.mxu0 %v9131
    %10422 = vmatprep.subr.bf16.mxu0 %v9134
    %10423 = vmatpush1.bf16.msra.mxu0 %v9133
    %10424 = vmatprep.subr.bf16.mxu0 %v9136
    %10425 = vmatpush1.bf16.msra.mxu0 %v9135
    %10426 = vmatprep.subr.bf16.mxu0 %v9138
    %10427 = vmatpush1.bf16.msra.mxu0 %v9137
    %10428 = vmatprep.subr.bf16.mxu0 %v9140
    %10429 = vmatpush1.bf16.msra.mxu0 %v9139
    %10430 = vmatprep.mubr.bf16.mxu0 %v10397
    %10431 = vmatmul.mubr.bf16.gmra.mrb[0].mxu0 %v10396
    %v10432 = vpop.f32.mrb[0].mxu0
    %v10433 = vadd.f32 0.0, %v10432
    %v10434 = vpop.f32.mrb[0].mxu0
    %v10435 = vadd.f32 0.0, %v10434
    %v10436 = vpop.f32.mrb[0].mxu0
    %v10437 = vpop.f32.mrb[0].mxu0
    %10438 = vdwg.mxu0
    %v10439 = vadd.f32 %v10394, %v10433
    %v10440 = vadd.f32 %v10395, %v10435
    %v10441 = vmul.f32 %v10439, 0.1
    %v10442 = vmul.f32 %v10440, 0.1
    %v10443 = vmax.f32 %v10439, %v10441
    %v10444 = vmax.f32 %v10440, %v10442
    %v10445 = vpack.c.bf16 %v10443, %v10443
    %v10446 = vpack.c.bf16 %v10444, %v10444
    %10447 = vmatprep.subr.bf16.mxu0 %v9330
    %10448 = vmatpush1.bf16.msra.mxu0 %v9329
    %10449 = vmatprep.subr.bf16.mxu0 %v9332
    %10450 = vmatpush1.bf16.msra.mxu0 %v9331
    %10451 = vmatprep.subr.bf16.mxu0 %v9334
    %10452 = vmatpush1.bf16.msra.mxu0 %v9333
    %10453 = vmatprep.subr.bf16.mxu0 %v9336
    %10454 = vmatpush1.bf16.msra.mxu0 %v9335
    %10455 = vmatprep.subr.bf16.mxu0 %v9338
    %10456 = vmatpush1.bf16.msra.mxu0 %v9337
    %10457 = vmatprep.subr.bf16.mxu0 %v9340
    %10458 = vmatpush1.bf16.msra.mxu0 %v9339
    %10459 = vmatprep.subr.bf16.mxu0 %v9342
    %10460 = vmatpush1.bf16.msra.mxu0 %v9341
    %10461 = vmatprep.subr.bf16.mxu0 %v9344
    %10462 = vmatpush1.bf16.msra.mxu0 %v9343
    %10463 = vmatprep.subr.bf16.mxu0 %v9346
    %10464 = vmatpush1.bf16.msra.mxu0 %v9345
    %10465 = vmatprep.subr.bf16.mxu0 %v9348
    %10466 = vmatpush1.bf16.msra.mxu0 %v9347
    %10467 = vmatprep.subr.bf16.mxu0 %v9350
    %10468 = vmatpush1.bf16.msra.mxu0 %v9349
    %10469 = vmatprep.subr.bf16.mxu0 %v9352
    %10470 = vmatpush1.bf16.msra.mxu0 %v9351
    %10471 = vmatprep.subr.bf16.mxu0 %v9354
    %10472 = vmatpush1.bf16.msra.mxu0 %v9353
    %10473 = vmatprep.subr.bf16.mxu0 %v9356
    %10474 = vmatpush1.bf16.msra.mxu0 %v9355
    %10475 = vmatprep.subr.bf16.mxu0 %v9358
    %10476 = vmatpush1.bf16.msra.mxu0 %v9357
    %10477 = vmatprep.subr.bf16.mxu0 %v9360
    %10478 = vmatpush1.bf16.msra.mxu0 %v9359
    %10479 = vmatprep.mubr.bf16.mxu0 %v10446
    %10480 = vmatmul.mubr.bf16.gmra.mrb[0].mxu0 %v10445
    %v10481 = vpop.f32.mrb[0].mxu0
    %v10482 = vadd.f32 %v9226, %v10481
    %v10483 = vpop.f32.mrb[0].mxu0
    %v10484 = vadd.f32 %v9230, %v10483
    %v10485 = vpop.f32.mrb[0].mxu0
    %v10486 = vpop.f32.mrb[0].mxu0
    %10487 = vdwg.mxu0
    %v10488 = vmul.f32 %v10482, 0.1
    %v10489 = vmul.f32 %v10484, 0.1
    %v10490 = vmax.f32 %v10482, %v10488
    %v10491 = vmax.f32 %v10484, %v10489
    %v10492 = vmul.f32 %v10380, 0.0
    %v10493 = vmul.f32 %v10381, 0.0
    %v10494 = vadd.f32 %v10490, %v10492
    %v10495 = vadd.f32 %v10491, %v10493
    %v10498 = vcombine.low %v10494, %v10495
    %v10500 = vunpack.c.l.s4 1983009808
    %v10501 = vunpack.c.0.s8 %v10500
    %v10502 = vlaneseq
    %v10503 = vshrl.u32 %v10502, 7
    %v10504 = vsub.s32 %v10501, %v10503
    %v10505 = vrot.slane %v10498, %v10504
    %10507 = vst [vmem:[#allocation2] sm:$0xf] %v10505
    // Predicated region
    $region94: #{_lambda_.1} parent=1 // pred_check
      _
    $region95: #{_lambda_.1} parent=1 // pred_check_branch
      %10509 = sbr.rel (0) target = $region97
    $region96: #{_lambda_.1} parent=1 // pred_region
      %s10511 = ssub.s32 64, 64
      %10512 = vsyncadd [#allocation3], %s10511
      %s10514 = sshll.u32 [#allocation2], 4
      %s10515 = int_to_ptr.vmem [resolvable:$true] %s10514
      %10517 = dma.vmem_to_hbm [thread:$0]  %s10515, 64, %s23, [#allocation3]
    $region97: #{_lambda_.1} parent=1 // pred_fallthru
      _
    // Predicated region
    $region98: #{_lambda_.1} parent=1 // pred_check
      _
    $region99: #{_lambda_.1} parent=1 // pred_check_branch
      %10519 = sbr.rel (0) target = $region101
    $region100: #{_lambda_.1} parent=1 // pred_region
      %10520 = dma.done [#allocation3], 64
    $region101: #{_lambda_.1} parent=1 // pred_fallthru
      _
    %10521 = vsyncpa [#allocation3], 1

</llo_original>
